<compile_context>
chip_gen: v5e
topology: v5e:2x2
jax: 0.10.0
libtpu: 0.0.40
codegen_flags: <defaults>
</compile_context>

<pallas_src>
import functools

import jax
import jax.numpy as jnp
from jax.experimental import pallas as pl
from jax.experimental.pallas import tpu as pltpu


# ----------------------------------------------------------------------------
# Fused Inception kernel (one image per grid step)
# ----------------------------------------------------------------------------
def _inception_kernel(x_ref, wred_ref, bred_ref, w2_ref, b2_ref,
                      w3_ref, b3_ref, w4_ref, b4_ref, out_ref,
                      r2pad_ref, r3pad_ref, *, H, W, c1, c2r, c3r):
    # x:    (1, H, W, Cin) bf16 activation (unpadded; halos built in-kernel)
    # wred: (Cin, c1+c2r+c3r)  fused [branch1 | b2-reduce | b3-reduce] weights
    # w2/w3:(9*Cred, Cout) im2col layout [(kh*3+kw)*Cred + ci, co], BN-folded
    # w4:   (Cin, pool_proj)
    # b*:   (1, Cout) f32 biases (BN scale already folded into weights)
    x = x_ref[0]                                     # (H, W, Cin)
    cin = x.shape[-1]
    cd = x.dtype
    HW = H * W
    xm = x.reshape(HW, cin)

    # ---- fused 1x1 convs: [branch1 | branch2-reduce | branch3-reduce] ------
    yred = jnp.dot(xm, wred_ref[...], preferred_element_type=jnp.float32)
    yred = jnp.maximum(yred + bred_ref[...], 0.0)    # (HW, c1+c2r+c3r) f32
    y1 = yred[:, :c1]                                # branch1 output (f32)

    # ---- branch2/3: 3x3 conv (pad 1) on reduced activations, im2col --------
    def conv3x3(r_f32, rpad_ref, w_ref, b_ref):
        cred = r_f32.shape[-1]
        # zero halo lives only in VMEM scratch (never in HBM)
        rpad_ref[...] = jnp.zeros_like(rpad_ref)
        rpad_ref[1:H + 1, 1:W + 1, :] = r_f32.reshape(H, W, cred).astype(cd)
        patches = [rpad_ref[kh:kh + H, kw:kw + W, :].reshape(HW, cred)
                   for kh in range(3) for kw in range(3)]
        pm = jnp.concatenate(patches, axis=-1)       # (HW, 9*cred) im2col
        y = jnp.dot(pm, w_ref[...], preferred_element_type=jnp.float32)
        return jnp.maximum(y + b_ref[...], 0.0)      # (HW, Cout) f32

    y2 = conv3x3(yred[:, c1:c1 + c2r], r2pad_ref, w2_ref, b2_ref)
    y3 = conv3x3(yred[:, c1 + c2r:c1 + c2r + c3r], r3pad_ref, w3_ref, b3_ref)

    # ---- branch4: separable 3x3 max-pool (stride 1, pad 1) + 1x1 conv ------
    neg = jnp.finfo(cd).min                          # finite, never hits MXU
    ncol = jnp.full((H, 1, cin), neg, cd)
    hm = jnp.maximum(x, jnp.concatenate([x[:, 1:, :], ncol], axis=1))
    hm = jnp.maximum(hm, jnp.concatenate([ncol, x[:, :W - 1, :]], axis=1))
    nrow = jnp.full((1, W, cin), neg, cd)
    pooled = jnp.maximum(hm, jnp.concatenate([hm[1:, :, :], nrow], axis=0))
    pooled = jnp.maximum(pooled,
                         jnp.concatenate([nrow, hm[:H - 1, :, :]], axis=0))
    y4 = jnp.dot(pooled.reshape(HW, cin), w4_ref[...],
                 preferred_element_type=jnp.float32)
    y4 = jnp.maximum(y4 + b4_ref[...], 0.0)

    # ---- ONE lane-dense output store: [branch1 | branch2 | branch3 | branch4]
    y = jnp.concatenate([y1, y2, y3, y4], axis=-1)   # (HW, Ctot) f32
    out_ref[...] = y.reshape(1, H, W, y.shape[-1]).astype(out_ref.dtype)


# ----------------------------------------------------------------------------
# Parameter construction (deterministic, synthetic; BN folded at build time)
# ----------------------------------------------------------------------------
def _bn_fold(key, cout, eps=0.001):
    k1, k2, k3, k4 = jax.random.split(key, 4)
    gamma = jax.random.uniform(k1, (cout,), jnp.float32, 0.5, 1.5)
    beta = 0.1 * jax.random.normal(k2, (cout,), jnp.float32)
    running_mean = 0.1 * jax.random.normal(k3, (cout,), jnp.float32)
    running_var = jax.random.uniform(k4, (cout,), jnp.float32, 0.5, 1.5)
    scale = gamma / jnp.sqrt(running_var + eps)
    bias = beta - running_mean * scale
    return scale, bias


def _make_basic_conv(key, cin, cout, ksize, compute_dtype):
    kw_, kb = jax.random.split(key)
    # PyTorch conv weight layout (Cout, Cin, kh, kw); no conv bias.
    w = 0.1 * jax.random.normal(kw_, (cout, cin, ksize, ksize), jnp.float32)
    scale, bias = _bn_fold(kb, cout)
    if ksize == 1:
        wk = jnp.transpose(w[:, :, 0, 0], (1, 0))                 # (Cin, Cout)
    else:
        # (kh, kw, ci) row-major -> row index (kh*3+kw)*Cin + ci (im2col order)
        wk = jnp.transpose(w, (2, 3, 1, 0)).reshape(ksize * ksize * cin, cout)
    wk = (wk * scale[None, :]).astype(compute_dtype)  # fold BN scale into W
    return wk, bias.reshape(1, cout).astype(jnp.float32)


def make_inception_params(key, in_channels, ch1x1, ch3x3red, ch3x3,
                          ch5x5red, ch5x5, pool_proj,
                          compute_dtype=jnp.bfloat16):
    keys = jax.random.split(key, 6)
    w1, b1 = _make_basic_conv(keys[0], in_channels, ch1x1, 1, compute_dtype)
    w2r, b2r = _make_basic_conv(keys[1], in_channels, ch3x3red, 1, compute_dtype)
    w2, b2 = _make_basic_conv(keys[2], ch3x3red, ch3x3, 3, compute_dtype)
    w3r, b3r = _make_basic_conv(keys[3], in_channels, ch5x5red, 1, compute_dtype)
    # NOTE: like torchvision GoogLeNet, "branch3" uses a 3x3 conv (padding=1)
    # even though the constructor argument is named ch5x5.
    w3, b3 = _make_basic_conv(keys[4], ch5x5red, ch5x5, 3, compute_dtype)
    w4, b4 = _make_basic_conv(keys[5], in_channels, pool_proj, 1, compute_dtype)
    return {
        "wred": jnp.concatenate([w1, w2r, w3r], axis=1),   # fused 1x1 weights
        "bred": jnp.concatenate([b1, b2r, b3r], axis=1),
        "w2": w2, "b2": b2,
        "w3": w3, "b3": b3,
        "w4": w4, "b4": b4,
    }


# ----------------------------------------------------------------------------
# Inception forward (NCHW in / NCHW out, like PyTorch)
# ----------------------------------------------------------------------------
@jax.jit
def inception_forward(x_nchw, params):
    wred, bred = params["wred"], params["bred"]
    w2, b2, w3, b3 = params["w2"], params["b2"], params["w3"], params["b3"]
    w4, b4 = params["w4"], params["b4"]
    compute_dtype = wred.dtype

    x = jnp.transpose(x_nchw, (0, 2, 3, 1)).astype(compute_dtype)   # NHWC bf16
    N, H, W, Cin = x.shape
    c2r = w2.shape[0] // 9
    c3r = w3.shape[0] // 9
    c1 = wred.shape[1] - c2r - c3r
    c2, c3, cp = w2.shape[1], w3.shape[1], w4.shape[1]
    ctot = c1 + c2 + c3 + cp

    kern = functools.partial(_inception_kernel, H=H, W=W,
                             c1=c1, c2r=c2r, c3r=c3r)
    out_nhwc = pl.pallas_call(
        kern,
        out_shape=jax.ShapeDtypeStruct((N, H, W, ctot), jnp.float32),
        grid=(N,),
        in_specs=[
            pl.BlockSpec((1, H, W, Cin), lambda n: (n, 0, 0, 0)),
            pl.BlockSpec(wred.shape, lambda n: (0, 0)),
            pl.BlockSpec(bred.shape, lambda n: (0, 0)),
            pl.BlockSpec(w2.shape, lambda n: (0, 0)),
            pl.BlockSpec(b2.shape, lambda n: (0, 0)),
            pl.BlockSpec(w3.shape, lambda n: (0, 0)),
            pl.BlockSpec(b3.shape, lambda n: (0, 0)),
            pl.BlockSpec(w4.shape, lambda n: (0, 0)),
            pl.BlockSpec(b4.shape, lambda n: (0, 0)),
        ],
        out_specs=pl.BlockSpec((1, H, W, ctot), lambda n: (n, 0, 0, 0)),
        scratch_shapes=[
            pltpu.VMEM((H + 2, W + 2, c2r), compute_dtype),   # zero-halo r2
            pltpu.VMEM((H + 2, W + 2, c3r), compute_dtype),   # zero-halo r3
        ],
        compiler_params=pltpu.CompilerParams(
            dimension_semantics=("parallel",),       # shard batch on v7x 2 TCs
            vmem_limit_bytes=48 * 1024 * 1024),      # fits v7x 64 MiB/TC
    )(x, wred, bred, w2, b2, w3, b3, w4, b4)

    # Channel order inside the kernel already matches torch.cat([b1,b2,b3,b4]).
    return jnp.transpose(out_nhwc, (0, 3, 1, 2))


if __name__ == "__main__":
    key = jax.random.PRNGKey(0)
    k_x, k_p = jax.random.split(key)

    # Inception(in_channels=4, ch1x1=8, ch3x3red=4, ch3x3=8,
    #           ch5x5red=4, ch5x5=8, pool_proj=8)
    in_channels, ch1x1, ch3x3red, ch3x3 = 4, 8, 4, 8
    ch5x5red, ch5x5, pool_proj = 4, 8, 8
    N, H, W = 2, 16, 16

    x = jax.random.normal(k_x, (N, in_channels, H, W), jnp.float32)
    params = make_inception_params(k_p, in_channels, ch1x1, ch3x3red, ch3x3,
                                   ch5x5red, ch5x5, pool_proj)

    out = inception_forward(x, params)
    out = jax.block_until_ready(out)

    expected_channels = ch1x1 + ch3x3 + ch5x5 + pool_proj
    assert out.shape == (N, expected_channels, H, W), out.shape
    assert out.dtype == jnp.float32
    assert bool(jnp.isfinite(out).all())

    print("KERNEL_OK")
</pallas_src>

<mosaic_0001>
module attributes {stable_mosaic.version = 11 : i64} {
  func.func @_inception_kernel(%arg0: i32, %arg1: memref<1x16x16x4xbf16, #tpu.memory_space<vmem>>, %arg2: memref<4x16xbf16, #tpu.memory_space<vmem>>, %arg3: memref<1x16xf32, #tpu.memory_space<vmem>>, %arg4: memref<36x8xbf16, #tpu.memory_space<vmem>>, %arg5: memref<1x8xf32, #tpu.memory_space<vmem>>, %arg6: memref<36x8xbf16, #tpu.memory_space<vmem>>, %arg7: memref<1x8xf32, #tpu.memory_space<vmem>>, %arg8: memref<4x8xbf16, #tpu.memory_space<vmem>>, %arg9: memref<1x8xf32, #tpu.memory_space<vmem>>, %arg10: memref<1x16x16x32xf32, #tpu.memory_space<vmem>>, %arg11: memref<18x18x4xbf16, #tpu.memory_space<vmem>>, %arg12: memref<18x18x4xbf16, #tpu.memory_space<vmem>>) attributes {dimension_semantics = [#tpu.dimension_semantics<parallel>], iteration_bounds = array<i64: 2>, scalar_prefetch = 0 : i64, scratch_operands = 2 : i64, tpu.core_type = #tpu.core_type<tc>, window_params = [{transform_indices = @transform_0, window_bounds = array<i64: 1, 16, 16, 4>}, {pipeline_mode = #tpu.pipeline_mode<synchronous>, transform_indices = @transform_1, window_bounds = array<i64: 4, 16>}, {pipeline_mode = #tpu.pipeline_mode<synchronous>, transform_indices = @transform_2, window_bounds = array<i64: 1, 16>}, {pipeline_mode = #tpu.pipeline_mode<synchronous>, transform_indices = @transform_3, window_bounds = array<i64: 36, 8>}, {pipeline_mode = #tpu.pipeline_mode<synchronous>, transform_indices = @transform_4, window_bounds = array<i64: 1, 8>}, {pipeline_mode = #tpu.pipeline_mode<synchronous>, transform_indices = @transform_5, window_bounds = array<i64: 36, 8>}, {pipeline_mode = #tpu.pipeline_mode<synchronous>, transform_indices = @transform_6, window_bounds = array<i64: 1, 8>}, {pipeline_mode = #tpu.pipeline_mode<synchronous>, transform_indices = @transform_7, window_bounds = array<i64: 4, 8>}, {pipeline_mode = #tpu.pipeline_mode<synchronous>, transform_indices = @transform_8, window_bounds = array<i64: 1, 8>}, {transform_indices = @transform_9, window_bounds = array<i64: 1, 16, 16, 32>}]} {
    %c0 = arith.constant 0 : index
    %c0_0 = arith.constant 0 : index
    %c0_1 = arith.constant 0 : index
    %c0_2 = arith.constant 0 : index
    %0 = vector.load %arg1[%c0, %c0_0, %c0_1, %c0_2] : memref<1x16x16x4xbf16, #tpu.memory_space<vmem>>, vector<1x16x16x4xbf16>
    %1 = vector.shape_cast %0 : vector<1x16x16x4xbf16> to vector<16x16x4xbf16>
    %2 = vector.shape_cast %1 : vector<16x16x4xbf16> to vector<256x4xbf16>
    %c0_3 = arith.constant 0 : index
    %c0_4 = arith.constant 0 : index
    %3 = vector.load %arg2[%c0_3, %c0_4] : memref<4x16xbf16, #tpu.memory_space<vmem>>, vector<4x16xbf16>
    %cst = arith.constant dense<0.000000e+00> : vector<256x16xf32>
    %4 = tpu.matmul %2, %3, %cst {dimension_numbers = #tpu.dot_dimension_numbers<[1], [0], [0], [1], [0, 0, 1, 1], [], []>} : vector<256x4xbf16>, vector<4x16xbf16>, vector<256x16xf32> -> vector<256x16xf32>
    %c0_5 = arith.constant 0 : index
    %c0_6 = arith.constant 0 : index
    %5 = vector.load %arg3[%c0_5, %c0_6] : memref<1x16xf32, #tpu.memory_space<vmem>>, vector<1x16xf32>
    %6 = vector.broadcast %5 : vector<1x16xf32> to vector<256x16xf32>
    %7 = arith.addf %4, %6 : vector<256x16xf32>
    %cst_7 = arith.constant 0.000000e+00 : f32
    %8 = vector.broadcast %cst_7 : f32 to vector<256x16xf32>
    %9 = arith.maximumf %7, %8 : vector<256x16xf32>
    %10 = vector.extract_strided_slice %9 {offsets = [0, 0], sizes = [256, 8], strides = [1, 1]} : vector<256x16xf32> to vector<256x8xf32>
    %11 = vector.extract_strided_slice %9 {offsets = [0, 8], sizes = [256, 4], strides = [1, 1]} : vector<256x16xf32> to vector<256x4xf32>
    %cst_8 = arith.constant 0.000000e+00 : bf16
    %12 = vector.broadcast %cst_8 : bf16 to vector<18x18x4xbf16>
    %c0_9 = arith.constant 0 : index
    %c0_10 = arith.constant 0 : index
    %c0_11 = arith.constant 0 : index
    %13 = vector.load %arg11[%c0_9, %c0_10, %c0_11] : memref<18x18x4xbf16, #tpu.memory_space<vmem>>, vector<18x18x4xbf16>
    tpu.vector_store %arg11[%c0_9, %c0_10, %c0_11], %12 {strides = array<i32>} : memref<18x18x4xbf16, #tpu.memory_space<vmem>>, vector<18x18x4xbf16>,
    %14 = vector.shape_cast %11 : vector<256x4xf32> to vector<16x16x4xf32>
    %15 = arith.truncf %14 : vector<16x16x4xf32> to vector<16x16x4xbf16>
    %c1 = arith.constant 1 : index
    %c1_12 = arith.constant 1 : index
    %c0_13 = arith.constant 0 : index
    %16 = vector.load %arg11[%c1, %c1_12, %c0_13] : memref<18x18x4xbf16, #tpu.memory_space<vmem>>, vector<16x16x4xbf16>
    tpu.vector_store %arg11[%c1, %c1_12, %c0_13], %15 {strides = array<i32>} : memref<18x18x4xbf16, #tpu.memory_space<vmem>>, vector<16x16x4xbf16>,
    %c0_14 = arith.constant 0 : index
    %c0_15 = arith.constant 0 : index
    %c0_16 = arith.constant 0 : index
    %17 = vector.load %arg11[%c0_14, %c0_15, %c0_16] : memref<18x18x4xbf16, #tpu.memory_space<vmem>>, vector<16x16x4xbf16>
    %18 = vector.shape_cast %17 : vector<16x16x4xbf16> to vector<256x4xbf16>
    %c0_17 = arith.constant 0 : index
    %c1_18 = arith.constant 1 : index
    %c0_19 = arith.constant 0 : index
    %19 = vector.load %arg11[%c0_17, %c1_18, %c0_19] : memref<18x18x4xbf16, #tpu.memory_space<vmem>>, vector<16x16x4xbf16>
    %20 = vector.shape_cast %19 : vector<16x16x4xbf16> to vector<256x4xbf16>
    %c0_20 = arith.constant 0 : index
    %c2 = arith.constant 2 : index
    %c0_21 = arith.constant 0 : index
    %21 = vector.load %arg11[%c0_20, %c2, %c0_21] : memref<18x18x4xbf16, #tpu.memory_space<vmem>>, vector<16x16x4xbf16>
    %22 = vector.shape_cast %21 : vector<16x16x4xbf16> to vector<256x4xbf16>
    %c1_22 = arith.constant 1 : index
    %c0_23 = arith.constant 0 : index
    %c0_24 = arith.constant 0 : index
    %23 = vector.load %arg11[%c1_22, %c0_23, %c0_24] : memref<18x18x4xbf16, #tpu.memory_space<vmem>>, vector<16x16x4xbf16>
    %24 = vector.shape_cast %23 : vector<16x16x4xbf16> to vector<256x4xbf16>
    %c1_25 = arith.constant 1 : index
    %c1_26 = arith.constant 1 : index
    %c0_27 = arith.constant 0 : index
    %25 = vector.load %arg11[%c1_25, %c1_26, %c0_27] : memref<18x18x4xbf16, #tpu.memory_space<vmem>>, vector<16x16x4xbf16>
    %26 = vector.shape_cast %25 : vector<16x16x4xbf16> to vector<256x4xbf16>
    %c1_28 = arith.constant 1 : index
    %c2_29 = arith.constant 2 : index
    %c0_30 = arith.constant 0 : index
    %27 = vector.load %arg11[%c1_28, %c2_29, %c0_30] : memref<18x18x4xbf16, #tpu.memory_space<vmem>>, vector<16x16x4xbf16>
    %28 = vector.shape_cast %27 : vector<16x16x4xbf16> to vector<256x4xbf16>
    %c2_31 = arith.constant 2 : index
    %c0_32 = arith.constant 0 : index
    %c0_33 = arith.constant 0 : index
    %29 = vector.load %arg11[%c2_31, %c0_32, %c0_33] : memref<18x18x4xbf16, #tpu.memory_space<vmem>>, vector<16x16x4xbf16>
    %30 = vector.shape_cast %29 : vector<16x16x4xbf16> to vector<256x4xbf16>
    %c2_34 = arith.constant 2 : index
    %c1_35 = arith.constant 1 : index
    %c0_36 = arith.constant 0 : index
    %31 = vector.load %arg11[%c2_34, %c1_35, %c0_36] : memref<18x18x4xbf16, #tpu.memory_space<vmem>>, vector<16x16x4xbf16>
    %32 = vector.shape_cast %31 : vector<16x16x4xbf16> to vector<256x4xbf16>
    %c2_37 = arith.constant 2 : index
    %c2_38 = arith.constant 2 : index
    %c0_39 = arith.constant 0 : index
    %33 = vector.load %arg11[%c2_37, %c2_38, %c0_39] : memref<18x18x4xbf16, #tpu.memory_space<vmem>>, vector<16x16x4xbf16>
    %34 = vector.shape_cast %33 : vector<16x16x4xbf16> to vector<256x4xbf16>
    %35 = tpu.concatenate %18, %20, %22, %24, %26, %28, %30, %32, %34 in 1 : vector<256x4xbf16>, vector<256x4xbf16>, vector<256x4xbf16>, vector<256x4xbf16>, vector<256x4xbf16>, vector<256x4xbf16>, vector<256x4xbf16>, vector<256x4xbf16>, vector<256x4xbf16> -> vector<256x36xbf16>
    %c0_40 = arith.constant 0 : index
    %c0_41 = arith.constant 0 : index
    %36 = vector.load %arg4[%c0_40, %c0_41] : memref<36x8xbf16, #tpu.memory_space<vmem>>, vector<36x8xbf16>
    %cst_42 = arith.constant dense<0.000000e+00> : vector<256x8xf32>
    %37 = tpu.matmul %35, %36, %cst_42 {dimension_numbers = #tpu.dot_dimension_numbers<[1], [0], [0], [1], [0, 0, 1, 1], [], []>} : vector<256x36xbf16>, vector<36x8xbf16>, vector<256x8xf32> -> vector<256x8xf32>
    %c0_43 = arith.constant 0 : index
    %c0_44 = arith.constant 0 : index
    %38 = vector.load %arg5[%c0_43, %c0_44] : memref<1x8xf32, #tpu.memory_space<vmem>>, vector<1x8xf32>
    %39 = vector.broadcast %38 : vector<1x8xf32> to vector<256x8xf32>
    %40 = arith.addf %37, %39 : vector<256x8xf32>
    %cst_45 = arith.constant 0.000000e+00 : f32
    %41 = vector.broadcast %cst_45 : f32 to vector<256x8xf32>
    %42 = arith.maximumf %40, %41 : vector<256x8xf32>
    %43 = vector.extract_strided_slice %9 {offsets = [0, 12], sizes = [256, 4], strides = [1, 1]} : vector<256x16xf32> to vector<256x4xf32>
    %cst_46 = arith.constant 0.000000e+00 : bf16
    %44 = vector.broadcast %cst_46 : bf16 to vector<18x18x4xbf16>
    %c0_47 = arith.constant 0 : index
    %c0_48 = arith.constant 0 : index
    %c0_49 = arith.constant 0 : index
    %45 = vector.load %arg12[%c0_47, %c0_48, %c0_49] : memref<18x18x4xbf16, #tpu.memory_space<vmem>>, vector<18x18x4xbf16>
    tpu.vector_store %arg12[%c0_47, %c0_48, %c0_49], %44 {strides = array<i32>} : memref<18x18x4xbf16, #tpu.memory_space<vmem>>, vector<18x18x4xbf16>,
    %46 = vector.shape_cast %43 : vector<256x4xf32> to vector<16x16x4xf32>
    %47 = arith.truncf %46 : vector<16x16x4xf32> to vector<16x16x4xbf16>
    %c1_50 = arith.constant 1 : index
    %c1_51 = arith.constant 1 : index
    %c0_52 = arith.constant 0 : index
    %48 = vector.load %arg12[%c1_50, %c1_51, %c0_52] : memref<18x18x4xbf16, #tpu.memory_space<vmem>>, vector<16x16x4xbf16>
    tpu.vector_store %arg12[%c1_50, %c1_51, %c0_52], %47 {strides = array<i32>} : memref<18x18x4xbf16, #tpu.memory_space<vmem>>, vector<16x16x4xbf16>,
    %c0_53 = arith.constant 0 : index
    %c0_54 = arith.constant 0 : index
    %c0_55 = arith.constant 0 : index
    %49 = vector.load %arg12[%c0_53, %c0_54, %c0_55] : memref<18x18x4xbf16, #tpu.memory_space<vmem>>, vector<16x16x4xbf16>
    %50 = vector.shape_cast %49 : vector<16x16x4xbf16> to vector<256x4xbf16>
    %c0_56 = arith.constant 0 : index
    %c1_57 = arith.constant 1 : index
    %c0_58 = arith.constant 0 : index
    %51 = vector.load %arg12[%c0_56, %c1_57, %c0_58] : memref<18x18x4xbf16, #tpu.memory_space<vmem>>, vector<16x16x4xbf16>
    %52 = vector.shape_cast %51 : vector<16x16x4xbf16> to vector<256x4xbf16>
    %c0_59 = arith.constant 0 : index
    %c2_60 = arith.constant 2 : index
    %c0_61 = arith.constant 0 : index
    %53 = vector.load %arg12[%c0_59, %c2_60, %c0_61] : memref<18x18x4xbf16, #tpu.memory_space<vmem>>, vector<16x16x4xbf16>
    %54 = vector.shape_cast %53 : vector<16x16x4xbf16> to vector<256x4xbf16>
    %c1_62 = arith.constant 1 : index
    %c0_63 = arith.constant 0 : index
    %c0_64 = arith.constant 0 : index
    %55 = vector.load %arg12[%c1_62, %c0_63, %c0_64] : memref<18x18x4xbf16, #tpu.memory_space<vmem>>, vector<16x16x4xbf16>
    %56 = vector.shape_cast %55 : vector<16x16x4xbf16> to vector<256x4xbf16>
    %c1_65 = arith.constant 1 : index
    %c1_66 = arith.constant 1 : index
    %c0_67 = arith.constant 0 : index
    %57 = vector.load %arg12[%c1_65, %c1_66, %c0_67] : memref<18x18x4xbf16, #tpu.memory_space<vmem>>, vector<16x16x4xbf16>
    %58 = vector.shape_cast %57 : vector<16x16x4xbf16> to vector<256x4xbf16>
    %c1_68 = arith.constant 1 : index
    %c2_69 = arith.constant 2 : index
    %c0_70 = arith.constant 0 : index
    %59 = vector.load %arg12[%c1_68, %c2_69, %c0_70] : memref<18x18x4xbf16, #tpu.memory_space<vmem>>, vector<16x16x4xbf16>
    %60 = vector.shape_cast %59 : vector<16x16x4xbf16> to vector<256x4xbf16>
    %c2_71 = arith.constant 2 : index
    %c0_72 = arith.constant 0 : index
    %c0_73 = arith.constant 0 : index
    %61 = vector.load %arg12[%c2_71, %c0_72, %c0_73] : memref<18x18x4xbf16, #tpu.memory_space<vmem>>, vector<16x16x4xbf16>
    %62 = vector.shape_cast %61 : vector<16x16x4xbf16> to vector<256x4xbf16>
    %c2_74 = arith.constant 2 : index
    %c1_75 = arith.constant 1 : index
    %c0_76 = arith.constant 0 : index
    %63 = vector.load %arg12[%c2_74, %c1_75, %c0_76] : memref<18x18x4xbf16, #tpu.memory_space<vmem>>, vector<16x16x4xbf16>
    %64 = vector.shape_cast %63 : vector<16x16x4xbf16> to vector<256x4xbf16>
    %c2_77 = arith.constant 2 : index
    %c2_78 = arith.constant 2 : index
    %c0_79 = arith.constant 0 : index
    %65 = vector.load %arg12[%c2_77, %c2_78, %c0_79] : memref<18x18x4xbf16, #tpu.memory_space<vmem>>, vector<16x16x4xbf16>
    %66 = vector.shape_cast %65 : vector<16x16x4xbf16> to vector<256x4xbf16>
    %67 = tpu.concatenate %50, %52, %54, %56, %58, %60, %62, %64, %66 in 1 : vector<256x4xbf16>, vector<256x4xbf16>, vector<256x4xbf16>, vector<256x4xbf16>, vector<256x4xbf16>, vector<256x4xbf16>, vector<256x4xbf16>, vector<256x4xbf16>, vector<256x4xbf16> -> vector<256x36xbf16>
    %c0_80 = arith.constant 0 : index
    %c0_81 = arith.constant 0 : index
    %68 = vector.load %arg6[%c0_80, %c0_81] : memref<36x8xbf16, #tpu.memory_space<vmem>>, vector<36x8xbf16>
    %cst_82 = arith.constant dense<0.000000e+00> : vector<256x8xf32>
    %69 = tpu.matmul %67, %68, %cst_82 {dimension_numbers = #tpu.dot_dimension_numbers<[1], [0], [0], [1], [0, 0, 1, 1], [], []>} : vector<256x36xbf16>, vector<36x8xbf16>, vector<256x8xf32> -> vector<256x8xf32>
    %c0_83 = arith.constant 0 : index
    %c0_84 = arith.constant 0 : index
    %70 = vector.load %arg7[%c0_83, %c0_84] : memref<1x8xf32, #tpu.memory_space<vmem>>, vector<1x8xf32>
    %71 = vector.broadcast %70 : vector<1x8xf32> to vector<256x8xf32>
    %72 = arith.addf %69, %71 : vector<256x8xf32>
    %cst_85 = arith.constant 0.000000e+00 : f32
    %73 = vector.broadcast %cst_85 : f32 to vector<256x8xf32>
    %74 = arith.maximumf %72, %73 : vector<256x8xf32>
    %cst_86 = arith.constant -3.389530e+38 : bf16
    %75 = vector.broadcast %cst_86 : bf16 to vector<16x1x4xbf16>
    %76 = vector.extract_strided_slice %1 {offsets = [0, 1, 0], sizes = [16, 15, 4], strides = [1, 1, 1]} : vector<16x16x4xbf16> to vector<16x15x4xbf16>
    %77 = tpu.concatenate %76, %75 in 1 : vector<16x15x4xbf16>, vector<16x1x4xbf16> -> vector<16x16x4xbf16>
    %78 = arith.maximumf %1, %77 : vector<16x16x4xbf16>
    %79 = vector.extract_strided_slice %1 {offsets = [0, 0, 0], sizes = [16, 15, 4], strides = [1, 1, 1]} : vector<16x16x4xbf16> to vector<16x15x4xbf16>
    %80 = tpu.concatenate %75, %79 in 1 : vector<16x1x4xbf16>, vector<16x15x4xbf16> -> vector<16x16x4xbf16>
    %81 = arith.maximumf %78, %80 : vector<16x16x4xbf16>
    %cst_87 = arith.constant -3.389530e+38 : bf16
    %82 = vector.broadcast %cst_87 : bf16 to vector<1x16x4xbf16>
    %83 = vector.extract_strided_slice %81 {offsets = [1, 0, 0], sizes = [15, 16, 4], strides = [1, 1, 1]} : vector<16x16x4xbf16> to vector<15x16x4xbf16>
    %84 = tpu.concatenate %83, %82 in 0 : vector<15x16x4xbf16>, vector<1x16x4xbf16> -> vector<16x16x4xbf16>
    %85 = arith.maximumf %81, %84 : vector<16x16x4xbf16>
    %86 = vector.extract_strided_slice %81 {offsets = [0, 0, 0], sizes = [15, 16, 4], strides = [1, 1, 1]} : vector<16x16x4xbf16> to vector<15x16x4xbf16>
    %87 = tpu.concatenate %82, %86 in 0 : vector<1x16x4xbf16>, vector<15x16x4xbf16> -> vector<16x16x4xbf16>
    %88 = arith.maximumf %85, %87 : vector<16x16x4xbf16>
    %89 = vector.shape_cast %88 : vector<16x16x4xbf16> to vector<256x4xbf16>
    %c0_88 = arith.constant 0 : index
    %c0_89 = arith.constant 0 : index
    %90 = vector.load %arg8[%c0_88, %c0_89] : memref<4x8xbf16, #tpu.memory_space<vmem>>, vector<4x8xbf16>
    %cst_90 = arith.constant dense<0.000000e+00> : vector<256x8xf32>
    %91 = tpu.matmul %89, %90, %cst_90 {dimension_numbers = #tpu.dot_dimension_numbers<[1], [0], [0], [1], [0, 0, 1, 1], [], []>} : vector<256x4xbf16>, vector<4x8xbf16>, vector<256x8xf32> -> vector<256x8xf32>
    %c0_91 = arith.constant 0 : index
    %c0_92 = arith.constant 0 : index
    %92 = vector.load %arg9[%c0_91, %c0_92] : memref<1x8xf32, #tpu.memory_space<vmem>>, vector<1x8xf32>
    %93 = vector.broadcast %92 : vector<1x8xf32> to vector<256x8xf32>
    %94 = arith.addf %91, %93 : vector<256x8xf32>
    %cst_93 = arith.constant 0.000000e+00 : f32
    %95 = vector.broadcast %cst_93 : f32 to vector<256x8xf32>
    %96 = arith.maximumf %94, %95 : vector<256x8xf32>
    %97 = tpu.concatenate %10, %42, %74, %96 in 1 : vector<256x8xf32>, vector<256x8xf32>, vector<256x8xf32>, vector<256x8xf32> -> vector<256x32xf32>
    %98 = vector.shape_cast %97 : vector<256x32xf32> to vector<1x16x16x32xf32>
    %c0_94 = arith.constant 0 : index
    %c0_95 = arith.constant 0 : index
    %c0_96 = arith.constant 0 : index
    %c0_97 = arith.constant 0 : index
    %99 = vector.load %arg10[%c0_94, %c0_95, %c0_96, %c0_97] : memref<1x16x16x32xf32, #tpu.memory_space<vmem>>, vector<1x16x16x32xf32>
    tpu.vector_store %arg10[%c0_94, %c0_95, %c0_96, %c0_97], %98 {strides = array<i32>} : memref<1x16x16x32xf32, #tpu.memory_space<vmem>>, vector<1x16x16x32xf32>,
    return
  }
  func.func @transform_0(%arg0: i32) -> (i32, i32, i32, i32) {
    %c0_i32 = arith.constant 0 : i32
    %c0_i32_0 = arith.constant 0 : i32
    %c0_i32_1 = arith.constant 0 : i32
    %c0_i32_2 = arith.constant 0 : i32
    return %arg0, %c0_i32, %c0_i32_0, %c0_i32_1 : i32, i32, i32, i32
  }
  func.func @transform_1(%arg0: i32) -> (i32, i32) {
    %c0_i32 = arith.constant 0 : i32
    %c0_i32_0 = arith.constant 0 : i32
    %c0_i32_1 = arith.constant 0 : i32
    return %c0_i32, %c0_i32_0 : i32, i32
  }
  func.func @transform_2(%arg0: i32) -> (i32, i32) {
    %c0_i32 = arith.constant 0 : i32
    %c0_i32_0 = arith.constant 0 : i32
    %c0_i32_1 = arith.constant 0 : i32
    return %c0_i32, %c0_i32_0 : i32, i32
  }
  func.func @transform_3(%arg0: i32) -> (i32, i32) {
    %c0_i32 = arith.constant 0 : i32
    %c0_i32_0 = arith.constant 0 : i32
    %c0_i32_1 = arith.constant 0 : i32
    return %c0_i32, %c0_i32_0 : i32, i32
  }
  func.func @transform_4(%arg0: i32) -> (i32, i32) {
    %c0_i32 = arith.constant 0 : i32
    %c0_i32_0 = arith.constant 0 : i32
    %c0_i32_1 = arith.constant 0 : i32
    return %c0_i32, %c0_i32_0 : i32, i32
  }
  func.func @transform_5(%arg0: i32) -> (i32, i32) {
    %c0_i32 = arith.constant 0 : i32
    %c0_i32_0 = arith.constant 0 : i32
    %c0_i32_1 = arith.constant 0 : i32
    return %c0_i32, %c0_i32_0 : i32, i32
  }
  func.func @transform_6(%arg0: i32) -> (i32, i32) {
    %c0_i32 = arith.constant 0 : i32
    %c0_i32_0 = arith.constant 0 : i32
    %c0_i32_1 = arith.constant 0 : i32
    return %c0_i32, %c0_i32_0 : i32, i32
  }
  func.func @transform_7(%arg0: i32) -> (i32, i32) {
    %c0_i32 = arith.constant 0 : i32
    %c0_i32_0 = arith.constant 0 : i32
    %c0_i32_1 = arith.constant 0 : i32
    return %c0_i32, %c0_i32_0 : i32, i32
  }
  func.func @transform_8(%arg0: i32) -> (i32, i32) {
    %c0_i32 = arith.constant 0 : i32
    %c0_i32_0 = arith.constant 0 : i32
    %c0_i32_1 = arith.constant 0 : i32
    return %c0_i32, %c0_i32_0 : i32, i32
  }
  func.func @transform_9(%arg0: i32) -> (i32, i32, i32, i32) {
    %c0_i32 = arith.constant 0 : i32
    %c0_i32_0 = arith.constant 0 : i32
    %c0_i32_1 = arith.constant 0 : i32
    %c0_i32_2 = arith.constant 0 : i32
    return %arg0, %c0_i32, %c0_i32_0, %c0_i32_1 : i32, i32, i32, i32
  }
}

</mosaic_0001>

<llo_original>
// kernel: inception_forward.1
$region0: #{inception_forward.1}
  #allocation0 [shape = 'u32[]', space=smem, size = 0x4, offset = 0x4, fixed_abs, tag = 'smem constant byte address 0x4 - core index']
  #allocation1 [shape = 'u32[72,128]{1,0:T(1,128)}', space=vmem, size = 0x9000, scoped, tag = 'internal scratch']
  #allocation2 [shape = 'bf16[18,18,4]{2,1,0:T(8,128)(2,1)}', space=vmem, size = 0x1b000, scoped, tag = 'scratch operand']
  #allocation3 [shape = 'bf16[18,18,4]{2,1,0:T(8,128)(2,1)}', space=vmem, size = 0x1b000, scoped, tag = 'scratch operand']
  %s0 = inlined_call_operand.vmem [shape: bf16[2,16,16,4], index: 0, kind: input, shape index: {}]
  %s1 = inlined_call_operand.vmem [shape: bf16[4,16], index: 1, kind: input, shape index: {}]
  %s2 = inlined_call_operand.vmem [shape: f32[1,16], index: 2, kind: input, shape index: {}]
  %s3 = inlined_call_operand.vmem [shape: bf16[36,8], index: 3, kind: input, shape index: {}]
  %s4 = inlined_call_operand.vmem [shape: f32[1,8], index: 4, kind: input, shape index: {}]
  %s5 = inlined_call_operand.vmem [shape: bf16[36,8], index: 5, kind: input, shape index: {}]
  %s6 = inlined_call_operand.vmem [shape: f32[1,8], index: 6, kind: input, shape index: {}]
  %s7 = inlined_call_operand.vmem [shape: bf16[4,8], index: 7, kind: input, shape index: {}]
  %s8 = inlined_call_operand.vmem [shape: f32[1,8], index: 8, kind: input, shape index: {}]
  %s9 = inlined_call_operand.hbm [shape: f32[2,16,16,32], index: 9, kind: output, shape index: {}]
  %s10 = sld [smem:[#allocation0]]
  $region69: #{inception_forward.1} parent=0
    _
  %s12 = ssub.s32 1, %s10
  %s13 = scalar_select 0, %s12, %s10
  $region1: #{inception_forward.1} parent=0
    #allocation4 [shape = 'u8[262144]{0}', space=vmem, size = 0x40000, scoped, tag = 'output window, operand 0']
    #allocation5 [shape = 's32[2]{0}', space=sflag, size = 0x8, scoped, tag = 'scoped memory for inception_forward.1']
    %14 = vsyncpa [#allocation5], 0
    %s15 = scalar_lea.sflag [#allocation5], 1
    %16 = vsyncpa %s15, 0
    loop: start=0, step=1, limit=4
    $region2: #{inception_forward.1} parent=1 // loop_pre_header
      _
    $region3: #{inception_forward.1} parent=1 // loop_header
      %s18 = sphi 0, %s22
      %p19 = scmp.ge.s32.totalorder %s18, 4
      %s28 = sphi 0, %s30
      %s31 = sphi 0, %s28
      %s32 = sphi 0, %s31
      %s48 = sphi 0, %s32
      %s52 = sphi 0, %s52
      %s54 = sphi 0, %s52
      %s55 = sphi 0, %s54
      %s69 = sphi 0, %s55
      %s73 = sphi 0, %s73
      %s75 = sphi 0, %s73
      %s76 = sphi 0, %s75
      %s90 = sphi 0, %s76
      %s94 = sphi 0, %s94
      %s96 = sphi 0, %s94
      %s97 = sphi 0, %s96
      %s111 = sphi 0, %s97
      %s115 = sphi 0, %s115
      %s117 = sphi 0, %s115
      %s118 = sphi 0, %s117
      %s132 = sphi 0, %s118
      %s136 = sphi 0, %s136
      %s138 = sphi 0, %s136
      %s139 = sphi 0, %s138
      %s153 = sphi 0, %s139
      %s157 = sphi 0, %s157
      %s159 = sphi 0, %s157
      %s160 = sphi 0, %s159
      %s174 = sphi 0, %s160
      %s178 = sphi 0, %s178
      %s180 = sphi 0, %s178
      %s181 = sphi 0, %s180
      %s195 = sphi 0, %s181
      %s199 = sphi 0, %s199
      %s201 = sphi 0, %s199
      %s202 = sphi 0, %s201
      %s216 = sphi 0, %s202
      %s222 = sphi 0, %s224
      %s225 = sphi 0, %s222
      %s226 = sphi 0, %s225
      %s242 = sphi 0, %s226
    $region4: #{inception_forward.1} parent=1 // loop_header_branch
      %21 = sbr.rel (%p19) target = $region8
    $region5: #{inception_forward.1} parent=1 // loop_body
      %s23 = ssub.s32 %s18, 1
      %s24 = ssub.s32 %s18, 2
      %s25 = sadd.s32 %s18, 1
      %s26 = ssub.s32 %s18, %s25
      %p27 = scmp.eq.s32.totalorder %s26, 0
      %s29 = sadd.s32 %s28, 1
      %s30 = scalar_select %p27, %s28, %s29
      %p33 = pneg %p27
      %p34 = scmp.eq.s32.totalorder %s18, 1
      %p35 = por %p33, %p34
      %p36 = scmp.ne.s32.totalorder %s28, %s31
      %p37 = scmp.eq.s32.totalorder %s18, 0
      %p38 = por %p36, %p37
      %p39 = scmp.ne.s32.totalorder %s28, %s31
      %p40 = scmp.eq.s32.totalorder %s23, 1
      %p41 = por %p39, %p40
      %p42 = scmp.ne.s32.totalorder %s31, %s32
      %p43 = scmp.eq.s32.totalorder %s23, 0
      %p44 = por %p42, %p43
      %p45 = scmp.ne.s32.totalorder %s31, %s32
      %p46 = scmp.eq.s32.totalorder %s24, 1
      %p47 = por %p45, %p46
      %p49 = scmp.ne.s32.totalorder %s32, %s48
      %p50 = scmp.eq.s32.totalorder %s24, 0
      %p51 = por %p49, %p50
      %s53 = sadd.s32 %s52, 1
      %p56 = scmp.eq.s32.totalorder %s18, 1
      %p57 = scmp.ne.s32.totalorder %s52, %s54
      %p58 = scmp.eq.s32.totalorder %s18, 0
      %p59 = por %p57, %p58
      %p60 = scmp.ne.s32.totalorder %s52, %s54
      %p61 = scmp.eq.s32.totalorder %s23, 1
      %p62 = por %p60, %p61
      %p63 = scmp.ne.s32.totalorder %s54, %s55
      %p64 = scmp.eq.s32.totalorder %s23, 0
      %p65 = por %p63, %p64
      %p66 = scmp.ne.s32.totalorder %s54, %s55
      %p67 = scmp.eq.s32.totalorder %s24, 1
      %p68 = por %p66, %p67
      %p70 = scmp.ne.s32.totalorder %s55, %s69
      %p71 = scmp.eq.s32.totalorder %s24, 0
      %p72 = por %p70, %p71
      %s74 = sadd.s32 %s73, 1
      %p77 = scmp.eq.s32.totalorder %s18, 1
      %p78 = scmp.ne.s32.totalorder %s73, %s75
      %p79 = scmp.eq.s32.totalorder %s18, 0
      %p80 = por %p78, %p79
      %p81 = scmp.ne.s32.totalorder %s73, %s75
      %p82 = scmp.eq.s32.totalorder %s23, 1
      %p83 = por %p81, %p82
      %p84 = scmp.ne.s32.totalorder %s75, %s76
      %p85 = scmp.eq.s32.totalorder %s23, 0
      %p86 = por %p84, %p85
      %p87 = scmp.ne.s32.totalorder %s75, %s76
      %p88 = scmp.eq.s32.totalorder %s24, 1
      %p89 = por %p87, %p88
      %p91 = scmp.ne.s32.totalorder %s76, %s90
      %p92 = scmp.eq.s32.totalorder %s24, 0
      %p93 = por %p91, %p92
      %s95 = sadd.s32 %s94, 1
      %p98 = scmp.eq.s32.totalorder %s18, 1
      %p99 = scmp.ne.s32.totalorder %s94, %s96
      %p100 = scmp.eq.s32.totalorder %s18, 0
      %p101 = por %p99, %p100
      %p102 = scmp.ne.s32.totalorder %s94, %s96
      %p103 = scmp.eq.s32.totalorder %s23, 1
      %p104 = por %p102, %p103
      %p105 = scmp.ne.s32.totalorder %s96, %s97
      %p106 = scmp.eq.s32.totalorder %s23, 0
      %p107 = por %p105, %p106
      %p108 = scmp.ne.s32.totalorder %s96, %s97
      %p109 = scmp.eq.s32.totalorder %s24, 1
      %p110 = por %p108, %p109
      %p112 = scmp.ne.s32.totalorder %s97, %s111
      %p113 = scmp.eq.s32.totalorder %s24, 0
      %p114 = por %p112, %p113
      %s116 = sadd.s32 %s115, 1
      %p119 = scmp.eq.s32.totalorder %s18, 1
      %p120 = scmp.ne.s32.totalorder %s115, %s117
      %p121 = scmp.eq.s32.totalorder %s18, 0
      %p122 = por %p120, %p121
      %p123 = scmp.ne.s32.totalorder %s115, %s117
      %p124 = scmp.eq.s32.totalorder %s23, 1
      %p125 = por %p123, %p124
      %p126 = scmp.ne.s32.totalorder %s117, %s118
      %p127 = scmp.eq.s32.totalorder %s23, 0
      %p128 = por %p126, %p127
      %p129 = scmp.ne.s32.totalorder %s117, %s118
      %p130 = scmp.eq.s32.totalorder %s24, 1
      %p131 = por %p129, %p130
      %p133 = scmp.ne.s32.totalorder %s118, %s132
      %p134 = scmp.eq.s32.totalorder %s24, 0
      %p135 = por %p133, %p134
      %s137 = sadd.s32 %s136, 1
      %p140 = scmp.eq.s32.totalorder %s18, 1
      %p141 = scmp.ne.s32.totalorder %s136, %s138
      %p142 = scmp.eq.s32.totalorder %s18, 0
      %p143 = por %p141, %p142
      %p144 = scmp.ne.s32.totalorder %s136, %s138
      %p145 = scmp.eq.s32.totalorder %s23, 1
      %p146 = por %p144, %p145
      %p147 = scmp.ne.s32.totalorder %s138, %s139
      %p148 = scmp.eq.s32.totalorder %s23, 0
      %p149 = por %p147, %p148
      %p150 = scmp.ne.s32.totalorder %s138, %s139
      %p151 = scmp.eq.s32.totalorder %s24, 1
      %p152 = por %p150, %p151
      %p154 = scmp.ne.s32.totalorder %s139, %s153
      %p155 = scmp.eq.s32.totalorder %s24, 0
      %p156 = por %p154, %p155
      %s158 = sadd.s32 %s157, 1
      %p161 = scmp.eq.s32.totalorder %s18, 1
      %p162 = scmp.ne.s32.totalorder %s157, %s159
      %p163 = scmp.eq.s32.totalorder %s18, 0
      %p164 = por %p162, %p163
      %p165 = scmp.ne.s32.totalorder %s157, %s159
      %p166 = scmp.eq.s32.totalorder %s23, 1
      %p167 = por %p165, %p166
      %p168 = scmp.ne.s32.totalorder %s159, %s160
      %p169 = scmp.eq.s32.totalorder %s23, 0
      %p170 = por %p168, %p169
      %p171 = scmp.ne.s32.totalorder %s159, %s160
      %p172 = scmp.eq.s32.totalorder %s24, 1
      %p173 = por %p171, %p172
      %p175 = scmp.ne.s32.totalorder %s160, %s174
      %p176 = scmp.eq.s32.totalorder %s24, 0
      %p177 = por %p175, %p176
      %s179 = sadd.s32 %s178, 1
      %p182 = scmp.eq.s32.totalorder %s18, 1
      %p183 = scmp.ne.s32.totalorder %s178, %s180
      %p184 = scmp.eq.s32.totalorder %s18, 0
      %p185 = por %p183, %p184
      %p186 = scmp.ne.s32.totalorder %s178, %s180
      %p187 = scmp.eq.s32.totalorder %s23, 1
      %p188 = por %p186, %p187
      %p189 = scmp.ne.s32.totalorder %s180, %s181
      %p190 = scmp.eq.s32.totalorder %s23, 0
      %p191 = por %p189, %p190
      %p192 = scmp.ne.s32.totalorder %s180, %s181
      %p193 = scmp.eq.s32.totalorder %s24, 1
      %p194 = por %p192, %p193
      %p196 = scmp.ne.s32.totalorder %s181, %s195
      %p197 = scmp.eq.s32.totalorder %s24, 0
      %p198 = por %p196, %p197
      %s200 = sadd.s32 %s199, 1
      %p203 = scmp.eq.s32.totalorder %s18, 1
      %p204 = scmp.ne.s32.totalorder %s199, %s201
      %p205 = scmp.eq.s32.totalorder %s18, 0
      %p206 = por %p204, %p205
      %p207 = scmp.ne.s32.totalorder %s199, %s201
      %p208 = scmp.eq.s32.totalorder %s23, 1
      %p209 = por %p207, %p208
      %p210 = scmp.ne.s32.totalorder %s201, %s202
      %p211 = scmp.eq.s32.totalorder %s23, 0
      %p212 = por %p210, %p211
      %p213 = scmp.ne.s32.totalorder %s201, %s202
      %p214 = scmp.eq.s32.totalorder %s24, 1
      %p215 = por %p213, %p214
      %p217 = scmp.ne.s32.totalorder %s202, %s216
      %p218 = scmp.eq.s32.totalorder %s24, 0
      %p219 = por %p217, %p218
      %s220 = ssub.s32 %s18, %s25
      %p221 = scmp.eq.s32.totalorder %s220, 0
      %s223 = sadd.s32 %s222, 1
      %s224 = scalar_select %p221, %s222, %s223
      %p227 = pneg %p221
      %p228 = scmp.eq.s32.totalorder %s18, 1
      %p229 = por %p227, %p228
      %p230 = scmp.ne.s32.totalorder %s222, %s225
      %p231 = scmp.eq.s32.totalorder %s18, 0
      %p232 = por %p230, %p231
      %p233 = scmp.ne.s32.totalorder %s222, %s225
      %p234 = scmp.eq.s32.totalorder %s23, 1
      %p235 = por %p233, %p234
      %p236 = scmp.ne.s32.totalorder %s225, %s226
      %p237 = scmp.eq.s32.totalorder %s23, 0
      %p238 = por %p236, %p237
      %p239 = scmp.ne.s32.totalorder %s225, %s226
      %p240 = scmp.eq.s32.totalorder %s24, 1
      %p241 = por %p239, %p240
      %p243 = scmp.ne.s32.totalorder %s226, %s242
      %p244 = scmp.eq.s32.totalorder %s24, 0
      %p245 = por %p243, %p244
      %p246 = scmp.le.s32.totalorder 1, %s18
      %p247 = scmp.lt.s32.totalorder %s18, 3
      %p248 = pnand %p246, %p247
      %p249 = pneg %p248
      // Predicated region
      $region9: #{inception_forward.1} parent=5 // pred_check
        _
      $region10: #{inception_forward.1} parent=5 // pred_check_branch
        %251 = sbr.rel (%p248) target = $region12
      $region11: #{inception_forward.1} parent=5 // pred_region
        %s252 = ssub.s32 %s18, 1
        // Predicated region
        $region13: #{inception_forward.1} parent=11 // pred_check
          %p253 = pneg %p65
        $region14: #{inception_forward.1} parent=11 // pred_check_branch
          %255 = sbr.rel (%p253) target = $region16
        $region15: #{inception_forward.1} parent=11 // pred_region
          _
        $region16: #{inception_forward.1} parent=11 // pred_fallthru
          _
        // Predicated region
        $region17: #{inception_forward.1} parent=11 // pred_check
          %p256 = pneg %p86
        $region18: #{inception_forward.1} parent=11 // pred_check_branch
          %258 = sbr.rel (%p256) target = $region20
        $region19: #{inception_forward.1} parent=11 // pred_region
          _
        $region20: #{inception_forward.1} parent=11 // pred_fallthru
          _
        // Predicated region
        $region21: #{inception_forward.1} parent=11 // pred_check
          %p259 = pneg %p107
        $region22: #{inception_forward.1} parent=11 // pred_check_branch
          %261 = sbr.rel (%p259) target = $region24
        $region23: #{inception_forward.1} parent=11 // pred_region
          _
        $region24: #{inception_forward.1} parent=11 // pred_fallthru
          _
        // Predicated region
        $region25: #{inception_forward.1} parent=11 // pred_check
          %p262 = pneg %p128
        $region26: #{inception_forward.1} parent=11 // pred_check_branch
          %264 = sbr.rel (%p262) target = $region28
        $region27: #{inception_forward.1} parent=11 // pred_region
          _
        $region28: #{inception_forward.1} parent=11 // pred_fallthru
          _
        // Predicated region
        $region29: #{inception_forward.1} parent=11 // pred_check
          %p265 = pneg %p149
        $region30: #{inception_forward.1} parent=11 // pred_check_branch
          %267 = sbr.rel (%p265) target = $region32
        $region31: #{inception_forward.1} parent=11 // pred_region
          _
        $region32: #{inception_forward.1} parent=11 // pred_fallthru
          _
        // Predicated region
        $region33: #{inception_forward.1} parent=11 // pred_check
          %p268 = pneg %p170
        $region34: #{inception_forward.1} parent=11 // pred_check_branch
          %270 = sbr.rel (%p268) target = $region36
        $region35: #{inception_forward.1} parent=11 // pred_region
          _
        $region36: #{inception_forward.1} parent=11 // pred_fallthru
          _
        // Predicated region
        $region37: #{inception_forward.1} parent=11 // pred_check
          %p271 = pneg %p191
        $region38: #{inception_forward.1} parent=11 // pred_check_branch
          %273 = sbr.rel (%p271) target = $region40
        $region39: #{inception_forward.1} parent=11 // pred_region
          _
        $region40: #{inception_forward.1} parent=11 // pred_fallthru
          _
        // Predicated region
        $region41: #{inception_forward.1} parent=11 // pred_check
          %p274 = pneg %p212
        $region42: #{inception_forward.1} parent=11 // pred_check_branch
          %276 = sbr.rel (%p274) target = $region44
        $region43: #{inception_forward.1} parent=11 // pred_region
          _
        $region44: #{inception_forward.1} parent=11 // pred_fallthru
          _
      $region12: #{inception_forward.1} parent=5 // pred_fallthru
        _
      %p277 = scmp.lt.s32.totalorder %s18, 2
      // Predicated region
      $region45: #{inception_forward.1} parent=5 // pred_check
        %p278 = pneg %p277
      $region46: #{inception_forward.1} parent=5 // pred_check_branch
        %280 = sbr.rel (%p278) target = $region48
      $region47: #{inception_forward.1} parent=5 // pred_region
        // Predicated region
        $region49: #{inception_forward.1} parent=47 // pred_check
          %p281 = pneg %p38
        $region50: #{inception_forward.1} parent=47 // pred_check_branch
          %283 = sbr.rel (%p281) target = $region52
        $region51: #{inception_forward.1} parent=47 // pred_region
          %p284 = scmp.lt.s32.totalorder %s18, 1
          %s285 = scalar_select %p284, %s18, 1
          %s286 = smul.addr %s285, 32
          %s287 = smul.addr %s286, 4
          %s288 = scalar_lea.vmem %s0, %s287
        $region52: #{inception_forward.1} parent=47 // pred_fallthru
          _
      $region48: #{inception_forward.1} parent=5 // pred_fallthru
        _
      %p289 = scmp.le.s32.totalorder 1, %s18
      %p290 = scmp.lt.s32.totalorder %s18, 3
      %p291 = pnand %p289, %p290
      %p292 = pneg %p291
      // Predicated region
      $region53: #{inception_forward.1} parent=5 // pred_check
        _
      $region54: #{inception_forward.1} parent=5 // pred_check_branch
        %294 = sbr.rel (%p291) target = $region56
      $region55: #{inception_forward.1} parent=5 // pred_region
        %s295 = ssub.s32 %s18, 1
        %p296 = scmp.lt.s32.totalorder %s23, 1
        %s297 = scalar_select %p296, %s23, 1
        %s298 = smul.addr %s297, 32
        %s299 = smul.addr %s298, 4
        %s300 = scalar_lea.vmem %s0, %s299
        %p301 = pneg %p44
        %p302 = pneg %p41
        %p303 = pneg %p65
        %p304 = pneg %p62
        %p305 = pneg %p86
        %p306 = pneg %p83
        %p307 = pneg %p107
        %p308 = pneg %p104
        %p309 = pneg %p128
        %p310 = pneg %p125
        %p311 = pneg %p149
        %p312 = pneg %p146
        %p313 = pneg %p170
        %p314 = pneg %p167
        %p315 = pneg %p191
        %p316 = pneg %p188
        %p317 = pneg %p212
        %p318 = pneg %p209
        %p319 = pneg %p238
        %p320 = pneg %p235
        %s321 = sand.u32 %s225, 1
        %s322 = scalar_lea.sflag [#allocation5], %s321
        %s323 = sand.u32 %s225, 1
        %s324 = smul.addr %s323, 256
        %s325 = scalar_lea.vmem [#allocation4], %s324
        %p326 = scmp.lt.s32.totalorder %s23, 1
        %s327 = scalar_select %p326, %s23, 1
        %s328 = smul.addr %s327, 32
        %s329 = smul.addr %s328, 4
        %s330 = scalar_lea.vmem %s0, %s329
        %v333 = vld [vmem:[%s330] sm:$0xf]
        %v334 = vld [vmem:[%s330 + $0x4] sm:$0xf]
        %v335 = vld [vmem:[%s330 + $0x8] sm:$0xf]
        %v336 = vld [vmem:[%s330 + $0xc] sm:$0xf]
        %v337 = vld [vmem:[%s330 + $0x10] sm:$0xf]
        %v338 = vld [vmem:[%s330 + $0x14] sm:$0xf]
        %v339 = vld [vmem:[%s330 + $0x18] sm:$0xf]
        %v340 = vld [vmem:[%s330 + $0x1c] sm:$0xf]
        %v341 = vld [vmem:[%s330 + $0x20] sm:$0xf]
        %v342 = vld [vmem:[%s330 + $0x24] sm:$0xf]
        %v343 = vld [vmem:[%s330 + $0x28] sm:$0xf]
        %v344 = vld [vmem:[%s330 + $0x2c] sm:$0xf]
        %v345 = vld [vmem:[%s330 + $0x30] sm:$0xf]
        %v346 = vld [vmem:[%s330 + $0x34] sm:$0xf]
        %v347 = vld [vmem:[%s330 + $0x38] sm:$0xf]
        %v348 = vld [vmem:[%s330 + $0x3c] sm:$0xf]
        %v349 = vld [vmem:[%s330 + $0x40] sm:$0xf]
        %v350 = vld [vmem:[%s330 + $0x44] sm:$0xf]
        %v351 = vld [vmem:[%s330 + $0x48] sm:$0xf]
        %v352 = vld [vmem:[%s330 + $0x4c] sm:$0xf]
        %v353 = vld [vmem:[%s330 + $0x50] sm:$0xf]
        %v354 = vld [vmem:[%s330 + $0x54] sm:$0xf]
        %v355 = vld [vmem:[%s330 + $0x58] sm:$0xf]
        %v356 = vld [vmem:[%s330 + $0x5c] sm:$0xf]
        %v357 = vld [vmem:[%s330 + $0x60] sm:$0xf]
        %v358 = vld [vmem:[%s330 + $0x64] sm:$0xf]
        %v359 = vld [vmem:[%s330 + $0x68] sm:$0xf]
        %v360 = vld [vmem:[%s330 + $0x6c] sm:$0xf]
        %v361 = vld [vmem:[%s330 + $0x70] sm:$0xf]
        %v362 = vld [vmem:[%s330 + $0x74] sm:$0xf]
        %v363 = vld [vmem:[%s330 + $0x78] sm:$0xf]
        %v364 = vld [vmem:[%s330 + $0x7c] sm:$0xf]
        %v365 = vld [vmem:[%s1] sm:$0x3]
        %v366 = vld [vmem:[%s2] sm:$0x1]
        %v368 = vperm.slane %v366, 0
        %v402 = vunpack.c.l.b16 %v333
        %v403 = vunpack.c.l.b16 %v334
        %v404 = vunpack.c.l.b16 %v335
        %v405 = vunpack.c.l.b16 %v336
        %v406 = vunpack.c.l.b16 %v337
        %v407 = vunpack.c.l.b16 %v338
        %v408 = vunpack.c.l.b16 %v339
        %v409 = vunpack.c.l.b16 %v340
        %v410 = vunpack.c.l.b16 %v341
        %v411 = vunpack.c.l.b16 %v342
        %v412 = vunpack.c.l.b16 %v343
        %v413 = vunpack.c.l.b16 %v344
        %v414 = vunpack.c.l.b16 %v345
        %v415 = vunpack.c.l.b16 %v346
        %v416 = vunpack.c.l.b16 %v347
        %v417 = vunpack.c.l.b16 %v348
        %v418 = vunpack.c.l.b16 %v349
        %v419 = vunpack.c.l.b16 %v350
        %v420 = vunpack.c.l.b16 %v351
        %v421 = vunpack.c.l.b16 %v352
        %v422 = vunpack.c.l.b16 %v353
        %v423 = vunpack.c.l.b16 %v354
        %v424 = vunpack.c.l.b16 %v355
        %v425 = vunpack.c.l.b16 %v356
        %v426 = vunpack.c.l.b16 %v357
        %v427 = vunpack.c.l.b16 %v358
        %v428 = vunpack.c.l.b16 %v359
        %v429 = vunpack.c.l.b16 %v360
        %v430 = vunpack.c.l.b16 %v361
        %v431 = vunpack.c.l.b16 %v362
        %v432 = vunpack.c.l.b16 %v363
        %v433 = vunpack.c.l.b16 %v364
        %v434 = vpack.c.b16 %v403, %v402
        %v435 = vpack.c.b16 %v405, %v404
        %v436 = vpack.c.b16 %v407, %v406
        %v437 = vpack.c.b16 %v409, %v408
        %v438 = vpack.c.b16 %v411, %v410
        %v439 = vpack.c.b16 %v413, %v412
        %v440 = vpack.c.b16 %v415, %v414
        %v441 = vpack.c.b16 %v417, %v416
        %v442 = vpack.c.b16 %v419, %v418
        %v443 = vpack.c.b16 %v421, %v420
        %v444 = vpack.c.b16 %v423, %v422
        %v445 = vpack.c.b16 %v425, %v424
        %v446 = vpack.c.b16 %v427, %v426
        %v447 = vpack.c.b16 %v429, %v428
        %v448 = vpack.c.b16 %v431, %v430
        %v449 = vpack.c.b16 %v433, %v432
        %vm450 = vcmask 31744
        %v452 = vsel %vm450, %v434, 0
        %v455 = vsel %vm450, %v435, 0
        %v458 = vsel %vm450, %v436, 0
        %v461 = vsel %vm450, %v437, 0
        %v464 = vsel %vm450, %v438, 0
        %v467 = vsel %vm450, %v439, 0
        %v470 = vsel %vm450, %v440, 0
        %v473 = vsel %vm450, %v441, 0
        %v476 = vsel %vm450, %v442, 0
        %v479 = vsel %vm450, %v443, 0
        %v482 = vsel %vm450, %v444, 0
        %v485 = vsel %vm450, %v445, 0
        %v488 = vsel %vm450, %v446, 0
        %v491 = vsel %vm450, %v447, 0
        %v494 = vsel %vm450, %v448, 0
        %v497 = vsel %vm450, %v449, 0
        %vm499 = vcmask 1041408
        %v501 = vsel %vm499, %v365, 0
        %503 = vmatpush.bf16.msra.mxu0 0
        %504 = vmatpush.bf16.msra.mxu0 0
        %505 = vmatpush.bf16.msra.mxu0 0
        %506 = vmatpush.bf16.msra.mxu0 0
        %507 = vmatpush.bf16.msra.mxu0 0
        %508 = vmatpush.bf16.msra.mxu0 0
        %509 = vmatpush.bf16.msra.mxu0 0
        %510 = vmatpush.bf16.msra.mxu0 %v501
        %511 = vmatmul.bf16.gmra.mxu0 %v452
        %v512 = vpop.f32.mrf.mxu0
        %v513 = vadd.f32 %v368, %v512
        %v514 = vpop.f32.mrf.mxu0
        %v515 = vadd.f32 %v368, %v514
        %516 = vmatmul.bf16.gmra.mxu0 %v455
        %v517 = vpop.f32.mrf.mxu0
        %v518 = vadd.f32 %v368, %v517
        %v519 = vpop.f32.mrf.mxu0
        %v520 = vadd.f32 %v368, %v519
        %521 = vmatmul.bf16.gmra.mxu0 %v458
        %v522 = vpop.f32.mrf.mxu0
        %v523 = vadd.f32 %v368, %v522
        %v524 = vpop.f32.mrf.mxu0
        %v525 = vadd.f32 %v368, %v524
        %526 = vmatmul.bf16.gmra.mxu0 %v461
        %v527 = vpop.f32.mrf.mxu0
        %v528 = vadd.f32 %v368, %v527
        %v529 = vpop.f32.mrf.mxu0
        %v530 = vadd.f32 %v368, %v529
        %531 = vmatmul.bf16.gmra.mxu0 %v464
        %v532 = vpop.f32.mrf.mxu0
        %v533 = vadd.f32 %v368, %v532
        %v534 = vpop.f32.mrf.mxu0
        %v535 = vadd.f32 %v368, %v534
        %536 = vmatmul.bf16.gmra.mxu0 %v467
        %v537 = vpop.f32.mrf.mxu0
        %v538 = vadd.f32 %v368, %v537
        %v539 = vpop.f32.mrf.mxu0
        %v540 = vadd.f32 %v368, %v539
        %541 = vmatmul.bf16.gmra.mxu0 %v470
        %v542 = vpop.f32.mrf.mxu0
        %v543 = vadd.f32 %v368, %v542
        %v544 = vpop.f32.mrf.mxu0
        %v545 = vadd.f32 %v368, %v544
        %546 = vmatmul.bf16.gmra.mxu0 %v473
        %v547 = vpop.f32.mrf.mxu0
        %v548 = vadd.f32 %v368, %v547
        %v549 = vpop.f32.mrf.mxu0
        %v550 = vadd.f32 %v368, %v549
        %551 = vmatmul.bf16.gmra.mxu0 %v476
        %v552 = vpop.f32.mrf.mxu0
        %v553 = vadd.f32 %v368, %v552
        %v554 = vpop.f32.mrf.mxu0
        %v555 = vadd.f32 %v368, %v554
        %556 = vmatmul.bf16.gmra.mxu0 %v479
        %v557 = vpop.f32.mrf.mxu0
        %v558 = vadd.f32 %v368, %v557
        %v559 = vpop.f32.mrf.mxu0
        %v560 = vadd.f32 %v368, %v559
        %561 = vmatmul.bf16.gmra.mxu0 %v482
        %v562 = vpop.f32.mrf.mxu0
        %v563 = vadd.f32 %v368, %v562
        %v564 = vpop.f32.mrf.mxu0
        %v565 = vadd.f32 %v368, %v564
        %566 = vmatmul.bf16.gmra.mxu0 %v485
        %v567 = vpop.f32.mrf.mxu0
        %v568 = vadd.f32 %v368, %v567
        %v569 = vpop.f32.mrf.mxu0
        %v570 = vadd.f32 %v368, %v569
        %571 = vmatmul.bf16.gmra.mxu0 %v488
        %v572 = vpop.f32.mrf.mxu0
        %v573 = vadd.f32 %v368, %v572
        %v574 = vpop.f32.mrf.mxu0
        %v575 = vadd.f32 %v368, %v574
        %576 = vmatmul.bf16.gmra.mxu0 %v491
        %v577 = vpop.f32.mrf.mxu0
        %v578 = vadd.f32 %v368, %v577
        %v579 = vpop.f32.mrf.mxu0
        %v580 = vadd.f32 %v368, %v579
        %581 = vmatmul.bf16.gmra.mxu0 %v494
        %v582 = vpop.f32.mrf.mxu0
        %v583 = vadd.f32 %v368, %v582
        %v584 = vpop.f32.mrf.mxu0
        %v585 = vadd.f32 %v368, %v584
        %586 = vmatmul.bf16.gmra.mxu0 %v497
        %v587 = vpop.f32.mrf.mxu0
        %v588 = vadd.f32 %v368, %v587
        %v589 = vpop.f32.mrf.mxu0
        %v590 = vadd.f32 %v368, %v589
        %591 = vdwg.mxu0
        %v592 = vmax.f32 %v513, 0.0
        %v593 = vmax.f32 %v515, 0.0
        %v594 = vmax.f32 %v518, 0.0
        %v595 = vmax.f32 %v520, 0.0
        %v596 = vmax.f32 %v523, 0.0
        %v597 = vmax.f32 %v525, 0.0
        %v598 = vmax.f32 %v528, 0.0
        %v599 = vmax.f32 %v530, 0.0
        %v600 = vmax.f32 %v533, 0.0
        %v601 = vmax.f32 %v535, 0.0
        %v602 = vmax.f32 %v538, 0.0
        %v603 = vmax.f32 %v540, 0.0
        %v604 = vmax.f32 %v543, 0.0
        %v605 = vmax.f32 %v545, 0.0
        %v606 = vmax.f32 %v548, 0.0
        %v607 = vmax.f32 %v550, 0.0
        %v608 = vmax.f32 %v553, 0.0
        %v609 = vmax.f32 %v555, 0.0
        %v610 = vmax.f32 %v558, 0.0
        %v611 = vmax.f32 %v560, 0.0
        %v612 = vmax.f32 %v563, 0.0
        %v613 = vmax.f32 %v565, 0.0
        %v614 = vmax.f32 %v568, 0.0
        %v615 = vmax.f32 %v570, 0.0
        %v616 = vmax.f32 %v573, 0.0
        %v617 = vmax.f32 %v575, 0.0
        %v618 = vmax.f32 %v578, 0.0
        %v619 = vmax.f32 %v580, 0.0
        %v620 = vmax.f32 %v583, 0.0
        %v621 = vmax.f32 %v585, 0.0
        %v622 = vmax.f32 %v588, 0.0
        %v623 = vmax.f32 %v590, 0.0
        %vm624 = vcmask 27648
        %625 = vst.msk [vmem:[#allocation2] sm:$0xf] %vm624, 0
        %626 = vst.msk [vmem:[#allocation2 + $0x4] sm:$0xf] %vm624, 0
        %vm627 = vcmask 24576
        %628 = vst.msk [vmem:[#allocation2 + $0x8] sm:$0x1] %vm627, 0
        %629 = vst.msk [vmem:[#allocation2 + $0xc] sm:$0xf] %vm624, 0
        %630 = vst.msk [vmem:[#allocation2 + $0x10] sm:$0xf] %vm624, 0
        %631 = vst.msk [vmem:[#allocation2 + $0x14] sm:$0x1] %vm627, 0
        %632 = vst.msk [vmem:[#allocation2 + $0x18] sm:$0xf] %vm624, 0
        %633 = vst.msk [vmem:[#allocation2 + $0x1c] sm:$0xf] %vm624, 0
        %634 = vst.msk [vmem:[#allocation2 + $0x20] sm:$0x1] %vm627, 0
        %635 = vst.msk [vmem:[#allocation2 + $0x24] sm:$0xf] %vm624, 0
        %636 = vst.msk [vmem:[#allocation2 + $0x28] sm:$0xf] %vm624, 0
        %637 = vst.msk [vmem:[#allocation2 + $0x2c] sm:$0x1] %vm627, 0
        %638 = vst.msk [vmem:[#allocation2 + $0x30] sm:$0xf] %vm624, 0
        %639 = vst.msk [vmem:[#allocation2 + $0x34] sm:$0xf] %vm624, 0
        %640 = vst.msk [vmem:[#allocation2 + $0x38] sm:$0x1] %vm627, 0
        %641 = vst.msk [vmem:[#allocation2 + $0x3c] sm:$0xf] %vm624, 0
        %642 = vst.msk [vmem:[#allocation2 + $0x40] sm:$0xf] %vm624, 0
        %643 = vst.msk [vmem:[#allocation2 + $0x44] sm:$0x1] %vm627, 0
        %644 = vst.msk [vmem:[#allocation2 + $0x48] sm:$0xf] %vm624, 0
        %645 = vst.msk [vmem:[#allocation2 + $0x4c] sm:$0xf] %vm624, 0
        %646 = vst.msk [vmem:[#allocation2 + $0x50] sm:$0x1] %vm627, 0
        %647 = vst.msk [vmem:[#allocation2 + $0x54] sm:$0xf] %vm624, 0
        %648 = vst.msk [vmem:[#allocation2 + $0x58] sm:$0xf] %vm624, 0
        %649 = vst.msk [vmem:[#allocation2 + $0x5c] sm:$0x1] %vm627, 0
        %650 = vst.msk [vmem:[#allocation2 + $0x60] sm:$0xf] %vm624, 0
        %651 = vst.msk [vmem:[#allocation2 + $0x64] sm:$0xf] %vm624, 0
        %652 = vst.msk [vmem:[#allocation2 + $0x68] sm:$0x1] %vm627, 0
        %653 = vst.msk [vmem:[#allocation2 + $0x6c] sm:$0xf] %vm624, 0
        %654 = vst.msk [vmem:[#allocation2 + $0x70] sm:$0xf] %vm624, 0
        %655 = vst.msk [vmem:[#allocation2 + $0x74] sm:$0x1] %vm627, 0
        %656 = vst.msk [vmem:[#allocation2 + $0x78] sm:$0xf] %vm624, 0
        %657 = vst.msk [vmem:[#allocation2 + $0x7c] sm:$0xf] %vm624, 0
        %658 = vst.msk [vmem:[#allocation2 + $0x80] sm:$0x1] %vm627, 0
        %659 = vst.msk [vmem:[#allocation2 + $0x84] sm:$0xf] %vm624, 0
        %660 = vst.msk [vmem:[#allocation2 + $0x88] sm:$0xf] %vm624, 0
        %661 = vst.msk [vmem:[#allocation2 + $0x8c] sm:$0x1] %vm627, 0
        %662 = vst.msk [vmem:[#allocation2 + $0x90] sm:$0xf] %vm624, 0
        %663 = vst.msk [vmem:[#allocation2 + $0x94] sm:$0xf] %vm624, 0
        %664 = vst.msk [vmem:[#allocation2 + $0x98] sm:$0x1] %vm627, 0
        %665 = vst.msk [vmem:[#allocation2 + $0x9c] sm:$0xf] %vm624, 0
        %666 = vst.msk [vmem:[#allocation2 + $0xa0] sm:$0xf] %vm624, 0
        %667 = vst.msk [vmem:[#allocation2 + $0xa4] sm:$0x1] %vm627, 0
        %668 = vst.msk [vmem:[#allocation2 + $0xa8] sm:$0xf] %vm624, 0
        %669 = vst.msk [vmem:[#allocation2 + $0xac] sm:$0xf] %vm624, 0
        %670 = vst.msk [vmem:[#allocation2 + $0xb0] sm:$0x1] %vm627, 0
        %671 = vst.msk [vmem:[#allocation2 + $0xb4] sm:$0xf] %vm624, 0
        %672 = vst.msk [vmem:[#allocation2 + $0xb8] sm:$0xf] %vm624, 0
        %673 = vst.msk [vmem:[#allocation2 + $0xbc] sm:$0x1] %vm627, 0
        %674 = vst.msk [vmem:[#allocation2 + $0xc0] sm:$0xf] %vm624, 0
        %675 = vst.msk [vmem:[#allocation2 + $0xc4] sm:$0xf] %vm624, 0
        %676 = vst.msk [vmem:[#allocation2 + $0xc8] sm:$0x1] %vm627, 0
        %677 = vst.msk [vmem:[#allocation2 + $0xcc] sm:$0xf] %vm624, 0
        %678 = vst.msk [vmem:[#allocation2 + $0xd0] sm:$0xf] %vm624, 0
        %679 = vst.msk [vmem:[#allocation2 + $0xd4] sm:$0x1] %vm627, 0
        %v680 = vpack.c.bf16 %v592, %v592
        %v681 = vpack.c.bf16 %v593, %v593
        %v682 = vpack.c.bf16 %v594, %v594
        %v683 = vpack.c.bf16 %v595, %v595
        %v684 = vpack.c.bf16 %v596, %v596
        %v685 = vpack.c.bf16 %v597, %v597
        %v686 = vpack.c.bf16 %v598, %v598
        %v687 = vpack.c.bf16 %v599, %v599
        %v688 = vpack.c.bf16 %v600, %v600
        %v689 = vpack.c.bf16 %v601, %v601
        %v690 = vpack.c.bf16 %v602, %v602
        %v691 = vpack.c.bf16 %v603, %v603
        %v692 = vpack.c.bf16 %v604, %v604
        %v693 = vpack.c.bf16 %v605, %v605
        %v694 = vpack.c.bf16 %v606, %v606
        %v695 = vpack.c.bf16 %v607, %v607
        %v696 = vpack.c.bf16 %v608, %v608
        %v697 = vpack.c.bf16 %v609, %v609
        %v698 = vpack.c.bf16 %v610, %v610
        %v699 = vpack.c.bf16 %v611, %v611
        %v700 = vpack.c.bf16 %v612, %v612
        %v701 = vpack.c.bf16 %v613, %v613
        %v702 = vpack.c.bf16 %v614, %v614
        %v703 = vpack.c.bf16 %v615, %v615
        %v704 = vpack.c.bf16 %v616, %v616
        %v705 = vpack.c.bf16 %v617, %v617
        %v706 = vpack.c.bf16 %v618, %v618
        %v707 = vpack.c.bf16 %v619, %v619
        %v708 = vpack.c.bf16 %v620, %v620
        %v709 = vpack.c.bf16 %v621, %v621
        %v710 = vpack.c.bf16 %v622, %v622
        %v711 = vpack.c.bf16 %v623, %v623
        %vm712 = vsmask.f32 256
        %vm713 = vsmask.f32 4368
        %vm714 = vmor %vm712, %vm713
        %v716 = vshrl.u32 %v680, 16
        %v718 = vrot.slane %v716, 7
        %v719 = vshll.u32 %v680, 16
        %v721 = vor.u32 %v718, %v719
        %v722 = vrot.slane %v718, 4
        %v724 = vshrl.u32 %v681, 16
        %v726 = vrot.slane %v724, 7
        %v727 = vshll.u32 %v681, 16
        %v729 = vor.u32 %v726, %v727
        %v730 = vsel %vm714, %v722, %v729
        %v731 = vrot.slane %v726, 4
        %v733 = vshrl.u32 %v682, 16
        %v735 = vrot.slane %v733, 7
        %v736 = vshll.u32 %v682, 16
        %v738 = vor.u32 %v735, %v736
        %v739 = vrot.slane %v735, 4
        %v741 = vshrl.u32 %v683, 16
        %v743 = vrot.slane %v741, 7
        %v744 = vshll.u32 %v683, 16
        %v746 = vor.u32 %v743, %v744
        %v747 = vsel %vm714, %v739, %v746
        %v748 = vrot.slane %v743, 4
        %v750 = vshrl.u32 %v684, 16
        %v752 = vrot.slane %v750, 7
        %v753 = vshll.u32 %v684, 16
        %v755 = vor.u32 %v752, %v753
        %v756 = vrot.slane %v752, 4
        %v758 = vshrl.u32 %v685, 16
        %v760 = vrot.slane %v758, 7
        %v761 = vshll.u32 %v685, 16
        %v763 = vor.u32 %v760, %v761
        %v764 = vsel %vm714, %v756, %v763
        %v765 = vrot.slane %v760, 4
        %v767 = vshrl.u32 %v686, 16
        %v769 = vrot.slane %v767, 7
        %v770 = vshll.u32 %v686, 16
        %v772 = vor.u32 %v769, %v770
        %v773 = vrot.slane %v769, 4
        %v775 = vshrl.u32 %v687, 16
        %v777 = vrot.slane %v775, 7
        %v778 = vshll.u32 %v687, 16
        %v780 = vor.u32 %v777, %v778
        %v781 = vsel %vm714, %v773, %v780
        %v782 = vrot.slane %v777, 4
        %v784 = vshrl.u32 %v688, 16
        %v786 = vrot.slane %v784, 7
        %v787 = vshll.u32 %v688, 16
        %v789 = vor.u32 %v786, %v787
        %v790 = vrot.slane %v786, 4
        %v792 = vshrl.u32 %v689, 16
        %v794 = vrot.slane %v792, 7
        %v795 = vshll.u32 %v689, 16
        %v797 = vor.u32 %v794, %v795
        %v798 = vsel %vm714, %v790, %v797
        %v799 = vrot.slane %v794, 4
        %v801 = vshrl.u32 %v690, 16
        %v803 = vrot.slane %v801, 7
        %v804 = vshll.u32 %v690, 16
        %v806 = vor.u32 %v803, %v804
        %v807 = vrot.slane %v803, 4
        %v809 = vshrl.u32 %v691, 16
        %v811 = vrot.slane %v809, 7
        %v812 = vshll.u32 %v691, 16
        %v814 = vor.u32 %v811, %v812
        %v815 = vsel %vm714, %v807, %v814
        %v816 = vrot.slane %v811, 4
        %v818 = vshrl.u32 %v692, 16
        %v820 = vrot.slane %v818, 7
        %v821 = vshll.u32 %v692, 16
        %v823 = vor.u32 %v820, %v821
        %v824 = vrot.slane %v820, 4
        %v826 = vshrl.u32 %v693, 16
        %v828 = vrot.slane %v826, 7
        %v829 = vshll.u32 %v693, 16
        %v831 = vor.u32 %v828, %v829
        %v832 = vsel %vm714, %v824, %v831
        %v833 = vrot.slane %v828, 4
        %v835 = vshrl.u32 %v694, 16
        %v837 = vrot.slane %v835, 7
        %v838 = vshll.u32 %v694, 16
        %v840 = vor.u32 %v837, %v838
        %v841 = vrot.slane %v837, 4
        %v843 = vshrl.u32 %v695, 16
        %v845 = vrot.slane %v843, 7
        %v846 = vshll.u32 %v695, 16
        %v848 = vor.u32 %v845, %v846
        %v849 = vsel %vm714, %v841, %v848
        %v850 = vrot.slane %v845, 4
        %v852 = vshrl.u32 %v696, 16
        %v854 = vrot.slane %v852, 7
        %v855 = vshll.u32 %v696, 16
        %v857 = vor.u32 %v854, %v855
        %v858 = vrot.slane %v854, 4
        %v860 = vshrl.u32 %v697, 16
        %v862 = vrot.slane %v860, 7
        %v863 = vshll.u32 %v697, 16
        %v865 = vor.u32 %v862, %v863
        %v866 = vsel %vm714, %v858, %v865
        %v867 = vrot.slane %v862, 4
        %v869 = vshrl.u32 %v698, 16
        %v871 = vrot.slane %v869, 7
        %v872 = vshll.u32 %v698, 16
        %v874 = vor.u32 %v871, %v872
        %v875 = vrot.slane %v871, 4
        %v877 = vshrl.u32 %v699, 16
        %v879 = vrot.slane %v877, 7
        %v880 = vshll.u32 %v699, 16
        %v882 = vor.u32 %v879, %v880
        %v883 = vsel %vm714, %v875, %v882
        %v884 = vrot.slane %v879, 4
        %v886 = vshrl.u32 %v700, 16
        %v888 = vrot.slane %v886, 7
        %v889 = vshll.u32 %v700, 16
        %v891 = vor.u32 %v888, %v889
        %v892 = vrot.slane %v888, 4
        %v894 = vshrl.u32 %v701, 16
        %v896 = vrot.slane %v894, 7
        %v897 = vshll.u32 %v701, 16
        %v899 = vor.u32 %v896, %v897
        %v900 = vsel %vm714, %v892, %v899
        %v901 = vrot.slane %v896, 4
        %v903 = vshrl.u32 %v702, 16
        %v905 = vrot.slane %v903, 7
        %v906 = vshll.u32 %v702, 16
        %v908 = vor.u32 %v905, %v906
        %v909 = vrot.slane %v905, 4
        %v911 = vshrl.u32 %v703, 16
        %v913 = vrot.slane %v911, 7
        %v914 = vshll.u32 %v703, 16
        %v916 = vor.u32 %v913, %v914
        %v917 = vsel %vm714, %v909, %v916
        %v918 = vrot.slane %v913, 4
        %v920 = vshrl.u32 %v704, 16
        %v922 = vrot.slane %v920, 7
        %v923 = vshll.u32 %v704, 16
        %v925 = vor.u32 %v922, %v923
        %v926 = vrot.slane %v922, 4
        %v928 = vshrl.u32 %v705, 16
        %v930 = vrot.slane %v928, 7
        %v931 = vshll.u32 %v705, 16
        %v933 = vor.u32 %v930, %v931
        %v934 = vsel %vm714, %v926, %v933
        %v935 = vrot.slane %v930, 4
        %v937 = vshrl.u32 %v706, 16
        %v939 = vrot.slane %v937, 7
        %v940 = vshll.u32 %v706, 16
        %v942 = vor.u32 %v939, %v940
        %v943 = vrot.slane %v939, 4
        %v945 = vshrl.u32 %v707, 16
        %v947 = vrot.slane %v945, 7
        %v948 = vshll.u32 %v707, 16
        %v950 = vor.u32 %v947, %v948
        %v951 = vsel %vm714, %v943, %v950
        %v952 = vrot.slane %v947, 4
        %v954 = vshrl.u32 %v708, 16
        %v956 = vrot.slane %v954, 7
        %v957 = vshll.u32 %v708, 16
        %v959 = vor.u32 %v956, %v957
        %v960 = vrot.slane %v956, 4
        %v962 = vshrl.u32 %v709, 16
        %v964 = vrot.slane %v962, 7
        %v965 = vshll.u32 %v709, 16
        %v967 = vor.u32 %v964, %v965
        %v968 = vsel %vm714, %v960, %v967
        %v969 = vrot.slane %v964, 4
        %v971 = vshrl.u32 %v710, 16
        %v973 = vrot.slane %v971, 7
        %v974 = vshll.u32 %v710, 16
        %v976 = vor.u32 %v973, %v974
        %v977 = vrot.slane %v973, 4
        %v979 = vshrl.u32 %v711, 16
        %v981 = vrot.slane %v979, 7
        %v982 = vshll.u32 %v711, 16
        %v984 = vor.u32 %v981, %v982
        %v985 = vsel %vm714, %v977, %v984
        %v986 = vrot.slane %v981, 4
        %987 = vrot.lane.b32.xlu0 %v721, 120
        %v988 = vpop.permute.xlu0 %987
        %989 = vrot.lane.b32.xlu0 %v730, 120
        %v990 = vpop.permute.xlu0 %989
        %991 = vrot.lane.b32.xlu0 %v731, 120
        %v992 = vpop.permute.xlu0 %991
        %993 = vrot.lane.b32.xlu0 %v738, 120
        %v994 = vpop.permute.xlu0 %993
        %995 = vrot.lane.b32.xlu0 %v747, 120
        %v996 = vpop.permute.xlu0 %995
        %997 = vrot.lane.b32.xlu0 %v748, 120
        %v998 = vpop.permute.xlu0 %997
        %999 = vrot.lane.b32.xlu0 %v755, 120
        %v1000 = vpop.permute.xlu0 %999
        %1001 = vrot.lane.b32.xlu0 %v764, 120
        %v1002 = vpop.permute.xlu0 %1001
        %1003 = vrot.lane.b32.xlu0 %v765, 120
        %v1004 = vpop.permute.xlu0 %1003
        %1005 = vrot.lane.b32.xlu0 %v772, 120
        %v1006 = vpop.permute.xlu0 %1005
        %1007 = vrot.lane.b32.xlu0 %v781, 120
        %v1008 = vpop.permute.xlu0 %1007
        %1009 = vrot.lane.b32.xlu0 %v782, 120
        %v1010 = vpop.permute.xlu0 %1009
        %1011 = vrot.lane.b32.xlu0 %v789, 120
        %v1012 = vpop.permute.xlu0 %1011
        %1013 = vrot.lane.b32.xlu0 %v798, 120
        %v1014 = vpop.permute.xlu0 %1013
        %1015 = vrot.lane.b32.xlu0 %v799, 120
        %v1016 = vpop.permute.xlu0 %1015
        %1017 = vrot.lane.b32.xlu0 %v806, 120
        %v1018 = vpop.permute.xlu0 %1017
        %1019 = vrot.lane.b32.xlu0 %v815, 120
        %v1020 = vpop.permute.xlu0 %1019
        %1021 = vrot.lane.b32.xlu0 %v816, 120
        %v1022 = vpop.permute.xlu0 %1021
        %1023 = vrot.lane.b32.xlu0 %v823, 120
        %v1024 = vpop.permute.xlu0 %1023
        %1025 = vrot.lane.b32.xlu0 %v832, 120
        %v1026 = vpop.permute.xlu0 %1025
        %1027 = vrot.lane.b32.xlu0 %v833, 120
        %v1028 = vpop.permute.xlu0 %1027
        %1029 = vrot.lane.b32.xlu0 %v840, 120
        %v1030 = vpop.permute.xlu0 %1029
        %1031 = vrot.lane.b32.xlu0 %v849, 120
        %v1032 = vpop.permute.xlu0 %1031
        %1033 = vrot.lane.b32.xlu0 %v850, 120
        %v1034 = vpop.permute.xlu0 %1033
        %1035 = vrot.lane.b32.xlu0 %v857, 120
        %v1036 = vpop.permute.xlu0 %1035
        %1037 = vrot.lane.b32.xlu0 %v866, 120
        %v1038 = vpop.permute.xlu0 %1037
        %1039 = vrot.lane.b32.xlu0 %v867, 120
        %v1040 = vpop.permute.xlu0 %1039
        %1041 = vrot.lane.b32.xlu0 %v874, 120
        %v1042 = vpop.permute.xlu0 %1041
        %1043 = vrot.lane.b32.xlu0 %v883, 120
        %v1044 = vpop.permute.xlu0 %1043
        %1045 = vrot.lane.b32.xlu0 %v884, 120
        %v1046 = vpop.permute.xlu0 %1045
        %1047 = vrot.lane.b32.xlu0 %v891, 120
        %v1048 = vpop.permute.xlu0 %1047
        %1049 = vrot.lane.b32.xlu0 %v900, 120
        %v1050 = vpop.permute.xlu0 %1049
        %1051 = vrot.lane.b32.xlu0 %v901, 120
        %v1052 = vpop.permute.xlu0 %1051
        %1053 = vrot.lane.b32.xlu0 %v908, 120
        %v1054 = vpop.permute.xlu0 %1053
        %1055 = vrot.lane.b32.xlu0 %v917, 120
        %v1056 = vpop.permute.xlu0 %1055
        %1057 = vrot.lane.b32.xlu0 %v918, 120
        %v1058 = vpop.permute.xlu0 %1057
        %1059 = vrot.lane.b32.xlu0 %v925, 120
        %v1060 = vpop.permute.xlu0 %1059
        %1061 = vrot.lane.b32.xlu0 %v934, 120
        %v1062 = vpop.permute.xlu0 %1061
        %1063 = vrot.lane.b32.xlu0 %v935, 120
        %v1064 = vpop.permute.xlu0 %1063
        %1065 = vrot.lane.b32.xlu0 %v942, 120
        %v1066 = vpop.permute.xlu0 %1065
        %1067 = vrot.lane.b32.xlu0 %v951, 120
        %v1068 = vpop.permute.xlu0 %1067
        %1069 = vrot.lane.b32.xlu0 %v952, 120
        %v1070 = vpop.permute.xlu0 %1069
        %1071 = vrot.lane.b32.xlu0 %v959, 120
        %v1072 = vpop.permute.xlu0 %1071
        %1073 = vrot.lane.b32.xlu0 %v968, 120
        %v1074 = vpop.permute.xlu0 %1073
        %1075 = vrot.lane.b32.xlu0 %v969, 120
        %v1076 = vpop.permute.xlu0 %1075
        %1077 = vrot.lane.b32.xlu0 %v976, 120
        %v1078 = vpop.permute.xlu0 %1077
        %1079 = vrot.lane.b32.xlu0 %v985, 120
        %v1080 = vpop.permute.xlu0 %1079
        %1081 = vrot.lane.b32.xlu0 %v986, 120
        %v1082 = vpop.permute.xlu0 %1081
        %s1131 = scalar_lea.vmem [#allocation2], 12
        %vm1132 = vcmask 27648
        %vm1133 = vsmask.f32 7938
        %vm1134 = vmand %vm1132, %vm1133
        %v1135 = vld [vmem:[%s1131] sm:$0xf]
        %v1136 = vsel %vm1134, %v988, %v1135
        %1137 = vst [vmem:[%s1131] sm:$0xf] %v1136
        %1138 = vst.msk [vmem:[%s1131 + $0x4] sm:$0xf] %vm624, %v990
        %vm1139 = vcmask 24576
        %vm1140 = vmand %vm1139, %vm712
        %v1141 = vld [vmem:[%s1131 + $0x8] sm:$0x1]
        %v1142 = vsel %vm1140, %v992, %v1141
        %1143 = vst [vmem:[%s1131 + $0x8] sm:$0x1] %v1142
        %v1144 = vld [vmem:[%s1131 + $0xc] sm:$0xf]
        %v1145 = vsel %vm1134, %v994, %v1144
        %1146 = vst [vmem:[%s1131 + $0xc] sm:$0xf] %v1145
        %1147 = vst.msk [vmem:[%s1131 + $0x10] sm:$0xf] %vm624, %v996
        %v1148 = vld [vmem:[%s1131 + $0x14] sm:$0x1]
        %v1149 = vsel %vm1140, %v998, %v1148
        %1150 = vst [vmem:[%s1131 + $0x14] sm:$0x1] %v1149
        %v1151 = vld [vmem:[%s1131 + $0x18] sm:$0xf]
        %v1152 = vsel %vm1134, %v1000, %v1151
        %1153 = vst [vmem:[%s1131 + $0x18] sm:$0xf] %v1152
        %1154 = vst.msk [vmem:[%s1131 + $0x1c] sm:$0xf] %vm624, %v1002
        %v1155 = vld [vmem:[%s1131 + $0x20] sm:$0x1]
        %v1156 = vsel %vm1140, %v1004, %v1155
        %1157 = vst [vmem:[%s1131 + $0x20] sm:$0x1] %v1156
        %v1158 = vld [vmem:[%s1131 + $0x24] sm:$0xf]
        %v1159 = vsel %vm1134, %v1006, %v1158
        %1160 = vst [vmem:[%s1131 + $0x24] sm:$0xf] %v1159
        %1161 = vst.msk [vmem:[%s1131 + $0x28] sm:$0xf] %vm624, %v1008
        %v1162 = vld [vmem:[%s1131 + $0x2c] sm:$0x1]
        %v1163 = vsel %vm1140, %v1010, %v1162
        %1164 = vst [vmem:[%s1131 + $0x2c] sm:$0x1] %v1163
        %v1165 = vld [vmem:[%s1131 + $0x30] sm:$0xf]
        %v1166 = vsel %vm1134, %v1012, %v1165
        %1167 = vst [vmem:[%s1131 + $0x30] sm:$0xf] %v1166
        %1168 = vst.msk [vmem:[%s1131 + $0x34] sm:$0xf] %vm624, %v1014
        %v1169 = vld [vmem:[%s1131 + $0x38] sm:$0x1]
        %v1170 = vsel %vm1140, %v1016, %v1169
        %1171 = vst [vmem:[%s1131 + $0x38] sm:$0x1] %v1170
        %v1172 = vld [vmem:[%s1131 + $0x3c] sm:$0xf]
        %v1173 = vsel %vm1134, %v1018, %v1172
        %1174 = vst [vmem:[%s1131 + $0x3c] sm:$0xf] %v1173
        %1175 = vst.msk [vmem:[%s1131 + $0x40] sm:$0xf] %vm624, %v1020
        %v1176 = vld [vmem:[%s1131 + $0x44] sm:$0x1]
        %v1177 = vsel %vm1140, %v1022, %v1176
        %1178 = vst [vmem:[%s1131 + $0x44] sm:$0x1] %v1177
        %v1179 = vld [vmem:[%s1131 + $0x48] sm:$0xf]
        %v1180 = vsel %vm1134, %v1024, %v1179
        %1181 = vst [vmem:[%s1131 + $0x48] sm:$0xf] %v1180
        %1182 = vst.msk [vmem:[%s1131 + $0x4c] sm:$0xf] %vm624, %v1026
        %v1183 = vld [vmem:[%s1131 + $0x50] sm:$0x1]
        %v1184 = vsel %vm1140, %v1028, %v1183
        %1185 = vst [vmem:[%s1131 + $0x50] sm:$0x1] %v1184
        %v1186 = vld [vmem:[%s1131 + $0x54] sm:$0xf]
        %v1187 = vsel %vm1134, %v1030, %v1186
        %1188 = vst [vmem:[%s1131 + $0x54] sm:$0xf] %v1187
        %1189 = vst.msk [vmem:[%s1131 + $0x58] sm:$0xf] %vm624, %v1032
        %v1190 = vld [vmem:[%s1131 + $0x5c] sm:$0x1]
        %v1191 = vsel %vm1140, %v1034, %v1190
        %1192 = vst [vmem:[%s1131 + $0x5c] sm:$0x1] %v1191
        %v1193 = vld [vmem:[%s1131 + $0x60] sm:$0xf]
        %v1194 = vsel %vm1134, %v1036, %v1193
        %1195 = vst [vmem:[%s1131 + $0x60] sm:$0xf] %v1194
        %1196 = vst.msk [vmem:[%s1131 + $0x64] sm:$0xf] %vm624, %v1038
        %v1197 = vld [vmem:[%s1131 + $0x68] sm:$0x1]
        %v1198 = vsel %vm1140, %v1040, %v1197
        %1199 = vst [vmem:[%s1131 + $0x68] sm:$0x1] %v1198
        %v1200 = vld [vmem:[%s1131 + $0x6c] sm:$0xf]
        %v1201 = vsel %vm1134, %v1042, %v1200
        %1202 = vst [vmem:[%s1131 + $0x6c] sm:$0xf] %v1201
        %1203 = vst.msk [vmem:[%s1131 + $0x70] sm:$0xf] %vm624, %v1044
        %v1204 = vld [vmem:[%s1131 + $0x74] sm:$0x1]
        %v1205 = vsel %vm1140, %v1046, %v1204
        %1206 = vst [vmem:[%s1131 + $0x74] sm:$0x1] %v1205
        %v1207 = vld [vmem:[%s1131 + $0x78] sm:$0xf]
        %v1208 = vsel %vm1134, %v1048, %v1207
        %1209 = vst [vmem:[%s1131 + $0x78] sm:$0xf] %v1208
        %1210 = vst.msk [vmem:[%s1131 + $0x7c] sm:$0xf] %vm624, %v1050
        %v1211 = vld [vmem:[%s1131 + $0x80] sm:$0x1]
        %v1212 = vsel %vm1140, %v1052, %v1211
        %1213 = vst [vmem:[%s1131 + $0x80] sm:$0x1] %v1212
        %v1214 = vld [vmem:[%s1131 + $0x84] sm:$0xf]
        %v1215 = vsel %vm1134, %v1054, %v1214
        %1216 = vst [vmem:[%s1131 + $0x84] sm:$0xf] %v1215
        %1217 = vst.msk [vmem:[%s1131 + $0x88] sm:$0xf] %vm624, %v1056
        %v1218 = vld [vmem:[%s1131 + $0x8c] sm:$0x1]
        %v1219 = vsel %vm1140, %v1058, %v1218
        %1220 = vst [vmem:[%s1131 + $0x8c] sm:$0x1] %v1219
        %v1221 = vld [vmem:[%s1131 + $0x90] sm:$0xf]
        %v1222 = vsel %vm1134, %v1060, %v1221
        %1223 = vst [vmem:[%s1131 + $0x90] sm:$0xf] %v1222
        %1224 = vst.msk [vmem:[%s1131 + $0x94] sm:$0xf] %vm624, %v1062
        %v1225 = vld [vmem:[%s1131 + $0x98] sm:$0x1]
        %v1226 = vsel %vm1140, %v1064, %v1225
        %1227 = vst [vmem:[%s1131 + $0x98] sm:$0x1] %v1226
        %v1228 = vld [vmem:[%s1131 + $0x9c] sm:$0xf]
        %v1229 = vsel %vm1134, %v1066, %v1228
        %1230 = vst [vmem:[%s1131 + $0x9c] sm:$0xf] %v1229
        %1231 = vst.msk [vmem:[%s1131 + $0xa0] sm:$0xf] %vm624, %v1068
        %v1232 = vld [vmem:[%s1131 + $0xa4] sm:$0x1]
        %v1233 = vsel %vm1140, %v1070, %v1232
        %1234 = vst [vmem:[%s1131 + $0xa4] sm:$0x1] %v1233
        %v1235 = vld [vmem:[%s1131 + $0xa8] sm:$0xf]
        %v1236 = vsel %vm1134, %v1072, %v1235
        %1237 = vst [vmem:[%s1131 + $0xa8] sm:$0xf] %v1236
        %1238 = vst.msk [vmem:[%s1131 + $0xac] sm:$0xf] %vm624, %v1074
        %v1239 = vld [vmem:[%s1131 + $0xb0] sm:$0x1]
        %v1240 = vsel %vm1140, %v1076, %v1239
        %1241 = vst [vmem:[%s1131 + $0xb0] sm:$0x1] %v1240
        %v1242 = vld [vmem:[%s1131 + $0xb4] sm:$0xf]
        %v1243 = vsel %vm1134, %v1078, %v1242
        %1244 = vst [vmem:[%s1131 + $0xb4] sm:$0xf] %v1243
        %1245 = vst.msk [vmem:[%s1131 + $0xb8] sm:$0xf] %vm624, %v1080
        %v1246 = vld [vmem:[%s1131 + $0xbc] sm:$0x1]
        %v1247 = vsel %vm1140, %v1082, %v1246
        %1248 = vst [vmem:[%s1131 + $0xbc] sm:$0x1] %v1247
        %v1249 = vld [vmem:[#allocation2] sm:$0xf]
        %v1250 = vld [vmem:[#allocation2 + $0x4] sm:$0xf]
        %v1251 = vld [vmem:[#allocation2 + $0xc] sm:$0xf]
        %v1252 = vld [vmem:[#allocation2 + $0x10] sm:$0xf]
        %v1253 = vld [vmem:[#allocation2 + $0x18] sm:$0xf]
        %v1254 = vld [vmem:[#allocation2 + $0x1c] sm:$0xf]
        %v1255 = vld [vmem:[#allocation2 + $0x24] sm:$0xf]
        %v1256 = vld [vmem:[#allocation2 + $0x28] sm:$0xf]
        %v1257 = vld [vmem:[#allocation2 + $0x30] sm:$0xf]
        %v1258 = vld [vmem:[#allocation2 + $0x34] sm:$0xf]
        %v1259 = vld [vmem:[#allocation2 + $0x3c] sm:$0xf]
        %v1260 = vld [vmem:[#allocation2 + $0x40] sm:$0xf]
        %v1261 = vld [vmem:[#allocation2 + $0x48] sm:$0xf]
        %v1262 = vld [vmem:[#allocation2 + $0x4c] sm:$0xf]
        %v1263 = vld [vmem:[#allocation2 + $0x54] sm:$0xf]
        %v1264 = vld [vmem:[#allocation2 + $0x58] sm:$0xf]
        %v1265 = vld [vmem:[#allocation2 + $0x60] sm:$0xf]
        %v1266 = vld [vmem:[#allocation2 + $0x64] sm:$0xf]
        %v1267 = vld [vmem:[#allocation2 + $0x6c] sm:$0xf]
        %v1268 = vld [vmem:[#allocation2 + $0x70] sm:$0xf]
        %v1269 = vld [vmem:[#allocation2 + $0x78] sm:$0xf]
        %v1270 = vld [vmem:[#allocation2 + $0x7c] sm:$0xf]
        %v1271 = vld [vmem:[#allocation2 + $0x84] sm:$0xf]
        %v1272 = vld [vmem:[#allocation2 + $0x88] sm:$0xf]
        %v1273 = vld [vmem:[#allocation2 + $0x90] sm:$0xf]
        %v1274 = vld [vmem:[#allocation2 + $0x94] sm:$0xf]
        %v1275 = vld [vmem:[#allocation2 + $0x9c] sm:$0xf]
        %v1276 = vld [vmem:[#allocation2 + $0xa0] sm:$0xf]
        %v1277 = vld [vmem:[#allocation2 + $0xa8] sm:$0xf]
        %v1278 = vld [vmem:[#allocation2 + $0xac] sm:$0xf]
        %v1279 = vld [vmem:[#allocation2 + $0xb4] sm:$0xf]
        %v1280 = vld [vmem:[#allocation2 + $0xb8] sm:$0xf]
        %v1281 = vld [vmem:[#allocation2 + $0x8] sm:$0x1]
        %v1282 = vld [vmem:[#allocation2 + $0x14] sm:$0x1]
        %v1283 = vld [vmem:[#allocation2 + $0x20] sm:$0x1]
        %v1284 = vld [vmem:[#allocation2 + $0x2c] sm:$0x1]
        %v1285 = vld [vmem:[#allocation2 + $0x38] sm:$0x1]
        %v1286 = vld [vmem:[#allocation2 + $0x44] sm:$0x1]
        %v1287 = vld [vmem:[#allocation2 + $0x50] sm:$0x1]
        %v1288 = vld [vmem:[#allocation2 + $0x5c] sm:$0x1]
        %v1289 = vld [vmem:[#allocation2 + $0x68] sm:$0x1]
        %v1290 = vld [vmem:[#allocation2 + $0x74] sm:$0x1]
        %v1291 = vld [vmem:[#allocation2 + $0x80] sm:$0x1]
        %v1292 = vld [vmem:[#allocation2 + $0x8c] sm:$0x1]
        %v1293 = vld [vmem:[#allocation2 + $0x98] sm:$0x1]
        %v1294 = vld [vmem:[#allocation2 + $0xa4] sm:$0x1]
        %v1295 = vld [vmem:[#allocation2 + $0xb0] sm:$0x1]
        %v1296 = vld [vmem:[#allocation2 + $0xbc] sm:$0x1]
        %vm1297 = vsmask.f32 3328
        %vm1298 = vsmask.f32 7440
        %vm1299 = vmor %vm1297, %vm1298
        %v1301 = vshrl.u32 %v1249, 16
        %v1303 = vrot.slane %v1301, 4
        %v1304 = vshll.u32 %v1249, 16
        %v1306 = vrot.slane %v1304, 5
        %v1307 = vor.u32 %v1303, %v1306
        %v1308 = vrot.slane %v1307, 4
        %v1310 = vshll.u32 %v1250, 16
        %v1312 = vrot.slane %v1310, 5
        %v1313 = vsel %vm1299, %v1308, %v1312
        %v1314 = vshrl.u32 %v1250, 16
        %v1316 = vrot.slane %v1314, 4
        %v1317 = vor.u32 %v1316, %v1312
        %v1318 = vrot.slane %v1317, 4
        %v1320 = vshll.u32 %v1281, 16
        %v1322 = vrot.slane %v1320, 5
        %v1323 = vsel %vm1299, %v1318, %v1322
        %v1325 = vshrl.u32 %v1251, 16
        %v1327 = vrot.slane %v1325, 4
        %v1328 = vshll.u32 %v1251, 16
        %v1330 = vrot.slane %v1328, 5
        %v1331 = vor.u32 %v1327, %v1330
        %v1332 = vrot.slane %v1331, 4
        %v1334 = vshll.u32 %v1252, 16
        %v1336 = vrot.slane %v1334, 5
        %v1337 = vsel %vm1299, %v1332, %v1336
        %v1338 = vshrl.u32 %v1252, 16
        %v1340 = vrot.slane %v1338, 4
        %v1341 = vor.u32 %v1340, %v1336
        %v1342 = vrot.slane %v1341, 4
        %v1344 = vshll.u32 %v1282, 16
        %v1346 = vrot.slane %v1344, 5
        %v1347 = vsel %vm1299, %v1342, %v1346
        %v1349 = vshrl.u32 %v1253, 16
        %v1351 = vrot.slane %v1349, 4
        %v1352 = vshll.u32 %v1253, 16
        %v1354 = vrot.slane %v1352, 5
        %v1355 = vor.u32 %v1351, %v1354
        %v1356 = vrot.slane %v1355, 4
        %v1358 = vshll.u32 %v1254, 16
        %v1360 = vrot.slane %v1358, 5
        %v1361 = vsel %vm1299, %v1356, %v1360
        %v1362 = vshrl.u32 %v1254, 16
        %v1364 = vrot.slane %v1362, 4
        %v1365 = vor.u32 %v1364, %v1360
        %v1366 = vrot.slane %v1365, 4
        %v1368 = vshll.u32 %v1283, 16
        %v1370 = vrot.slane %v1368, 5
        %v1371 = vsel %vm1299, %v1366, %v1370
        %v1373 = vshrl.u32 %v1255, 16
        %v1375 = vrot.slane %v1373, 4
        %v1376 = vshll.u32 %v1255, 16
        %v1378 = vrot.slane %v1376, 5
        %v1379 = vor.u32 %v1375, %v1378
        %v1380 = vrot.slane %v1379, 4
        %v1382 = vshll.u32 %v1256, 16
        %v1384 = vrot.slane %v1382, 5
        %v1385 = vsel %vm1299, %v1380, %v1384
        %v1386 = vshrl.u32 %v1256, 16
        %v1388 = vrot.slane %v1386, 4
        %v1389 = vor.u32 %v1388, %v1384
        %v1390 = vrot.slane %v1389, 4
        %v1392 = vshll.u32 %v1284, 16
        %v1394 = vrot.slane %v1392, 5
        %v1395 = vsel %vm1299, %v1390, %v1394
        %v1397 = vshrl.u32 %v1257, 16
        %v1399 = vrot.slane %v1397, 4
        %v1400 = vshll.u32 %v1257, 16
        %v1402 = vrot.slane %v1400, 5
        %v1403 = vor.u32 %v1399, %v1402
        %v1404 = vrot.slane %v1403, 4
        %v1406 = vshll.u32 %v1258, 16
        %v1408 = vrot.slane %v1406, 5
        %v1409 = vsel %vm1299, %v1404, %v1408
        %v1410 = vshrl.u32 %v1258, 16
        %v1412 = vrot.slane %v1410, 4
        %v1413 = vor.u32 %v1412, %v1408
        %v1414 = vrot.slane %v1413, 4
        %v1416 = vshll.u32 %v1285, 16
        %v1418 = vrot.slane %v1416, 5
        %v1419 = vsel %vm1299, %v1414, %v1418
        %v1421 = vshrl.u32 %v1259, 16
        %v1423 = vrot.slane %v1421, 4
        %v1424 = vshll.u32 %v1259, 16
        %v1426 = vrot.slane %v1424, 5
        %v1427 = vor.u32 %v1423, %v1426
        %v1428 = vrot.slane %v1427, 4
        %v1430 = vshll.u32 %v1260, 16
        %v1432 = vrot.slane %v1430, 5
        %v1433 = vsel %vm1299, %v1428, %v1432
        %v1434 = vshrl.u32 %v1260, 16
        %v1436 = vrot.slane %v1434, 4
        %v1437 = vor.u32 %v1436, %v1432
        %v1438 = vrot.slane %v1437, 4
        %v1440 = vshll.u32 %v1286, 16
        %v1442 = vrot.slane %v1440, 5
        %v1443 = vsel %vm1299, %v1438, %v1442
        %v1445 = vshrl.u32 %v1261, 16
        %v1447 = vrot.slane %v1445, 4
        %v1448 = vshll.u32 %v1261, 16
        %v1450 = vrot.slane %v1448, 5
        %v1451 = vor.u32 %v1447, %v1450
        %v1452 = vrot.slane %v1451, 4
        %v1454 = vshll.u32 %v1262, 16
        %v1456 = vrot.slane %v1454, 5
        %v1457 = vsel %vm1299, %v1452, %v1456
        %v1458 = vshrl.u32 %v1262, 16
        %v1460 = vrot.slane %v1458, 4
        %v1461 = vor.u32 %v1460, %v1456
        %v1462 = vrot.slane %v1461, 4
        %v1464 = vshll.u32 %v1287, 16
        %v1466 = vrot.slane %v1464, 5
        %v1467 = vsel %vm1299, %v1462, %v1466
        %v1469 = vshrl.u32 %v1263, 16
        %v1471 = vrot.slane %v1469, 4
        %v1472 = vshll.u32 %v1263, 16
        %v1474 = vrot.slane %v1472, 5
        %v1475 = vor.u32 %v1471, %v1474
        %v1476 = vrot.slane %v1475, 4
        %v1478 = vshll.u32 %v1264, 16
        %v1480 = vrot.slane %v1478, 5
        %v1481 = vsel %vm1299, %v1476, %v1480
        %v1482 = vshrl.u32 %v1264, 16
        %v1484 = vrot.slane %v1482, 4
        %v1485 = vor.u32 %v1484, %v1480
        %v1486 = vrot.slane %v1485, 4
        %v1488 = vshll.u32 %v1288, 16
        %v1490 = vrot.slane %v1488, 5
        %v1491 = vsel %vm1299, %v1486, %v1490
        %v1493 = vshrl.u32 %v1265, 16
        %v1495 = vrot.slane %v1493, 4
        %v1496 = vshll.u32 %v1265, 16
        %v1498 = vrot.slane %v1496, 5
        %v1499 = vor.u32 %v1495, %v1498
        %v1500 = vrot.slane %v1499, 4
        %v1502 = vshll.u32 %v1266, 16
        %v1504 = vrot.slane %v1502, 5
        %v1505 = vsel %vm1299, %v1500, %v1504
        %v1506 = vshrl.u32 %v1266, 16
        %v1508 = vrot.slane %v1506, 4
        %v1509 = vor.u32 %v1508, %v1504
        %v1510 = vrot.slane %v1509, 4
        %v1512 = vshll.u32 %v1289, 16
        %v1514 = vrot.slane %v1512, 5
        %v1515 = vsel %vm1299, %v1510, %v1514
        %v1517 = vshrl.u32 %v1267, 16
        %v1519 = vrot.slane %v1517, 4
        %v1520 = vshll.u32 %v1267, 16
        %v1522 = vrot.slane %v1520, 5
        %v1523 = vor.u32 %v1519, %v1522
        %v1524 = vrot.slane %v1523, 4
        %v1526 = vshll.u32 %v1268, 16
        %v1528 = vrot.slane %v1526, 5
        %v1529 = vsel %vm1299, %v1524, %v1528
        %v1530 = vshrl.u32 %v1268, 16
        %v1532 = vrot.slane %v1530, 4
        %v1533 = vor.u32 %v1532, %v1528
        %v1534 = vrot.slane %v1533, 4
        %v1536 = vshll.u32 %v1290, 16
        %v1538 = vrot.slane %v1536, 5
        %v1539 = vsel %vm1299, %v1534, %v1538
        %v1541 = vshrl.u32 %v1269, 16
        %v1543 = vrot.slane %v1541, 4
        %v1544 = vshll.u32 %v1269, 16
        %v1546 = vrot.slane %v1544, 5
        %v1547 = vor.u32 %v1543, %v1546
        %v1548 = vrot.slane %v1547, 4
        %v1550 = vshll.u32 %v1270, 16
        %v1552 = vrot.slane %v1550, 5
        %v1553 = vsel %vm1299, %v1548, %v1552
        %v1554 = vshrl.u32 %v1270, 16
        %v1556 = vrot.slane %v1554, 4
        %v1557 = vor.u32 %v1556, %v1552
        %v1558 = vrot.slane %v1557, 4
        %v1560 = vshll.u32 %v1291, 16
        %v1562 = vrot.slane %v1560, 5
        %v1563 = vsel %vm1299, %v1558, %v1562
        %v1565 = vshrl.u32 %v1271, 16
        %v1567 = vrot.slane %v1565, 4
        %v1568 = vshll.u32 %v1271, 16
        %v1570 = vrot.slane %v1568, 5
        %v1571 = vor.u32 %v1567, %v1570
        %v1572 = vrot.slane %v1571, 4
        %v1574 = vshll.u32 %v1272, 16
        %v1576 = vrot.slane %v1574, 5
        %v1577 = vsel %vm1299, %v1572, %v1576
        %v1578 = vshrl.u32 %v1272, 16
        %v1580 = vrot.slane %v1578, 4
        %v1581 = vor.u32 %v1580, %v1576
        %v1582 = vrot.slane %v1581, 4
        %v1584 = vshll.u32 %v1292, 16
        %v1586 = vrot.slane %v1584, 5
        %v1587 = vsel %vm1299, %v1582, %v1586
        %v1589 = vshrl.u32 %v1273, 16
        %v1591 = vrot.slane %v1589, 4
        %v1592 = vshll.u32 %v1273, 16
        %v1594 = vrot.slane %v1592, 5
        %v1595 = vor.u32 %v1591, %v1594
        %v1596 = vrot.slane %v1595, 4
        %v1598 = vshll.u32 %v1274, 16
        %v1600 = vrot.slane %v1598, 5
        %v1601 = vsel %vm1299, %v1596, %v1600
        %v1602 = vshrl.u32 %v1274, 16
        %v1604 = vrot.slane %v1602, 4
        %v1605 = vor.u32 %v1604, %v1600
        %v1606 = vrot.slane %v1605, 4
        %v1608 = vshll.u32 %v1293, 16
        %v1610 = vrot.slane %v1608, 5
        %v1611 = vsel %vm1299, %v1606, %v1610
        %v1613 = vshrl.u32 %v1275, 16
        %v1615 = vrot.slane %v1613, 4
        %v1616 = vshll.u32 %v1275, 16
        %v1618 = vrot.slane %v1616, 5
        %v1619 = vor.u32 %v1615, %v1618
        %v1620 = vrot.slane %v1619, 4
        %v1622 = vshll.u32 %v1276, 16
        %v1624 = vrot.slane %v1622, 5
        %v1625 = vsel %vm1299, %v1620, %v1624
        %v1626 = vshrl.u32 %v1276, 16
        %v1628 = vrot.slane %v1626, 4
        %v1629 = vor.u32 %v1628, %v1624
        %v1630 = vrot.slane %v1629, 4
        %v1632 = vshll.u32 %v1294, 16
        %v1634 = vrot.slane %v1632, 5
        %v1635 = vsel %vm1299, %v1630, %v1634
        %v1637 = vshrl.u32 %v1277, 16
        %v1639 = vrot.slane %v1637, 4
        %v1640 = vshll.u32 %v1277, 16
        %v1642 = vrot.slane %v1640, 5
        %v1643 = vor.u32 %v1639, %v1642
        %v1644 = vrot.slane %v1643, 4
        %v1646 = vshll.u32 %v1278, 16
        %v1648 = vrot.slane %v1646, 5
        %v1649 = vsel %vm1299, %v1644, %v1648
        %v1650 = vshrl.u32 %v1278, 16
        %v1652 = vrot.slane %v1650, 4
        %v1653 = vor.u32 %v1652, %v1648
        %v1654 = vrot.slane %v1653, 4
        %v1656 = vshll.u32 %v1295, 16
        %v1658 = vrot.slane %v1656, 5
        %v1659 = vsel %vm1299, %v1654, %v1658
        %v1661 = vshrl.u32 %v1279, 16
        %v1663 = vrot.slane %v1661, 4
        %v1664 = vshll.u32 %v1279, 16
        %v1666 = vrot.slane %v1664, 5
        %v1667 = vor.u32 %v1663, %v1666
        %v1668 = vrot.slane %v1667, 4
        %v1670 = vshll.u32 %v1280, 16
        %v1672 = vrot.slane %v1670, 5
        %v1673 = vsel %vm1299, %v1668, %v1672
        %v1674 = vshrl.u32 %v1280, 16
        %v1676 = vrot.slane %v1674, 4
        %v1677 = vor.u32 %v1676, %v1672
        %v1678 = vrot.slane %v1677, 4
        %v1680 = vshll.u32 %v1296, 16
        %v1682 = vrot.slane %v1680, 5
        %v1683 = vsel %vm1299, %v1678, %v1682
        %v1684 = vld [vmem:[#allocation2] sm:$0xe]
        %v1685 = vld [vmem:[#allocation2 + $0xc] sm:$0xe]
        %v1686 = vld [vmem:[#allocation2 + $0x18] sm:$0xe]
        %v1687 = vld [vmem:[#allocation2 + $0x24] sm:$0xe]
        %v1688 = vld [vmem:[#allocation2 + $0x30] sm:$0xe]
        %v1689 = vld [vmem:[#allocation2 + $0x3c] sm:$0xe]
        %v1690 = vld [vmem:[#allocation2 + $0x48] sm:$0xe]
        %v1691 = vld [vmem:[#allocation2 + $0x54] sm:$0xe]
        %v1692 = vld [vmem:[#allocation2 + $0x60] sm:$0xe]
        %v1693 = vld [vmem:[#allocation2 + $0x6c] sm:$0xe]
        %v1694 = vld [vmem:[#allocation2 + $0x78] sm:$0xe]
        %v1695 = vld [vmem:[#allocation2 + $0x84] sm:$0xe]
        %v1696 = vld [vmem:[#allocation2 + $0x90] sm:$0xe]
        %v1697 = vld [vmem:[#allocation2 + $0x9c] sm:$0xe]
        %v1698 = vld [vmem:[#allocation2 + $0xa8] sm:$0xe]
        %v1699 = vld [vmem:[#allocation2 + $0xb4] sm:$0xe]
        %vm1748 = vcmask 1042432
        %vm1749 = vcmask 1046532
        %vm1750 = vmor %vm1748, %vm1749
        %v1751 = vrot.slane %v1684, 5
        %v1752 = vrot.slane %v1751, 4
        %v1753 = vrot.slane %v1250, 5
        %v1754 = vsel %vm1750, %v1752, %v1753
        %v1755 = vrot.slane %v1753, 4
        %v1756 = vrot.slane %v1281, 5
        %v1757 = vsel %vm1750, %v1755, %v1756
        %v1758 = vrot.slane %v1685, 5
        %v1759 = vrot.slane %v1758, 4
        %v1760 = vrot.slane %v1252, 5
        %v1761 = vsel %vm1750, %v1759, %v1760
        %v1762 = vrot.slane %v1760, 4
        %v1763 = vrot.slane %v1282, 5
        %v1764 = vsel %vm1750, %v1762, %v1763
        %v1765 = vrot.slane %v1686, 5
        %v1766 = vrot.slane %v1765, 4
        %v1767 = vrot.slane %v1254, 5
        %v1768 = vsel %vm1750, %v1766, %v1767
        %v1769 = vrot.slane %v1767, 4
        %v1770 = vrot.slane %v1283, 5
        %v1771 = vsel %vm1750, %v1769, %v1770
        %v1772 = vrot.slane %v1687, 5
        %v1773 = vrot.slane %v1772, 4
        %v1774 = vrot.slane %v1256, 5
        %v1775 = vsel %vm1750, %v1773, %v1774
        %v1776 = vrot.slane %v1774, 4
        %v1777 = vrot.slane %v1284, 5
        %v1778 = vsel %vm1750, %v1776, %v1777
        %v1779 = vrot.slane %v1688, 5
        %v1780 = vrot.slane %v1779, 4
        %v1781 = vrot.slane %v1258, 5
        %v1782 = vsel %vm1750, %v1780, %v1781
        %v1783 = vrot.slane %v1781, 4
        %v1784 = vrot.slane %v1285, 5
        %v1785 = vsel %vm1750, %v1783, %v1784
        %v1786 = vrot.slane %v1689, 5
        %v1787 = vrot.slane %v1786, 4
        %v1788 = vrot.slane %v1260, 5
        %v1789 = vsel %vm1750, %v1787, %v1788
        %v1790 = vrot.slane %v1788, 4
        %v1791 = vrot.slane %v1286, 5
        %v1792 = vsel %vm1750, %v1790, %v1791
        %v1793 = vrot.slane %v1690, 5
        %v1794 = vrot.slane %v1793, 4
        %v1795 = vrot.slane %v1262, 5
        %v1796 = vsel %vm1750, %v1794, %v1795
        %v1797 = vrot.slane %v1795, 4
        %v1798 = vrot.slane %v1287, 5
        %v1799 = vsel %vm1750, %v1797, %v1798
        %v1800 = vrot.slane %v1691, 5
        %v1801 = vrot.slane %v1800, 4
        %v1802 = vrot.slane %v1264, 5
        %v1803 = vsel %vm1750, %v1801, %v1802
        %v1804 = vrot.slane %v1802, 4
        %v1805 = vrot.slane %v1288, 5
        %v1806 = vsel %vm1750, %v1804, %v1805
        %v1807 = vrot.slane %v1692, 5
        %v1808 = vrot.slane %v1807, 4
        %v1809 = vrot.slane %v1266, 5
        %v1810 = vsel %vm1750, %v1808, %v1809
        %v1811 = vrot.slane %v1809, 4
        %v1812 = vrot.slane %v1289, 5
        %v1813 = vsel %vm1750, %v1811, %v1812
        %v1814 = vrot.slane %v1693, 5
        %v1815 = vrot.slane %v1814, 4
        %v1816 = vrot.slane %v1268, 5
        %v1817 = vsel %vm1750, %v1815, %v1816
        %v1818 = vrot.slane %v1816, 4
        %v1819 = vrot.slane %v1290, 5
        %v1820 = vsel %vm1750, %v1818, %v1819
        %v1821 = vrot.slane %v1694, 5
        %v1822 = vrot.slane %v1821, 4
        %v1823 = vrot.slane %v1270, 5
        %v1824 = vsel %vm1750, %v1822, %v1823
        %v1825 = vrot.slane %v1823, 4
        %v1826 = vrot.slane %v1291, 5
        %v1827 = vsel %vm1750, %v1825, %v1826
        %v1828 = vrot.slane %v1695, 5
        %v1829 = vrot.slane %v1828, 4
        %v1830 = vrot.slane %v1272, 5
        %v1831 = vsel %vm1750, %v1829, %v1830
        %v1832 = vrot.slane %v1830, 4
        %v1833 = vrot.slane %v1292, 5
        %v1834 = vsel %vm1750, %v1832, %v1833
        %v1835 = vrot.slane %v1696, 5
        %v1836 = vrot.slane %v1835, 4
        %v1837 = vrot.slane %v1274, 5
        %v1838 = vsel %vm1750, %v1836, %v1837
        %v1839 = vrot.slane %v1837, 4
        %v1840 = vrot.slane %v1293, 5
        %v1841 = vsel %vm1750, %v1839, %v1840
        %v1842 = vrot.slane %v1697, 5
        %v1843 = vrot.slane %v1842, 4
        %v1844 = vrot.slane %v1276, 5
        %v1845 = vsel %vm1750, %v1843, %v1844
        %v1846 = vrot.slane %v1844, 4
        %v1847 = vrot.slane %v1294, 5
        %v1848 = vsel %vm1750, %v1846, %v1847
        %v1849 = vrot.slane %v1698, 5
        %v1850 = vrot.slane %v1849, 4
        %v1851 = vrot.slane %v1278, 5
        %v1852 = vsel %vm1750, %v1850, %v1851
        %v1853 = vrot.slane %v1851, 4
        %v1854 = vrot.slane %v1295, 5
        %v1855 = vsel %vm1750, %v1853, %v1854
        %v1856 = vrot.slane %v1699, 5
        %v1857 = vrot.slane %v1856, 4
        %v1858 = vrot.slane %v1280, 5
        %v1859 = vsel %vm1750, %v1857, %v1858
        %v1860 = vrot.slane %v1858, 4
        %v1861 = vrot.slane %v1296, 5
        %v1862 = vsel %vm1750, %v1860, %v1861
        %v1863 = vld [vmem:[%s1131] sm:$0xf]
        %v1864 = vld [vmem:[%s1131 + $0x4] sm:$0xf]
        %v1865 = vld [vmem:[%s1131 + $0xc] sm:$0xf]
        %v1866 = vld [vmem:[%s1131 + $0x10] sm:$0xf]
        %v1867 = vld [vmem:[%s1131 + $0x18] sm:$0xf]
        %v1868 = vld [vmem:[%s1131 + $0x1c] sm:$0xf]
        %v1869 = vld [vmem:[%s1131 + $0x24] sm:$0xf]
        %v1870 = vld [vmem:[%s1131 + $0x28] sm:$0xf]
        %v1871 = vld [vmem:[%s1131 + $0x30] sm:$0xf]
        %v1872 = vld [vmem:[%s1131 + $0x34] sm:$0xf]
        %v1873 = vld [vmem:[%s1131 + $0x3c] sm:$0xf]
        %v1874 = vld [vmem:[%s1131 + $0x40] sm:$0xf]
        %v1875 = vld [vmem:[%s1131 + $0x48] sm:$0xf]
        %v1876 = vld [vmem:[%s1131 + $0x4c] sm:$0xf]
        %v1877 = vld [vmem:[%s1131 + $0x54] sm:$0xf]
        %v1878 = vld [vmem:[%s1131 + $0x58] sm:$0xf]
        %v1879 = vld [vmem:[%s1131 + $0x60] sm:$0xf]
        %v1880 = vld [vmem:[%s1131 + $0x64] sm:$0xf]
        %v1881 = vld [vmem:[%s1131 + $0x6c] sm:$0xf]
        %v1882 = vld [vmem:[%s1131 + $0x70] sm:$0xf]
        %v1883 = vld [vmem:[%s1131 + $0x78] sm:$0xf]
        %v1884 = vld [vmem:[%s1131 + $0x7c] sm:$0xf]
        %v1885 = vld [vmem:[%s1131 + $0x84] sm:$0xf]
        %v1886 = vld [vmem:[%s1131 + $0x88] sm:$0xf]
        %v1887 = vld [vmem:[%s1131 + $0x90] sm:$0xf]
        %v1888 = vld [vmem:[%s1131 + $0x94] sm:$0xf]
        %v1889 = vld [vmem:[%s1131 + $0x9c] sm:$0xf]
        %v1890 = vld [vmem:[%s1131 + $0xa0] sm:$0xf]
        %v1891 = vld [vmem:[%s1131 + $0xa8] sm:$0xf]
        %v1892 = vld [vmem:[%s1131 + $0xac] sm:$0xf]
        %v1893 = vld [vmem:[%s1131 + $0xb4] sm:$0xf]
        %v1894 = vld [vmem:[%s1131 + $0xb8] sm:$0xf]
        %v1895 = vld [vmem:[%s1131 + $0x8] sm:$0x1]
        %v1896 = vld [vmem:[%s1131 + $0x14] sm:$0x1]
        %v1897 = vld [vmem:[%s1131 + $0x20] sm:$0x1]
        %v1898 = vld [vmem:[%s1131 + $0x2c] sm:$0x1]
        %v1899 = vld [vmem:[%s1131 + $0x38] sm:$0x1]
        %v1900 = vld [vmem:[%s1131 + $0x44] sm:$0x1]
        %v1901 = vld [vmem:[%s1131 + $0x50] sm:$0x1]
        %v1902 = vld [vmem:[%s1131 + $0x5c] sm:$0x1]
        %v1903 = vld [vmem:[%s1131 + $0x68] sm:$0x1]
        %v1904 = vld [vmem:[%s1131 + $0x74] sm:$0x1]
        %v1905 = vld [vmem:[%s1131 + $0x80] sm:$0x1]
        %v1906 = vld [vmem:[%s1131 + $0x8c] sm:$0x1]
        %v1907 = vld [vmem:[%s1131 + $0x98] sm:$0x1]
        %v1908 = vld [vmem:[%s1131 + $0xa4] sm:$0x1]
        %v1909 = vld [vmem:[%s1131 + $0xb0] sm:$0x1]
        %v1910 = vld [vmem:[%s1131 + $0xbc] sm:$0x1]
        %v1912 = vshrl.u32 %v1863, 16
        %v1914 = vrot.slane %v1912, 4
        %v1915 = vshll.u32 %v1863, 16
        %v1917 = vrot.slane %v1915, 5
        %v1918 = vor.u32 %v1914, %v1917
        %v1919 = vrot.slane %v1918, 4
        %v1921 = vshll.u32 %v1864, 16
        %v1923 = vrot.slane %v1921, 5
        %v1924 = vsel %vm1299, %v1919, %v1923
        %v1925 = vshrl.u32 %v1864, 16
        %v1927 = vrot.slane %v1925, 4
        %v1928 = vor.u32 %v1927, %v1923
        %v1929 = vrot.slane %v1928, 4
        %v1931 = vshll.u32 %v1895, 16
        %v1933 = vrot.slane %v1931, 5
        %v1934 = vsel %vm1299, %v1929, %v1933
        %v1936 = vshrl.u32 %v1865, 16
        %v1938 = vrot.slane %v1936, 4
        %v1939 = vshll.u32 %v1865, 16
        %v1941 = vrot.slane %v1939, 5
        %v1942 = vor.u32 %v1938, %v1941
        %v1943 = vrot.slane %v1942, 4
        %v1945 = vshll.u32 %v1866, 16
        %v1947 = vrot.slane %v1945, 5
        %v1948 = vsel %vm1299, %v1943, %v1947
        %v1949 = vshrl.u32 %v1866, 16
        %v1951 = vrot.slane %v1949, 4
        %v1952 = vor.u32 %v1951, %v1947
        %v1953 = vrot.slane %v1952, 4
        %v1955 = vshll.u32 %v1896, 16
        %v1957 = vrot.slane %v1955, 5
        %v1958 = vsel %vm1299, %v1953, %v1957
        %v1960 = vshrl.u32 %v1867, 16
        %v1962 = vrot.slane %v1960, 4
        %v1963 = vshll.u32 %v1867, 16
        %v1965 = vrot.slane %v1963, 5
        %v1966 = vor.u32 %v1962, %v1965
        %v1967 = vrot.slane %v1966, 4
        %v1969 = vshll.u32 %v1868, 16
        %v1971 = vrot.slane %v1969, 5
        %v1972 = vsel %vm1299, %v1967, %v1971
        %v1973 = vshrl.u32 %v1868, 16
        %v1975 = vrot.slane %v1973, 4
        %v1976 = vor.u32 %v1975, %v1971
        %v1977 = vrot.slane %v1976, 4
        %v1979 = vshll.u32 %v1897, 16
        %v1981 = vrot.slane %v1979, 5
        %v1982 = vsel %vm1299, %v1977, %v1981
        %v1984 = vshrl.u32 %v1869, 16
        %v1986 = vrot.slane %v1984, 4
        %v1987 = vshll.u32 %v1869, 16
        %v1989 = vrot.slane %v1987, 5
        %v1990 = vor.u32 %v1986, %v1989
        %v1991 = vrot.slane %v1990, 4
        %v1993 = vshll.u32 %v1870, 16
        %v1995 = vrot.slane %v1993, 5
        %v1996 = vsel %vm1299, %v1991, %v1995
        %v1997 = vshrl.u32 %v1870, 16
        %v1999 = vrot.slane %v1997, 4
        %v2000 = vor.u32 %v1999, %v1995
        %v2001 = vrot.slane %v2000, 4
        %v2003 = vshll.u32 %v1898, 16
        %v2005 = vrot.slane %v2003, 5
        %v2006 = vsel %vm1299, %v2001, %v2005
        %v2008 = vshrl.u32 %v1871, 16
        %v2010 = vrot.slane %v2008, 4
        %v2011 = vshll.u32 %v1871, 16
        %v2013 = vrot.slane %v2011, 5
        %v2014 = vor.u32 %v2010, %v2013
        %v2015 = vrot.slane %v2014, 4
        %v2017 = vshll.u32 %v1872, 16
        %v2019 = vrot.slane %v2017, 5
        %v2020 = vsel %vm1299, %v2015, %v2019
        %v2021 = vshrl.u32 %v1872, 16
        %v2023 = vrot.slane %v2021, 4
        %v2024 = vor.u32 %v2023, %v2019
        %v2025 = vrot.slane %v2024, 4
        %v2027 = vshll.u32 %v1899, 16
        %v2029 = vrot.slane %v2027, 5
        %v2030 = vsel %vm1299, %v2025, %v2029
        %v2032 = vshrl.u32 %v1873, 16
        %v2034 = vrot.slane %v2032, 4
        %v2035 = vshll.u32 %v1873, 16
        %v2037 = vrot.slane %v2035, 5
        %v2038 = vor.u32 %v2034, %v2037
        %v2039 = vrot.slane %v2038, 4
        %v2041 = vshll.u32 %v1874, 16
        %v2043 = vrot.slane %v2041, 5
        %v2044 = vsel %vm1299, %v2039, %v2043
        %v2045 = vshrl.u32 %v1874, 16
        %v2047 = vrot.slane %v2045, 4
        %v2048 = vor.u32 %v2047, %v2043
        %v2049 = vrot.slane %v2048, 4
        %v2051 = vshll.u32 %v1900, 16
        %v2053 = vrot.slane %v2051, 5
        %v2054 = vsel %vm1299, %v2049, %v2053
        %v2056 = vshrl.u32 %v1875, 16
        %v2058 = vrot.slane %v2056, 4
        %v2059 = vshll.u32 %v1875, 16
        %v2061 = vrot.slane %v2059, 5
        %v2062 = vor.u32 %v2058, %v2061
        %v2063 = vrot.slane %v2062, 4
        %v2065 = vshll.u32 %v1876, 16
        %v2067 = vrot.slane %v2065, 5
        %v2068 = vsel %vm1299, %v2063, %v2067
        %v2069 = vshrl.u32 %v1876, 16
        %v2071 = vrot.slane %v2069, 4
        %v2072 = vor.u32 %v2071, %v2067
        %v2073 = vrot.slane %v2072, 4
        %v2075 = vshll.u32 %v1901, 16
        %v2077 = vrot.slane %v2075, 5
        %v2078 = vsel %vm1299, %v2073, %v2077
        %v2080 = vshrl.u32 %v1877, 16
        %v2082 = vrot.slane %v2080, 4
        %v2083 = vshll.u32 %v1877, 16
        %v2085 = vrot.slane %v2083, 5
        %v2086 = vor.u32 %v2082, %v2085
        %v2087 = vrot.slane %v2086, 4
        %v2089 = vshll.u32 %v1878, 16
        %v2091 = vrot.slane %v2089, 5
        %v2092 = vsel %vm1299, %v2087, %v2091
        %v2093 = vshrl.u32 %v1878, 16
        %v2095 = vrot.slane %v2093, 4
        %v2096 = vor.u32 %v2095, %v2091
        %v2097 = vrot.slane %v2096, 4
        %v2099 = vshll.u32 %v1902, 16
        %v2101 = vrot.slane %v2099, 5
        %v2102 = vsel %vm1299, %v2097, %v2101
        %v2104 = vshrl.u32 %v1879, 16
        %v2106 = vrot.slane %v2104, 4
        %v2107 = vshll.u32 %v1879, 16
        %v2109 = vrot.slane %v2107, 5
        %v2110 = vor.u32 %v2106, %v2109
        %v2111 = vrot.slane %v2110, 4
        %v2113 = vshll.u32 %v1880, 16
        %v2115 = vrot.slane %v2113, 5
        %v2116 = vsel %vm1299, %v2111, %v2115
        %v2117 = vshrl.u32 %v1880, 16
        %v2119 = vrot.slane %v2117, 4
        %v2120 = vor.u32 %v2119, %v2115
        %v2121 = vrot.slane %v2120, 4
        %v2123 = vshll.u32 %v1903, 16
        %v2125 = vrot.slane %v2123, 5
        %v2126 = vsel %vm1299, %v2121, %v2125
        %v2128 = vshrl.u32 %v1881, 16
        %v2130 = vrot.slane %v2128, 4
        %v2131 = vshll.u32 %v1881, 16
        %v2133 = vrot.slane %v2131, 5
        %v2134 = vor.u32 %v2130, %v2133
        %v2135 = vrot.slane %v2134, 4
        %v2137 = vshll.u32 %v1882, 16
        %v2139 = vrot.slane %v2137, 5
        %v2140 = vsel %vm1299, %v2135, %v2139
        %v2141 = vshrl.u32 %v1882, 16
        %v2143 = vrot.slane %v2141, 4
        %v2144 = vor.u32 %v2143, %v2139
        %v2145 = vrot.slane %v2144, 4
        %v2147 = vshll.u32 %v1904, 16
        %v2149 = vrot.slane %v2147, 5
        %v2150 = vsel %vm1299, %v2145, %v2149
        %v2152 = vshrl.u32 %v1883, 16
        %v2154 = vrot.slane %v2152, 4
        %v2155 = vshll.u32 %v1883, 16
        %v2157 = vrot.slane %v2155, 5
        %v2158 = vor.u32 %v2154, %v2157
        %v2159 = vrot.slane %v2158, 4
        %v2161 = vshll.u32 %v1884, 16
        %v2163 = vrot.slane %v2161, 5
        %v2164 = vsel %vm1299, %v2159, %v2163
        %v2165 = vshrl.u32 %v1884, 16
        %v2167 = vrot.slane %v2165, 4
        %v2168 = vor.u32 %v2167, %v2163
        %v2169 = vrot.slane %v2168, 4
        %v2171 = vshll.u32 %v1905, 16
        %v2173 = vrot.slane %v2171, 5
        %v2174 = vsel %vm1299, %v2169, %v2173
        %v2176 = vshrl.u32 %v1885, 16
        %v2178 = vrot.slane %v2176, 4
        %v2179 = vshll.u32 %v1885, 16
        %v2181 = vrot.slane %v2179, 5
        %v2182 = vor.u32 %v2178, %v2181
        %v2183 = vrot.slane %v2182, 4
        %v2185 = vshll.u32 %v1886, 16
        %v2187 = vrot.slane %v2185, 5
        %v2188 = vsel %vm1299, %v2183, %v2187
        %v2189 = vshrl.u32 %v1886, 16
        %v2191 = vrot.slane %v2189, 4
        %v2192 = vor.u32 %v2191, %v2187
        %v2193 = vrot.slane %v2192, 4
        %v2195 = vshll.u32 %v1906, 16
        %v2197 = vrot.slane %v2195, 5
        %v2198 = vsel %vm1299, %v2193, %v2197
        %v2200 = vshrl.u32 %v1887, 16
        %v2202 = vrot.slane %v2200, 4
        %v2203 = vshll.u32 %v1887, 16
        %v2205 = vrot.slane %v2203, 5
        %v2206 = vor.u32 %v2202, %v2205
        %v2207 = vrot.slane %v2206, 4
        %v2209 = vshll.u32 %v1888, 16
        %v2211 = vrot.slane %v2209, 5
        %v2212 = vsel %vm1299, %v2207, %v2211
        %v2213 = vshrl.u32 %v1888, 16
        %v2215 = vrot.slane %v2213, 4
        %v2216 = vor.u32 %v2215, %v2211
        %v2217 = vrot.slane %v2216, 4
        %v2219 = vshll.u32 %v1907, 16
        %v2221 = vrot.slane %v2219, 5
        %v2222 = vsel %vm1299, %v2217, %v2221
        %v2224 = vshrl.u32 %v1889, 16
        %v2226 = vrot.slane %v2224, 4
        %v2227 = vshll.u32 %v1889, 16
        %v2229 = vrot.slane %v2227, 5
        %v2230 = vor.u32 %v2226, %v2229
        %v2231 = vrot.slane %v2230, 4
        %v2233 = vshll.u32 %v1890, 16
        %v2235 = vrot.slane %v2233, 5
        %v2236 = vsel %vm1299, %v2231, %v2235
        %v2237 = vshrl.u32 %v1890, 16
        %v2239 = vrot.slane %v2237, 4
        %v2240 = vor.u32 %v2239, %v2235
        %v2241 = vrot.slane %v2240, 4
        %v2243 = vshll.u32 %v1908, 16
        %v2245 = vrot.slane %v2243, 5
        %v2246 = vsel %vm1299, %v2241, %v2245
        %v2248 = vshrl.u32 %v1891, 16
        %v2250 = vrot.slane %v2248, 4
        %v2251 = vshll.u32 %v1891, 16
        %v2253 = vrot.slane %v2251, 5
        %v2254 = vor.u32 %v2250, %v2253
        %v2255 = vrot.slane %v2254, 4
        %v2257 = vshll.u32 %v1892, 16
        %v2259 = vrot.slane %v2257, 5
        %v2260 = vsel %vm1299, %v2255, %v2259
        %v2261 = vshrl.u32 %v1892, 16
        %v2263 = vrot.slane %v2261, 4
        %v2264 = vor.u32 %v2263, %v2259
        %v2265 = vrot.slane %v2264, 4
        %v2267 = vshll.u32 %v1909, 16
        %v2269 = vrot.slane %v2267, 5
        %v2270 = vsel %vm1299, %v2265, %v2269
        %v2272 = vshrl.u32 %v1893, 16
        %v2274 = vrot.slane %v2272, 4
        %v2275 = vshll.u32 %v1893, 16
        %v2277 = vrot.slane %v2275, 5
        %v2278 = vor.u32 %v2274, %v2277
        %v2279 = vrot.slane %v2278, 4
        %v2281 = vshll.u32 %v1894, 16
        %v2283 = vrot.slane %v2281, 5
        %v2284 = vsel %vm1299, %v2279, %v2283
        %v2285 = vshrl.u32 %v1894, 16
        %v2287 = vrot.slane %v2285, 4
        %v2288 = vor.u32 %v2287, %v2283
        %v2289 = vrot.slane %v2288, 4
        %v2291 = vshll.u32 %v1910, 16
        %v2293 = vrot.slane %v2291, 5
        %v2294 = vsel %vm1299, %v2289, %v2293
        %v2295 = vld [vmem:[%s1131] sm:$0xe]
        %v2296 = vld [vmem:[%s1131 + $0xc] sm:$0xe]
        %v2297 = vld [vmem:[%s1131 + $0x18] sm:$0xe]
        %v2298 = vld [vmem:[%s1131 + $0x24] sm:$0xe]
        %v2299 = vld [vmem:[%s1131 + $0x30] sm:$0xe]
        %v2300 = vld [vmem:[%s1131 + $0x3c] sm:$0xe]
        %v2301 = vld [vmem:[%s1131 + $0x48] sm:$0xe]
        %v2302 = vld [vmem:[%s1131 + $0x54] sm:$0xe]
        %v2303 = vld [vmem:[%s1131 + $0x60] sm:$0xe]
        %v2304 = vld [vmem:[%s1131 + $0x6c] sm:$0xe]
        %v2305 = vld [vmem:[%s1131 + $0x78] sm:$0xe]
        %v2306 = vld [vmem:[%s1131 + $0x84] sm:$0xe]
        %v2307 = vld [vmem:[%s1131 + $0x90] sm:$0xe]
        %v2308 = vld [vmem:[%s1131 + $0x9c] sm:$0xe]
        %v2309 = vld [vmem:[%s1131 + $0xa8] sm:$0xe]
        %v2310 = vld [vmem:[%s1131 + $0xb4] sm:$0xe]
        %v2359 = vrot.slane %v2295, 5
        %v2360 = vrot.slane %v2359, 4
        %v2361 = vrot.slane %v1864, 5
        %v2362 = vsel %vm1750, %v2360, %v2361
        %v2363 = vrot.slane %v2361, 4
        %v2364 = vrot.slane %v1895, 5
        %v2365 = vsel %vm1750, %v2363, %v2364
        %v2366 = vrot.slane %v2296, 5
        %v2367 = vrot.slane %v2366, 4
        %v2368 = vrot.slane %v1866, 5
        %v2369 = vsel %vm1750, %v2367, %v2368
        %v2370 = vrot.slane %v2368, 4
        %v2371 = vrot.slane %v1896, 5
        %v2372 = vsel %vm1750, %v2370, %v2371
        %v2373 = vrot.slane %v2297, 5
        %v2374 = vrot.slane %v2373, 4
        %v2375 = vrot.slane %v1868, 5
        %v2376 = vsel %vm1750, %v2374, %v2375
        %v2377 = vrot.slane %v2375, 4
        %v2378 = vrot.slane %v1897, 5
        %v2379 = vsel %vm1750, %v2377, %v2378
        %v2380 = vrot.slane %v2298, 5
        %v2381 = vrot.slane %v2380, 4
        %v2382 = vrot.slane %v1870, 5
        %v2383 = vsel %vm1750, %v2381, %v2382
        %v2384 = vrot.slane %v2382, 4
        %v2385 = vrot.slane %v1898, 5
        %v2386 = vsel %vm1750, %v2384, %v2385
        %v2387 = vrot.slane %v2299, 5
        %v2388 = vrot.slane %v2387, 4
        %v2389 = vrot.slane %v1872, 5
        %v2390 = vsel %vm1750, %v2388, %v2389
        %v2391 = vrot.slane %v2389, 4
        %v2392 = vrot.slane %v1899, 5
        %v2393 = vsel %vm1750, %v2391, %v2392
        %v2394 = vrot.slane %v2300, 5
        %v2395 = vrot.slane %v2394, 4
        %v2396 = vrot.slane %v1874, 5
        %v2397 = vsel %vm1750, %v2395, %v2396
        %v2398 = vrot.slane %v2396, 4
        %v2399 = vrot.slane %v1900, 5
        %v2400 = vsel %vm1750, %v2398, %v2399
        %v2401 = vrot.slane %v2301, 5
        %v2402 = vrot.slane %v2401, 4
        %v2403 = vrot.slane %v1876, 5
        %v2404 = vsel %vm1750, %v2402, %v2403
        %v2405 = vrot.slane %v2403, 4
        %v2406 = vrot.slane %v1901, 5
        %v2407 = vsel %vm1750, %v2405, %v2406
        %v2408 = vrot.slane %v2302, 5
        %v2409 = vrot.slane %v2408, 4
        %v2410 = vrot.slane %v1878, 5
        %v2411 = vsel %vm1750, %v2409, %v2410
        %v2412 = vrot.slane %v2410, 4
        %v2413 = vrot.slane %v1902, 5
        %v2414 = vsel %vm1750, %v2412, %v2413
        %v2415 = vrot.slane %v2303, 5
        %v2416 = vrot.slane %v2415, 4
        %v2417 = vrot.slane %v1880, 5
        %v2418 = vsel %vm1750, %v2416, %v2417
        %v2419 = vrot.slane %v2417, 4
        %v2420 = vrot.slane %v1903, 5
        %v2421 = vsel %vm1750, %v2419, %v2420
        %v2422 = vrot.slane %v2304, 5
        %v2423 = vrot.slane %v2422, 4
        %v2424 = vrot.slane %v1882, 5
        %v2425 = vsel %vm1750, %v2423, %v2424
        %v2426 = vrot.slane %v2424, 4
        %v2427 = vrot.slane %v1904, 5
        %v2428 = vsel %vm1750, %v2426, %v2427
        %v2429 = vrot.slane %v2305, 5
        %v2430 = vrot.slane %v2429, 4
        %v2431 = vrot.slane %v1884, 5
        %v2432 = vsel %vm1750, %v2430, %v2431
        %v2433 = vrot.slane %v2431, 4
        %v2434 = vrot.slane %v1905, 5
        %v2435 = vsel %vm1750, %v2433, %v2434
        %v2436 = vrot.slane %v2306, 5
        %v2437 = vrot.slane %v2436, 4
        %v2438 = vrot.slane %v1886, 5
        %v2439 = vsel %vm1750, %v2437, %v2438
        %v2440 = vrot.slane %v2438, 4
        %v2441 = vrot.slane %v1906, 5
        %v2442 = vsel %vm1750, %v2440, %v2441
        %v2443 = vrot.slane %v2307, 5
        %v2444 = vrot.slane %v2443, 4
        %v2445 = vrot.slane %v1888, 5
        %v2446 = vsel %vm1750, %v2444, %v2445
        %v2447 = vrot.slane %v2445, 4
        %v2448 = vrot.slane %v1907, 5
        %v2449 = vsel %vm1750, %v2447, %v2448
        %v2450 = vrot.slane %v2308, 5
        %v2451 = vrot.slane %v2450, 4
        %v2452 = vrot.slane %v1890, 5
        %v2453 = vsel %vm1750, %v2451, %v2452
        %v2454 = vrot.slane %v2452, 4
        %v2455 = vrot.slane %v1908, 5
        %v2456 = vsel %vm1750, %v2454, %v2455
        %v2457 = vrot.slane %v2309, 5
        %v2458 = vrot.slane %v2457, 4
        %v2459 = vrot.slane %v1892, 5
        %v2460 = vsel %vm1750, %v2458, %v2459
        %v2461 = vrot.slane %v2459, 4
        %v2462 = vrot.slane %v1909, 5
        %v2463 = vsel %vm1750, %v2461, %v2462
        %v2464 = vrot.slane %v2310, 5
        %v2465 = vrot.slane %v2464, 4
        %v2466 = vrot.slane %v1894, 5
        %v2467 = vsel %vm1750, %v2465, %v2466
        %v2468 = vrot.slane %v2466, 4
        %v2469 = vrot.slane %v1910, 5
        %v2470 = vsel %vm1750, %v2468, %v2469
        %s2471 = scalar_lea.vmem [#allocation2], 24
        %v2472 = vld [vmem:[%s2471] sm:$0xf]
        %v2473 = vld [vmem:[%s2471 + $0x4] sm:$0xf]
        %v2474 = vld [vmem:[%s2471 + $0xc] sm:$0xf]
        %v2475 = vld [vmem:[%s2471 + $0x10] sm:$0xf]
        %v2476 = vld [vmem:[%s2471 + $0x18] sm:$0xf]
        %v2477 = vld [vmem:[%s2471 + $0x1c] sm:$0xf]
        %v2478 = vld [vmem:[%s2471 + $0x24] sm:$0xf]
        %v2479 = vld [vmem:[%s2471 + $0x28] sm:$0xf]
        %v2480 = vld [vmem:[%s2471 + $0x30] sm:$0xf]
        %v2481 = vld [vmem:[%s2471 + $0x34] sm:$0xf]
        %v2482 = vld [vmem:[%s2471 + $0x3c] sm:$0xf]
        %v2483 = vld [vmem:[%s2471 + $0x40] sm:$0xf]
        %v2484 = vld [vmem:[%s2471 + $0x48] sm:$0xf]
        %v2485 = vld [vmem:[%s2471 + $0x4c] sm:$0xf]
        %v2486 = vld [vmem:[%s2471 + $0x54] sm:$0xf]
        %v2487 = vld [vmem:[%s2471 + $0x58] sm:$0xf]
        %v2488 = vld [vmem:[%s2471 + $0x60] sm:$0xf]
        %v2489 = vld [vmem:[%s2471 + $0x64] sm:$0xf]
        %v2490 = vld [vmem:[%s2471 + $0x6c] sm:$0xf]
        %v2491 = vld [vmem:[%s2471 + $0x70] sm:$0xf]
        %v2492 = vld [vmem:[%s2471 + $0x78] sm:$0xf]
        %v2493 = vld [vmem:[%s2471 + $0x7c] sm:$0xf]
        %v2494 = vld [vmem:[%s2471 + $0x84] sm:$0xf]
        %v2495 = vld [vmem:[%s2471 + $0x88] sm:$0xf]
        %v2496 = vld [vmem:[%s2471 + $0x90] sm:$0xf]
        %v2497 = vld [vmem:[%s2471 + $0x94] sm:$0xf]
        %v2498 = vld [vmem:[%s2471 + $0x9c] sm:$0xf]
        %v2499 = vld [vmem:[%s2471 + $0xa0] sm:$0xf]
        %v2500 = vld [vmem:[%s2471 + $0xa8] sm:$0xf]
        %v2501 = vld [vmem:[%s2471 + $0xac] sm:$0xf]
        %v2502 = vld [vmem:[%s2471 + $0xb4] sm:$0xf]
        %v2503 = vld [vmem:[%s2471 + $0xb8] sm:$0xf]
        %v2504 = vld [vmem:[%s2471 + $0x8] sm:$0x1]
        %v2505 = vld [vmem:[%s2471 + $0x14] sm:$0x1]
        %v2506 = vld [vmem:[%s2471 + $0x20] sm:$0x1]
        %v2507 = vld [vmem:[%s2471 + $0x2c] sm:$0x1]
        %v2508 = vld [vmem:[%s2471 + $0x38] sm:$0x1]
        %v2509 = vld [vmem:[%s2471 + $0x44] sm:$0x1]
        %v2510 = vld [vmem:[%s2471 + $0x50] sm:$0x1]
        %v2511 = vld [vmem:[%s2471 + $0x5c] sm:$0x1]
        %v2512 = vld [vmem:[%s2471 + $0x68] sm:$0x1]
        %v2513 = vld [vmem:[%s2471 + $0x74] sm:$0x1]
        %v2514 = vld [vmem:[%s2471 + $0x80] sm:$0x1]
        %v2515 = vld [vmem:[%s2471 + $0x8c] sm:$0x1]
        %v2516 = vld [vmem:[%s2471 + $0x98] sm:$0x1]
        %v2517 = vld [vmem:[%s2471 + $0xa4] sm:$0x1]
        %v2518 = vld [vmem:[%s2471 + $0xb0] sm:$0x1]
        %v2519 = vld [vmem:[%s2471 + $0xbc] sm:$0x1]
        %v2521 = vshrl.u32 %v2472, 16
        %v2523 = vrot.slane %v2521, 4
        %v2524 = vshll.u32 %v2472, 16
        %v2526 = vrot.slane %v2524, 5
        %v2527 = vor.u32 %v2523, %v2526
        %v2528 = vrot.slane %v2527, 4
        %v2530 = vshll.u32 %v2473, 16
        %v2532 = vrot.slane %v2530, 5
        %v2533 = vsel %vm1299, %v2528, %v2532
        %v2534 = vshrl.u32 %v2473, 16
        %v2536 = vrot.slane %v2534, 4
        %v2537 = vor.u32 %v2536, %v2532
        %v2538 = vrot.slane %v2537, 4
        %v2540 = vshll.u32 %v2504, 16
        %v2542 = vrot.slane %v2540, 5
        %v2543 = vsel %vm1299, %v2538, %v2542
        %v2545 = vshrl.u32 %v2474, 16
        %v2547 = vrot.slane %v2545, 4
        %v2548 = vshll.u32 %v2474, 16
        %v2550 = vrot.slane %v2548, 5
        %v2551 = vor.u32 %v2547, %v2550
        %v2552 = vrot.slane %v2551, 4
        %v2554 = vshll.u32 %v2475, 16
        %v2556 = vrot.slane %v2554, 5
        %v2557 = vsel %vm1299, %v2552, %v2556
        %v2558 = vshrl.u32 %v2475, 16
        %v2560 = vrot.slane %v2558, 4
        %v2561 = vor.u32 %v2560, %v2556
        %v2562 = vrot.slane %v2561, 4
        %v2564 = vshll.u32 %v2505, 16
        %v2566 = vrot.slane %v2564, 5
        %v2567 = vsel %vm1299, %v2562, %v2566
        %v2569 = vshrl.u32 %v2476, 16
        %v2571 = vrot.slane %v2569, 4
        %v2572 = vshll.u32 %v2476, 16
        %v2574 = vrot.slane %v2572, 5
        %v2575 = vor.u32 %v2571, %v2574
        %v2576 = vrot.slane %v2575, 4
        %v2578 = vshll.u32 %v2477, 16
        %v2580 = vrot.slane %v2578, 5
        %v2581 = vsel %vm1299, %v2576, %v2580
        %v2582 = vshrl.u32 %v2477, 16
        %v2584 = vrot.slane %v2582, 4
        %v2585 = vor.u32 %v2584, %v2580
        %v2586 = vrot.slane %v2585, 4
        %v2588 = vshll.u32 %v2506, 16
        %v2590 = vrot.slane %v2588, 5
        %v2591 = vsel %vm1299, %v2586, %v2590
        %v2593 = vshrl.u32 %v2478, 16
        %v2595 = vrot.slane %v2593, 4
        %v2596 = vshll.u32 %v2478, 16
        %v2598 = vrot.slane %v2596, 5
        %v2599 = vor.u32 %v2595, %v2598
        %v2600 = vrot.slane %v2599, 4
        %v2602 = vshll.u32 %v2479, 16
        %v2604 = vrot.slane %v2602, 5
        %v2605 = vsel %vm1299, %v2600, %v2604
        %v2606 = vshrl.u32 %v2479, 16
        %v2608 = vrot.slane %v2606, 4
        %v2609 = vor.u32 %v2608, %v2604
        %v2610 = vrot.slane %v2609, 4
        %v2612 = vshll.u32 %v2507, 16
        %v2614 = vrot.slane %v2612, 5
        %v2615 = vsel %vm1299, %v2610, %v2614
        %v2617 = vshrl.u32 %v2480, 16
        %v2619 = vrot.slane %v2617, 4
        %v2620 = vshll.u32 %v2480, 16
        %v2622 = vrot.slane %v2620, 5
        %v2623 = vor.u32 %v2619, %v2622
        %v2624 = vrot.slane %v2623, 4
        %v2626 = vshll.u32 %v2481, 16
        %v2628 = vrot.slane %v2626, 5
        %v2629 = vsel %vm1299, %v2624, %v2628
        %v2630 = vshrl.u32 %v2481, 16
        %v2632 = vrot.slane %v2630, 4
        %v2633 = vor.u32 %v2632, %v2628
        %v2634 = vrot.slane %v2633, 4
        %v2636 = vshll.u32 %v2508, 16
        %v2638 = vrot.slane %v2636, 5
        %v2639 = vsel %vm1299, %v2634, %v2638
        %v2641 = vshrl.u32 %v2482, 16
        %v2643 = vrot.slane %v2641, 4
        %v2644 = vshll.u32 %v2482, 16
        %v2646 = vrot.slane %v2644, 5
        %v2647 = vor.u32 %v2643, %v2646
        %v2648 = vrot.slane %v2647, 4
        %v2650 = vshll.u32 %v2483, 16
        %v2652 = vrot.slane %v2650, 5
        %v2653 = vsel %vm1299, %v2648, %v2652
        %v2654 = vshrl.u32 %v2483, 16
        %v2656 = vrot.slane %v2654, 4
        %v2657 = vor.u32 %v2656, %v2652
        %v2658 = vrot.slane %v2657, 4
        %v2660 = vshll.u32 %v2509, 16
        %v2662 = vrot.slane %v2660, 5
        %v2663 = vsel %vm1299, %v2658, %v2662
        %v2665 = vshrl.u32 %v2484, 16
        %v2667 = vrot.slane %v2665, 4
        %v2668 = vshll.u32 %v2484, 16
        %v2670 = vrot.slane %v2668, 5
        %v2671 = vor.u32 %v2667, %v2670
        %v2672 = vrot.slane %v2671, 4
        %v2674 = vshll.u32 %v2485, 16
        %v2676 = vrot.slane %v2674, 5
        %v2677 = vsel %vm1299, %v2672, %v2676
        %v2678 = vshrl.u32 %v2485, 16
        %v2680 = vrot.slane %v2678, 4
        %v2681 = vor.u32 %v2680, %v2676
        %v2682 = vrot.slane %v2681, 4
        %v2684 = vshll.u32 %v2510, 16
        %v2686 = vrot.slane %v2684, 5
        %v2687 = vsel %vm1299, %v2682, %v2686
        %v2689 = vshrl.u32 %v2486, 16
        %v2691 = vrot.slane %v2689, 4
        %v2692 = vshll.u32 %v2486, 16
        %v2694 = vrot.slane %v2692, 5
        %v2695 = vor.u32 %v2691, %v2694
        %v2696 = vrot.slane %v2695, 4
        %v2698 = vshll.u32 %v2487, 16
        %v2700 = vrot.slane %v2698, 5
        %v2701 = vsel %vm1299, %v2696, %v2700
        %v2702 = vshrl.u32 %v2487, 16
        %v2704 = vrot.slane %v2702, 4
        %v2705 = vor.u32 %v2704, %v2700
        %v2706 = vrot.slane %v2705, 4
        %v2708 = vshll.u32 %v2511, 16
        %v2710 = vrot.slane %v2708, 5
        %v2711 = vsel %vm1299, %v2706, %v2710
        %v2713 = vshrl.u32 %v2488, 16
        %v2715 = vrot.slane %v2713, 4
        %v2716 = vshll.u32 %v2488, 16
        %v2718 = vrot.slane %v2716, 5
        %v2719 = vor.u32 %v2715, %v2718
        %v2720 = vrot.slane %v2719, 4
        %v2722 = vshll.u32 %v2489, 16
        %v2724 = vrot.slane %v2722, 5
        %v2725 = vsel %vm1299, %v2720, %v2724
        %v2726 = vshrl.u32 %v2489, 16
        %v2728 = vrot.slane %v2726, 4
        %v2729 = vor.u32 %v2728, %v2724
        %v2730 = vrot.slane %v2729, 4
        %v2732 = vshll.u32 %v2512, 16
        %v2734 = vrot.slane %v2732, 5
        %v2735 = vsel %vm1299, %v2730, %v2734
        %v2737 = vshrl.u32 %v2490, 16
        %v2739 = vrot.slane %v2737, 4
        %v2740 = vshll.u32 %v2490, 16
        %v2742 = vrot.slane %v2740, 5
        %v2743 = vor.u32 %v2739, %v2742
        %v2744 = vrot.slane %v2743, 4
        %v2746 = vshll.u32 %v2491, 16
        %v2748 = vrot.slane %v2746, 5
        %v2749 = vsel %vm1299, %v2744, %v2748
        %v2750 = vshrl.u32 %v2491, 16
        %v2752 = vrot.slane %v2750, 4
        %v2753 = vor.u32 %v2752, %v2748
        %v2754 = vrot.slane %v2753, 4
        %v2756 = vshll.u32 %v2513, 16
        %v2758 = vrot.slane %v2756, 5
        %v2759 = vsel %vm1299, %v2754, %v2758
        %v2761 = vshrl.u32 %v2492, 16
        %v2763 = vrot.slane %v2761, 4
        %v2764 = vshll.u32 %v2492, 16
        %v2766 = vrot.slane %v2764, 5
        %v2767 = vor.u32 %v2763, %v2766
        %v2768 = vrot.slane %v2767, 4
        %v2770 = vshll.u32 %v2493, 16
        %v2772 = vrot.slane %v2770, 5
        %v2773 = vsel %vm1299, %v2768, %v2772
        %v2774 = vshrl.u32 %v2493, 16
        %v2776 = vrot.slane %v2774, 4
        %v2777 = vor.u32 %v2776, %v2772
        %v2778 = vrot.slane %v2777, 4
        %v2780 = vshll.u32 %v2514, 16
        %v2782 = vrot.slane %v2780, 5
        %v2783 = vsel %vm1299, %v2778, %v2782
        %v2785 = vshrl.u32 %v2494, 16
        %v2787 = vrot.slane %v2785, 4
        %v2788 = vshll.u32 %v2494, 16
        %v2790 = vrot.slane %v2788, 5
        %v2791 = vor.u32 %v2787, %v2790
        %v2792 = vrot.slane %v2791, 4
        %v2794 = vshll.u32 %v2495, 16
        %v2796 = vrot.slane %v2794, 5
        %v2797 = vsel %vm1299, %v2792, %v2796
        %v2798 = vshrl.u32 %v2495, 16
        %v2800 = vrot.slane %v2798, 4
        %v2801 = vor.u32 %v2800, %v2796
        %v2802 = vrot.slane %v2801, 4
        %v2804 = vshll.u32 %v2515, 16
        %v2806 = vrot.slane %v2804, 5
        %v2807 = vsel %vm1299, %v2802, %v2806
        %v2809 = vshrl.u32 %v2496, 16
        %v2811 = vrot.slane %v2809, 4
        %v2812 = vshll.u32 %v2496, 16
        %v2814 = vrot.slane %v2812, 5
        %v2815 = vor.u32 %v2811, %v2814
        %v2816 = vrot.slane %v2815, 4
        %v2818 = vshll.u32 %v2497, 16
        %v2820 = vrot.slane %v2818, 5
        %v2821 = vsel %vm1299, %v2816, %v2820
        %v2822 = vshrl.u32 %v2497, 16
        %v2824 = vrot.slane %v2822, 4
        %v2825 = vor.u32 %v2824, %v2820
        %v2826 = vrot.slane %v2825, 4
        %v2828 = vshll.u32 %v2516, 16
        %v2830 = vrot.slane %v2828, 5
        %v2831 = vsel %vm1299, %v2826, %v2830
        %v2833 = vshrl.u32 %v2498, 16
        %v2835 = vrot.slane %v2833, 4
        %v2836 = vshll.u32 %v2498, 16
        %v2838 = vrot.slane %v2836, 5
        %v2839 = vor.u32 %v2835, %v2838
        %v2840 = vrot.slane %v2839, 4
        %v2842 = vshll.u32 %v2499, 16
        %v2844 = vrot.slane %v2842, 5
        %v2845 = vsel %vm1299, %v2840, %v2844
        %v2846 = vshrl.u32 %v2499, 16
        %v2848 = vrot.slane %v2846, 4
        %v2849 = vor.u32 %v2848, %v2844
        %v2850 = vrot.slane %v2849, 4
        %v2852 = vshll.u32 %v2517, 16
        %v2854 = vrot.slane %v2852, 5
        %v2855 = vsel %vm1299, %v2850, %v2854
        %v2857 = vshrl.u32 %v2500, 16
        %v2859 = vrot.slane %v2857, 4
        %v2860 = vshll.u32 %v2500, 16
        %v2862 = vrot.slane %v2860, 5
        %v2863 = vor.u32 %v2859, %v2862
        %v2864 = vrot.slane %v2863, 4
        %v2866 = vshll.u32 %v2501, 16
        %v2868 = vrot.slane %v2866, 5
        %v2869 = vsel %vm1299, %v2864, %v2868
        %v2870 = vshrl.u32 %v2501, 16
        %v2872 = vrot.slane %v2870, 4
        %v2873 = vor.u32 %v2872, %v2868
        %v2874 = vrot.slane %v2873, 4
        %v2876 = vshll.u32 %v2518, 16
        %v2878 = vrot.slane %v2876, 5
        %v2879 = vsel %vm1299, %v2874, %v2878
        %v2881 = vshrl.u32 %v2502, 16
        %v2883 = vrot.slane %v2881, 4
        %v2884 = vshll.u32 %v2502, 16
        %v2886 = vrot.slane %v2884, 5
        %v2887 = vor.u32 %v2883, %v2886
        %v2888 = vrot.slane %v2887, 4
        %v2890 = vshll.u32 %v2503, 16
        %v2892 = vrot.slane %v2890, 5
        %v2893 = vsel %vm1299, %v2888, %v2892
        %v2894 = vshrl.u32 %v2503, 16
        %v2896 = vrot.slane %v2894, 4
        %v2897 = vor.u32 %v2896, %v2892
        %v2898 = vrot.slane %v2897, 4
        %v2900 = vshll.u32 %v2519, 16
        %v2902 = vrot.slane %v2900, 5
        %v2903 = vsel %vm1299, %v2898, %v2902
        %v2904 = vld [vmem:[%s2471] sm:$0xe]
        %v2905 = vld [vmem:[%s2471 + $0xc] sm:$0xe]
        %v2906 = vld [vmem:[%s2471 + $0x18] sm:$0xe]
        %v2907 = vld [vmem:[%s2471 + $0x24] sm:$0xe]
        %v2908 = vld [vmem:[%s2471 + $0x30] sm:$0xe]
        %v2909 = vld [vmem:[%s2471 + $0x3c] sm:$0xe]
        %v2910 = vld [vmem:[%s2471 + $0x48] sm:$0xe]
        %v2911 = vld [vmem:[%s2471 + $0x54] sm:$0xe]
        %v2912 = vld [vmem:[%s2471 + $0x60] sm:$0xe]
        %v2913 = vld [vmem:[%s2471 + $0x6c] sm:$0xe]
        %v2914 = vld [vmem:[%s2471 + $0x78] sm:$0xe]
        %v2915 = vld [vmem:[%s2471 + $0x84] sm:$0xe]
        %v2916 = vld [vmem:[%s2471 + $0x90] sm:$0xe]
        %v2917 = vld [vmem:[%s2471 + $0x9c] sm:$0xe]
        %v2918 = vld [vmem:[%s2471 + $0xa8] sm:$0xe]
        %v2919 = vld [vmem:[%s2471 + $0xb4] sm:$0xe]
        %v2968 = vrot.slane %v2904, 5
        %v2969 = vrot.slane %v2968, 4
        %v2970 = vrot.slane %v2473, 5
        %v2971 = vsel %vm1750, %v2969, %v2970
        %v2972 = vrot.slane %v2970, 4
        %v2973 = vrot.slane %v2504, 5
        %v2974 = vsel %vm1750, %v2972, %v2973
        %v2975 = vrot.slane %v2905, 5
        %v2976 = vrot.slane %v2975, 4
        %v2977 = vrot.slane %v2475, 5
        %v2978 = vsel %vm1750, %v2976, %v2977
        %v2979 = vrot.slane %v2977, 4
        %v2980 = vrot.slane %v2505, 5
        %v2981 = vsel %vm1750, %v2979, %v2980
        %v2982 = vrot.slane %v2906, 5
        %v2983 = vrot.slane %v2982, 4
        %v2984 = vrot.slane %v2477, 5
        %v2985 = vsel %vm1750, %v2983, %v2984
        %v2986 = vrot.slane %v2984, 4
        %v2987 = vrot.slane %v2506, 5
        %v2988 = vsel %vm1750, %v2986, %v2987
        %v2989 = vrot.slane %v2907, 5
        %v2990 = vrot.slane %v2989, 4
        %v2991 = vrot.slane %v2479, 5
        %v2992 = vsel %vm1750, %v2990, %v2991
        %v2993 = vrot.slane %v2991, 4
        %v2994 = vrot.slane %v2507, 5
        %v2995 = vsel %vm1750, %v2993, %v2994
        %v2996 = vrot.slane %v2908, 5
        %v2997 = vrot.slane %v2996, 4
        %v2998 = vrot.slane %v2481, 5
        %v2999 = vsel %vm1750, %v2997, %v2998
        %v3000 = vrot.slane %v2998, 4
        %v3001 = vrot.slane %v2508, 5
        %v3002 = vsel %vm1750, %v3000, %v3001
        %v3003 = vrot.slane %v2909, 5
        %v3004 = vrot.slane %v3003, 4
        %v3005 = vrot.slane %v2483, 5
        %v3006 = vsel %vm1750, %v3004, %v3005
        %v3007 = vrot.slane %v3005, 4
        %v3008 = vrot.slane %v2509, 5
        %v3009 = vsel %vm1750, %v3007, %v3008
        %v3010 = vrot.slane %v2910, 5
        %v3011 = vrot.slane %v3010, 4
        %v3012 = vrot.slane %v2485, 5
        %v3013 = vsel %vm1750, %v3011, %v3012
        %v3014 = vrot.slane %v3012, 4
        %v3015 = vrot.slane %v2510, 5
        %v3016 = vsel %vm1750, %v3014, %v3015
        %v3017 = vrot.slane %v2911, 5
        %v3018 = vrot.slane %v3017, 4
        %v3019 = vrot.slane %v2487, 5
        %v3020 = vsel %vm1750, %v3018, %v3019
        %v3021 = vrot.slane %v3019, 4
        %v3022 = vrot.slane %v2511, 5
        %v3023 = vsel %vm1750, %v3021, %v3022
        %v3024 = vrot.slane %v2912, 5
        %v3025 = vrot.slane %v3024, 4
        %v3026 = vrot.slane %v2489, 5
        %v3027 = vsel %vm1750, %v3025, %v3026
        %v3028 = vrot.slane %v3026, 4
        %v3029 = vrot.slane %v2512, 5
        %v3030 = vsel %vm1750, %v3028, %v3029
        %v3031 = vrot.slane %v2913, 5
        %v3032 = vrot.slane %v3031, 4
        %v3033 = vrot.slane %v2491, 5
        %v3034 = vsel %vm1750, %v3032, %v3033
        %v3035 = vrot.slane %v3033, 4
        %v3036 = vrot.slane %v2513, 5
        %v3037 = vsel %vm1750, %v3035, %v3036
        %v3038 = vrot.slane %v2914, 5
        %v3039 = vrot.slane %v3038, 4
        %v3040 = vrot.slane %v2493, 5
        %v3041 = vsel %vm1750, %v3039, %v3040
        %v3042 = vrot.slane %v3040, 4
        %v3043 = vrot.slane %v2514, 5
        %v3044 = vsel %vm1750, %v3042, %v3043
        %v3045 = vrot.slane %v2915, 5
        %v3046 = vrot.slane %v3045, 4
        %v3047 = vrot.slane %v2495, 5
        %v3048 = vsel %vm1750, %v3046, %v3047
        %v3049 = vrot.slane %v3047, 4
        %v3050 = vrot.slane %v2515, 5
        %v3051 = vsel %vm1750, %v3049, %v3050
        %v3052 = vrot.slane %v2916, 5
        %v3053 = vrot.slane %v3052, 4
        %v3054 = vrot.slane %v2497, 5
        %v3055 = vsel %vm1750, %v3053, %v3054
        %v3056 = vrot.slane %v3054, 4
        %v3057 = vrot.slane %v2516, 5
        %v3058 = vsel %vm1750, %v3056, %v3057
        %v3059 = vrot.slane %v2917, 5
        %v3060 = vrot.slane %v3059, 4
        %v3061 = vrot.slane %v2499, 5
        %v3062 = vsel %vm1750, %v3060, %v3061
        %v3063 = vrot.slane %v3061, 4
        %v3064 = vrot.slane %v2517, 5
        %v3065 = vsel %vm1750, %v3063, %v3064
        %v3066 = vrot.slane %v2918, 5
        %v3067 = vrot.slane %v3066, 4
        %v3068 = vrot.slane %v2501, 5
        %v3069 = vsel %vm1750, %v3067, %v3068
        %v3070 = vrot.slane %v3068, 4
        %v3071 = vrot.slane %v2518, 5
        %v3072 = vsel %vm1750, %v3070, %v3071
        %v3073 = vrot.slane %v2919, 5
        %v3074 = vrot.slane %v3073, 4
        %v3075 = vrot.slane %v2503, 5
        %v3076 = vsel %vm1750, %v3074, %v3075
        %v3077 = vrot.slane %v3075, 4
        %v3078 = vrot.slane %v2519, 5
        %v3079 = vsel %vm1750, %v3077, %v3078
        %v3096 = vunpack.c.l.b16 %v1249
        %v3097 = vunpack.c.l.b16 %v1250
        %v3098 = vunpack.c.l.b16 %v1251
        %v3099 = vunpack.c.l.b16 %v1252
        %v3100 = vunpack.c.l.b16 %v1253
        %v3101 = vunpack.c.l.b16 %v1254
        %v3102 = vunpack.c.l.b16 %v1255
        %v3103 = vunpack.c.l.b16 %v1256
        %v3104 = vunpack.c.l.b16 %v1257
        %v3105 = vunpack.c.l.b16 %v1258
        %v3106 = vunpack.c.l.b16 %v1259
        %v3107 = vunpack.c.l.b16 %v1260
        %v3108 = vunpack.c.l.b16 %v1261
        %v3109 = vunpack.c.l.b16 %v1262
        %v3110 = vunpack.c.l.b16 %v1263
        %v3111 = vunpack.c.l.b16 %v1264
        %v3112 = vunpack.c.l.b16 %v1265
        %v3113 = vunpack.c.l.b16 %v1266
        %v3114 = vunpack.c.l.b16 %v1267
        %v3115 = vunpack.c.l.b16 %v1268
        %v3116 = vunpack.c.l.b16 %v1269
        %v3117 = vunpack.c.l.b16 %v1270
        %v3118 = vunpack.c.l.b16 %v1271
        %v3119 = vunpack.c.l.b16 %v1272
        %v3120 = vunpack.c.l.b16 %v1273
        %v3121 = vunpack.c.l.b16 %v1274
        %v3122 = vunpack.c.l.b16 %v1275
        %v3123 = vunpack.c.l.b16 %v1276
        %v3124 = vunpack.c.l.b16 %v1277
        %v3125 = vunpack.c.l.b16 %v1278
        %v3126 = vunpack.c.l.b16 %v1279
        %v3127 = vunpack.c.l.b16 %v1280
        %v3128 = vpack.c.b16 %v3097, %v3096
        %v3129 = vpack.c.b16 %v3099, %v3098
        %v3130 = vpack.c.b16 %v3101, %v3100
        %v3131 = vpack.c.b16 %v3103, %v3102
        %v3132 = vpack.c.b16 %v3105, %v3104
        %v3133 = vpack.c.b16 %v3107, %v3106
        %v3134 = vpack.c.b16 %v3109, %v3108
        %v3135 = vpack.c.b16 %v3111, %v3110
        %v3136 = vpack.c.b16 %v3113, %v3112
        %v3137 = vpack.c.b16 %v3115, %v3114
        %v3138 = vpack.c.b16 %v3117, %v3116
        %v3139 = vpack.c.b16 %v3119, %v3118
        %v3140 = vpack.c.b16 %v3121, %v3120
        %v3141 = vpack.c.b16 %v3123, %v3122
        %v3142 = vpack.c.b16 %v3125, %v3124
        %v3143 = vpack.c.b16 %v3127, %v3126
        %v3144 = vunpack.c.l.b16 %v1313
        %v3145 = vunpack.c.l.b16 %v1323
        %v3146 = vunpack.c.l.b16 %v1337
        %v3147 = vunpack.c.l.b16 %v1347
        %v3148 = vunpack.c.l.b16 %v1361
        %v3149 = vunpack.c.l.b16 %v1371
        %v3150 = vunpack.c.l.b16 %v1385
        %v3151 = vunpack.c.l.b16 %v1395
        %v3152 = vunpack.c.l.b16 %v1409
        %v3153 = vunpack.c.l.b16 %v1419
        %v3154 = vunpack.c.l.b16 %v1433
        %v3155 = vunpack.c.l.b16 %v1443
        %v3156 = vunpack.c.l.b16 %v1457
        %v3157 = vunpack.c.l.b16 %v1467
        %v3158 = vunpack.c.l.b16 %v1481
        %v3159 = vunpack.c.l.b16 %v1491
        %v3160 = vunpack.c.l.b16 %v1505
        %v3161 = vunpack.c.l.b16 %v1515
        %v3162 = vunpack.c.l.b16 %v1529
        %v3163 = vunpack.c.l.b16 %v1539
        %v3164 = vunpack.c.l.b16 %v1553
        %v3165 = vunpack.c.l.b16 %v1563
        %v3166 = vunpack.c.l.b16 %v1577
        %v3167 = vunpack.c.l.b16 %v1587
        %v3168 = vunpack.c.l.b16 %v1601
        %v3169 = vunpack.c.l.b16 %v1611
        %v3170 = vunpack.c.l.b16 %v1625
        %v3171 = vunpack.c.l.b16 %v1635
        %v3172 = vunpack.c.l.b16 %v1649
        %v3173 = vunpack.c.l.b16 %v1659
        %v3174 = vunpack.c.l.b16 %v1673
        %v3175 = vunpack.c.l.b16 %v1683
        %v3176 = vpack.c.b16 %v3145, %v3144
        %v3177 = vpack.c.b16 %v3147, %v3146
        %v3178 = vpack.c.b16 %v3149, %v3148
        %v3179 = vpack.c.b16 %v3151, %v3150
        %v3180 = vpack.c.b16 %v3153, %v3152
        %v3181 = vpack.c.b16 %v3155, %v3154
        %v3182 = vpack.c.b16 %v3157, %v3156
        %v3183 = vpack.c.b16 %v3159, %v3158
        %v3184 = vpack.c.b16 %v3161, %v3160
        %v3185 = vpack.c.b16 %v3163, %v3162
        %v3186 = vpack.c.b16 %v3165, %v3164
        %v3187 = vpack.c.b16 %v3167, %v3166
        %v3188 = vpack.c.b16 %v3169, %v3168
        %v3189 = vpack.c.b16 %v3171, %v3170
        %v3190 = vpack.c.b16 %v3173, %v3172
        %v3191 = vpack.c.b16 %v3175, %v3174
        %3192 = vrot.lane.b32.xlu0 %v3176, 4
        %v3193 = vpop.permute.xlu0 %3192
        %3194 = vrot.lane.b32.xlu0 %v3177, 4
        %v3195 = vpop.permute.xlu0 %3194
        %3196 = vrot.lane.b32.xlu0 %v3178, 4
        %v3197 = vpop.permute.xlu0 %3196
        %3198 = vrot.lane.b32.xlu0 %v3179, 4
        %v3199 = vpop.permute.xlu0 %3198
        %3200 = vrot.lane.b32.xlu0 %v3180, 4
        %v3201 = vpop.permute.xlu0 %3200
        %3202 = vrot.lane.b32.xlu0 %v3181, 4
        %v3203 = vpop.permute.xlu0 %3202
        %3204 = vrot.lane.b32.xlu0 %v3182, 4
        %v3205 = vpop.permute.xlu0 %3204
        %3206 = vrot.lane.b32.xlu0 %v3183, 4
        %v3207 = vpop.permute.xlu0 %3206
        %3208 = vrot.lane.b32.xlu0 %v3184, 4
        %v3209 = vpop.permute.xlu0 %3208
        %3210 = vrot.lane.b32.xlu0 %v3185, 4
        %v3211 = vpop.permute.xlu0 %3210
        %3212 = vrot.lane.b32.xlu0 %v3186, 4
        %v3213 = vpop.permute.xlu0 %3212
        %3214 = vrot.lane.b32.xlu0 %v3187, 4
        %v3215 = vpop.permute.xlu0 %3214
        %3216 = vrot.lane.b32.xlu0 %v3188, 4
        %v3217 = vpop.permute.xlu0 %3216
        %3218 = vrot.lane.b32.xlu0 %v3189, 4
        %v3219 = vpop.permute.xlu0 %3218
        %3220 = vrot.lane.b32.xlu0 %v3190, 4
        %v3221 = vpop.permute.xlu0 %3220
        %3222 = vrot.lane.b32.xlu0 %v3191, 4
        %v3223 = vpop.permute.xlu0 %3222
        %v3224 = vunpack.c.l.b16 %v1754
        %v3225 = vunpack.c.l.b16 %v1757
        %v3226 = vunpack.c.l.b16 %v1761
        %v3227 = vunpack.c.l.b16 %v1764
        %v3228 = vunpack.c.l.b16 %v1768
        %v3229 = vunpack.c.l.b16 %v1771
        %v3230 = vunpack.c.l.b16 %v1775
        %v3231 = vunpack.c.l.b16 %v1778
        %v3232 = vunpack.c.l.b16 %v1782
        %v3233 = vunpack.c.l.b16 %v1785
        %v3234 = vunpack.c.l.b16 %v1789
        %v3235 = vunpack.c.l.b16 %v1792
        %v3236 = vunpack.c.l.b16 %v1796
        %v3237 = vunpack.c.l.b16 %v1799
        %v3238 = vunpack.c.l.b16 %v1803
        %v3239 = vunpack.c.l.b16 %v1806
        %v3240 = vunpack.c.l.b16 %v1810
        %v3241 = vunpack.c.l.b16 %v1813
        %v3242 = vunpack.c.l.b16 %v1817
        %v3243 = vunpack.c.l.b16 %v1820
        %v3244 = vunpack.c.l.b16 %v1824
        %v3245 = vunpack.c.l.b16 %v1827
        %v3246 = vunpack.c.l.b16 %v1831
        %v3247 = vunpack.c.l.b16 %v1834
        %v3248 = vunpack.c.l.b16 %v1838
        %v3249 = vunpack.c.l.b16 %v1841
        %v3250 = vunpack.c.l.b16 %v1845
        %v3251 = vunpack.c.l.b16 %v1848
        %v3252 = vunpack.c.l.b16 %v1852
        %v3253 = vunpack.c.l.b16 %v1855
        %v3254 = vunpack.c.l.b16 %v1859
        %v3255 = vunpack.c.l.b16 %v1862
        %v3256 = vpack.c.b16 %v3225, %v3224
        %v3257 = vpack.c.b16 %v3227, %v3226
        %v3258 = vpack.c.b16 %v3229, %v3228
        %v3259 = vpack.c.b16 %v3231, %v3230
        %v3260 = vpack.c.b16 %v3233, %v3232
        %v3261 = vpack.c.b16 %v3235, %v3234
        %v3262 = vpack.c.b16 %v3237, %v3236
        %v3263 = vpack.c.b16 %v3239, %v3238
        %v3264 = vpack.c.b16 %v3241, %v3240
        %v3265 = vpack.c.b16 %v3243, %v3242
        %v3266 = vpack.c.b16 %v3245, %v3244
        %v3267 = vpack.c.b16 %v3247, %v3246
        %v3268 = vpack.c.b16 %v3249, %v3248
        %v3269 = vpack.c.b16 %v3251, %v3250
        %v3270 = vpack.c.b16 %v3253, %v3252
        %v3271 = vpack.c.b16 %v3255, %v3254
        %3272 = vrot.lane.b32.xlu0 %v3256, 8
        %v3273 = vpop.permute.xlu0 %3272
        %3274 = vrot.lane.b32.xlu0 %v3257, 8
        %v3275 = vpop.permute.xlu0 %3274
        %3276 = vrot.lane.b32.xlu0 %v3258, 8
        %v3277 = vpop.permute.xlu0 %3276
        %3278 = vrot.lane.b32.xlu0 %v3259, 8
        %v3279 = vpop.permute.xlu0 %3278
        %3280 = vrot.lane.b32.xlu0 %v3260, 8
        %v3281 = vpop.permute.xlu0 %3280
        %3282 = vrot.lane.b32.xlu0 %v3261, 8
        %v3283 = vpop.permute.xlu0 %3282
        %3284 = vrot.lane.b32.xlu0 %v3262, 8
        %v3285 = vpop.permute.xlu0 %3284
        %3286 = vrot.lane.b32.xlu0 %v3263, 8
        %v3287 = vpop.permute.xlu0 %3286
        %3288 = vrot.lane.b32.xlu0 %v3264, 8
        %v3289 = vpop.permute.xlu0 %3288
        %3290 = vrot.lane.b32.xlu0 %v3265, 8
        %v3291 = vpop.permute.xlu0 %3290
        %3292 = vrot.lane.b32.xlu0 %v3266, 8
        %v3293 = vpop.permute.xlu0 %3292
        %3294 = vrot.lane.b32.xlu0 %v3267, 8
        %v3295 = vpop.permute.xlu0 %3294
        %3296 = vrot.lane.b32.xlu0 %v3268, 8
        %v3297 = vpop.permute.xlu0 %3296
        %3298 = vrot.lane.b32.xlu0 %v3269, 8
        %v3299 = vpop.permute.xlu0 %3298
        %3300 = vrot.lane.b32.xlu0 %v3270, 8
        %v3301 = vpop.permute.xlu0 %3300
        %3302 = vrot.lane.b32.xlu0 %v3271, 8
        %v3303 = vpop.permute.xlu0 %3302
        %v3320 = vunpack.c.l.b16 %v1863
        %v3321 = vunpack.c.l.b16 %v1864
        %v3322 = vunpack.c.l.b16 %v1865
        %v3323 = vunpack.c.l.b16 %v1866
        %v3324 = vunpack.c.l.b16 %v1867
        %v3325 = vunpack.c.l.b16 %v1868
        %v3326 = vunpack.c.l.b16 %v1869
        %v3327 = vunpack.c.l.b16 %v1870
        %v3328 = vunpack.c.l.b16 %v1871
        %v3329 = vunpack.c.l.b16 %v1872
        %v3330 = vunpack.c.l.b16 %v1873
        %v3331 = vunpack.c.l.b16 %v1874
        %v3332 = vunpack.c.l.b16 %v1875
        %v3333 = vunpack.c.l.b16 %v1876
        %v3334 = vunpack.c.l.b16 %v1877
        %v3335 = vunpack.c.l.b16 %v1878
        %v3336 = vunpack.c.l.b16 %v1879
        %v3337 = vunpack.c.l.b16 %v1880
        %v3338 = vunpack.c.l.b16 %v1881
        %v3339 = vunpack.c.l.b16 %v1882
        %v3340 = vunpack.c.l.b16 %v1883
        %v3341 = vunpack.c.l.b16 %v1884
        %v3342 = vunpack.c.l.b16 %v1885
        %v3343 = vunpack.c.l.b16 %v1886
        %v3344 = vunpack.c.l.b16 %v1887
        %v3345 = vunpack.c.l.b16 %v1888
        %v3346 = vunpack.c.l.b16 %v1889
        %v3347 = vunpack.c.l.b16 %v1890
        %v3348 = vunpack.c.l.b16 %v1891
        %v3349 = vunpack.c.l.b16 %v1892
        %v3350 = vunpack.c.l.b16 %v1893
        %v3351 = vunpack.c.l.b16 %v1894
        %v3352 = vpack.c.b16 %v3321, %v3320
        %v3353 = vpack.c.b16 %v3323, %v3322
        %v3354 = vpack.c.b16 %v3325, %v3324
        %v3355 = vpack.c.b16 %v3327, %v3326
        %v3356 = vpack.c.b16 %v3329, %v3328
        %v3357 = vpack.c.b16 %v3331, %v3330
        %v3358 = vpack.c.b16 %v3333, %v3332
        %v3359 = vpack.c.b16 %v3335, %v3334
        %v3360 = vpack.c.b16 %v3337, %v3336
        %v3361 = vpack.c.b16 %v3339, %v3338
        %v3362 = vpack.c.b16 %v3341, %v3340
        %v3363 = vpack.c.b16 %v3343, %v3342
        %v3364 = vpack.c.b16 %v3345, %v3344
        %v3365 = vpack.c.b16 %v3347, %v3346
        %v3366 = vpack.c.b16 %v3349, %v3348
        %v3367 = vpack.c.b16 %v3351, %v3350
        %3368 = vrot.lane.b32.xlu0 %v3352, 12
        %v3369 = vpop.permute.xlu0 %3368
        %3370 = vrot.lane.b32.xlu0 %v3353, 12
        %v3371 = vpop.permute.xlu0 %3370
        %3372 = vrot.lane.b32.xlu0 %v3354, 12
        %v3373 = vpop.permute.xlu0 %3372
        %3374 = vrot.lane.b32.xlu0 %v3355, 12
        %v3375 = vpop.permute.xlu0 %3374
        %3376 = vrot.lane.b32.xlu0 %v3356, 12
        %v3377 = vpop.permute.xlu0 %3376
        %3378 = vrot.lane.b32.xlu0 %v3357, 12
        %v3379 = vpop.permute.xlu0 %3378
        %3380 = vrot.lane.b32.xlu0 %v3358, 12
        %v3381 = vpop.permute.xlu0 %3380
        %3382 = vrot.lane.b32.xlu0 %v3359, 12
        %v3383 = vpop.permute.xlu0 %3382
        %3384 = vrot.lane.b32.xlu0 %v3360, 12
        %v3385 = vpop.permute.xlu0 %3384
        %3386 = vrot.lane.b32.xlu0 %v3361, 12
        %v3387 = vpop.permute.xlu0 %3386
        %3388 = vrot.lane.b32.xlu0 %v3362, 12
        %v3389 = vpop.permute.xlu0 %3388
        %3390 = vrot.lane.b32.xlu0 %v3363, 12
        %v3391 = vpop.permute.xlu0 %3390
        %3392 = vrot.lane.b32.xlu0 %v3364, 12
        %v3393 = vpop.permute.xlu0 %3392
        %3394 = vrot.lane.b32.xlu0 %v3365, 12
        %v3395 = vpop.permute.xlu0 %3394
        %3396 = vrot.lane.b32.xlu0 %v3366, 12
        %v3397 = vpop.permute.xlu0 %3396
        %3398 = vrot.lane.b32.xlu0 %v3367, 12
        %v3399 = vpop.permute.xlu0 %3398
        %v3400 = vunpack.c.l.b16 %v1924
        %v3401 = vunpack.c.l.b16 %v1934
        %v3402 = vunpack.c.l.b16 %v1948
        %v3403 = vunpack.c.l.b16 %v1958
        %v3404 = vunpack.c.l.b16 %v1972
        %v3405 = vunpack.c.l.b16 %v1982
        %v3406 = vunpack.c.l.b16 %v1996
        %v3407 = vunpack.c.l.b16 %v2006
        %v3408 = vunpack.c.l.b16 %v2020
        %v3409 = vunpack.c.l.b16 %v2030
        %v3410 = vunpack.c.l.b16 %v2044
        %v3411 = vunpack.c.l.b16 %v2054
        %v3412 = vunpack.c.l.b16 %v2068
        %v3413 = vunpack.c.l.b16 %v2078
        %v3414 = vunpack.c.l.b16 %v2092
        %v3415 = vunpack.c.l.b16 %v2102
        %v3416 = vunpack.c.l.b16 %v2116
        %v3417 = vunpack.c.l.b16 %v2126
        %v3418 = vunpack.c.l.b16 %v2140
        %v3419 = vunpack.c.l.b16 %v2150
        %v3420 = vunpack.c.l.b16 %v2164
        %v3421 = vunpack.c.l.b16 %v2174
        %v3422 = vunpack.c.l.b16 %v2188
        %v3423 = vunpack.c.l.b16 %v2198
        %v3424 = vunpack.c.l.b16 %v2212
        %v3425 = vunpack.c.l.b16 %v2222
        %v3426 = vunpack.c.l.b16 %v2236
        %v3427 = vunpack.c.l.b16 %v2246
        %v3428 = vunpack.c.l.b16 %v2260
        %v3429 = vunpack.c.l.b16 %v2270
        %v3430 = vunpack.c.l.b16 %v2284
        %v3431 = vunpack.c.l.b16 %v2294
        %v3432 = vpack.c.b16 %v3401, %v3400
        %v3433 = vpack.c.b16 %v3403, %v3402
        %v3434 = vpack.c.b16 %v3405, %v3404
        %v3435 = vpack.c.b16 %v3407, %v3406
        %v3436 = vpack.c.b16 %v3409, %v3408
        %v3437 = vpack.c.b16 %v3411, %v3410
        %v3438 = vpack.c.b16 %v3413, %v3412
        %v3439 = vpack.c.b16 %v3415, %v3414
        %v3440 = vpack.c.b16 %v3417, %v3416
        %v3441 = vpack.c.b16 %v3419, %v3418
        %v3442 = vpack.c.b16 %v3421, %v3420
        %v3443 = vpack.c.b16 %v3423, %v3422
        %v3444 = vpack.c.b16 %v3425, %v3424
        %v3445 = vpack.c.b16 %v3427, %v3426
        %v3446 = vpack.c.b16 %v3429, %v3428
        %v3447 = vpack.c.b16 %v3431, %v3430
        %3448 = vrot.lane.b32.xlu0 %v3432, 16
        %v3449 = vpop.permute.xlu0 %3448
        %3450 = vrot.lane.b32.xlu0 %v3433, 16
        %v3451 = vpop.permute.xlu0 %3450
        %3452 = vrot.lane.b32.xlu0 %v3434, 16
        %v3453 = vpop.permute.xlu0 %3452
        %3454 = vrot.lane.b32.xlu0 %v3435, 16
        %v3455 = vpop.permute.xlu0 %3454
        %3456 = vrot.lane.b32.xlu0 %v3436, 16
        %v3457 = vpop.permute.xlu0 %3456
        %3458 = vrot.lane.b32.xlu0 %v3437, 16
        %v3459 = vpop.permute.xlu0 %3458
        %3460 = vrot.lane.b32.xlu0 %v3438, 16
        %v3461 = vpop.permute.xlu0 %3460
        %3462 = vrot.lane.b32.xlu0 %v3439, 16
        %v3463 = vpop.permute.xlu0 %3462
        %3464 = vrot.lane.b32.xlu0 %v3440, 16
        %v3465 = vpop.permute.xlu0 %3464
        %3466 = vrot.lane.b32.xlu0 %v3441, 16
        %v3467 = vpop.permute.xlu0 %3466
        %3468 = vrot.lane.b32.xlu0 %v3442, 16
        %v3469 = vpop.permute.xlu0 %3468
        %3470 = vrot.lane.b32.xlu0 %v3443, 16
        %v3471 = vpop.permute.xlu0 %3470
        %3472 = vrot.lane.b32.xlu0 %v3444, 16
        %v3473 = vpop.permute.xlu0 %3472
        %3474 = vrot.lane.b32.xlu0 %v3445, 16
        %v3475 = vpop.permute.xlu0 %3474
        %3476 = vrot.lane.b32.xlu0 %v3446, 16
        %v3477 = vpop.permute.xlu0 %3476
        %3478 = vrot.lane.b32.xlu0 %v3447, 16
        %v3479 = vpop.permute.xlu0 %3478
        %v3480 = vunpack.c.l.b16 %v2362
        %v3481 = vunpack.c.l.b16 %v2365
        %v3482 = vunpack.c.l.b16 %v2369
        %v3483 = vunpack.c.l.b16 %v2372
        %v3484 = vunpack.c.l.b16 %v2376
        %v3485 = vunpack.c.l.b16 %v2379
        %v3486 = vunpack.c.l.b16 %v2383
        %v3487 = vunpack.c.l.b16 %v2386
        %v3488 = vunpack.c.l.b16 %v2390
        %v3489 = vunpack.c.l.b16 %v2393
        %v3490 = vunpack.c.l.b16 %v2397
        %v3491 = vunpack.c.l.b16 %v2400
        %v3492 = vunpack.c.l.b16 %v2404
        %v3493 = vunpack.c.l.b16 %v2407
        %v3494 = vunpack.c.l.b16 %v2411
        %v3495 = vunpack.c.l.b16 %v2414
        %v3496 = vunpack.c.l.b16 %v2418
        %v3497 = vunpack.c.l.b16 %v2421
        %v3498 = vunpack.c.l.b16 %v2425
        %v3499 = vunpack.c.l.b16 %v2428
        %v3500 = vunpack.c.l.b16 %v2432
        %v3501 = vunpack.c.l.b16 %v2435
        %v3502 = vunpack.c.l.b16 %v2439
        %v3503 = vunpack.c.l.b16 %v2442
        %v3504 = vunpack.c.l.b16 %v2446
        %v3505 = vunpack.c.l.b16 %v2449
        %v3506 = vunpack.c.l.b16 %v2453
        %v3507 = vunpack.c.l.b16 %v2456
        %v3508 = vunpack.c.l.b16 %v2460
        %v3509 = vunpack.c.l.b16 %v2463
        %v3510 = vunpack.c.l.b16 %v2467
        %v3511 = vunpack.c.l.b16 %v2470
        %v3512 = vpack.c.b16 %v3481, %v3480
        %v3513 = vpack.c.b16 %v3483, %v3482
        %v3514 = vpack.c.b16 %v3485, %v3484
        %v3515 = vpack.c.b16 %v3487, %v3486
        %v3516 = vpack.c.b16 %v3489, %v3488
        %v3517 = vpack.c.b16 %v3491, %v3490
        %v3518 = vpack.c.b16 %v3493, %v3492
        %v3519 = vpack.c.b16 %v3495, %v3494
        %v3520 = vpack.c.b16 %v3497, %v3496
        %v3521 = vpack.c.b16 %v3499, %v3498
        %v3522 = vpack.c.b16 %v3501, %v3500
        %v3523 = vpack.c.b16 %v3503, %v3502
        %v3524 = vpack.c.b16 %v3505, %v3504
        %v3525 = vpack.c.b16 %v3507, %v3506
        %v3526 = vpack.c.b16 %v3509, %v3508
        %v3527 = vpack.c.b16 %v3511, %v3510
        %3528 = vrot.lane.b32.xlu0 %v3512, 20
        %v3529 = vpop.permute.xlu0 %3528
        %3530 = vrot.lane.b32.xlu0 %v3513, 20
        %v3531 = vpop.permute.xlu0 %3530
        %3532 = vrot.lane.b32.xlu0 %v3514, 20
        %v3533 = vpop.permute.xlu0 %3532
        %3534 = vrot.lane.b32.xlu0 %v3515, 20
        %v3535 = vpop.permute.xlu0 %3534
        %3536 = vrot.lane.b32.xlu0 %v3516, 20
        %v3537 = vpop.permute.xlu0 %3536
        %3538 = vrot.lane.b32.xlu0 %v3517, 20
        %v3539 = vpop.permute.xlu0 %3538
        %3540 = vrot.lane.b32.xlu0 %v3518, 20
        %v3541 = vpop.permute.xlu0 %3540
        %3542 = vrot.lane.b32.xlu0 %v3519, 20
        %v3543 = vpop.permute.xlu0 %3542
        %3544 = vrot.lane.b32.xlu0 %v3520, 20
        %v3545 = vpop.permute.xlu0 %3544
        %3546 = vrot.lane.b32.xlu0 %v3521, 20
        %v3547 = vpop.permute.xlu0 %3546
        %3548 = vrot.lane.b32.xlu0 %v3522, 20
        %v3549 = vpop.permute.xlu0 %3548
        %3550 = vrot.lane.b32.xlu0 %v3523, 20
        %v3551 = vpop.permute.xlu0 %3550
        %3552 = vrot.lane.b32.xlu0 %v3524, 20
        %v3553 = vpop.permute.xlu0 %3552
        %3554 = vrot.lane.b32.xlu0 %v3525, 20
        %v3555 = vpop.permute.xlu0 %3554
        %3556 = vrot.lane.b32.xlu0 %v3526, 20
        %v3557 = vpop.permute.xlu0 %3556
        %3558 = vrot.lane.b32.xlu0 %v3527, 20
        %v3559 = vpop.permute.xlu0 %3558
        %v3576 = vunpack.c.l.b16 %v2472
        %v3577 = vunpack.c.l.b16 %v2473
        %v3578 = vunpack.c.l.b16 %v2474
        %v3579 = vunpack.c.l.b16 %v2475
        %v3580 = vunpack.c.l.b16 %v2476
        %v3581 = vunpack.c.l.b16 %v2477
        %v3582 = vunpack.c.l.b16 %v2478
        %v3583 = vunpack.c.l.b16 %v2479
        %v3584 = vunpack.c.l.b16 %v2480
        %v3585 = vunpack.c.l.b16 %v2481
        %v3586 = vunpack.c.l.b16 %v2482
        %v3587 = vunpack.c.l.b16 %v2483
        %v3588 = vunpack.c.l.b16 %v2484
        %v3589 = vunpack.c.l.b16 %v2485
        %v3590 = vunpack.c.l.b16 %v2486
        %v3591 = vunpack.c.l.b16 %v2487
        %v3592 = vunpack.c.l.b16 %v2488
        %v3593 = vunpack.c.l.b16 %v2489
        %v3594 = vunpack.c.l.b16 %v2490
        %v3595 = vunpack.c.l.b16 %v2491
        %v3596 = vunpack.c.l.b16 %v2492
        %v3597 = vunpack.c.l.b16 %v2493
        %v3598 = vunpack.c.l.b16 %v2494
        %v3599 = vunpack.c.l.b16 %v2495
        %v3600 = vunpack.c.l.b16 %v2496
        %v3601 = vunpack.c.l.b16 %v2497
        %v3602 = vunpack.c.l.b16 %v2498
        %v3603 = vunpack.c.l.b16 %v2499
        %v3604 = vunpack.c.l.b16 %v2500
        %v3605 = vunpack.c.l.b16 %v2501
        %v3606 = vunpack.c.l.b16 %v2502
        %v3607 = vunpack.c.l.b16 %v2503
        %v3608 = vpack.c.b16 %v3577, %v3576
        %v3609 = vpack.c.b16 %v3579, %v3578
        %v3610 = vpack.c.b16 %v3581, %v3580
        %v3611 = vpack.c.b16 %v3583, %v3582
        %v3612 = vpack.c.b16 %v3585, %v3584
        %v3613 = vpack.c.b16 %v3587, %v3586
        %v3614 = vpack.c.b16 %v3589, %v3588
        %v3615 = vpack.c.b16 %v3591, %v3590
        %v3616 = vpack.c.b16 %v3593, %v3592
        %v3617 = vpack.c.b16 %v3595, %v3594
        %v3618 = vpack.c.b16 %v3597, %v3596
        %v3619 = vpack.c.b16 %v3599, %v3598
        %v3620 = vpack.c.b16 %v3601, %v3600
        %v3621 = vpack.c.b16 %v3603, %v3602
        %v3622 = vpack.c.b16 %v3605, %v3604
        %v3623 = vpack.c.b16 %v3607, %v3606
        %3624 = vrot.lane.b32.xlu0 %v3608, 24
        %v3625 = vpop.permute.xlu0 %3624
        %3626 = vrot.lane.b32.xlu0 %v3609, 24
        %v3627 = vpop.permute.xlu0 %3626
        %3628 = vrot.lane.b32.xlu0 %v3610, 24
        %v3629 = vpop.permute.xlu0 %3628
        %3630 = vrot.lane.b32.xlu0 %v3611, 24
        %v3631 = vpop.permute.xlu0 %3630
        %3632 = vrot.lane.b32.xlu0 %v3612, 24
        %v3633 = vpop.permute.xlu0 %3632
        %3634 = vrot.lane.b32.xlu0 %v3613, 24
        %v3635 = vpop.permute.xlu0 %3634
        %3636 = vrot.lane.b32.xlu0 %v3614, 24
        %v3637 = vpop.permute.xlu0 %3636
        %3638 = vrot.lane.b32.xlu0 %v3615, 24
        %v3639 = vpop.permute.xlu0 %3638
        %3640 = vrot.lane.b32.xlu0 %v3616, 24
        %v3641 = vpop.permute.xlu0 %3640
        %3642 = vrot.lane.b32.xlu0 %v3617, 24
        %v3643 = vpop.permute.xlu0 %3642
        %3644 = vrot.lane.b32.xlu0 %v3618, 24
        %v3645 = vpop.permute.xlu0 %3644
        %3646 = vrot.lane.b32.xlu0 %v3619, 24
        %v3647 = vpop.permute.xlu0 %3646
        %3648 = vrot.lane.b32.xlu0 %v3620, 24
        %v3649 = vpop.permute.xlu0 %3648
        %3650 = vrot.lane.b32.xlu0 %v3621, 24
        %v3651 = vpop.permute.xlu0 %3650
        %3652 = vrot.lane.b32.xlu0 %v3622, 24
        %v3653 = vpop.permute.xlu0 %3652
        %3654 = vrot.lane.b32.xlu0 %v3623, 24
        %v3655 = vpop.permute.xlu0 %3654
        %v3656 = vunpack.c.l.b16 %v2533
        %v3657 = vunpack.c.l.b16 %v2543
        %v3658 = vunpack.c.l.b16 %v2557
        %v3659 = vunpack.c.l.b16 %v2567
        %v3660 = vunpack.c.l.b16 %v2581
        %v3661 = vunpack.c.l.b16 %v2591
        %v3662 = vunpack.c.l.b16 %v2605
        %v3663 = vunpack.c.l.b16 %v2615
        %v3664 = vunpack.c.l.b16 %v2629
        %v3665 = vunpack.c.l.b16 %v2639
        %v3666 = vunpack.c.l.b16 %v2653
        %v3667 = vunpack.c.l.b16 %v2663
        %v3668 = vunpack.c.l.b16 %v2677
        %v3669 = vunpack.c.l.b16 %v2687
        %v3670 = vunpack.c.l.b16 %v2701
        %v3671 = vunpack.c.l.b16 %v2711
        %v3672 = vunpack.c.l.b16 %v2725
        %v3673 = vunpack.c.l.b16 %v2735
        %v3674 = vunpack.c.l.b16 %v2749
        %v3675 = vunpack.c.l.b16 %v2759
        %v3676 = vunpack.c.l.b16 %v2773
        %v3677 = vunpack.c.l.b16 %v2783
        %v3678 = vunpack.c.l.b16 %v2797
        %v3679 = vunpack.c.l.b16 %v2807
        %v3680 = vunpack.c.l.b16 %v2821
        %v3681 = vunpack.c.l.b16 %v2831
        %v3682 = vunpack.c.l.b16 %v2845
        %v3683 = vunpack.c.l.b16 %v2855
        %v3684 = vunpack.c.l.b16 %v2869
        %v3685 = vunpack.c.l.b16 %v2879
        %v3686 = vunpack.c.l.b16 %v2893
        %v3687 = vunpack.c.l.b16 %v2903
        %v3688 = vpack.c.b16 %v3657, %v3656
        %v3689 = vpack.c.b16 %v3659, %v3658
        %v3690 = vpack.c.b16 %v3661, %v3660
        %v3691 = vpack.c.b16 %v3663, %v3662
        %v3692 = vpack.c.b16 %v3665, %v3664
        %v3693 = vpack.c.b16 %v3667, %v3666
        %v3694 = vpack.c.b16 %v3669, %v3668
        %v3695 = vpack.c.b16 %v3671, %v3670
        %v3696 = vpack.c.b16 %v3673, %v3672
        %v3697 = vpack.c.b16 %v3675, %v3674
        %v3698 = vpack.c.b16 %v3677, %v3676
        %v3699 = vpack.c.b16 %v3679, %v3678
        %v3700 = vpack.c.b16 %v3681, %v3680
        %v3701 = vpack.c.b16 %v3683, %v3682
        %v3702 = vpack.c.b16 %v3685, %v3684
        %v3703 = vpack.c.b16 %v3687, %v3686
        %3704 = vrot.lane.b32.xlu0 %v3688, 28
        %v3705 = vpop.permute.xlu0 %3704
        %3706 = vrot.lane.b32.xlu0 %v3689, 28
        %v3707 = vpop.permute.xlu0 %3706
        %3708 = vrot.lane.b32.xlu0 %v3690, 28
        %v3709 = vpop.permute.xlu0 %3708
        %3710 = vrot.lane.b32.xlu0 %v3691, 28
        %v3711 = vpop.permute.xlu0 %3710
        %3712 = vrot.lane.b32.xlu0 %v3692, 28
        %v3713 = vpop.permute.xlu0 %3712
        %3714 = vrot.lane.b32.xlu0 %v3693, 28
        %v3715 = vpop.permute.xlu0 %3714
        %3716 = vrot.lane.b32.xlu0 %v3694, 28
        %v3717 = vpop.permute.xlu0 %3716
        %3718 = vrot.lane.b32.xlu0 %v3695, 28
        %v3719 = vpop.permute.xlu0 %3718
        %3720 = vrot.lane.b32.xlu0 %v3696, 28
        %v3721 = vpop.permute.xlu0 %3720
        %3722 = vrot.lane.b32.xlu0 %v3697, 28
        %v3723 = vpop.permute.xlu0 %3722
        %3724 = vrot.lane.b32.xlu0 %v3698, 28
        %v3725 = vpop.permute.xlu0 %3724
        %3726 = vrot.lane.b32.xlu0 %v3699, 28
        %v3727 = vpop.permute.xlu0 %3726
        %3728 = vrot.lane.b32.xlu0 %v3700, 28
        %v3729 = vpop.permute.xlu0 %3728
        %3730 = vrot.lane.b32.xlu0 %v3701, 28
        %v3731 = vpop.permute.xlu0 %3730
        %3732 = vrot.lane.b32.xlu0 %v3702, 28
        %v3733 = vpop.permute.xlu0 %3732
        %3734 = vrot.lane.b32.xlu0 %v3703, 28
        %v3735 = vpop.permute.xlu0 %3734
        %v3736 = vunpack.c.l.b16 %v2971
        %v3737 = vunpack.c.l.b16 %v2974
        %v3738 = vunpack.c.l.b16 %v2978
        %v3739 = vunpack.c.l.b16 %v2981
        %v3740 = vunpack.c.l.b16 %v2985
        %v3741 = vunpack.c.l.b16 %v2988
        %v3742 = vunpack.c.l.b16 %v2992
        %v3743 = vunpack.c.l.b16 %v2995
        %v3744 = vunpack.c.l.b16 %v2999
        %v3745 = vunpack.c.l.b16 %v3002
        %v3746 = vunpack.c.l.b16 %v3006
        %v3747 = vunpack.c.l.b16 %v3009
        %v3748 = vunpack.c.l.b16 %v3013
        %v3749 = vunpack.c.l.b16 %v3016
        %v3750 = vunpack.c.l.b16 %v3020
        %v3751 = vunpack.c.l.b16 %v3023
        %v3752 = vunpack.c.l.b16 %v3027
        %v3753 = vunpack.c.l.b16 %v3030
        %v3754 = vunpack.c.l.b16 %v3034
        %v3755 = vunpack.c.l.b16 %v3037
        %v3756 = vunpack.c.l.b16 %v3041
        %v3757 = vunpack.c.l.b16 %v3044
        %v3758 = vunpack.c.l.b16 %v3048
        %v3759 = vunpack.c.l.b16 %v3051
        %v3760 = vunpack.c.l.b16 %v3055
        %v3761 = vunpack.c.l.b16 %v3058
        %v3762 = vunpack.c.l.b16 %v3062
        %v3763 = vunpack.c.l.b16 %v3065
        %v3764 = vunpack.c.l.b16 %v3069
        %v3765 = vunpack.c.l.b16 %v3072
        %v3766 = vunpack.c.l.b16 %v3076
        %v3767 = vunpack.c.l.b16 %v3079
        %v3768 = vpack.c.b16 %v3737, %v3736
        %v3769 = vpack.c.b16 %v3739, %v3738
        %v3770 = vpack.c.b16 %v3741, %v3740
        %v3771 = vpack.c.b16 %v3743, %v3742
        %v3772 = vpack.c.b16 %v3745, %v3744
        %v3773 = vpack.c.b16 %v3747, %v3746
        %v3774 = vpack.c.b16 %v3749, %v3748
        %v3775 = vpack.c.b16 %v3751, %v3750
        %v3776 = vpack.c.b16 %v3753, %v3752
        %v3777 = vpack.c.b16 %v3755, %v3754
        %v3778 = vpack.c.b16 %v3757, %v3756
        %v3779 = vpack.c.b16 %v3759, %v3758
        %v3780 = vpack.c.b16 %v3761, %v3760
        %v3781 = vpack.c.b16 %v3763, %v3762
        %v3782 = vpack.c.b16 %v3765, %v3764
        %v3783 = vpack.c.b16 %v3767, %v3766
        %3784 = vrot.lane.b32.xlu0 %v3768, 32
        %v3785 = vpop.permute.xlu0 %3784
        %3786 = vrot.lane.b32.xlu0 %v3769, 32
        %v3787 = vpop.permute.xlu0 %3786
        %3788 = vrot.lane.b32.xlu0 %v3770, 32
        %v3789 = vpop.permute.xlu0 %3788
        %3790 = vrot.lane.b32.xlu0 %v3771, 32
        %v3791 = vpop.permute.xlu0 %3790
        %3792 = vrot.lane.b32.xlu0 %v3772, 32
        %v3793 = vpop.permute.xlu0 %3792
        %3794 = vrot.lane.b32.xlu0 %v3773, 32
        %v3795 = vpop.permute.xlu0 %3794
        %3796 = vrot.lane.b32.xlu0 %v3774, 32
        %v3797 = vpop.permute.xlu0 %3796
        %3798 = vrot.lane.b32.xlu0 %v3775, 32
        %v3799 = vpop.permute.xlu0 %3798
        %3800 = vrot.lane.b32.xlu0 %v3776, 32
        %v3801 = vpop.permute.xlu0 %3800
        %3802 = vrot.lane.b32.xlu0 %v3777, 32
        %v3803 = vpop.permute.xlu0 %3802
        %3804 = vrot.lane.b32.xlu0 %v3778, 32
        %v3805 = vpop.permute.xlu0 %3804
        %3806 = vrot.lane.b32.xlu0 %v3779, 32
        %v3807 = vpop.permute.xlu0 %3806
        %3808 = vrot.lane.b32.xlu0 %v3780, 32
        %v3809 = vpop.permute.xlu0 %3808
        %3810 = vrot.lane.b32.xlu0 %v3781, 32
        %v3811 = vpop.permute.xlu0 %3810
        %3812 = vrot.lane.b32.xlu0 %v3782, 32
        %v3813 = vpop.permute.xlu0 %3812
        %3814 = vrot.lane.b32.xlu0 %v3783, 32
        %v3815 = vpop.permute.xlu0 %3814
        %v3818 = vsel %vm450, %v3128, %v3193
        %v3821 = vsel %vm450, %v3129, %v3195
        %v3824 = vsel %vm450, %v3130, %v3197
        %v3827 = vsel %vm450, %v3131, %v3199
        %v3830 = vsel %vm450, %v3132, %v3201
        %v3833 = vsel %vm450, %v3133, %v3203
        %v3836 = vsel %vm450, %v3134, %v3205
        %v3839 = vsel %vm450, %v3135, %v3207
        %v3842 = vsel %vm450, %v3136, %v3209
        %v3845 = vsel %vm450, %v3137, %v3211
        %v3848 = vsel %vm450, %v3138, %v3213
        %v3851 = vsel %vm450, %v3139, %v3215
        %v3854 = vsel %vm450, %v3140, %v3217
        %v3857 = vsel %vm450, %v3141, %v3219
        %v3860 = vsel %vm450, %v3142, %v3221
        %v3863 = vsel %vm450, %v3143, %v3223
        %vm3864 = vcmask 64512
        %v3866 = vsel %vm3864, %v3818, %v3273
        %v3868 = vsel %vm3864, %v3821, %v3275
        %v3870 = vsel %vm3864, %v3824, %v3277
        %v3872 = vsel %vm3864, %v3827, %v3279
        %v3874 = vsel %vm3864, %v3830, %v3281
        %v3876 = vsel %vm3864, %v3833, %v3283
        %v3878 = vsel %vm3864, %v3836, %v3285
        %v3880 = vsel %vm3864, %v3839, %v3287
        %v3882 = vsel %vm3864, %v3842, %v3289
        %v3884 = vsel %vm3864, %v3845, %v3291
        %v3886 = vsel %vm3864, %v3848, %v3293
        %v3888 = vsel %vm3864, %v3851, %v3295
        %v3890 = vsel %vm3864, %v3854, %v3297
        %v3892 = vsel %vm3864, %v3857, %v3299
        %v3894 = vsel %vm3864, %v3860, %v3301
        %v3896 = vsel %vm3864, %v3863, %v3303
        %vm3897 = vcmask 97280
        %v3899 = vsel %vm3897, %v3866, %v3369
        %v3901 = vsel %vm3897, %v3868, %v3371
        %v3903 = vsel %vm3897, %v3870, %v3373
        %v3905 = vsel %vm3897, %v3872, %v3375
        %v3907 = vsel %vm3897, %v3874, %v3377
        %v3909 = vsel %vm3897, %v3876, %v3379
        %v3911 = vsel %vm3897, %v3878, %v3381
        %v3913 = vsel %vm3897, %v3880, %v3383
        %v3915 = vsel %vm3897, %v3882, %v3385
        %v3917 = vsel %vm3897, %v3884, %v3387
        %v3919 = vsel %vm3897, %v3886, %v3389
        %v3921 = vsel %vm3897, %v3888, %v3391
        %v3923 = vsel %vm3897, %v3890, %v3393
        %v3925 = vsel %vm3897, %v3892, %v3395
        %v3927 = vsel %vm3897, %v3894, %v3397
        %v3929 = vsel %vm3897, %v3896, %v3399
        %vm3930 = vcmask 130048
        %v3932 = vsel %vm3930, %v3899, %v3449
        %v3934 = vsel %vm3930, %v3901, %v3451
        %v3936 = vsel %vm3930, %v3903, %v3453
        %v3938 = vsel %vm3930, %v3905, %v3455
        %v3940 = vsel %vm3930, %v3907, %v3457
        %v3942 = vsel %vm3930, %v3909, %v3459
        %v3944 = vsel %vm3930, %v3911, %v3461
        %v3946 = vsel %vm3930, %v3913, %v3463
        %v3948 = vsel %vm3930, %v3915, %v3465
        %v3950 = vsel %vm3930, %v3917, %v3467
        %v3952 = vsel %vm3930, %v3919, %v3469
        %v3954 = vsel %vm3930, %v3921, %v3471
        %v3956 = vsel %vm3930, %v3923, %v3473
        %v3958 = vsel %vm3930, %v3925, %v3475
        %v3960 = vsel %vm3930, %v3927, %v3477
        %v3962 = vsel %vm3930, %v3929, %v3479
        %vm3963 = vcmask 162816
        %v3965 = vsel %vm3963, %v3932, %v3529
        %v3967 = vsel %vm3963, %v3934, %v3531
        %v3969 = vsel %vm3963, %v3936, %v3533
        %v3971 = vsel %vm3963, %v3938, %v3535
        %v3973 = vsel %vm3963, %v3940, %v3537
        %v3975 = vsel %vm3963, %v3942, %v3539
        %v3977 = vsel %vm3963, %v3944, %v3541
        %v3979 = vsel %vm3963, %v3946, %v3543
        %v3981 = vsel %vm3963, %v3948, %v3545
        %v3983 = vsel %vm3963, %v3950, %v3547
        %v3985 = vsel %vm3963, %v3952, %v3549
        %v3987 = vsel %vm3963, %v3954, %v3551
        %v3989 = vsel %vm3963, %v3956, %v3553
        %v3991 = vsel %vm3963, %v3958, %v3555
        %v3993 = vsel %vm3963, %v3960, %v3557
        %v3995 = vsel %vm3963, %v3962, %v3559
        %vm3996 = vcmask 195584
        %v3998 = vsel %vm3996, %v3965, %v3625
        %v4000 = vsel %vm3996, %v3967, %v3627
        %v4002 = vsel %vm3996, %v3969, %v3629
        %v4004 = vsel %vm3996, %v3971, %v3631
        %v4006 = vsel %vm3996, %v3973, %v3633
        %v4008 = vsel %vm3996, %v3975, %v3635
        %v4010 = vsel %vm3996, %v3977, %v3637
        %v4012 = vsel %vm3996, %v3979, %v3639
        %v4014 = vsel %vm3996, %v3981, %v3641
        %v4016 = vsel %vm3996, %v3983, %v3643
        %v4018 = vsel %vm3996, %v3985, %v3645
        %v4020 = vsel %vm3996, %v3987, %v3647
        %v4022 = vsel %vm3996, %v3989, %v3649
        %v4024 = vsel %vm3996, %v3991, %v3651
        %v4026 = vsel %vm3996, %v3993, %v3653
        %v4028 = vsel %vm3996, %v3995, %v3655
        %vm4029 = vcmask 228352
        %v4031 = vsel %vm4029, %v3998, %v3705
        %v4033 = vsel %vm4029, %v4000, %v3707
        %v4035 = vsel %vm4029, %v4002, %v3709
        %v4037 = vsel %vm4029, %v4004, %v3711
        %v4039 = vsel %vm4029, %v4006, %v3713
        %v4041 = vsel %vm4029, %v4008, %v3715
        %v4043 = vsel %vm4029, %v4010, %v3717
        %v4045 = vsel %vm4029, %v4012, %v3719
        %v4047 = vsel %vm4029, %v4014, %v3721
        %v4049 = vsel %vm4029, %v4016, %v3723
        %v4051 = vsel %vm4029, %v4018, %v3725
        %v4053 = vsel %vm4029, %v4020, %v3727
        %v4055 = vsel %vm4029, %v4022, %v3729
        %v4057 = vsel %vm4029, %v4024, %v3731
        %v4059 = vsel %vm4029, %v4026, %v3733
        %v4061 = vsel %vm4029, %v4028, %v3735
        %vm4062 = vcmask 261120
        %v4064 = vsel %vm4062, %v4031, %v3785
        %v4066 = vsel %vm4062, %v4033, %v3787
        %v4068 = vsel %vm4062, %v4035, %v3789
        %v4070 = vsel %vm4062, %v4037, %v3791
        %v4072 = vsel %vm4062, %v4039, %v3793
        %v4074 = vsel %vm4062, %v4041, %v3795
        %v4076 = vsel %vm4062, %v4043, %v3797
        %v4078 = vsel %vm4062, %v4045, %v3799
        %v4080 = vsel %vm4062, %v4047, %v3801
        %v4082 = vsel %vm4062, %v4049, %v3803
        %v4084 = vsel %vm4062, %v4051, %v3805
        %v4086 = vsel %vm4062, %v4053, %v3807
        %v4088 = vsel %vm4062, %v4055, %v3809
        %v4090 = vsel %vm4062, %v4057, %v3811
        %v4092 = vsel %vm4062, %v4059, %v3813
        %v4094 = vsel %vm4062, %v4061, %v3815
        %v4095 = vld [vmem:[%s3] sm:$0xf]
        %v4096 = vld [vmem:[%s3 + $0x4] sm:$0xf]
        %v4097 = vld [vmem:[%s3 + $0x8] sm:$0xf]
        %v4098 = vld [vmem:[%s3 + $0xc] sm:$0xf]
        %v4099 = vld [vmem:[%s3 + $0x10] sm:$0x3]
        %v4100 = vld [vmem:[%s4] sm:$0x1]
        %v4102 = vperm.slane %v4100, 0
        %v4109 = vunpack.c.l.b16 %v4095
        %v4110 = vunpack.c.l.b16 %v4096
        %v4111 = vunpack.c.l.b16 %v4097
        %v4112 = vunpack.c.l.b16 %v4098
        %v4113 = vunpack.c.l.b16 %v4099
        %v4114 = vpack.c.b16 %v4110, %v4109
        %v4115 = vpack.c.b16 %v4112, %v4111
        %v4116 = vpack.c.b16 %v4113, %v4113
        %vm4119 = vcmask 293888
        %v4120 = vsel %vm4119, %v4064, 0
        %v4122 = vsel %vm4119, %v4066, 0
        %v4124 = vsel %vm4119, %v4068, 0
        %v4126 = vsel %vm4119, %v4070, 0
        %v4128 = vsel %vm4119, %v4072, 0
        %v4130 = vsel %vm4119, %v4074, 0
        %v4132 = vsel %vm4119, %v4076, 0
        %v4134 = vsel %vm4119, %v4078, 0
        %v4136 = vsel %vm4119, %v4080, 0
        %v4138 = vsel %vm4119, %v4082, 0
        %v4140 = vsel %vm4119, %v4084, 0
        %v4142 = vsel %vm4119, %v4086, 0
        %v4144 = vsel %vm4119, %v4088, 0
        %v4146 = vsel %vm4119, %v4090, 0
        %v4148 = vsel %vm4119, %v4092, 0
        %v4150 = vsel %vm4119, %v4094, 0
        %v4153 = vsel %vm499, %v4116, 0
        %4155 = vmatpush.bf16.msra.mxu0 0
        %4156 = vmatpush.bf16.msra.mxu0 0
        %4157 = vmatpush.bf16.msra.mxu0 0
        %4158 = vmatpush.bf16.msra.mxu0 0
        %4159 = vmatpush.bf16.msra.mxu0 0
        %4160 = vmatpush.bf16.msra.mxu0 %v4153
        %4161 = vmatpush.bf16.msra.mxu0 %v4115
        %4162 = vmatpush.bf16.msra.mxu0 %v4114
        %4163 = vmatmul.bf16.gmra.mxu0 %v4120
        %v4164 = vpop.f32.mrf.mxu0
        %v4165 = vadd.f32 %v4102, %v4164
        %v4166 = vpop.f32.mrf.mxu0
        %v4167 = vadd.f32 %v4102, %v4166
        %4168 = vmatmul.bf16.gmra.mxu0 %v4122
        %v4169 = vpop.f32.mrf.mxu0
        %v4170 = vadd.f32 %v4102, %v4169
        %v4171 = vpop.f32.mrf.mxu0
        %v4172 = vadd.f32 %v4102, %v4171
        %4173 = vmatmul.bf16.gmra.mxu0 %v4124
        %v4174 = vpop.f32.mrf.mxu0
        %v4175 = vadd.f32 %v4102, %v4174
        %v4176 = vpop.f32.mrf.mxu0
        %v4177 = vadd.f32 %v4102, %v4176
        %4178 = vmatmul.bf16.gmra.mxu0 %v4126
        %v4179 = vpop.f32.mrf.mxu0
        %v4180 = vadd.f32 %v4102, %v4179
        %v4181 = vpop.f32.mrf.mxu0
        %v4182 = vadd.f32 %v4102, %v4181
        %4183 = vmatmul.bf16.gmra.mxu0 %v4128
        %v4184 = vpop.f32.mrf.mxu0
        %v4185 = vadd.f32 %v4102, %v4184
        %v4186 = vpop.f32.mrf.mxu0
        %v4187 = vadd.f32 %v4102, %v4186
        %4188 = vmatmul.bf16.gmra.mxu0 %v4130
        %v4189 = vpop.f32.mrf.mxu0
        %v4190 = vadd.f32 %v4102, %v4189
        %v4191 = vpop.f32.mrf.mxu0
        %v4192 = vadd.f32 %v4102, %v4191
        %4193 = vmatmul.bf16.gmra.mxu0 %v4132
        %v4194 = vpop.f32.mrf.mxu0
        %v4195 = vadd.f32 %v4102, %v4194
        %v4196 = vpop.f32.mrf.mxu0
        %v4197 = vadd.f32 %v4102, %v4196
        %4198 = vmatmul.bf16.gmra.mxu0 %v4134
        %v4199 = vpop.f32.mrf.mxu0
        %v4200 = vadd.f32 %v4102, %v4199
        %v4201 = vpop.f32.mrf.mxu0
        %v4202 = vadd.f32 %v4102, %v4201
        %4203 = vmatmul.bf16.gmra.mxu0 %v4136
        %v4204 = vpop.f32.mrf.mxu0
        %v4205 = vadd.f32 %v4102, %v4204
        %v4206 = vpop.f32.mrf.mxu0
        %v4207 = vadd.f32 %v4102, %v4206
        %4208 = vmatmul.bf16.gmra.mxu0 %v4138
        %v4209 = vpop.f32.mrf.mxu0
        %v4210 = vadd.f32 %v4102, %v4209
        %v4211 = vpop.f32.mrf.mxu0
        %v4212 = vadd.f32 %v4102, %v4211
        %4213 = vmatmul.bf16.gmra.mxu0 %v4140
        %v4214 = vpop.f32.mrf.mxu0
        %v4215 = vadd.f32 %v4102, %v4214
        %v4216 = vpop.f32.mrf.mxu0
        %v4217 = vadd.f32 %v4102, %v4216
        %4218 = vmatmul.bf16.gmra.mxu0 %v4142
        %v4219 = vpop.f32.mrf.mxu0
        %v4220 = vadd.f32 %v4102, %v4219
        %v4221 = vpop.f32.mrf.mxu0
        %v4222 = vadd.f32 %v4102, %v4221
        %4223 = vmatmul.bf16.gmra.mxu0 %v4144
        %v4224 = vpop.f32.mrf.mxu0
        %v4225 = vadd.f32 %v4102, %v4224
        %v4226 = vpop.f32.mrf.mxu0
        %v4227 = vadd.f32 %v4102, %v4226
        %4228 = vmatmul.bf16.gmra.mxu0 %v4146
        %v4229 = vpop.f32.mrf.mxu0
        %v4230 = vadd.f32 %v4102, %v4229
        %v4231 = vpop.f32.mrf.mxu0
        %v4232 = vadd.f32 %v4102, %v4231
        %4233 = vmatmul.bf16.gmra.mxu0 %v4148
        %v4234 = vpop.f32.mrf.mxu0
        %v4235 = vadd.f32 %v4102, %v4234
        %v4236 = vpop.f32.mrf.mxu0
        %v4237 = vadd.f32 %v4102, %v4236
        %4238 = vmatmul.bf16.gmra.mxu0 %v4150
        %v4239 = vpop.f32.mrf.mxu0
        %v4240 = vadd.f32 %v4102, %v4239
        %v4241 = vpop.f32.mrf.mxu0
        %v4242 = vadd.f32 %v4102, %v4241
        %4243 = vdwg.mxu0
        %v4244 = vmax.f32 %v4165, 0.0
        %v4245 = vmax.f32 %v4167, 0.0
        %v4246 = vmax.f32 %v4170, 0.0
        %v4247 = vmax.f32 %v4172, 0.0
        %v4248 = vmax.f32 %v4175, 0.0
        %v4249 = vmax.f32 %v4177, 0.0
        %v4250 = vmax.f32 %v4180, 0.0
        %v4251 = vmax.f32 %v4182, 0.0
        %v4252 = vmax.f32 %v4185, 0.0
        %v4253 = vmax.f32 %v4187, 0.0
        %v4254 = vmax.f32 %v4190, 0.0
        %v4255 = vmax.f32 %v4192, 0.0
        %v4256 = vmax.f32 %v4195, 0.0
        %v4257 = vmax.f32 %v4197, 0.0
        %v4258 = vmax.f32 %v4200, 0.0
        %v4259 = vmax.f32 %v4202, 0.0
        %v4260 = vmax.f32 %v4205, 0.0
        %v4261 = vmax.f32 %v4207, 0.0
        %v4262 = vmax.f32 %v4210, 0.0
        %v4263 = vmax.f32 %v4212, 0.0
        %v4264 = vmax.f32 %v4215, 0.0
        %v4265 = vmax.f32 %v4217, 0.0
        %v4266 = vmax.f32 %v4220, 0.0
        %v4267 = vmax.f32 %v4222, 0.0
        %v4268 = vmax.f32 %v4225, 0.0
        %v4269 = vmax.f32 %v4227, 0.0
        %v4270 = vmax.f32 %v4230, 0.0
        %v4271 = vmax.f32 %v4232, 0.0
        %v4272 = vmax.f32 %v4235, 0.0
        %v4273 = vmax.f32 %v4237, 0.0
        %v4274 = vmax.f32 %v4240, 0.0
        %v4275 = vmax.f32 %v4242, 0.0
        %4276 = vst.msk [vmem:[#allocation3] sm:$0xf] %vm624, 0
        %4277 = vst.msk [vmem:[#allocation3 + $0x4] sm:$0xf] %vm624, 0
        %4278 = vst.msk [vmem:[#allocation3 + $0x8] sm:$0x1] %vm627, 0
        %4279 = vst.msk [vmem:[#allocation3 + $0xc] sm:$0xf] %vm624, 0
        %4280 = vst.msk [vmem:[#allocation3 + $0x10] sm:$0xf] %vm624, 0
        %4281 = vst.msk [vmem:[#allocation3 + $0x14] sm:$0x1] %vm627, 0
        %4282 = vst.msk [vmem:[#allocation3 + $0x18] sm:$0xf] %vm624, 0
        %4283 = vst.msk [vmem:[#allocation3 + $0x1c] sm:$0xf] %vm624, 0
        %4284 = vst.msk [vmem:[#allocation3 + $0x20] sm:$0x1] %vm627, 0
        %4285 = vst.msk [vmem:[#allocation3 + $0x24] sm:$0xf] %vm624, 0
        %4286 = vst.msk [vmem:[#allocation3 + $0x28] sm:$0xf] %vm624, 0
        %4287 = vst.msk [vmem:[#allocation3 + $0x2c] sm:$0x1] %vm627, 0
        %4288 = vst.msk [vmem:[#allocation3 + $0x30] sm:$0xf] %vm624, 0
        %4289 = vst.msk [vmem:[#allocation3 + $0x34] sm:$0xf] %vm624, 0
        %4290 = vst.msk [vmem:[#allocation3 + $0x38] sm:$0x1] %vm627, 0
        %4291 = vst.msk [vmem:[#allocation3 + $0x3c] sm:$0xf] %vm624, 0
        %4292 = vst.msk [vmem:[#allocation3 + $0x40] sm:$0xf] %vm624, 0
        %4293 = vst.msk [vmem:[#allocation3 + $0x44] sm:$0x1] %vm627, 0
        %4294 = vst.msk [vmem:[#allocation3 + $0x48] sm:$0xf] %vm624, 0
        %4295 = vst.msk [vmem:[#allocation3 + $0x4c] sm:$0xf] %vm624, 0
        %4296 = vst.msk [vmem:[#allocation3 + $0x50] sm:$0x1] %vm627, 0
        %4297 = vst.msk [vmem:[#allocation3 + $0x54] sm:$0xf] %vm624, 0
        %4298 = vst.msk [vmem:[#allocation3 + $0x58] sm:$0xf] %vm624, 0
        %4299 = vst.msk [vmem:[#allocation3 + $0x5c] sm:$0x1] %vm627, 0
        %4300 = vst.msk [vmem:[#allocation3 + $0x60] sm:$0xf] %vm624, 0
        %4301 = vst.msk [vmem:[#allocation3 + $0x64] sm:$0xf] %vm624, 0
        %4302 = vst.msk [vmem:[#allocation3 + $0x68] sm:$0x1] %vm627, 0
        %4303 = vst.msk [vmem:[#allocation3 + $0x6c] sm:$0xf] %vm624, 0
        %4304 = vst.msk [vmem:[#allocation3 + $0x70] sm:$0xf] %vm624, 0
        %4305 = vst.msk [vmem:[#allocation3 + $0x74] sm:$0x1] %vm627, 0
        %4306 = vst.msk [vmem:[#allocation3 + $0x78] sm:$0xf] %vm624, 0
        %4307 = vst.msk [vmem:[#allocation3 + $0x7c] sm:$0xf] %vm624, 0
        %4308 = vst.msk [vmem:[#allocation3 + $0x80] sm:$0x1] %vm627, 0
        %4309 = vst.msk [vmem:[#allocation3 + $0x84] sm:$0xf] %vm624, 0
        %4310 = vst.msk [vmem:[#allocation3 + $0x88] sm:$0xf] %vm624, 0
        %4311 = vst.msk [vmem:[#allocation3 + $0x8c] sm:$0x1] %vm627, 0
        %4312 = vst.msk [vmem:[#allocation3 + $0x90] sm:$0xf] %vm624, 0
        %4313 = vst.msk [vmem:[#allocation3 + $0x94] sm:$0xf] %vm624, 0
        %4314 = vst.msk [vmem:[#allocation3 + $0x98] sm:$0x1] %vm627, 0
        %4315 = vst.msk [vmem:[#allocation3 + $0x9c] sm:$0xf] %vm624, 0
        %4316 = vst.msk [vmem:[#allocation3 + $0xa0] sm:$0xf] %vm624, 0
        %4317 = vst.msk [vmem:[#allocation3 + $0xa4] sm:$0x1] %vm627, 0
        %4318 = vst.msk [vmem:[#allocation3 + $0xa8] sm:$0xf] %vm624, 0
        %4319 = vst.msk [vmem:[#allocation3 + $0xac] sm:$0xf] %vm624, 0
        %4320 = vst.msk [vmem:[#allocation3 + $0xb0] sm:$0x1] %vm627, 0
        %4321 = vst.msk [vmem:[#allocation3 + $0xb4] sm:$0xf] %vm624, 0
        %4322 = vst.msk [vmem:[#allocation3 + $0xb8] sm:$0xf] %vm624, 0
        %4323 = vst.msk [vmem:[#allocation3 + $0xbc] sm:$0x1] %vm627, 0
        %4324 = vst.msk [vmem:[#allocation3 + $0xc0] sm:$0xf] %vm624, 0
        %4325 = vst.msk [vmem:[#allocation3 + $0xc4] sm:$0xf] %vm624, 0
        %4326 = vst.msk [vmem:[#allocation3 + $0xc8] sm:$0x1] %vm627, 0
        %4327 = vst.msk [vmem:[#allocation3 + $0xcc] sm:$0xf] %vm624, 0
        %4328 = vst.msk [vmem:[#allocation3 + $0xd0] sm:$0xf] %vm624, 0
        %4329 = vst.msk [vmem:[#allocation3 + $0xd4] sm:$0x1] %vm627, 0
        %4330 = vrot.lane.b32.xlu0 %v721, 116
        %v4331 = vpop.permute.xlu0 %4330
        %4332 = vrot.lane.b32.xlu0 %v730, 116
        %v4333 = vpop.permute.xlu0 %4332
        %4334 = vrot.lane.b32.xlu0 %v731, 116
        %v4335 = vpop.permute.xlu0 %4334
        %4336 = vrot.lane.b32.xlu0 %v738, 116
        %v4337 = vpop.permute.xlu0 %4336
        %4338 = vrot.lane.b32.xlu0 %v747, 116
        %v4339 = vpop.permute.xlu0 %4338
        %4340 = vrot.lane.b32.xlu0 %v748, 116
        %v4341 = vpop.permute.xlu0 %4340
        %4342 = vrot.lane.b32.xlu0 %v755, 116
        %v4343 = vpop.permute.xlu0 %4342
        %4344 = vrot.lane.b32.xlu0 %v764, 116
        %v4345 = vpop.permute.xlu0 %4344
        %4346 = vrot.lane.b32.xlu0 %v765, 116
        %v4347 = vpop.permute.xlu0 %4346
        %4348 = vrot.lane.b32.xlu0 %v772, 116
        %v4349 = vpop.permute.xlu0 %4348
        %4350 = vrot.lane.b32.xlu0 %v781, 116
        %v4351 = vpop.permute.xlu0 %4350
        %4352 = vrot.lane.b32.xlu0 %v782, 116
        %v4353 = vpop.permute.xlu0 %4352
        %4354 = vrot.lane.b32.xlu0 %v789, 116
        %v4355 = vpop.permute.xlu0 %4354
        %4356 = vrot.lane.b32.xlu0 %v798, 116
        %v4357 = vpop.permute.xlu0 %4356
        %4358 = vrot.lane.b32.xlu0 %v799, 116
        %v4359 = vpop.permute.xlu0 %4358
        %4360 = vrot.lane.b32.xlu0 %v806, 116
        %v4361 = vpop.permute.xlu0 %4360
        %4362 = vrot.lane.b32.xlu0 %v815, 116
        %v4363 = vpop.permute.xlu0 %4362
        %4364 = vrot.lane.b32.xlu0 %v816, 116
        %v4365 = vpop.permute.xlu0 %4364
        %4366 = vrot.lane.b32.xlu0 %v823, 116
        %v4367 = vpop.permute.xlu0 %4366
        %4368 = vrot.lane.b32.xlu0 %v832, 116
        %v4369 = vpop.permute.xlu0 %4368
        %4370 = vrot.lane.b32.xlu0 %v833, 116
        %v4371 = vpop.permute.xlu0 %4370
        %4372 = vrot.lane.b32.xlu0 %v840, 116
        %v4373 = vpop.permute.xlu0 %4372
        %4374 = vrot.lane.b32.xlu0 %v849, 116
        %v4375 = vpop.permute.xlu0 %4374
        %4376 = vrot.lane.b32.xlu0 %v850, 116
        %v4377 = vpop.permute.xlu0 %4376
        %4378 = vrot.lane.b32.xlu0 %v857, 116
        %v4379 = vpop.permute.xlu0 %4378
        %4380 = vrot.lane.b32.xlu0 %v866, 116
        %v4381 = vpop.permute.xlu0 %4380
        %4382 = vrot.lane.b32.xlu0 %v867, 116
        %v4383 = vpop.permute.xlu0 %4382
        %4384 = vrot.lane.b32.xlu0 %v874, 116
        %v4385 = vpop.permute.xlu0 %4384
        %4386 = vrot.lane.b32.xlu0 %v883, 116
        %v4387 = vpop.permute.xlu0 %4386
        %4388 = vrot.lane.b32.xlu0 %v884, 116
        %v4389 = vpop.permute.xlu0 %4388
        %4390 = vrot.lane.b32.xlu0 %v891, 116
        %v4391 = vpop.permute.xlu0 %4390
        %4392 = vrot.lane.b32.xlu0 %v900, 116
        %v4393 = vpop.permute.xlu0 %4392
        %4394 = vrot.lane.b32.xlu0 %v901, 116
        %v4395 = vpop.permute.xlu0 %4394
        %4396 = vrot.lane.b32.xlu0 %v908, 116
        %v4397 = vpop.permute.xlu0 %4396
        %4398 = vrot.lane.b32.xlu0 %v917, 116
        %v4399 = vpop.permute.xlu0 %4398
        %4400 = vrot.lane.b32.xlu0 %v918, 116
        %v4401 = vpop.permute.xlu0 %4400
        %4402 = vrot.lane.b32.xlu0 %v925, 116
        %v4403 = vpop.permute.xlu0 %4402
        %4404 = vrot.lane.b32.xlu0 %v934, 116
        %v4405 = vpop.permute.xlu0 %4404
        %4406 = vrot.lane.b32.xlu0 %v935, 116
        %v4407 = vpop.permute.xlu0 %4406
        %4408 = vrot.lane.b32.xlu0 %v942, 116
        %v4409 = vpop.permute.xlu0 %4408
        %4410 = vrot.lane.b32.xlu0 %v951, 116
        %v4411 = vpop.permute.xlu0 %4410
        %4412 = vrot.lane.b32.xlu0 %v952, 116
        %v4413 = vpop.permute.xlu0 %4412
        %4414 = vrot.lane.b32.xlu0 %v959, 116
        %v4415 = vpop.permute.xlu0 %4414
        %4416 = vrot.lane.b32.xlu0 %v968, 116
        %v4417 = vpop.permute.xlu0 %4416
        %4418 = vrot.lane.b32.xlu0 %v969, 116
        %v4419 = vpop.permute.xlu0 %4418
        %4420 = vrot.lane.b32.xlu0 %v976, 116
        %v4421 = vpop.permute.xlu0 %4420
        %4422 = vrot.lane.b32.xlu0 %v985, 116
        %v4423 = vpop.permute.xlu0 %4422
        %4424 = vrot.lane.b32.xlu0 %v986, 116
        %v4425 = vpop.permute.xlu0 %4424
        %s4474 = scalar_lea.vmem [#allocation3], 12
        %v4475 = vld [vmem:[%s4474] sm:$0xf]
        %v4476 = vsel %vm1134, %v4331, %v4475
        %4477 = vst [vmem:[%s4474] sm:$0xf] %v4476
        %4478 = vst.msk [vmem:[%s4474 + $0x4] sm:$0xf] %vm624, %v4333
        %v4479 = vld [vmem:[%s4474 + $0x8] sm:$0x1]
        %v4480 = vsel %vm1140, %v4335, %v4479
        %4481 = vst [vmem:[%s4474 + $0x8] sm:$0x1] %v4480
        %v4482 = vld [vmem:[%s4474 + $0xc] sm:$0xf]
        %v4483 = vsel %vm1134, %v4337, %v4482
        %4484 = vst [vmem:[%s4474 + $0xc] sm:$0xf] %v4483
        %4485 = vst.msk [vmem:[%s4474 + $0x10] sm:$0xf] %vm624, %v4339
        %v4486 = vld [vmem:[%s4474 + $0x14] sm:$0x1]
        %v4487 = vsel %vm1140, %v4341, %v4486
        %4488 = vst [vmem:[%s4474 + $0x14] sm:$0x1] %v4487
        %v4489 = vld [vmem:[%s4474 + $0x18] sm:$0xf]
        %v4490 = vsel %vm1134, %v4343, %v4489
        %4491 = vst [vmem:[%s4474 + $0x18] sm:$0xf] %v4490
        %4492 = vst.msk [vmem:[%s4474 + $0x1c] sm:$0xf] %vm624, %v4345
        %v4493 = vld [vmem:[%s4474 + $0x20] sm:$0x1]
        %v4494 = vsel %vm1140, %v4347, %v4493
        %4495 = vst [vmem:[%s4474 + $0x20] sm:$0x1] %v4494
        %v4496 = vld [vmem:[%s4474 + $0x24] sm:$0xf]
        %v4497 = vsel %vm1134, %v4349, %v4496
        %4498 = vst [vmem:[%s4474 + $0x24] sm:$0xf] %v4497
        %4499 = vst.msk [vmem:[%s4474 + $0x28] sm:$0xf] %vm624, %v4351
        %v4500 = vld [vmem:[%s4474 + $0x2c] sm:$0x1]
        %v4501 = vsel %vm1140, %v4353, %v4500
        %4502 = vst [vmem:[%s4474 + $0x2c] sm:$0x1] %v4501
        %v4503 = vld [vmem:[%s4474 + $0x30] sm:$0xf]
        %v4504 = vsel %vm1134, %v4355, %v4503
        %4505 = vst [vmem:[%s4474 + $0x30] sm:$0xf] %v4504
        %4506 = vst.msk [vmem:[%s4474 + $0x34] sm:$0xf] %vm624, %v4357
        %v4507 = vld [vmem:[%s4474 + $0x38] sm:$0x1]
        %v4508 = vsel %vm1140, %v4359, %v4507
        %4509 = vst [vmem:[%s4474 + $0x38] sm:$0x1] %v4508
        %v4510 = vld [vmem:[%s4474 + $0x3c] sm:$0xf]
        %v4511 = vsel %vm1134, %v4361, %v4510
        %4512 = vst [vmem:[%s4474 + $0x3c] sm:$0xf] %v4511
        %4513 = vst.msk [vmem:[%s4474 + $0x40] sm:$0xf] %vm624, %v4363
        %v4514 = vld [vmem:[%s4474 + $0x44] sm:$0x1]
        %v4515 = vsel %vm1140, %v4365, %v4514
        %4516 = vst [vmem:[%s4474 + $0x44] sm:$0x1] %v4515
        %v4517 = vld [vmem:[%s4474 + $0x48] sm:$0xf]
        %v4518 = vsel %vm1134, %v4367, %v4517
        %4519 = vst [vmem:[%s4474 + $0x48] sm:$0xf] %v4518
        %4520 = vst.msk [vmem:[%s4474 + $0x4c] sm:$0xf] %vm624, %v4369
        %v4521 = vld [vmem:[%s4474 + $0x50] sm:$0x1]
        %v4522 = vsel %vm1140, %v4371, %v4521
        %4523 = vst [vmem:[%s4474 + $0x50] sm:$0x1] %v4522
        %v4524 = vld [vmem:[%s4474 + $0x54] sm:$0xf]
        %v4525 = vsel %vm1134, %v4373, %v4524
        %4526 = vst [vmem:[%s4474 + $0x54] sm:$0xf] %v4525
        %4527 = vst.msk [vmem:[%s4474 + $0x58] sm:$0xf] %vm624, %v4375
        %v4528 = vld [vmem:[%s4474 + $0x5c] sm:$0x1]
        %v4529 = vsel %vm1140, %v4377, %v4528
        %4530 = vst [vmem:[%s4474 + $0x5c] sm:$0x1] %v4529
        %v4531 = vld [vmem:[%s4474 + $0x60] sm:$0xf]
        %v4532 = vsel %vm1134, %v4379, %v4531
        %4533 = vst [vmem:[%s4474 + $0x60] sm:$0xf] %v4532
        %4534 = vst.msk [vmem:[%s4474 + $0x64] sm:$0xf] %vm624, %v4381
        %v4535 = vld [vmem:[%s4474 + $0x68] sm:$0x1]
        %v4536 = vsel %vm1140, %v4383, %v4535
        %4537 = vst [vmem:[%s4474 + $0x68] sm:$0x1] %v4536
        %v4538 = vld [vmem:[%s4474 + $0x6c] sm:$0xf]
        %v4539 = vsel %vm1134, %v4385, %v4538
        %4540 = vst [vmem:[%s4474 + $0x6c] sm:$0xf] %v4539
        %4541 = vst.msk [vmem:[%s4474 + $0x70] sm:$0xf] %vm624, %v4387
        %v4542 = vld [vmem:[%s4474 + $0x74] sm:$0x1]
        %v4543 = vsel %vm1140, %v4389, %v4542
        %4544 = vst [vmem:[%s4474 + $0x74] sm:$0x1] %v4543
        %v4545 = vld [vmem:[%s4474 + $0x78] sm:$0xf]
        %v4546 = vsel %vm1134, %v4391, %v4545
        %4547 = vst [vmem:[%s4474 + $0x78] sm:$0xf] %v4546
        %4548 = vst.msk [vmem:[%s4474 + $0x7c] sm:$0xf] %vm624, %v4393
        %v4549 = vld [vmem:[%s4474 + $0x80] sm:$0x1]
        %v4550 = vsel %vm1140, %v4395, %v4549
        %4551 = vst [vmem:[%s4474 + $0x80] sm:$0x1] %v4550
        %v4552 = vld [vmem:[%s4474 + $0x84] sm:$0xf]
        %v4553 = vsel %vm1134, %v4397, %v4552
        %4554 = vst [vmem:[%s4474 + $0x84] sm:$0xf] %v4553
        %4555 = vst.msk [vmem:[%s4474 + $0x88] sm:$0xf] %vm624, %v4399
        %v4556 = vld [vmem:[%s4474 + $0x8c] sm:$0x1]
        %v4557 = vsel %vm1140, %v4401, %v4556
        %4558 = vst [vmem:[%s4474 + $0x8c] sm:$0x1] %v4557
        %v4559 = vld [vmem:[%s4474 + $0x90] sm:$0xf]
        %v4560 = vsel %vm1134, %v4403, %v4559
        %4561 = vst [vmem:[%s4474 + $0x90] sm:$0xf] %v4560
        %4562 = vst.msk [vmem:[%s4474 + $0x94] sm:$0xf] %vm624, %v4405
        %v4563 = vld [vmem:[%s4474 + $0x98] sm:$0x1]
        %v4564 = vsel %vm1140, %v4407, %v4563
        %4565 = vst [vmem:[%s4474 + $0x98] sm:$0x1] %v4564
        %v4566 = vld [vmem:[%s4474 + $0x9c] sm:$0xf]
        %v4567 = vsel %vm1134, %v4409, %v4566
        %4568 = vst [vmem:[%s4474 + $0x9c] sm:$0xf] %v4567
        %4569 = vst.msk [vmem:[%s4474 + $0xa0] sm:$0xf] %vm624, %v4411
        %v4570 = vld [vmem:[%s4474 + $0xa4] sm:$0x1]
        %v4571 = vsel %vm1140, %v4413, %v4570
        %4572 = vst [vmem:[%s4474 + $0xa4] sm:$0x1] %v4571
        %v4573 = vld [vmem:[%s4474 + $0xa8] sm:$0xf]
        %v4574 = vsel %vm1134, %v4415, %v4573
        %4575 = vst [vmem:[%s4474 + $0xa8] sm:$0xf] %v4574
        %4576 = vst.msk [vmem:[%s4474 + $0xac] sm:$0xf] %vm624, %v4417
        %v4577 = vld [vmem:[%s4474 + $0xb0] sm:$0x1]
        %v4578 = vsel %vm1140, %v4419, %v4577
        %4579 = vst [vmem:[%s4474 + $0xb0] sm:$0x1] %v4578
        %v4580 = vld [vmem:[%s4474 + $0xb4] sm:$0xf]
        %v4581 = vsel %vm1134, %v4421, %v4580
        %4582 = vst [vmem:[%s4474 + $0xb4] sm:$0xf] %v4581
        %4583 = vst.msk [vmem:[%s4474 + $0xb8] sm:$0xf] %vm624, %v4423
        %v4584 = vld [vmem:[%s4474 + $0xbc] sm:$0x1]
        %v4585 = vsel %vm1140, %v4425, %v4584
        %4586 = vst [vmem:[%s4474 + $0xbc] sm:$0x1] %v4585
        %v4587 = vld [vmem:[#allocation3] sm:$0xf]
        %v4588 = vld [vmem:[#allocation3 + $0x4] sm:$0xf]
        %v4589 = vld [vmem:[#allocation3 + $0xc] sm:$0xf]
        %v4590 = vld [vmem:[#allocation3 + $0x10] sm:$0xf]
        %v4591 = vld [vmem:[#allocation3 + $0x18] sm:$0xf]
        %v4592 = vld [vmem:[#allocation3 + $0x1c] sm:$0xf]
        %v4593 = vld [vmem:[#allocation3 + $0x24] sm:$0xf]
        %v4594 = vld [vmem:[#allocation3 + $0x28] sm:$0xf]
        %v4595 = vld [vmem:[#allocation3 + $0x30] sm:$0xf]
        %v4596 = vld [vmem:[#allocation3 + $0x34] sm:$0xf]
        %v4597 = vld [vmem:[#allocation3 + $0x3c] sm:$0xf]
        %v4598 = vld [vmem:[#allocation3 + $0x40] sm:$0xf]
        %v4599 = vld [vmem:[#allocation3 + $0x48] sm:$0xf]
        %v4600 = vld [vmem:[#allocation3 + $0x4c] sm:$0xf]
        %v4601 = vld [vmem:[#allocation3 + $0x54] sm:$0xf]
        %v4602 = vld [vmem:[#allocation3 + $0x58] sm:$0xf]
        %v4603 = vld [vmem:[#allocation3 + $0x60] sm:$0xf]
        %v4604 = vld [vmem:[#allocation3 + $0x64] sm:$0xf]
        %v4605 = vld [vmem:[#allocation3 + $0x6c] sm:$0xf]
        %v4606 = vld [vmem:[#allocation3 + $0x70] sm:$0xf]
        %v4607 = vld [vmem:[#allocation3 + $0x78] sm:$0xf]
        %v4608 = vld [vmem:[#allocation3 + $0x7c] sm:$0xf]
        %v4609 = vld [vmem:[#allocation3 + $0x84] sm:$0xf]
        %v4610 = vld [vmem:[#allocation3 + $0x88] sm:$0xf]
        %v4611 = vld [vmem:[#allocation3 + $0x90] sm:$0xf]
        %v4612 = vld [vmem:[#allocation3 + $0x94] sm:$0xf]
        %v4613 = vld [vmem:[#allocation3 + $0x9c] sm:$0xf]
        %v4614 = vld [vmem:[#allocation3 + $0xa0] sm:$0xf]
        %v4615 = vld [vmem:[#allocation3 + $0xa8] sm:$0xf]
        %v4616 = vld [vmem:[#allocation3 + $0xac] sm:$0xf]
        %v4617 = vld [vmem:[#allocation3 + $0xb4] sm:$0xf]
        %v4618 = vld [vmem:[#allocation3 + $0xb8] sm:$0xf]
        %v4619 = vld [vmem:[#allocation3 + $0x8] sm:$0x1]
        %v4620 = vld [vmem:[#allocation3 + $0x14] sm:$0x1]
        %v4621 = vld [vmem:[#allocation3 + $0x20] sm:$0x1]
        %v4622 = vld [vmem:[#allocation3 + $0x2c] sm:$0x1]
        %v4623 = vld [vmem:[#allocation3 + $0x38] sm:$0x1]
        %v4624 = vld [vmem:[#allocation3 + $0x44] sm:$0x1]
        %v4625 = vld [vmem:[#allocation3 + $0x50] sm:$0x1]
        %v4626 = vld [vmem:[#allocation3 + $0x5c] sm:$0x1]
        %v4627 = vld [vmem:[#allocation3 + $0x68] sm:$0x1]
        %v4628 = vld [vmem:[#allocation3 + $0x74] sm:$0x1]
        %v4629 = vld [vmem:[#allocation3 + $0x80] sm:$0x1]
        %v4630 = vld [vmem:[#allocation3 + $0x8c] sm:$0x1]
        %v4631 = vld [vmem:[#allocation3 + $0x98] sm:$0x1]
        %v4632 = vld [vmem:[#allocation3 + $0xa4] sm:$0x1]
        %v4633 = vld [vmem:[#allocation3 + $0xb0] sm:$0x1]
        %v4634 = vld [vmem:[#allocation3 + $0xbc] sm:$0x1]
        %v4636 = vshrl.u32 %v4587, 16
        %v4638 = vrot.slane %v4636, 4
        %v4639 = vshll.u32 %v4587, 16
        %v4641 = vrot.slane %v4639, 5
        %v4642 = vor.u32 %v4638, %v4641
        %v4643 = vrot.slane %v4642, 4
        %v4645 = vshll.u32 %v4588, 16
        %v4647 = vrot.slane %v4645, 5
        %v4648 = vsel %vm1299, %v4643, %v4647
        %v4649 = vshrl.u32 %v4588, 16
        %v4651 = vrot.slane %v4649, 4
        %v4652 = vor.u32 %v4651, %v4647
        %v4653 = vrot.slane %v4652, 4
        %v4655 = vshll.u32 %v4619, 16
        %v4657 = vrot.slane %v4655, 5
        %v4658 = vsel %vm1299, %v4653, %v4657
        %v4660 = vshrl.u32 %v4589, 16
        %v4662 = vrot.slane %v4660, 4
        %v4663 = vshll.u32 %v4589, 16
        %v4665 = vrot.slane %v4663, 5
        %v4666 = vor.u32 %v4662, %v4665
        %v4667 = vrot.slane %v4666, 4
        %v4669 = vshll.u32 %v4590, 16
        %v4671 = vrot.slane %v4669, 5
        %v4672 = vsel %vm1299, %v4667, %v4671
        %v4673 = vshrl.u32 %v4590, 16
        %v4675 = vrot.slane %v4673, 4
        %v4676 = vor.u32 %v4675, %v4671
        %v4677 = vrot.slane %v4676, 4
        %v4679 = vshll.u32 %v4620, 16
        %v4681 = vrot.slane %v4679, 5
        %v4682 = vsel %vm1299, %v4677, %v4681
        %v4684 = vshrl.u32 %v4591, 16
        %v4686 = vrot.slane %v4684, 4
        %v4687 = vshll.u32 %v4591, 16
        %v4689 = vrot.slane %v4687, 5
        %v4690 = vor.u32 %v4686, %v4689
        %v4691 = vrot.slane %v4690, 4
        %v4693 = vshll.u32 %v4592, 16
        %v4695 = vrot.slane %v4693, 5
        %v4696 = vsel %vm1299, %v4691, %v4695
        %v4697 = vshrl.u32 %v4592, 16
        %v4699 = vrot.slane %v4697, 4
        %v4700 = vor.u32 %v4699, %v4695
        %v4701 = vrot.slane %v4700, 4
        %v4703 = vshll.u32 %v4621, 16
        %v4705 = vrot.slane %v4703, 5
        %v4706 = vsel %vm1299, %v4701, %v4705
        %v4708 = vshrl.u32 %v4593, 16
        %v4710 = vrot.slane %v4708, 4
        %v4711 = vshll.u32 %v4593, 16
        %v4713 = vrot.slane %v4711, 5
        %v4714 = vor.u32 %v4710, %v4713
        %v4715 = vrot.slane %v4714, 4
        %v4717 = vshll.u32 %v4594, 16
        %v4719 = vrot.slane %v4717, 5
        %v4720 = vsel %vm1299, %v4715, %v4719
        %v4721 = vshrl.u32 %v4594, 16
        %v4723 = vrot.slane %v4721, 4
        %v4724 = vor.u32 %v4723, %v4719
        %v4725 = vrot.slane %v4724, 4
        %v4727 = vshll.u32 %v4622, 16
        %v4729 = vrot.slane %v4727, 5
        %v4730 = vsel %vm1299, %v4725, %v4729
        %v4732 = vshrl.u32 %v4595, 16
        %v4734 = vrot.slane %v4732, 4
        %v4735 = vshll.u32 %v4595, 16
        %v4737 = vrot.slane %v4735, 5
        %v4738 = vor.u32 %v4734, %v4737
        %v4739 = vrot.slane %v4738, 4
        %v4741 = vshll.u32 %v4596, 16
        %v4743 = vrot.slane %v4741, 5
        %v4744 = vsel %vm1299, %v4739, %v4743
        %v4745 = vshrl.u32 %v4596, 16
        %v4747 = vrot.slane %v4745, 4
        %v4748 = vor.u32 %v4747, %v4743
        %v4749 = vrot.slane %v4748, 4
        %v4751 = vshll.u32 %v4623, 16
        %v4753 = vrot.slane %v4751, 5
        %v4754 = vsel %vm1299, %v4749, %v4753
        %v4756 = vshrl.u32 %v4597, 16
        %v4758 = vrot.slane %v4756, 4
        %v4759 = vshll.u32 %v4597, 16
        %v4761 = vrot.slane %v4759, 5
        %v4762 = vor.u32 %v4758, %v4761
        %v4763 = vrot.slane %v4762, 4
        %v4765 = vshll.u32 %v4598, 16
        %v4767 = vrot.slane %v4765, 5
        %v4768 = vsel %vm1299, %v4763, %v4767
        %v4769 = vshrl.u32 %v4598, 16
        %v4771 = vrot.slane %v4769, 4
        %v4772 = vor.u32 %v4771, %v4767
        %v4773 = vrot.slane %v4772, 4
        %v4775 = vshll.u32 %v4624, 16
        %v4777 = vrot.slane %v4775, 5
        %v4778 = vsel %vm1299, %v4773, %v4777
        %v4780 = vshrl.u32 %v4599, 16
        %v4782 = vrot.slane %v4780, 4
        %v4783 = vshll.u32 %v4599, 16
        %v4785 = vrot.slane %v4783, 5
        %v4786 = vor.u32 %v4782, %v4785
        %v4787 = vrot.slane %v4786, 4
        %v4789 = vshll.u32 %v4600, 16
        %v4791 = vrot.slane %v4789, 5
        %v4792 = vsel %vm1299, %v4787, %v4791
        %v4793 = vshrl.u32 %v4600, 16
        %v4795 = vrot.slane %v4793, 4
        %v4796 = vor.u32 %v4795, %v4791
        %v4797 = vrot.slane %v4796, 4
        %v4799 = vshll.u32 %v4625, 16
        %v4801 = vrot.slane %v4799, 5
        %v4802 = vsel %vm1299, %v4797, %v4801
        %v4804 = vshrl.u32 %v4601, 16
        %v4806 = vrot.slane %v4804, 4
        %v4807 = vshll.u32 %v4601, 16
        %v4809 = vrot.slane %v4807, 5
        %v4810 = vor.u32 %v4806, %v4809
        %v4811 = vrot.slane %v4810, 4
        %v4813 = vshll.u32 %v4602, 16
        %v4815 = vrot.slane %v4813, 5
        %v4816 = vsel %vm1299, %v4811, %v4815
        %v4817 = vshrl.u32 %v4602, 16
        %v4819 = vrot.slane %v4817, 4
        %v4820 = vor.u32 %v4819, %v4815
        %v4821 = vrot.slane %v4820, 4
        %v4823 = vshll.u32 %v4626, 16
        %v4825 = vrot.slane %v4823, 5
        %v4826 = vsel %vm1299, %v4821, %v4825
        %v4828 = vshrl.u32 %v4603, 16
        %v4830 = vrot.slane %v4828, 4
        %v4831 = vshll.u32 %v4603, 16
        %v4833 = vrot.slane %v4831, 5
        %v4834 = vor.u32 %v4830, %v4833
        %v4835 = vrot.slane %v4834, 4
        %v4837 = vshll.u32 %v4604, 16
        %v4839 = vrot.slane %v4837, 5
        %v4840 = vsel %vm1299, %v4835, %v4839
        %v4841 = vshrl.u32 %v4604, 16
        %v4843 = vrot.slane %v4841, 4
        %v4844 = vor.u32 %v4843, %v4839
        %v4845 = vrot.slane %v4844, 4
        %v4847 = vshll.u32 %v4627, 16
        %v4849 = vrot.slane %v4847, 5
        %v4850 = vsel %vm1299, %v4845, %v4849
        %v4852 = vshrl.u32 %v4605, 16
        %v4854 = vrot.slane %v4852, 4
        %v4855 = vshll.u32 %v4605, 16
        %v4857 = vrot.slane %v4855, 5
        %v4858 = vor.u32 %v4854, %v4857
        %v4859 = vrot.slane %v4858, 4
        %v4861 = vshll.u32 %v4606, 16
        %v4863 = vrot.slane %v4861, 5
        %v4864 = vsel %vm1299, %v4859, %v4863
        %v4865 = vshrl.u32 %v4606, 16
        %v4867 = vrot.slane %v4865, 4
        %v4868 = vor.u32 %v4867, %v4863
        %v4869 = vrot.slane %v4868, 4
        %v4871 = vshll.u32 %v4628, 16
        %v4873 = vrot.slane %v4871, 5
        %v4874 = vsel %vm1299, %v4869, %v4873
        %v4876 = vshrl.u32 %v4607, 16
        %v4878 = vrot.slane %v4876, 4
        %v4879 = vshll.u32 %v4607, 16
        %v4881 = vrot.slane %v4879, 5
        %v4882 = vor.u32 %v4878, %v4881
        %v4883 = vrot.slane %v4882, 4
        %v4885 = vshll.u32 %v4608, 16
        %v4887 = vrot.slane %v4885, 5
        %v4888 = vsel %vm1299, %v4883, %v4887
        %v4889 = vshrl.u32 %v4608, 16
        %v4891 = vrot.slane %v4889, 4
        %v4892 = vor.u32 %v4891, %v4887
        %v4893 = vrot.slane %v4892, 4
        %v4895 = vshll.u32 %v4629, 16
        %v4897 = vrot.slane %v4895, 5
        %v4898 = vsel %vm1299, %v4893, %v4897
        %v4900 = vshrl.u32 %v4609, 16
        %v4902 = vrot.slane %v4900, 4
        %v4903 = vshll.u32 %v4609, 16
        %v4905 = vrot.slane %v4903, 5
        %v4906 = vor.u32 %v4902, %v4905
        %v4907 = vrot.slane %v4906, 4
        %v4909 = vshll.u32 %v4610, 16
        %v4911 = vrot.slane %v4909, 5
        %v4912 = vsel %vm1299, %v4907, %v4911
        %v4913 = vshrl.u32 %v4610, 16
        %v4915 = vrot.slane %v4913, 4
        %v4916 = vor.u32 %v4915, %v4911
        %v4917 = vrot.slane %v4916, 4
        %v4919 = vshll.u32 %v4630, 16
        %v4921 = vrot.slane %v4919, 5
        %v4922 = vsel %vm1299, %v4917, %v4921
        %v4924 = vshrl.u32 %v4611, 16
        %v4926 = vrot.slane %v4924, 4
        %v4927 = vshll.u32 %v4611, 16
        %v4929 = vrot.slane %v4927, 5
        %v4930 = vor.u32 %v4926, %v4929
        %v4931 = vrot.slane %v4930, 4
        %v4933 = vshll.u32 %v4612, 16
        %v4935 = vrot.slane %v4933, 5
        %v4936 = vsel %vm1299, %v4931, %v4935
        %v4937 = vshrl.u32 %v4612, 16
        %v4939 = vrot.slane %v4937, 4
        %v4940 = vor.u32 %v4939, %v4935
        %v4941 = vrot.slane %v4940, 4
        %v4943 = vshll.u32 %v4631, 16
        %v4945 = vrot.slane %v4943, 5
        %v4946 = vsel %vm1299, %v4941, %v4945
        %v4948 = vshrl.u32 %v4613, 16
        %v4950 = vrot.slane %v4948, 4
        %v4951 = vshll.u32 %v4613, 16
        %v4953 = vrot.slane %v4951, 5
        %v4954 = vor.u32 %v4950, %v4953
        %v4955 = vrot.slane %v4954, 4
        %v4957 = vshll.u32 %v4614, 16
        %v4959 = vrot.slane %v4957, 5
        %v4960 = vsel %vm1299, %v4955, %v4959
        %v4961 = vshrl.u32 %v4614, 16
        %v4963 = vrot.slane %v4961, 4
        %v4964 = vor.u32 %v4963, %v4959
        %v4965 = vrot.slane %v4964, 4
        %v4967 = vshll.u32 %v4632, 16
        %v4969 = vrot.slane %v4967, 5
        %v4970 = vsel %vm1299, %v4965, %v4969
        %v4972 = vshrl.u32 %v4615, 16
        %v4974 = vrot.slane %v4972, 4
        %v4975 = vshll.u32 %v4615, 16
        %v4977 = vrot.slane %v4975, 5
        %v4978 = vor.u32 %v4974, %v4977
        %v4979 = vrot.slane %v4978, 4
        %v4981 = vshll.u32 %v4616, 16
        %v4983 = vrot.slane %v4981, 5
        %v4984 = vsel %vm1299, %v4979, %v4983
        %v4985 = vshrl.u32 %v4616, 16
        %v4987 = vrot.slane %v4985, 4
        %v4988 = vor.u32 %v4987, %v4983
        %v4989 = vrot.slane %v4988, 4
        %v4991 = vshll.u32 %v4633, 16
        %v4993 = vrot.slane %v4991, 5
        %v4994 = vsel %vm1299, %v4989, %v4993
        %v4996 = vshrl.u32 %v4617, 16
        %v4998 = vrot.slane %v4996, 4
        %v4999 = vshll.u32 %v4617, 16
        %v5001 = vrot.slane %v4999, 5
        %v5002 = vor.u32 %v4998, %v5001
        %v5003 = vrot.slane %v5002, 4
        %v5005 = vshll.u32 %v4618, 16
        %v5007 = vrot.slane %v5005, 5
        %v5008 = vsel %vm1299, %v5003, %v5007
        %v5009 = vshrl.u32 %v4618, 16
        %v5011 = vrot.slane %v5009, 4
        %v5012 = vor.u32 %v5011, %v5007
        %v5013 = vrot.slane %v5012, 4
        %v5015 = vshll.u32 %v4634, 16
        %v5017 = vrot.slane %v5015, 5
        %v5018 = vsel %vm1299, %v5013, %v5017
        %v5019 = vld [vmem:[#allocation3] sm:$0xe]
        %v5020 = vld [vmem:[#allocation3 + $0xc] sm:$0xe]
        %v5021 = vld [vmem:[#allocation3 + $0x18] sm:$0xe]
        %v5022 = vld [vmem:[#allocation3 + $0x24] sm:$0xe]
        %v5023 = vld [vmem:[#allocation3 + $0x30] sm:$0xe]
        %v5024 = vld [vmem:[#allocation3 + $0x3c] sm:$0xe]
        %v5025 = vld [vmem:[#allocation3 + $0x48] sm:$0xe]
        %v5026 = vld [vmem:[#allocation3 + $0x54] sm:$0xe]
        %v5027 = vld [vmem:[#allocation3 + $0x60] sm:$0xe]
        %v5028 = vld [vmem:[#allocation3 + $0x6c] sm:$0xe]
        %v5029 = vld [vmem:[#allocation3 + $0x78] sm:$0xe]
        %v5030 = vld [vmem:[#allocation3 + $0x84] sm:$0xe]
        %v5031 = vld [vmem:[#allocation3 + $0x90] sm:$0xe]
        %v5032 = vld [vmem:[#allocation3 + $0x9c] sm:$0xe]
        %v5033 = vld [vmem:[#allocation3 + $0xa8] sm:$0xe]
        %v5034 = vld [vmem:[#allocation3 + $0xb4] sm:$0xe]
        %v5083 = vrot.slane %v5019, 5
        %v5084 = vrot.slane %v5083, 4
        %v5085 = vrot.slane %v4588, 5
        %v5086 = vsel %vm1750, %v5084, %v5085
        %v5087 = vrot.slane %v5085, 4
        %v5088 = vrot.slane %v4619, 5
        %v5089 = vsel %vm1750, %v5087, %v5088
        %v5090 = vrot.slane %v5020, 5
        %v5091 = vrot.slane %v5090, 4
        %v5092 = vrot.slane %v4590, 5
        %v5093 = vsel %vm1750, %v5091, %v5092
        %v5094 = vrot.slane %v5092, 4
        %v5095 = vrot.slane %v4620, 5
        %v5096 = vsel %vm1750, %v5094, %v5095
        %v5097 = vrot.slane %v5021, 5
        %v5098 = vrot.slane %v5097, 4
        %v5099 = vrot.slane %v4592, 5
        %v5100 = vsel %vm1750, %v5098, %v5099
        %v5101 = vrot.slane %v5099, 4
        %v5102 = vrot.slane %v4621, 5
        %v5103 = vsel %vm1750, %v5101, %v5102
        %v5104 = vrot.slane %v5022, 5
        %v5105 = vrot.slane %v5104, 4
        %v5106 = vrot.slane %v4594, 5
        %v5107 = vsel %vm1750, %v5105, %v5106
        %v5108 = vrot.slane %v5106, 4
        %v5109 = vrot.slane %v4622, 5
        %v5110 = vsel %vm1750, %v5108, %v5109
        %v5111 = vrot.slane %v5023, 5
        %v5112 = vrot.slane %v5111, 4
        %v5113 = vrot.slane %v4596, 5
        %v5114 = vsel %vm1750, %v5112, %v5113
        %v5115 = vrot.slane %v5113, 4
        %v5116 = vrot.slane %v4623, 5
        %v5117 = vsel %vm1750, %v5115, %v5116
        %v5118 = vrot.slane %v5024, 5
        %v5119 = vrot.slane %v5118, 4
        %v5120 = vrot.slane %v4598, 5
        %v5121 = vsel %vm1750, %v5119, %v5120
        %v5122 = vrot.slane %v5120, 4
        %v5123 = vrot.slane %v4624, 5
        %v5124 = vsel %vm1750, %v5122, %v5123
        %v5125 = vrot.slane %v5025, 5
        %v5126 = vrot.slane %v5125, 4
        %v5127 = vrot.slane %v4600, 5
        %v5128 = vsel %vm1750, %v5126, %v5127
        %v5129 = vrot.slane %v5127, 4
        %v5130 = vrot.slane %v4625, 5
        %v5131 = vsel %vm1750, %v5129, %v5130
        %v5132 = vrot.slane %v5026, 5
        %v5133 = vrot.slane %v5132, 4
        %v5134 = vrot.slane %v4602, 5
        %v5135 = vsel %vm1750, %v5133, %v5134
        %v5136 = vrot.slane %v5134, 4
        %v5137 = vrot.slane %v4626, 5
        %v5138 = vsel %vm1750, %v5136, %v5137
        %v5139 = vrot.slane %v5027, 5
        %v5140 = vrot.slane %v5139, 4
        %v5141 = vrot.slane %v4604, 5
        %v5142 = vsel %vm1750, %v5140, %v5141
        %v5143 = vrot.slane %v5141, 4
        %v5144 = vrot.slane %v4627, 5
        %v5145 = vsel %vm1750, %v5143, %v5144
        %v5146 = vrot.slane %v5028, 5
        %v5147 = vrot.slane %v5146, 4
        %v5148 = vrot.slane %v4606, 5
        %v5149 = vsel %vm1750, %v5147, %v5148
        %v5150 = vrot.slane %v5148, 4
        %v5151 = vrot.slane %v4628, 5
        %v5152 = vsel %vm1750, %v5150, %v5151
        %v5153 = vrot.slane %v5029, 5
        %v5154 = vrot.slane %v5153, 4
        %v5155 = vrot.slane %v4608, 5
        %v5156 = vsel %vm1750, %v5154, %v5155
        %v5157 = vrot.slane %v5155, 4
        %v5158 = vrot.slane %v4629, 5
        %v5159 = vsel %vm1750, %v5157, %v5158
        %v5160 = vrot.slane %v5030, 5
        %v5161 = vrot.slane %v5160, 4
        %v5162 = vrot.slane %v4610, 5
        %v5163 = vsel %vm1750, %v5161, %v5162
        %v5164 = vrot.slane %v5162, 4
        %v5165 = vrot.slane %v4630, 5
        %v5166 = vsel %vm1750, %v5164, %v5165
        %v5167 = vrot.slane %v5031, 5
        %v5168 = vrot.slane %v5167, 4
        %v5169 = vrot.slane %v4612, 5
        %v5170 = vsel %vm1750, %v5168, %v5169
        %v5171 = vrot.slane %v5169, 4
        %v5172 = vrot.slane %v4631, 5
        %v5173 = vsel %vm1750, %v5171, %v5172
        %v5174 = vrot.slane %v5032, 5
        %v5175 = vrot.slane %v5174, 4
        %v5176 = vrot.slane %v4614, 5
        %v5177 = vsel %vm1750, %v5175, %v5176
        %v5178 = vrot.slane %v5176, 4
        %v5179 = vrot.slane %v4632, 5
        %v5180 = vsel %vm1750, %v5178, %v5179
        %v5181 = vrot.slane %v5033, 5
        %v5182 = vrot.slane %v5181, 4
        %v5183 = vrot.slane %v4616, 5
        %v5184 = vsel %vm1750, %v5182, %v5183
        %v5185 = vrot.slane %v5183, 4
        %v5186 = vrot.slane %v4633, 5
        %v5187 = vsel %vm1750, %v5185, %v5186
        %v5188 = vrot.slane %v5034, 5
        %v5189 = vrot.slane %v5188, 4
        %v5190 = vrot.slane %v4618, 5
        %v5191 = vsel %vm1750, %v5189, %v5190
        %v5192 = vrot.slane %v5190, 4
        %v5193 = vrot.slane %v4634, 5
        %v5194 = vsel %vm1750, %v5192, %v5193
        %v5195 = vld [vmem:[%s4474] sm:$0xf]
        %v5196 = vld [vmem:[%s4474 + $0x4] sm:$0xf]
        %v5197 = vld [vmem:[%s4474 + $0xc] sm:$0xf]
        %v5198 = vld [vmem:[%s4474 + $0x10] sm:$0xf]
        %v5199 = vld [vmem:[%s4474 + $0x18] sm:$0xf]
        %v5200 = vld [vmem:[%s4474 + $0x1c] sm:$0xf]
        %v5201 = vld [vmem:[%s4474 + $0x24] sm:$0xf]
        %v5202 = vld [vmem:[%s4474 + $0x28] sm:$0xf]
        %v5203 = vld [vmem:[%s4474 + $0x30] sm:$0xf]
        %v5204 = vld [vmem:[%s4474 + $0x34] sm:$0xf]
        %v5205 = vld [vmem:[%s4474 + $0x3c] sm:$0xf]
        %v5206 = vld [vmem:[%s4474 + $0x40] sm:$0xf]
        %v5207 = vld [vmem:[%s4474 + $0x48] sm:$0xf]
        %v5208 = vld [vmem:[%s4474 + $0x4c] sm:$0xf]
        %v5209 = vld [vmem:[%s4474 + $0x54] sm:$0xf]
        %v5210 = vld [vmem:[%s4474 + $0x58] sm:$0xf]
        %v5211 = vld [vmem:[%s4474 + $0x60] sm:$0xf]
        %v5212 = vld [vmem:[%s4474 + $0x64] sm:$0xf]
        %v5213 = vld [vmem:[%s4474 + $0x6c] sm:$0xf]
        %v5214 = vld [vmem:[%s4474 + $0x70] sm:$0xf]
        %v5215 = vld [vmem:[%s4474 + $0x78] sm:$0xf]
        %v5216 = vld [vmem:[%s4474 + $0x7c] sm:$0xf]
        %v5217 = vld [vmem:[%s4474 + $0x84] sm:$0xf]
        %v5218 = vld [vmem:[%s4474 + $0x88] sm:$0xf]
        %v5219 = vld [vmem:[%s4474 + $0x90] sm:$0xf]
        %v5220 = vld [vmem:[%s4474 + $0x94] sm:$0xf]
        %v5221 = vld [vmem:[%s4474 + $0x9c] sm:$0xf]
        %v5222 = vld [vmem:[%s4474 + $0xa0] sm:$0xf]
        %v5223 = vld [vmem:[%s4474 + $0xa8] sm:$0xf]
        %v5224 = vld [vmem:[%s4474 + $0xac] sm:$0xf]
        %v5225 = vld [vmem:[%s4474 + $0xb4] sm:$0xf]
        %v5226 = vld [vmem:[%s4474 + $0xb8] sm:$0xf]
        %v5227 = vld [vmem:[%s4474 + $0x8] sm:$0x1]
        %v5228 = vld [vmem:[%s4474 + $0x14] sm:$0x1]
        %v5229 = vld [vmem:[%s4474 + $0x20] sm:$0x1]
        %v5230 = vld [vmem:[%s4474 + $0x2c] sm:$0x1]
        %v5231 = vld [vmem:[%s4474 + $0x38] sm:$0x1]
        %v5232 = vld [vmem:[%s4474 + $0x44] sm:$0x1]
        %v5233 = vld [vmem:[%s4474 + $0x50] sm:$0x1]
        %v5234 = vld [vmem:[%s4474 + $0x5c] sm:$0x1]
        %v5235 = vld [vmem:[%s4474 + $0x68] sm:$0x1]
        %v5236 = vld [vmem:[%s4474 + $0x74] sm:$0x1]
        %v5237 = vld [vmem:[%s4474 + $0x80] sm:$0x1]
        %v5238 = vld [vmem:[%s4474 + $0x8c] sm:$0x1]
        %v5239 = vld [vmem:[%s4474 + $0x98] sm:$0x1]
        %v5240 = vld [vmem:[%s4474 + $0xa4] sm:$0x1]
        %v5241 = vld [vmem:[%s4474 + $0xb0] sm:$0x1]
        %v5242 = vld [vmem:[%s4474 + $0xbc] sm:$0x1]
        %v5244 = vshrl.u32 %v5195, 16
        %v5246 = vrot.slane %v5244, 4
        %v5247 = vshll.u32 %v5195, 16
        %v5249 = vrot.slane %v5247, 5
        %v5250 = vor.u32 %v5246, %v5249
        %v5251 = vrot.slane %v5250, 4
        %v5253 = vshll.u32 %v5196, 16
        %v5255 = vrot.slane %v5253, 5
        %v5256 = vsel %vm1299, %v5251, %v5255
        %v5257 = vshrl.u32 %v5196, 16
        %v5259 = vrot.slane %v5257, 4
        %v5260 = vor.u32 %v5259, %v5255
        %v5261 = vrot.slane %v5260, 4
        %v5263 = vshll.u32 %v5227, 16
        %v5265 = vrot.slane %v5263, 5
        %v5266 = vsel %vm1299, %v5261, %v5265
        %v5268 = vshrl.u32 %v5197, 16
        %v5270 = vrot.slane %v5268, 4
        %v5271 = vshll.u32 %v5197, 16
        %v5273 = vrot.slane %v5271, 5
        %v5274 = vor.u32 %v5270, %v5273
        %v5275 = vrot.slane %v5274, 4
        %v5277 = vshll.u32 %v5198, 16
        %v5279 = vrot.slane %v5277, 5
        %v5280 = vsel %vm1299, %v5275, %v5279
        %v5281 = vshrl.u32 %v5198, 16
        %v5283 = vrot.slane %v5281, 4
        %v5284 = vor.u32 %v5283, %v5279
        %v5285 = vrot.slane %v5284, 4
        %v5287 = vshll.u32 %v5228, 16
        %v5289 = vrot.slane %v5287, 5
        %v5290 = vsel %vm1299, %v5285, %v5289
        %v5292 = vshrl.u32 %v5199, 16
        %v5294 = vrot.slane %v5292, 4
        %v5295 = vshll.u32 %v5199, 16
        %v5297 = vrot.slane %v5295, 5
        %v5298 = vor.u32 %v5294, %v5297
        %v5299 = vrot.slane %v5298, 4
        %v5301 = vshll.u32 %v5200, 16
        %v5303 = vrot.slane %v5301, 5
        %v5304 = vsel %vm1299, %v5299, %v5303
        %v5305 = vshrl.u32 %v5200, 16
        %v5307 = vrot.slane %v5305, 4
        %v5308 = vor.u32 %v5307, %v5303
        %v5309 = vrot.slane %v5308, 4
        %v5311 = vshll.u32 %v5229, 16
        %v5313 = vrot.slane %v5311, 5
        %v5314 = vsel %vm1299, %v5309, %v5313
        %v5316 = vshrl.u32 %v5201, 16
        %v5318 = vrot.slane %v5316, 4
        %v5319 = vshll.u32 %v5201, 16
        %v5321 = vrot.slane %v5319, 5
        %v5322 = vor.u32 %v5318, %v5321
        %v5323 = vrot.slane %v5322, 4
        %v5325 = vshll.u32 %v5202, 16
        %v5327 = vrot.slane %v5325, 5
        %v5328 = vsel %vm1299, %v5323, %v5327
        %v5329 = vshrl.u32 %v5202, 16
        %v5331 = vrot.slane %v5329, 4
        %v5332 = vor.u32 %v5331, %v5327
        %v5333 = vrot.slane %v5332, 4
        %v5335 = vshll.u32 %v5230, 16
        %v5337 = vrot.slane %v5335, 5
        %v5338 = vsel %vm1299, %v5333, %v5337
        %v5340 = vshrl.u32 %v5203, 16
        %v5342 = vrot.slane %v5340, 4
        %v5343 = vshll.u32 %v5203, 16
        %v5345 = vrot.slane %v5343, 5
        %v5346 = vor.u32 %v5342, %v5345
        %v5347 = vrot.slane %v5346, 4
        %v5349 = vshll.u32 %v5204, 16
        %v5351 = vrot.slane %v5349, 5
        %v5352 = vsel %vm1299, %v5347, %v5351
        %v5353 = vshrl.u32 %v5204, 16
        %v5355 = vrot.slane %v5353, 4
        %v5356 = vor.u32 %v5355, %v5351
        %v5357 = vrot.slane %v5356, 4
        %v5359 = vshll.u32 %v5231, 16
        %v5361 = vrot.slane %v5359, 5
        %v5362 = vsel %vm1299, %v5357, %v5361
        %v5364 = vshrl.u32 %v5205, 16
        %v5366 = vrot.slane %v5364, 4
        %v5367 = vshll.u32 %v5205, 16
        %v5369 = vrot.slane %v5367, 5
        %v5370 = vor.u32 %v5366, %v5369
        %v5371 = vrot.slane %v5370, 4
        %v5373 = vshll.u32 %v5206, 16
        %v5375 = vrot.slane %v5373, 5
        %v5376 = vsel %vm1299, %v5371, %v5375
        %v5377 = vshrl.u32 %v5206, 16
        %v5379 = vrot.slane %v5377, 4
        %v5380 = vor.u32 %v5379, %v5375
        %v5381 = vrot.slane %v5380, 4
        %v5383 = vshll.u32 %v5232, 16
        %v5385 = vrot.slane %v5383, 5
        %v5386 = vsel %vm1299, %v5381, %v5385
        %v5388 = vshrl.u32 %v5207, 16
        %v5390 = vrot.slane %v5388, 4
        %v5391 = vshll.u32 %v5207, 16
        %v5393 = vrot.slane %v5391, 5
        %v5394 = vor.u32 %v5390, %v5393
        %v5395 = vrot.slane %v5394, 4
        %v5397 = vshll.u32 %v5208, 16
        %v5399 = vrot.slane %v5397, 5
        %v5400 = vsel %vm1299, %v5395, %v5399
        %v5401 = vshrl.u32 %v5208, 16
        %v5403 = vrot.slane %v5401, 4
        %v5404 = vor.u32 %v5403, %v5399
        %v5405 = vrot.slane %v5404, 4
        %v5407 = vshll.u32 %v5233, 16
        %v5409 = vrot.slane %v5407, 5
        %v5410 = vsel %vm1299, %v5405, %v5409
        %v5412 = vshrl.u32 %v5209, 16
        %v5414 = vrot.slane %v5412, 4
        %v5415 = vshll.u32 %v5209, 16
        %v5417 = vrot.slane %v5415, 5
        %v5418 = vor.u32 %v5414, %v5417
        %v5419 = vrot.slane %v5418, 4
        %v5421 = vshll.u32 %v5210, 16
        %v5423 = vrot.slane %v5421, 5
        %v5424 = vsel %vm1299, %v5419, %v5423
        %v5425 = vshrl.u32 %v5210, 16
        %v5427 = vrot.slane %v5425, 4
        %v5428 = vor.u32 %v5427, %v5423
        %v5429 = vrot.slane %v5428, 4
        %v5431 = vshll.u32 %v5234, 16
        %v5433 = vrot.slane %v5431, 5
        %v5434 = vsel %vm1299, %v5429, %v5433
        %v5436 = vshrl.u32 %v5211, 16
        %v5438 = vrot.slane %v5436, 4
        %v5439 = vshll.u32 %v5211, 16
        %v5441 = vrot.slane %v5439, 5
        %v5442 = vor.u32 %v5438, %v5441
        %v5443 = vrot.slane %v5442, 4
        %v5445 = vshll.u32 %v5212, 16
        %v5447 = vrot.slane %v5445, 5
        %v5448 = vsel %vm1299, %v5443, %v5447
        %v5449 = vshrl.u32 %v5212, 16
        %v5451 = vrot.slane %v5449, 4
        %v5452 = vor.u32 %v5451, %v5447
        %v5453 = vrot.slane %v5452, 4
        %v5455 = vshll.u32 %v5235, 16
        %v5457 = vrot.slane %v5455, 5
        %v5458 = vsel %vm1299, %v5453, %v5457
        %v5460 = vshrl.u32 %v5213, 16
        %v5462 = vrot.slane %v5460, 4
        %v5463 = vshll.u32 %v5213, 16
        %v5465 = vrot.slane %v5463, 5
        %v5466 = vor.u32 %v5462, %v5465
        %v5467 = vrot.slane %v5466, 4
        %v5469 = vshll.u32 %v5214, 16
        %v5471 = vrot.slane %v5469, 5
        %v5472 = vsel %vm1299, %v5467, %v5471
        %v5473 = vshrl.u32 %v5214, 16
        %v5475 = vrot.slane %v5473, 4
        %v5476 = vor.u32 %v5475, %v5471
        %v5477 = vrot.slane %v5476, 4
        %v5479 = vshll.u32 %v5236, 16
        %v5481 = vrot.slane %v5479, 5
        %v5482 = vsel %vm1299, %v5477, %v5481
        %v5484 = vshrl.u32 %v5215, 16
        %v5486 = vrot.slane %v5484, 4
        %v5487 = vshll.u32 %v5215, 16
        %v5489 = vrot.slane %v5487, 5
        %v5490 = vor.u32 %v5486, %v5489
        %v5491 = vrot.slane %v5490, 4
        %v5493 = vshll.u32 %v5216, 16
        %v5495 = vrot.slane %v5493, 5
        %v5496 = vsel %vm1299, %v5491, %v5495
        %v5497 = vshrl.u32 %v5216, 16
        %v5499 = vrot.slane %v5497, 4
        %v5500 = vor.u32 %v5499, %v5495
        %v5501 = vrot.slane %v5500, 4
        %v5503 = vshll.u32 %v5237, 16
        %v5505 = vrot.slane %v5503, 5
        %v5506 = vsel %vm1299, %v5501, %v5505
        %v5508 = vshrl.u32 %v5217, 16
        %v5510 = vrot.slane %v5508, 4
        %v5511 = vshll.u32 %v5217, 16
        %v5513 = vrot.slane %v5511, 5
        %v5514 = vor.u32 %v5510, %v5513
        %v5515 = vrot.slane %v5514, 4
        %v5517 = vshll.u32 %v5218, 16
        %v5519 = vrot.slane %v5517, 5
        %v5520 = vsel %vm1299, %v5515, %v5519
        %v5521 = vshrl.u32 %v5218, 16
        %v5523 = vrot.slane %v5521, 4
        %v5524 = vor.u32 %v5523, %v5519
        %v5525 = vrot.slane %v5524, 4
        %v5527 = vshll.u32 %v5238, 16
        %v5529 = vrot.slane %v5527, 5
        %v5530 = vsel %vm1299, %v5525, %v5529
        %v5532 = vshrl.u32 %v5219, 16
        %v5534 = vrot.slane %v5532, 4
        %v5535 = vshll.u32 %v5219, 16
        %v5537 = vrot.slane %v5535, 5
        %v5538 = vor.u32 %v5534, %v5537
        %v5539 = vrot.slane %v5538, 4
        %v5541 = vshll.u32 %v5220, 16
        %v5543 = vrot.slane %v5541, 5
        %v5544 = vsel %vm1299, %v5539, %v5543
        %v5545 = vshrl.u32 %v5220, 16
        %v5547 = vrot.slane %v5545, 4
        %v5548 = vor.u32 %v5547, %v5543
        %v5549 = vrot.slane %v5548, 4
        %v5551 = vshll.u32 %v5239, 16
        %v5553 = vrot.slane %v5551, 5
        %v5554 = vsel %vm1299, %v5549, %v5553
        %v5556 = vshrl.u32 %v5221, 16
        %v5558 = vrot.slane %v5556, 4
        %v5559 = vshll.u32 %v5221, 16
        %v5561 = vrot.slane %v5559, 5
        %v5562 = vor.u32 %v5558, %v5561
        %v5563 = vrot.slane %v5562, 4
        %v5565 = vshll.u32 %v5222, 16
        %v5567 = vrot.slane %v5565, 5
        %v5568 = vsel %vm1299, %v5563, %v5567
        %v5569 = vshrl.u32 %v5222, 16
        %v5571 = vrot.slane %v5569, 4
        %v5572 = vor.u32 %v5571, %v5567
        %v5573 = vrot.slane %v5572, 4
        %v5575 = vshll.u32 %v5240, 16
        %v5577 = vrot.slane %v5575, 5
        %v5578 = vsel %vm1299, %v5573, %v5577
        %v5580 = vshrl.u32 %v5223, 16
        %v5582 = vrot.slane %v5580, 4
        %v5583 = vshll.u32 %v5223, 16
        %v5585 = vrot.slane %v5583, 5
        %v5586 = vor.u32 %v5582, %v5585
        %v5587 = vrot.slane %v5586, 4
        %v5589 = vshll.u32 %v5224, 16
        %v5591 = vrot.slane %v5589, 5
        %v5592 = vsel %vm1299, %v5587, %v5591
        %v5593 = vshrl.u32 %v5224, 16
        %v5595 = vrot.slane %v5593, 4
        %v5596 = vor.u32 %v5595, %v5591
        %v5597 = vrot.slane %v5596, 4
        %v5599 = vshll.u32 %v5241, 16
        %v5601 = vrot.slane %v5599, 5
        %v5602 = vsel %vm1299, %v5597, %v5601
        %v5604 = vshrl.u32 %v5225, 16
        %v5606 = vrot.slane %v5604, 4
        %v5607 = vshll.u32 %v5225, 16
        %v5609 = vrot.slane %v5607, 5
        %v5610 = vor.u32 %v5606, %v5609
        %v5611 = vrot.slane %v5610, 4
        %v5613 = vshll.u32 %v5226, 16
        %v5615 = vrot.slane %v5613, 5
        %v5616 = vsel %vm1299, %v5611, %v5615
        %v5617 = vshrl.u32 %v5226, 16
        %v5619 = vrot.slane %v5617, 4
        %v5620 = vor.u32 %v5619, %v5615
        %v5621 = vrot.slane %v5620, 4
        %v5623 = vshll.u32 %v5242, 16
        %v5625 = vrot.slane %v5623, 5
        %v5626 = vsel %vm1299, %v5621, %v5625
        %v5627 = vld [vmem:[%s4474] sm:$0xe]
        %v5628 = vld [vmem:[%s4474 + $0xc] sm:$0xe]
        %v5629 = vld [vmem:[%s4474 + $0x18] sm:$0xe]
        %v5630 = vld [vmem:[%s4474 + $0x24] sm:$0xe]
        %v5631 = vld [vmem:[%s4474 + $0x30] sm:$0xe]
        %v5632 = vld [vmem:[%s4474 + $0x3c] sm:$0xe]
        %v5633 = vld [vmem:[%s4474 + $0x48] sm:$0xe]
        %v5634 = vld [vmem:[%s4474 + $0x54] sm:$0xe]
        %v5635 = vld [vmem:[%s4474 + $0x60] sm:$0xe]
        %v5636 = vld [vmem:[%s4474 + $0x6c] sm:$0xe]
        %v5637 = vld [vmem:[%s4474 + $0x78] sm:$0xe]
        %v5638 = vld [vmem:[%s4474 + $0x84] sm:$0xe]
        %v5639 = vld [vmem:[%s4474 + $0x90] sm:$0xe]
        %v5640 = vld [vmem:[%s4474 + $0x9c] sm:$0xe]
        %v5641 = vld [vmem:[%s4474 + $0xa8] sm:$0xe]
        %v5642 = vld [vmem:[%s4474 + $0xb4] sm:$0xe]
        %v5691 = vrot.slane %v5627, 5
        %v5692 = vrot.slane %v5691, 4
        %v5693 = vrot.slane %v5196, 5
        %v5694 = vsel %vm1750, %v5692, %v5693
        %v5695 = vrot.slane %v5693, 4
        %v5696 = vrot.slane %v5227, 5
        %v5697 = vsel %vm1750, %v5695, %v5696
        %v5698 = vrot.slane %v5628, 5
        %v5699 = vrot.slane %v5698, 4
        %v5700 = vrot.slane %v5198, 5
        %v5701 = vsel %vm1750, %v5699, %v5700
        %v5702 = vrot.slane %v5700, 4
        %v5703 = vrot.slane %v5228, 5
        %v5704 = vsel %vm1750, %v5702, %v5703
        %v5705 = vrot.slane %v5629, 5
        %v5706 = vrot.slane %v5705, 4
        %v5707 = vrot.slane %v5200, 5
        %v5708 = vsel %vm1750, %v5706, %v5707
        %v5709 = vrot.slane %v5707, 4
        %v5710 = vrot.slane %v5229, 5
        %v5711 = vsel %vm1750, %v5709, %v5710
        %v5712 = vrot.slane %v5630, 5
        %v5713 = vrot.slane %v5712, 4
        %v5714 = vrot.slane %v5202, 5
        %v5715 = vsel %vm1750, %v5713, %v5714
        %v5716 = vrot.slane %v5714, 4
        %v5717 = vrot.slane %v5230, 5
        %v5718 = vsel %vm1750, %v5716, %v5717
        %v5719 = vrot.slane %v5631, 5
        %v5720 = vrot.slane %v5719, 4
        %v5721 = vrot.slane %v5204, 5
        %v5722 = vsel %vm1750, %v5720, %v5721
        %v5723 = vrot.slane %v5721, 4
        %v5724 = vrot.slane %v5231, 5
        %v5725 = vsel %vm1750, %v5723, %v5724
        %v5726 = vrot.slane %v5632, 5
        %v5727 = vrot.slane %v5726, 4
        %v5728 = vrot.slane %v5206, 5
        %v5729 = vsel %vm1750, %v5727, %v5728
        %v5730 = vrot.slane %v5728, 4
        %v5731 = vrot.slane %v5232, 5
        %v5732 = vsel %vm1750, %v5730, %v5731
        %v5733 = vrot.slane %v5633, 5
        %v5734 = vrot.slane %v5733, 4
        %v5735 = vrot.slane %v5208, 5
        %v5736 = vsel %vm1750, %v5734, %v5735
        %v5737 = vrot.slane %v5735, 4
        %v5738 = vrot.slane %v5233, 5
        %v5739 = vsel %vm1750, %v5737, %v5738
        %v5740 = vrot.slane %v5634, 5
        %v5741 = vrot.slane %v5740, 4
        %v5742 = vrot.slane %v5210, 5
        %v5743 = vsel %vm1750, %v5741, %v5742
        %v5744 = vrot.slane %v5742, 4
        %v5745 = vrot.slane %v5234, 5
        %v5746 = vsel %vm1750, %v5744, %v5745
        %v5747 = vrot.slane %v5635, 5
        %v5748 = vrot.slane %v5747, 4
        %v5749 = vrot.slane %v5212, 5
        %v5750 = vsel %vm1750, %v5748, %v5749
        %v5751 = vrot.slane %v5749, 4
        %v5752 = vrot.slane %v5235, 5
        %v5753 = vsel %vm1750, %v5751, %v5752
        %v5754 = vrot.slane %v5636, 5
        %v5755 = vrot.slane %v5754, 4
        %v5756 = vrot.slane %v5214, 5
        %v5757 = vsel %vm1750, %v5755, %v5756
        %v5758 = vrot.slane %v5756, 4
        %v5759 = vrot.slane %v5236, 5
        %v5760 = vsel %vm1750, %v5758, %v5759
        %v5761 = vrot.slane %v5637, 5
        %v5762 = vrot.slane %v5761, 4
        %v5763 = vrot.slane %v5216, 5
        %v5764 = vsel %vm1750, %v5762, %v5763
        %v5765 = vrot.slane %v5763, 4
        %v5766 = vrot.slane %v5237, 5
        %v5767 = vsel %vm1750, %v5765, %v5766
        %v5768 = vrot.slane %v5638, 5
        %v5769 = vrot.slane %v5768, 4
        %v5770 = vrot.slane %v5218, 5
        %v5771 = vsel %vm1750, %v5769, %v5770
        %v5772 = vrot.slane %v5770, 4
        %v5773 = vrot.slane %v5238, 5
        %v5774 = vsel %vm1750, %v5772, %v5773
        %v5775 = vrot.slane %v5639, 5
        %v5776 = vrot.slane %v5775, 4
        %v5777 = vrot.slane %v5220, 5
        %v5778 = vsel %vm1750, %v5776, %v5777
        %v5779 = vrot.slane %v5777, 4
        %v5780 = vrot.slane %v5239, 5
        %v5781 = vsel %vm1750, %v5779, %v5780
        %v5782 = vrot.slane %v5640, 5
        %v5783 = vrot.slane %v5782, 4
        %v5784 = vrot.slane %v5222, 5
        %v5785 = vsel %vm1750, %v5783, %v5784
        %v5786 = vrot.slane %v5784, 4
        %v5787 = vrot.slane %v5240, 5
        %v5788 = vsel %vm1750, %v5786, %v5787
        %v5789 = vrot.slane %v5641, 5
        %v5790 = vrot.slane %v5789, 4
        %v5791 = vrot.slane %v5224, 5
        %v5792 = vsel %vm1750, %v5790, %v5791
        %v5793 = vrot.slane %v5791, 4
        %v5794 = vrot.slane %v5241, 5
        %v5795 = vsel %vm1750, %v5793, %v5794
        %v5796 = vrot.slane %v5642, 5
        %v5797 = vrot.slane %v5796, 4
        %v5798 = vrot.slane %v5226, 5
        %v5799 = vsel %vm1750, %v5797, %v5798
        %v5800 = vrot.slane %v5798, 4
        %v5801 = vrot.slane %v5242, 5
        %v5802 = vsel %vm1750, %v5800, %v5801
        %s5803 = scalar_lea.vmem [#allocation3], 24
        %v5804 = vld [vmem:[%s5803] sm:$0xf]
        %v5805 = vld [vmem:[%s5803 + $0x4] sm:$0xf]
        %v5806 = vld [vmem:[%s5803 + $0xc] sm:$0xf]
        %v5807 = vld [vmem:[%s5803 + $0x10] sm:$0xf]
        %v5808 = vld [vmem:[%s5803 + $0x18] sm:$0xf]
        %v5809 = vld [vmem:[%s5803 + $0x1c] sm:$0xf]
        %v5810 = vld [vmem:[%s5803 + $0x24] sm:$0xf]
        %v5811 = vld [vmem:[%s5803 + $0x28] sm:$0xf]
        %v5812 = vld [vmem:[%s5803 + $0x30] sm:$0xf]
        %v5813 = vld [vmem:[%s5803 + $0x34] sm:$0xf]
        %v5814 = vld [vmem:[%s5803 + $0x3c] sm:$0xf]
        %v5815 = vld [vmem:[%s5803 + $0x40] sm:$0xf]
        %v5816 = vld [vmem:[%s5803 + $0x48] sm:$0xf]
        %v5817 = vld [vmem:[%s5803 + $0x4c] sm:$0xf]
        %v5818 = vld [vmem:[%s5803 + $0x54] sm:$0xf]
        %v5819 = vld [vmem:[%s5803 + $0x58] sm:$0xf]
        %v5820 = vld [vmem:[%s5803 + $0x60] sm:$0xf]
        %v5821 = vld [vmem:[%s5803 + $0x64] sm:$0xf]
        %v5822 = vld [vmem:[%s5803 + $0x6c] sm:$0xf]
        %v5823 = vld [vmem:[%s5803 + $0x70] sm:$0xf]
        %v5824 = vld [vmem:[%s5803 + $0x78] sm:$0xf]
        %v5825 = vld [vmem:[%s5803 + $0x7c] sm:$0xf]
        %v5826 = vld [vmem:[%s5803 + $0x84] sm:$0xf]
        %v5827 = vld [vmem:[%s5803 + $0x88] sm:$0xf]
        %v5828 = vld [vmem:[%s5803 + $0x90] sm:$0xf]
        %v5829 = vld [vmem:[%s5803 + $0x94] sm:$0xf]
        %v5830 = vld [vmem:[%s5803 + $0x9c] sm:$0xf]
        %v5831 = vld [vmem:[%s5803 + $0xa0] sm:$0xf]
        %v5832 = vld [vmem:[%s5803 + $0xa8] sm:$0xf]
        %v5833 = vld [vmem:[%s5803 + $0xac] sm:$0xf]
        %v5834 = vld [vmem:[%s5803 + $0xb4] sm:$0xf]
        %v5835 = vld [vmem:[%s5803 + $0xb8] sm:$0xf]
        %v5836 = vld [vmem:[%s5803 + $0x8] sm:$0x1]
        %v5837 = vld [vmem:[%s5803 + $0x14] sm:$0x1]
        %v5838 = vld [vmem:[%s5803 + $0x20] sm:$0x1]
        %v5839 = vld [vmem:[%s5803 + $0x2c] sm:$0x1]
        %v5840 = vld [vmem:[%s5803 + $0x38] sm:$0x1]
        %v5841 = vld [vmem:[%s5803 + $0x44] sm:$0x1]
        %v5842 = vld [vmem:[%s5803 + $0x50] sm:$0x1]
        %v5843 = vld [vmem:[%s5803 + $0x5c] sm:$0x1]
        %v5844 = vld [vmem:[%s5803 + $0x68] sm:$0x1]
        %v5845 = vld [vmem:[%s5803 + $0x74] sm:$0x1]
        %v5846 = vld [vmem:[%s5803 + $0x80] sm:$0x1]
        %v5847 = vld [vmem:[%s5803 + $0x8c] sm:$0x1]
        %v5848 = vld [vmem:[%s5803 + $0x98] sm:$0x1]
        %v5849 = vld [vmem:[%s5803 + $0xa4] sm:$0x1]
        %v5850 = vld [vmem:[%s5803 + $0xb0] sm:$0x1]
        %v5851 = vld [vmem:[%s5803 + $0xbc] sm:$0x1]
        %v5853 = vshrl.u32 %v5804, 16
        %v5855 = vrot.slane %v5853, 4
        %v5856 = vshll.u32 %v5804, 16
        %v5858 = vrot.slane %v5856, 5
        %v5859 = vor.u32 %v5855, %v5858
        %v5860 = vrot.slane %v5859, 4
        %v5862 = vshll.u32 %v5805, 16
        %v5864 = vrot.slane %v5862, 5
        %v5865 = vsel %vm1299, %v5860, %v5864
        %v5866 = vshrl.u32 %v5805, 16
        %v5868 = vrot.slane %v5866, 4
        %v5869 = vor.u32 %v5868, %v5864
        %v5870 = vrot.slane %v5869, 4
        %v5872 = vshll.u32 %v5836, 16
        %v5874 = vrot.slane %v5872, 5
        %v5875 = vsel %vm1299, %v5870, %v5874
        %v5877 = vshrl.u32 %v5806, 16
        %v5879 = vrot.slane %v5877, 4
        %v5880 = vshll.u32 %v5806, 16
        %v5882 = vrot.slane %v5880, 5
        %v5883 = vor.u32 %v5879, %v5882
        %v5884 = vrot.slane %v5883, 4
        %v5886 = vshll.u32 %v5807, 16
        %v5888 = vrot.slane %v5886, 5
        %v5889 = vsel %vm1299, %v5884, %v5888
        %v5890 = vshrl.u32 %v5807, 16
        %v5892 = vrot.slane %v5890, 4
        %v5893 = vor.u32 %v5892, %v5888
        %v5894 = vrot.slane %v5893, 4
        %v5896 = vshll.u32 %v5837, 16
        %v5898 = vrot.slane %v5896, 5
        %v5899 = vsel %vm1299, %v5894, %v5898
        %v5901 = vshrl.u32 %v5808, 16
        %v5903 = vrot.slane %v5901, 4
        %v5904 = vshll.u32 %v5808, 16
        %v5906 = vrot.slane %v5904, 5
        %v5907 = vor.u32 %v5903, %v5906
        %v5908 = vrot.slane %v5907, 4
        %v5910 = vshll.u32 %v5809, 16
        %v5912 = vrot.slane %v5910, 5
        %v5913 = vsel %vm1299, %v5908, %v5912
        %v5914 = vshrl.u32 %v5809, 16
        %v5916 = vrot.slane %v5914, 4
        %v5917 = vor.u32 %v5916, %v5912
        %v5918 = vrot.slane %v5917, 4
        %v5920 = vshll.u32 %v5838, 16
        %v5922 = vrot.slane %v5920, 5
        %v5923 = vsel %vm1299, %v5918, %v5922
        %v5925 = vshrl.u32 %v5810, 16
        %v5927 = vrot.slane %v5925, 4
        %v5928 = vshll.u32 %v5810, 16
        %v5930 = vrot.slane %v5928, 5
        %v5931 = vor.u32 %v5927, %v5930
        %v5932 = vrot.slane %v5931, 4
        %v5934 = vshll.u32 %v5811, 16
        %v5936 = vrot.slane %v5934, 5
        %v5937 = vsel %vm1299, %v5932, %v5936
        %v5938 = vshrl.u32 %v5811, 16
        %v5940 = vrot.slane %v5938, 4
        %v5941 = vor.u32 %v5940, %v5936
        %v5942 = vrot.slane %v5941, 4
        %v5944 = vshll.u32 %v5839, 16
        %v5946 = vrot.slane %v5944, 5
        %v5947 = vsel %vm1299, %v5942, %v5946
        %v5949 = vshrl.u32 %v5812, 16
        %v5951 = vrot.slane %v5949, 4
        %v5952 = vshll.u32 %v5812, 16
        %v5954 = vrot.slane %v5952, 5
        %v5955 = vor.u32 %v5951, %v5954
        %v5956 = vrot.slane %v5955, 4
        %v5958 = vshll.u32 %v5813, 16
        %v5960 = vrot.slane %v5958, 5
        %v5961 = vsel %vm1299, %v5956, %v5960
        %v5962 = vshrl.u32 %v5813, 16
        %v5964 = vrot.slane %v5962, 4
        %v5965 = vor.u32 %v5964, %v5960
        %v5966 = vrot.slane %v5965, 4
        %v5968 = vshll.u32 %v5840, 16
        %v5970 = vrot.slane %v5968, 5
        %v5971 = vsel %vm1299, %v5966, %v5970
        %v5973 = vshrl.u32 %v5814, 16
        %v5975 = vrot.slane %v5973, 4
        %v5976 = vshll.u32 %v5814, 16
        %v5978 = vrot.slane %v5976, 5
        %v5979 = vor.u32 %v5975, %v5978
        %v5980 = vrot.slane %v5979, 4
        %v5982 = vshll.u32 %v5815, 16
        %v5984 = vrot.slane %v5982, 5
        %v5985 = vsel %vm1299, %v5980, %v5984
        %v5986 = vshrl.u32 %v5815, 16
        %v5988 = vrot.slane %v5986, 4
        %v5989 = vor.u32 %v5988, %v5984
        %v5990 = vrot.slane %v5989, 4
        %v5992 = vshll.u32 %v5841, 16
        %v5994 = vrot.slane %v5992, 5
        %v5995 = vsel %vm1299, %v5990, %v5994
        %v5997 = vshrl.u32 %v5816, 16
        %v5999 = vrot.slane %v5997, 4
        %v6000 = vshll.u32 %v5816, 16
        %v6002 = vrot.slane %v6000, 5
        %v6003 = vor.u32 %v5999, %v6002
        %v6004 = vrot.slane %v6003, 4
        %v6006 = vshll.u32 %v5817, 16
        %v6008 = vrot.slane %v6006, 5
        %v6009 = vsel %vm1299, %v6004, %v6008
        %v6010 = vshrl.u32 %v5817, 16
        %v6012 = vrot.slane %v6010, 4
        %v6013 = vor.u32 %v6012, %v6008
        %v6014 = vrot.slane %v6013, 4
        %v6016 = vshll.u32 %v5842, 16
        %v6018 = vrot.slane %v6016, 5
        %v6019 = vsel %vm1299, %v6014, %v6018
        %v6021 = vshrl.u32 %v5818, 16
        %v6023 = vrot.slane %v6021, 4
        %v6024 = vshll.u32 %v5818, 16
        %v6026 = vrot.slane %v6024, 5
        %v6027 = vor.u32 %v6023, %v6026
        %v6028 = vrot.slane %v6027, 4
        %v6030 = vshll.u32 %v5819, 16
        %v6032 = vrot.slane %v6030, 5
        %v6033 = vsel %vm1299, %v6028, %v6032
        %v6034 = vshrl.u32 %v5819, 16
        %v6036 = vrot.slane %v6034, 4
        %v6037 = vor.u32 %v6036, %v6032
        %v6038 = vrot.slane %v6037, 4
        %v6040 = vshll.u32 %v5843, 16
        %v6042 = vrot.slane %v6040, 5
        %v6043 = vsel %vm1299, %v6038, %v6042
        %v6045 = vshrl.u32 %v5820, 16
        %v6047 = vrot.slane %v6045, 4
        %v6048 = vshll.u32 %v5820, 16
        %v6050 = vrot.slane %v6048, 5
        %v6051 = vor.u32 %v6047, %v6050
        %v6052 = vrot.slane %v6051, 4
        %v6054 = vshll.u32 %v5821, 16
        %v6056 = vrot.slane %v6054, 5
        %v6057 = vsel %vm1299, %v6052, %v6056
        %v6058 = vshrl.u32 %v5821, 16
        %v6060 = vrot.slane %v6058, 4
        %v6061 = vor.u32 %v6060, %v6056
        %v6062 = vrot.slane %v6061, 4
        %v6064 = vshll.u32 %v5844, 16
        %v6066 = vrot.slane %v6064, 5
        %v6067 = vsel %vm1299, %v6062, %v6066
        %v6069 = vshrl.u32 %v5822, 16
        %v6071 = vrot.slane %v6069, 4
        %v6072 = vshll.u32 %v5822, 16
        %v6074 = vrot.slane %v6072, 5
        %v6075 = vor.u32 %v6071, %v6074
        %v6076 = vrot.slane %v6075, 4
        %v6078 = vshll.u32 %v5823, 16
        %v6080 = vrot.slane %v6078, 5
        %v6081 = vsel %vm1299, %v6076, %v6080
        %v6082 = vshrl.u32 %v5823, 16
        %v6084 = vrot.slane %v6082, 4
        %v6085 = vor.u32 %v6084, %v6080
        %v6086 = vrot.slane %v6085, 4
        %v6088 = vshll.u32 %v5845, 16
        %v6090 = vrot.slane %v6088, 5
        %v6091 = vsel %vm1299, %v6086, %v6090
        %v6093 = vshrl.u32 %v5824, 16
        %v6095 = vrot.slane %v6093, 4
        %v6096 = vshll.u32 %v5824, 16
        %v6098 = vrot.slane %v6096, 5
        %v6099 = vor.u32 %v6095, %v6098
        %v6100 = vrot.slane %v6099, 4
        %v6102 = vshll.u32 %v5825, 16
        %v6104 = vrot.slane %v6102, 5
        %v6105 = vsel %vm1299, %v6100, %v6104
        %v6106 = vshrl.u32 %v5825, 16
        %v6108 = vrot.slane %v6106, 4
        %v6109 = vor.u32 %v6108, %v6104
        %v6110 = vrot.slane %v6109, 4
        %v6112 = vshll.u32 %v5846, 16
        %v6114 = vrot.slane %v6112, 5
        %v6115 = vsel %vm1299, %v6110, %v6114
        %v6117 = vshrl.u32 %v5826, 16
        %v6119 = vrot.slane %v6117, 4
        %v6120 = vshll.u32 %v5826, 16
        %v6122 = vrot.slane %v6120, 5
        %v6123 = vor.u32 %v6119, %v6122
        %v6124 = vrot.slane %v6123, 4
        %v6126 = vshll.u32 %v5827, 16
        %v6128 = vrot.slane %v6126, 5
        %v6129 = vsel %vm1299, %v6124, %v6128
        %v6130 = vshrl.u32 %v5827, 16
        %v6132 = vrot.slane %v6130, 4
        %v6133 = vor.u32 %v6132, %v6128
        %v6134 = vrot.slane %v6133, 4
        %v6136 = vshll.u32 %v5847, 16
        %v6138 = vrot.slane %v6136, 5
        %v6139 = vsel %vm1299, %v6134, %v6138
        %v6141 = vshrl.u32 %v5828, 16
        %v6143 = vrot.slane %v6141, 4
        %v6144 = vshll.u32 %v5828, 16
        %v6146 = vrot.slane %v6144, 5
        %v6147 = vor.u32 %v6143, %v6146
        %v6148 = vrot.slane %v6147, 4
        %v6150 = vshll.u32 %v5829, 16
        %v6152 = vrot.slane %v6150, 5
        %v6153 = vsel %vm1299, %v6148, %v6152
        %v6154 = vshrl.u32 %v5829, 16
        %v6156 = vrot.slane %v6154, 4
        %v6157 = vor.u32 %v6156, %v6152
        %v6158 = vrot.slane %v6157, 4
        %v6160 = vshll.u32 %v5848, 16
        %v6162 = vrot.slane %v6160, 5
        %v6163 = vsel %vm1299, %v6158, %v6162
        %v6165 = vshrl.u32 %v5830, 16
        %v6167 = vrot.slane %v6165, 4
        %v6168 = vshll.u32 %v5830, 16
        %v6170 = vrot.slane %v6168, 5
        %v6171 = vor.u32 %v6167, %v6170
        %v6172 = vrot.slane %v6171, 4
        %v6174 = vshll.u32 %v5831, 16
        %v6176 = vrot.slane %v6174, 5
        %v6177 = vsel %vm1299, %v6172, %v6176
        %v6178 = vshrl.u32 %v5831, 16
        %v6180 = vrot.slane %v6178, 4
        %v6181 = vor.u32 %v6180, %v6176
        %v6182 = vrot.slane %v6181, 4
        %v6184 = vshll.u32 %v5849, 16
        %v6186 = vrot.slane %v6184, 5
        %v6187 = vsel %vm1299, %v6182, %v6186
        %v6189 = vshrl.u32 %v5832, 16
        %v6191 = vrot.slane %v6189, 4
        %v6192 = vshll.u32 %v5832, 16
        %v6194 = vrot.slane %v6192, 5
        %v6195 = vor.u32 %v6191, %v6194
        %v6196 = vrot.slane %v6195, 4
        %v6198 = vshll.u32 %v5833, 16
        %v6200 = vrot.slane %v6198, 5
        %v6201 = vsel %vm1299, %v6196, %v6200
        %v6202 = vshrl.u32 %v5833, 16
        %v6204 = vrot.slane %v6202, 4
        %v6205 = vor.u32 %v6204, %v6200
        %v6206 = vrot.slane %v6205, 4
        %v6208 = vshll.u32 %v5850, 16
        %v6210 = vrot.slane %v6208, 5
        %v6211 = vsel %vm1299, %v6206, %v6210
        %v6213 = vshrl.u32 %v5834, 16
        %v6215 = vrot.slane %v6213, 4
        %v6216 = vshll.u32 %v5834, 16
        %v6218 = vrot.slane %v6216, 5
        %v6219 = vor.u32 %v6215, %v6218
        %v6220 = vrot.slane %v6219, 4
        %v6222 = vshll.u32 %v5835, 16
        %v6224 = vrot.slane %v6222, 5
        %v6225 = vsel %vm1299, %v6220, %v6224
        %v6226 = vshrl.u32 %v5835, 16
        %v6228 = vrot.slane %v6226, 4
        %v6229 = vor.u32 %v6228, %v6224
        %v6230 = vrot.slane %v6229, 4
        %v6232 = vshll.u32 %v5851, 16
        %v6234 = vrot.slane %v6232, 5
        %v6235 = vsel %vm1299, %v6230, %v6234
        %v6236 = vld [vmem:[%s5803] sm:$0xe]
        %v6237 = vld [vmem:[%s5803 + $0xc] sm:$0xe]
        %v6238 = vld [vmem:[%s5803 + $0x18] sm:$0xe]
        %v6239 = vld [vmem:[%s5803 + $0x24] sm:$0xe]
        %v6240 = vld [vmem:[%s5803 + $0x30] sm:$0xe]
        %v6241 = vld [vmem:[%s5803 + $0x3c] sm:$0xe]
        %v6242 = vld [vmem:[%s5803 + $0x48] sm:$0xe]
        %v6243 = vld [vmem:[%s5803 + $0x54] sm:$0xe]
        %v6244 = vld [vmem:[%s5803 + $0x60] sm:$0xe]
        %v6245 = vld [vmem:[%s5803 + $0x6c] sm:$0xe]
        %v6246 = vld [vmem:[%s5803 + $0x78] sm:$0xe]
        %v6247 = vld [vmem:[%s5803 + $0x84] sm:$0xe]
        %v6248 = vld [vmem:[%s5803 + $0x90] sm:$0xe]
        %v6249 = vld [vmem:[%s5803 + $0x9c] sm:$0xe]
        %v6250 = vld [vmem:[%s5803 + $0xa8] sm:$0xe]
        %v6251 = vld [vmem:[%s5803 + $0xb4] sm:$0xe]
        %v6300 = vrot.slane %v6236, 5
        %v6301 = vrot.slane %v6300, 4
        %v6302 = vrot.slane %v5805, 5
        %v6303 = vsel %vm1750, %v6301, %v6302
        %v6304 = vrot.slane %v6302, 4
        %v6305 = vrot.slane %v5836, 5
        %v6306 = vsel %vm1750, %v6304, %v6305
        %v6307 = vrot.slane %v6237, 5
        %v6308 = vrot.slane %v6307, 4
        %v6309 = vrot.slane %v5807, 5
        %v6310 = vsel %vm1750, %v6308, %v6309
        %v6311 = vrot.slane %v6309, 4
        %v6312 = vrot.slane %v5837, 5
        %v6313 = vsel %vm1750, %v6311, %v6312
        %v6314 = vrot.slane %v6238, 5
        %v6315 = vrot.slane %v6314, 4
        %v6316 = vrot.slane %v5809, 5
        %v6317 = vsel %vm1750, %v6315, %v6316
        %v6318 = vrot.slane %v6316, 4
        %v6319 = vrot.slane %v5838, 5
        %v6320 = vsel %vm1750, %v6318, %v6319
        %v6321 = vrot.slane %v6239, 5
        %v6322 = vrot.slane %v6321, 4
        %v6323 = vrot.slane %v5811, 5
        %v6324 = vsel %vm1750, %v6322, %v6323
        %v6325 = vrot.slane %v6323, 4
        %v6326 = vrot.slane %v5839, 5
        %v6327 = vsel %vm1750, %v6325, %v6326
        %v6328 = vrot.slane %v6240, 5
        %v6329 = vrot.slane %v6328, 4
        %v6330 = vrot.slane %v5813, 5
        %v6331 = vsel %vm1750, %v6329, %v6330
        %v6332 = vrot.slane %v6330, 4
        %v6333 = vrot.slane %v5840, 5
        %v6334 = vsel %vm1750, %v6332, %v6333
        %v6335 = vrot.slane %v6241, 5
        %v6336 = vrot.slane %v6335, 4
        %v6337 = vrot.slane %v5815, 5
        %v6338 = vsel %vm1750, %v6336, %v6337
        %v6339 = vrot.slane %v6337, 4
        %v6340 = vrot.slane %v5841, 5
        %v6341 = vsel %vm1750, %v6339, %v6340
        %v6342 = vrot.slane %v6242, 5
        %v6343 = vrot.slane %v6342, 4
        %v6344 = vrot.slane %v5817, 5
        %v6345 = vsel %vm1750, %v6343, %v6344
        %v6346 = vrot.slane %v6344, 4
        %v6347 = vrot.slane %v5842, 5
        %v6348 = vsel %vm1750, %v6346, %v6347
        %v6349 = vrot.slane %v6243, 5
        %v6350 = vrot.slane %v6349, 4
        %v6351 = vrot.slane %v5819, 5
        %v6352 = vsel %vm1750, %v6350, %v6351
        %v6353 = vrot.slane %v6351, 4
        %v6354 = vrot.slane %v5843, 5
        %v6355 = vsel %vm1750, %v6353, %v6354
        %v6356 = vrot.slane %v6244, 5
        %v6357 = vrot.slane %v6356, 4
        %v6358 = vrot.slane %v5821, 5
        %v6359 = vsel %vm1750, %v6357, %v6358
        %v6360 = vrot.slane %v6358, 4
        %v6361 = vrot.slane %v5844, 5
        %v6362 = vsel %vm1750, %v6360, %v6361
        %v6363 = vrot.slane %v6245, 5
        %v6364 = vrot.slane %v6363, 4
        %v6365 = vrot.slane %v5823, 5
        %v6366 = vsel %vm1750, %v6364, %v6365
        %v6367 = vrot.slane %v6365, 4
        %v6368 = vrot.slane %v5845, 5
        %v6369 = vsel %vm1750, %v6367, %v6368
        %v6370 = vrot.slane %v6246, 5
        %v6371 = vrot.slane %v6370, 4
        %v6372 = vrot.slane %v5825, 5
        %v6373 = vsel %vm1750, %v6371, %v6372
        %v6374 = vrot.slane %v6372, 4
        %v6375 = vrot.slane %v5846, 5
        %v6376 = vsel %vm1750, %v6374, %v6375
        %v6377 = vrot.slane %v6247, 5
        %v6378 = vrot.slane %v6377, 4
        %v6379 = vrot.slane %v5827, 5
        %v6380 = vsel %vm1750, %v6378, %v6379
        %v6381 = vrot.slane %v6379, 4
        %v6382 = vrot.slane %v5847, 5
        %v6383 = vsel %vm1750, %v6381, %v6382
        %v6384 = vrot.slane %v6248, 5
        %v6385 = vrot.slane %v6384, 4
        %v6386 = vrot.slane %v5829, 5
        %v6387 = vsel %vm1750, %v6385, %v6386
        %v6388 = vrot.slane %v6386, 4
        %v6389 = vrot.slane %v5848, 5
        %v6390 = vsel %vm1750, %v6388, %v6389
        %v6391 = vrot.slane %v6249, 5
        %v6392 = vrot.slane %v6391, 4
        %v6393 = vrot.slane %v5831, 5
        %v6394 = vsel %vm1750, %v6392, %v6393
        %v6395 = vrot.slane %v6393, 4
        %v6396 = vrot.slane %v5849, 5
        %v6397 = vsel %vm1750, %v6395, %v6396
        %v6398 = vrot.slane %v6250, 5
        %v6399 = vrot.slane %v6398, 4
        %v6400 = vrot.slane %v5833, 5
        %v6401 = vsel %vm1750, %v6399, %v6400
        %v6402 = vrot.slane %v6400, 4
        %v6403 = vrot.slane %v5850, 5
        %v6404 = vsel %vm1750, %v6402, %v6403
        %v6405 = vrot.slane %v6251, 5
        %v6406 = vrot.slane %v6405, 4
        %v6407 = vrot.slane %v5835, 5
        %v6408 = vsel %vm1750, %v6406, %v6407
        %v6409 = vrot.slane %v6407, 4
        %v6410 = vrot.slane %v5851, 5
        %v6411 = vsel %vm1750, %v6409, %v6410
        %v6428 = vunpack.c.l.b16 %v4587
        %v6429 = vunpack.c.l.b16 %v4588
        %v6430 = vunpack.c.l.b16 %v4589
        %v6431 = vunpack.c.l.b16 %v4590
        %v6432 = vunpack.c.l.b16 %v4591
        %v6433 = vunpack.c.l.b16 %v4592
        %v6434 = vunpack.c.l.b16 %v4593
        %v6435 = vunpack.c.l.b16 %v4594
        %v6436 = vunpack.c.l.b16 %v4595
        %v6437 = vunpack.c.l.b16 %v4596
        %v6438 = vunpack.c.l.b16 %v4597
        %v6439 = vunpack.c.l.b16 %v4598
        %v6440 = vunpack.c.l.b16 %v4599
        %v6441 = vunpack.c.l.b16 %v4600
        %v6442 = vunpack.c.l.b16 %v4601
        %v6443 = vunpack.c.l.b16 %v4602
        %v6444 = vunpack.c.l.b16 %v4603
        %v6445 = vunpack.c.l.b16 %v4604
        %v6446 = vunpack.c.l.b16 %v4605
        %v6447 = vunpack.c.l.b16 %v4606
        %v6448 = vunpack.c.l.b16 %v4607
        %v6449 = vunpack.c.l.b16 %v4608
        %v6450 = vunpack.c.l.b16 %v4609
        %v6451 = vunpack.c.l.b16 %v4610
        %v6452 = vunpack.c.l.b16 %v4611
        %v6453 = vunpack.c.l.b16 %v4612
        %v6454 = vunpack.c.l.b16 %v4613
        %v6455 = vunpack.c.l.b16 %v4614
        %v6456 = vunpack.c.l.b16 %v4615
        %v6457 = vunpack.c.l.b16 %v4616
        %v6458 = vunpack.c.l.b16 %v4617
        %v6459 = vunpack.c.l.b16 %v4618
        %v6460 = vpack.c.b16 %v6429, %v6428
        %v6461 = vpack.c.b16 %v6431, %v6430
        %v6462 = vpack.c.b16 %v6433, %v6432
        %v6463 = vpack.c.b16 %v6435, %v6434
        %v6464 = vpack.c.b16 %v6437, %v6436
        %v6465 = vpack.c.b16 %v6439, %v6438
        %v6466 = vpack.c.b16 %v6441, %v6440
        %v6467 = vpack.c.b16 %v6443, %v6442
        %v6468 = vpack.c.b16 %v6445, %v6444
        %v6469 = vpack.c.b16 %v6447, %v6446
        %v6470 = vpack.c.b16 %v6449, %v6448
        %v6471 = vpack.c.b16 %v6451, %v6450
        %v6472 = vpack.c.b16 %v6453, %v6452
        %v6473 = vpack.c.b16 %v6455, %v6454
        %v6474 = vpack.c.b16 %v6457, %v6456
        %v6475 = vpack.c.b16 %v6459, %v6458
        %v6476 = vunpack.c.l.b16 %v4648
        %v6477 = vunpack.c.l.b16 %v4658
        %v6478 = vunpack.c.l.b16 %v4672
        %v6479 = vunpack.c.l.b16 %v4682
        %v6480 = vunpack.c.l.b16 %v4696
        %v6481 = vunpack.c.l.b16 %v4706
        %v6482 = vunpack.c.l.b16 %v4720
        %v6483 = vunpack.c.l.b16 %v4730
        %v6484 = vunpack.c.l.b16 %v4744
        %v6485 = vunpack.c.l.b16 %v4754
        %v6486 = vunpack.c.l.b16 %v4768
        %v6487 = vunpack.c.l.b16 %v4778
        %v6488 = vunpack.c.l.b16 %v4792
        %v6489 = vunpack.c.l.b16 %v4802
        %v6490 = vunpack.c.l.b16 %v4816
        %v6491 = vunpack.c.l.b16 %v4826
        %v6492 = vunpack.c.l.b16 %v4840
        %v6493 = vunpack.c.l.b16 %v4850
        %v6494 = vunpack.c.l.b16 %v4864
        %v6495 = vunpack.c.l.b16 %v4874
        %v6496 = vunpack.c.l.b16 %v4888
        %v6497 = vunpack.c.l.b16 %v4898
        %v6498 = vunpack.c.l.b16 %v4912
        %v6499 = vunpack.c.l.b16 %v4922
        %v6500 = vunpack.c.l.b16 %v4936
        %v6501 = vunpack.c.l.b16 %v4946
        %v6502 = vunpack.c.l.b16 %v4960
        %v6503 = vunpack.c.l.b16 %v4970
        %v6504 = vunpack.c.l.b16 %v4984
        %v6505 = vunpack.c.l.b16 %v4994
        %v6506 = vunpack.c.l.b16 %v5008
        %v6507 = vunpack.c.l.b16 %v5018
        %v6508 = vpack.c.b16 %v6477, %v6476
        %v6509 = vpack.c.b16 %v6479, %v6478
        %v6510 = vpack.c.b16 %v6481, %v6480
        %v6511 = vpack.c.b16 %v6483, %v6482
        %v6512 = vpack.c.b16 %v6485, %v6484
        %v6513 = vpack.c.b16 %v6487, %v6486
        %v6514 = vpack.c.b16 %v6489, %v6488
        %v6515 = vpack.c.b16 %v6491, %v6490
        %v6516 = vpack.c.b16 %v6493, %v6492
        %v6517 = vpack.c.b16 %v6495, %v6494
        %v6518 = vpack.c.b16 %v6497, %v6496
        %v6519 = vpack.c.b16 %v6499, %v6498
        %v6520 = vpack.c.b16 %v6501, %v6500
        %v6521 = vpack.c.b16 %v6503, %v6502
        %v6522 = vpack.c.b16 %v6505, %v6504
        %v6523 = vpack.c.b16 %v6507, %v6506
        %6524 = vrot.lane.b32.xlu0 %v6508, 4
        %v6525 = vpop.permute.xlu0 %6524
        %6526 = vrot.lane.b32.xlu0 %v6509, 4
        %v6527 = vpop.permute.xlu0 %6526
        %6528 = vrot.lane.b32.xlu0 %v6510, 4
        %v6529 = vpop.permute.xlu0 %6528
        %6530 = vrot.lane.b32.xlu0 %v6511, 4
        %v6531 = vpop.permute.xlu0 %6530
        %6532 = vrot.lane.b32.xlu0 %v6512, 4
        %v6533 = vpop.permute.xlu0 %6532
        %6534 = vrot.lane.b32.xlu0 %v6513, 4
        %v6535 = vpop.permute.xlu0 %6534
        %6536 = vrot.lane.b32.xlu0 %v6514, 4
        %v6537 = vpop.permute.xlu0 %6536
        %6538 = vrot.lane.b32.xlu0 %v6515, 4
        %v6539 = vpop.permute.xlu0 %6538
        %6540 = vrot.lane.b32.xlu0 %v6516, 4
        %v6541 = vpop.permute.xlu0 %6540
        %6542 = vrot.lane.b32.xlu0 %v6517, 4
        %v6543 = vpop.permute.xlu0 %6542
        %6544 = vrot.lane.b32.xlu0 %v6518, 4
        %v6545 = vpop.permute.xlu0 %6544
        %6546 = vrot.lane.b32.xlu0 %v6519, 4
        %v6547 = vpop.permute.xlu0 %6546
        %6548 = vrot.lane.b32.xlu0 %v6520, 4
        %v6549 = vpop.permute.xlu0 %6548
        %6550 = vrot.lane.b32.xlu0 %v6521, 4
        %v6551 = vpop.permute.xlu0 %6550
        %6552 = vrot.lane.b32.xlu0 %v6522, 4
        %v6553 = vpop.permute.xlu0 %6552
        %6554 = vrot.lane.b32.xlu0 %v6523, 4
        %v6555 = vpop.permute.xlu0 %6554
        %v6556 = vunpack.c.l.b16 %v5086
        %v6557 = vunpack.c.l.b16 %v5089
        %v6558 = vunpack.c.l.b16 %v5093
        %v6559 = vunpack.c.l.b16 %v5096
        %v6560 = vunpack.c.l.b16 %v5100
        %v6561 = vunpack.c.l.b16 %v5103
        %v6562 = vunpack.c.l.b16 %v5107
        %v6563 = vunpack.c.l.b16 %v5110
        %v6564 = vunpack.c.l.b16 %v5114
        %v6565 = vunpack.c.l.b16 %v5117
        %v6566 = vunpack.c.l.b16 %v5121
        %v6567 = vunpack.c.l.b16 %v5124
        %v6568 = vunpack.c.l.b16 %v5128
        %v6569 = vunpack.c.l.b16 %v5131
        %v6570 = vunpack.c.l.b16 %v5135
        %v6571 = vunpack.c.l.b16 %v5138
        %v6572 = vunpack.c.l.b16 %v5142
        %v6573 = vunpack.c.l.b16 %v5145
        %v6574 = vunpack.c.l.b16 %v5149
        %v6575 = vunpack.c.l.b16 %v5152
        %v6576 = vunpack.c.l.b16 %v5156
        %v6577 = vunpack.c.l.b16 %v5159
        %v6578 = vunpack.c.l.b16 %v5163
        %v6579 = vunpack.c.l.b16 %v5166
        %v6580 = vunpack.c.l.b16 %v5170
        %v6581 = vunpack.c.l.b16 %v5173
        %v6582 = vunpack.c.l.b16 %v5177
        %v6583 = vunpack.c.l.b16 %v5180
        %v6584 = vunpack.c.l.b16 %v5184
        %v6585 = vunpack.c.l.b16 %v5187
        %v6586 = vunpack.c.l.b16 %v5191
        %v6587 = vunpack.c.l.b16 %v5194
        %v6588 = vpack.c.b16 %v6557, %v6556
        %v6589 = vpack.c.b16 %v6559, %v6558
        %v6590 = vpack.c.b16 %v6561, %v6560
        %v6591 = vpack.c.b16 %v6563, %v6562
        %v6592 = vpack.c.b16 %v6565, %v6564
        %v6593 = vpack.c.b16 %v6567, %v6566
        %v6594 = vpack.c.b16 %v6569, %v6568
        %v6595 = vpack.c.b16 %v6571, %v6570
        %v6596 = vpack.c.b16 %v6573, %v6572
        %v6597 = vpack.c.b16 %v6575, %v6574
        %v6598 = vpack.c.b16 %v6577, %v6576
        %v6599 = vpack.c.b16 %v6579, %v6578
        %v6600 = vpack.c.b16 %v6581, %v6580
        %v6601 = vpack.c.b16 %v6583, %v6582
        %v6602 = vpack.c.b16 %v6585, %v6584
        %v6603 = vpack.c.b16 %v6587, %v6586
        %6604 = vrot.lane.b32.xlu0 %v6588, 8
        %v6605 = vpop.permute.xlu0 %6604
        %6606 = vrot.lane.b32.xlu0 %v6589, 8
        %v6607 = vpop.permute.xlu0 %6606
        %6608 = vrot.lane.b32.xlu0 %v6590, 8
        %v6609 = vpop.permute.xlu0 %6608
        %6610 = vrot.lane.b32.xlu0 %v6591, 8
        %v6611 = vpop.permute.xlu0 %6610
        %6612 = vrot.lane.b32.xlu0 %v6592, 8
        %v6613 = vpop.permute.xlu0 %6612
        %6614 = vrot.lane.b32.xlu0 %v6593, 8
        %v6615 = vpop.permute.xlu0 %6614
        %6616 = vrot.lane.b32.xlu0 %v6594, 8
        %v6617 = vpop.permute.xlu0 %6616
        %6618 = vrot.lane.b32.xlu0 %v6595, 8
        %v6619 = vpop.permute.xlu0 %6618
        %6620 = vrot.lane.b32.xlu0 %v6596, 8
        %v6621 = vpop.permute.xlu0 %6620
        %6622 = vrot.lane.b32.xlu0 %v6597, 8
        %v6623 = vpop.permute.xlu0 %6622
        %6624 = vrot.lane.b32.xlu0 %v6598, 8
        %v6625 = vpop.permute.xlu0 %6624
        %6626 = vrot.lane.b32.xlu0 %v6599, 8
        %v6627 = vpop.permute.xlu0 %6626
        %6628 = vrot.lane.b32.xlu0 %v6600, 8
        %v6629 = vpop.permute.xlu0 %6628
        %6630 = vrot.lane.b32.xlu0 %v6601, 8
        %v6631 = vpop.permute.xlu0 %6630
        %6632 = vrot.lane.b32.xlu0 %v6602, 8
        %v6633 = vpop.permute.xlu0 %6632
        %6634 = vrot.lane.b32.xlu0 %v6603, 8
        %v6635 = vpop.permute.xlu0 %6634
        %v6652 = vunpack.c.l.b16 %v5195
        %v6653 = vunpack.c.l.b16 %v5196
        %v6654 = vunpack.c.l.b16 %v5197
        %v6655 = vunpack.c.l.b16 %v5198
        %v6656 = vunpack.c.l.b16 %v5199
        %v6657 = vunpack.c.l.b16 %v5200
        %v6658 = vunpack.c.l.b16 %v5201
        %v6659 = vunpack.c.l.b16 %v5202
        %v6660 = vunpack.c.l.b16 %v5203
        %v6661 = vunpack.c.l.b16 %v5204
        %v6662 = vunpack.c.l.b16 %v5205
        %v6663 = vunpack.c.l.b16 %v5206
        %v6664 = vunpack.c.l.b16 %v5207
        %v6665 = vunpack.c.l.b16 %v5208
        %v6666 = vunpack.c.l.b16 %v5209
        %v6667 = vunpack.c.l.b16 %v5210
        %v6668 = vunpack.c.l.b16 %v5211
        %v6669 = vunpack.c.l.b16 %v5212
        %v6670 = vunpack.c.l.b16 %v5213
        %v6671 = vunpack.c.l.b16 %v5214
        %v6672 = vunpack.c.l.b16 %v5215
        %v6673 = vunpack.c.l.b16 %v5216
        %v6674 = vunpack.c.l.b16 %v5217
        %v6675 = vunpack.c.l.b16 %v5218
        %v6676 = vunpack.c.l.b16 %v5219
        %v6677 = vunpack.c.l.b16 %v5220
        %v6678 = vunpack.c.l.b16 %v5221
        %v6679 = vunpack.c.l.b16 %v5222
        %v6680 = vunpack.c.l.b16 %v5223
        %v6681 = vunpack.c.l.b16 %v5224
        %v6682 = vunpack.c.l.b16 %v5225
        %v6683 = vunpack.c.l.b16 %v5226
        %v6684 = vpack.c.b16 %v6653, %v6652
        %v6685 = vpack.c.b16 %v6655, %v6654
        %v6686 = vpack.c.b16 %v6657, %v6656
        %v6687 = vpack.c.b16 %v6659, %v6658
        %v6688 = vpack.c.b16 %v6661, %v6660
        %v6689 = vpack.c.b16 %v6663, %v6662
        %v6690 = vpack.c.b16 %v6665, %v6664
        %v6691 = vpack.c.b16 %v6667, %v6666
        %v6692 = vpack.c.b16 %v6669, %v6668
        %v6693 = vpack.c.b16 %v6671, %v6670
        %v6694 = vpack.c.b16 %v6673, %v6672
        %v6695 = vpack.c.b16 %v6675, %v6674
        %v6696 = vpack.c.b16 %v6677, %v6676
        %v6697 = vpack.c.b16 %v6679, %v6678
        %v6698 = vpack.c.b16 %v6681, %v6680
        %v6699 = vpack.c.b16 %v6683, %v6682
        %6700 = vrot.lane.b32.xlu0 %v6684, 12
        %v6701 = vpop.permute.xlu0 %6700
        %6702 = vrot.lane.b32.xlu0 %v6685, 12
        %v6703 = vpop.permute.xlu0 %6702
        %6704 = vrot.lane.b32.xlu0 %v6686, 12
        %v6705 = vpop.permute.xlu0 %6704
        %6706 = vrot.lane.b32.xlu0 %v6687, 12
        %v6707 = vpop.permute.xlu0 %6706
        %6708 = vrot.lane.b32.xlu0 %v6688, 12
        %v6709 = vpop.permute.xlu0 %6708
        %6710 = vrot.lane.b32.xlu0 %v6689, 12
        %v6711 = vpop.permute.xlu0 %6710
        %6712 = vrot.lane.b32.xlu0 %v6690, 12
        %v6713 = vpop.permute.xlu0 %6712
        %6714 = vrot.lane.b32.xlu0 %v6691, 12
        %v6715 = vpop.permute.xlu0 %6714
        %6716 = vrot.lane.b32.xlu0 %v6692, 12
        %v6717 = vpop.permute.xlu0 %6716
        %6718 = vrot.lane.b32.xlu0 %v6693, 12
        %v6719 = vpop.permute.xlu0 %6718
        %6720 = vrot.lane.b32.xlu0 %v6694, 12
        %v6721 = vpop.permute.xlu0 %6720
        %6722 = vrot.lane.b32.xlu0 %v6695, 12
        %v6723 = vpop.permute.xlu0 %6722
        %6724 = vrot.lane.b32.xlu0 %v6696, 12
        %v6725 = vpop.permute.xlu0 %6724
        %6726 = vrot.lane.b32.xlu0 %v6697, 12
        %v6727 = vpop.permute.xlu0 %6726
        %6728 = vrot.lane.b32.xlu0 %v6698, 12
        %v6729 = vpop.permute.xlu0 %6728
        %6730 = vrot.lane.b32.xlu0 %v6699, 12
        %v6731 = vpop.permute.xlu0 %6730
        %v6732 = vunpack.c.l.b16 %v5256
        %v6733 = vunpack.c.l.b16 %v5266
        %v6734 = vunpack.c.l.b16 %v5280
        %v6735 = vunpack.c.l.b16 %v5290
        %v6736 = vunpack.c.l.b16 %v5304
        %v6737 = vunpack.c.l.b16 %v5314
        %v6738 = vunpack.c.l.b16 %v5328
        %v6739 = vunpack.c.l.b16 %v5338
        %v6740 = vunpack.c.l.b16 %v5352
        %v6741 = vunpack.c.l.b16 %v5362
        %v6742 = vunpack.c.l.b16 %v5376
        %v6743 = vunpack.c.l.b16 %v5386
        %v6744 = vunpack.c.l.b16 %v5400
        %v6745 = vunpack.c.l.b16 %v5410
        %v6746 = vunpack.c.l.b16 %v5424
        %v6747 = vunpack.c.l.b16 %v5434
        %v6748 = vunpack.c.l.b16 %v5448
        %v6749 = vunpack.c.l.b16 %v5458
        %v6750 = vunpack.c.l.b16 %v5472
        %v6751 = vunpack.c.l.b16 %v5482
        %v6752 = vunpack.c.l.b16 %v5496
        %v6753 = vunpack.c.l.b16 %v5506
        %v6754 = vunpack.c.l.b16 %v5520
        %v6755 = vunpack.c.l.b16 %v5530
        %v6756 = vunpack.c.l.b16 %v5544
        %v6757 = vunpack.c.l.b16 %v5554
        %v6758 = vunpack.c.l.b16 %v5568
        %v6759 = vunpack.c.l.b16 %v5578
        %v6760 = vunpack.c.l.b16 %v5592
        %v6761 = vunpack.c.l.b16 %v5602
        %v6762 = vunpack.c.l.b16 %v5616
        %v6763 = vunpack.c.l.b16 %v5626
        %v6764 = vpack.c.b16 %v6733, %v6732
        %v6765 = vpack.c.b16 %v6735, %v6734
        %v6766 = vpack.c.b16 %v6737, %v6736
        %v6767 = vpack.c.b16 %v6739, %v6738
        %v6768 = vpack.c.b16 %v6741, %v6740
        %v6769 = vpack.c.b16 %v6743, %v6742
        %v6770 = vpack.c.b16 %v6745, %v6744
        %v6771 = vpack.c.b16 %v6747, %v6746
        %v6772 = vpack.c.b16 %v6749, %v6748
        %v6773 = vpack.c.b16 %v6751, %v6750
        %v6774 = vpack.c.b16 %v6753, %v6752
        %v6775 = vpack.c.b16 %v6755, %v6754
        %v6776 = vpack.c.b16 %v6757, %v6756
        %v6777 = vpack.c.b16 %v6759, %v6758
        %v6778 = vpack.c.b16 %v6761, %v6760
        %v6779 = vpack.c.b16 %v6763, %v6762
        %6780 = vrot.lane.b32.xlu0 %v6764, 16
        %v6781 = vpop.permute.xlu0 %6780
        %6782 = vrot.lane.b32.xlu0 %v6765, 16
        %v6783 = vpop.permute.xlu0 %6782
        %6784 = vrot.lane.b32.xlu0 %v6766, 16
        %v6785 = vpop.permute.xlu0 %6784
        %6786 = vrot.lane.b32.xlu0 %v6767, 16
        %v6787 = vpop.permute.xlu0 %6786
        %6788 = vrot.lane.b32.xlu0 %v6768, 16
        %v6789 = vpop.permute.xlu0 %6788
        %6790 = vrot.lane.b32.xlu0 %v6769, 16
        %v6791 = vpop.permute.xlu0 %6790
        %6792 = vrot.lane.b32.xlu0 %v6770, 16
        %v6793 = vpop.permute.xlu0 %6792
        %6794 = vrot.lane.b32.xlu0 %v6771, 16
        %v6795 = vpop.permute.xlu0 %6794
        %6796 = vrot.lane.b32.xlu0 %v6772, 16
        %v6797 = vpop.permute.xlu0 %6796
        %6798 = vrot.lane.b32.xlu0 %v6773, 16
        %v6799 = vpop.permute.xlu0 %6798
        %6800 = vrot.lane.b32.xlu0 %v6774, 16
        %v6801 = vpop.permute.xlu0 %6800
        %6802 = vrot.lane.b32.xlu0 %v6775, 16
        %v6803 = vpop.permute.xlu0 %6802
        %6804 = vrot.lane.b32.xlu0 %v6776, 16
        %v6805 = vpop.permute.xlu0 %6804
        %6806 = vrot.lane.b32.xlu0 %v6777, 16
        %v6807 = vpop.permute.xlu0 %6806
        %6808 = vrot.lane.b32.xlu0 %v6778, 16
        %v6809 = vpop.permute.xlu0 %6808
        %6810 = vrot.lane.b32.xlu0 %v6779, 16
        %v6811 = vpop.permute.xlu0 %6810
        %v6812 = vunpack.c.l.b16 %v5694
        %v6813 = vunpack.c.l.b16 %v5697
        %v6814 = vunpack.c.l.b16 %v5701
        %v6815 = vunpack.c.l.b16 %v5704
        %v6816 = vunpack.c.l.b16 %v5708
        %v6817 = vunpack.c.l.b16 %v5711
        %v6818 = vunpack.c.l.b16 %v5715
        %v6819 = vunpack.c.l.b16 %v5718
        %v6820 = vunpack.c.l.b16 %v5722
        %v6821 = vunpack.c.l.b16 %v5725
        %v6822 = vunpack.c.l.b16 %v5729
        %v6823 = vunpack.c.l.b16 %v5732
        %v6824 = vunpack.c.l.b16 %v5736
        %v6825 = vunpack.c.l.b16 %v5739
        %v6826 = vunpack.c.l.b16 %v5743
        %v6827 = vunpack.c.l.b16 %v5746
        %v6828 = vunpack.c.l.b16 %v5750
        %v6829 = vunpack.c.l.b16 %v5753
        %v6830 = vunpack.c.l.b16 %v5757
        %v6831 = vunpack.c.l.b16 %v5760
        %v6832 = vunpack.c.l.b16 %v5764
        %v6833 = vunpack.c.l.b16 %v5767
        %v6834 = vunpack.c.l.b16 %v5771
        %v6835 = vunpack.c.l.b16 %v5774
        %v6836 = vunpack.c.l.b16 %v5778
        %v6837 = vunpack.c.l.b16 %v5781
        %v6838 = vunpack.c.l.b16 %v5785
        %v6839 = vunpack.c.l.b16 %v5788
        %v6840 = vunpack.c.l.b16 %v5792
        %v6841 = vunpack.c.l.b16 %v5795
        %v6842 = vunpack.c.l.b16 %v5799
        %v6843 = vunpack.c.l.b16 %v5802
        %v6844 = vpack.c.b16 %v6813, %v6812
        %v6845 = vpack.c.b16 %v6815, %v6814
        %v6846 = vpack.c.b16 %v6817, %v6816
        %v6847 = vpack.c.b16 %v6819, %v6818
        %v6848 = vpack.c.b16 %v6821, %v6820
        %v6849 = vpack.c.b16 %v6823, %v6822
        %v6850 = vpack.c.b16 %v6825, %v6824
        %v6851 = vpack.c.b16 %v6827, %v6826
        %v6852 = vpack.c.b16 %v6829, %v6828
        %v6853 = vpack.c.b16 %v6831, %v6830
        %v6854 = vpack.c.b16 %v6833, %v6832
        %v6855 = vpack.c.b16 %v6835, %v6834
        %v6856 = vpack.c.b16 %v6837, %v6836
        %v6857 = vpack.c.b16 %v6839, %v6838
        %v6858 = vpack.c.b16 %v6841, %v6840
        %v6859 = vpack.c.b16 %v6843, %v6842
        %6860 = vrot.lane.b32.xlu0 %v6844, 20
        %v6861 = vpop.permute.xlu0 %6860
        %6862 = vrot.lane.b32.xlu0 %v6845, 20
        %v6863 = vpop.permute.xlu0 %6862
        %6864 = vrot.lane.b32.xlu0 %v6846, 20
        %v6865 = vpop.permute.xlu0 %6864
        %6866 = vrot.lane.b32.xlu0 %v6847, 20
        %v6867 = vpop.permute.xlu0 %6866
        %6868 = vrot.lane.b32.xlu0 %v6848, 20
        %v6869 = vpop.permute.xlu0 %6868
        %6870 = vrot.lane.b32.xlu0 %v6849, 20
        %v6871 = vpop.permute.xlu0 %6870
        %6872 = vrot.lane.b32.xlu0 %v6850, 20
        %v6873 = vpop.permute.xlu0 %6872
        %6874 = vrot.lane.b32.xlu0 %v6851, 20
        %v6875 = vpop.permute.xlu0 %6874
        %6876 = vrot.lane.b32.xlu0 %v6852, 20
        %v6877 = vpop.permute.xlu0 %6876
        %6878 = vrot.lane.b32.xlu0 %v6853, 20
        %v6879 = vpop.permute.xlu0 %6878
        %6880 = vrot.lane.b32.xlu0 %v6854, 20
        %v6881 = vpop.permute.xlu0 %6880
        %6882 = vrot.lane.b32.xlu0 %v6855, 20
        %v6883 = vpop.permute.xlu0 %6882
        %6884 = vrot.lane.b32.xlu0 %v6856, 20
        %v6885 = vpop.permute.xlu0 %6884
        %6886 = vrot.lane.b32.xlu0 %v6857, 20
        %v6887 = vpop.permute.xlu0 %6886
        %6888 = vrot.lane.b32.xlu0 %v6858, 20
        %v6889 = vpop.permute.xlu0 %6888
        %6890 = vrot.lane.b32.xlu0 %v6859, 20
        %v6891 = vpop.permute.xlu0 %6890
        %v6908 = vunpack.c.l.b16 %v5804
        %v6909 = vunpack.c.l.b16 %v5805
        %v6910 = vunpack.c.l.b16 %v5806
        %v6911 = vunpack.c.l.b16 %v5807
        %v6912 = vunpack.c.l.b16 %v5808
        %v6913 = vunpack.c.l.b16 %v5809
        %v6914 = vunpack.c.l.b16 %v5810
        %v6915 = vunpack.c.l.b16 %v5811
        %v6916 = vunpack.c.l.b16 %v5812
        %v6917 = vunpack.c.l.b16 %v5813
        %v6918 = vunpack.c.l.b16 %v5814
        %v6919 = vunpack.c.l.b16 %v5815
        %v6920 = vunpack.c.l.b16 %v5816
        %v6921 = vunpack.c.l.b16 %v5817
        %v6922 = vunpack.c.l.b16 %v5818
        %v6923 = vunpack.c.l.b16 %v5819
        %v6924 = vunpack.c.l.b16 %v5820
        %v6925 = vunpack.c.l.b16 %v5821
        %v6926 = vunpack.c.l.b16 %v5822
        %v6927 = vunpack.c.l.b16 %v5823
        %v6928 = vunpack.c.l.b16 %v5824
        %v6929 = vunpack.c.l.b16 %v5825
        %v6930 = vunpack.c.l.b16 %v5826
        %v6931 = vunpack.c.l.b16 %v5827
        %v6932 = vunpack.c.l.b16 %v5828
        %v6933 = vunpack.c.l.b16 %v5829
        %v6934 = vunpack.c.l.b16 %v5830
        %v6935 = vunpack.c.l.b16 %v5831
        %v6936 = vunpack.c.l.b16 %v5832
        %v6937 = vunpack.c.l.b16 %v5833
        %v6938 = vunpack.c.l.b16 %v5834
        %v6939 = vunpack.c.l.b16 %v5835
        %v6940 = vpack.c.b16 %v6909, %v6908
        %v6941 = vpack.c.b16 %v6911, %v6910
        %v6942 = vpack.c.b16 %v6913, %v6912
        %v6943 = vpack.c.b16 %v6915, %v6914
        %v6944 = vpack.c.b16 %v6917, %v6916
        %v6945 = vpack.c.b16 %v6919, %v6918
        %v6946 = vpack.c.b16 %v6921, %v6920
        %v6947 = vpack.c.b16 %v6923, %v6922
        %v6948 = vpack.c.b16 %v6925, %v6924
        %v6949 = vpack.c.b16 %v6927, %v6926
        %v6950 = vpack.c.b16 %v6929, %v6928
        %v6951 = vpack.c.b16 %v6931, %v6930
        %v6952 = vpack.c.b16 %v6933, %v6932
        %v6953 = vpack.c.b16 %v6935, %v6934
        %v6954 = vpack.c.b16 %v6937, %v6936
        %v6955 = vpack.c.b16 %v6939, %v6938
        %6956 = vrot.lane.b32.xlu0 %v6940, 24
        %v6957 = vpop.permute.xlu0 %6956
        %6958 = vrot.lane.b32.xlu0 %v6941, 24
        %v6959 = vpop.permute.xlu0 %6958
        %6960 = vrot.lane.b32.xlu0 %v6942, 24
        %v6961 = vpop.permute.xlu0 %6960
        %6962 = vrot.lane.b32.xlu0 %v6943, 24
        %v6963 = vpop.permute.xlu0 %6962
        %6964 = vrot.lane.b32.xlu0 %v6944, 24
        %v6965 = vpop.permute.xlu0 %6964
        %6966 = vrot.lane.b32.xlu0 %v6945, 24
        %v6967 = vpop.permute.xlu0 %6966
        %6968 = vrot.lane.b32.xlu0 %v6946, 24
        %v6969 = vpop.permute.xlu0 %6968
        %6970 = vrot.lane.b32.xlu0 %v6947, 24
        %v6971 = vpop.permute.xlu0 %6970
        %6972 = vrot.lane.b32.xlu0 %v6948, 24
        %v6973 = vpop.permute.xlu0 %6972
        %6974 = vrot.lane.b32.xlu0 %v6949, 24
        %v6975 = vpop.permute.xlu0 %6974
        %6976 = vrot.lane.b32.xlu0 %v6950, 24
        %v6977 = vpop.permute.xlu0 %6976
        %6978 = vrot.lane.b32.xlu0 %v6951, 24
        %v6979 = vpop.permute.xlu0 %6978
        %6980 = vrot.lane.b32.xlu0 %v6952, 24
        %v6981 = vpop.permute.xlu0 %6980
        %6982 = vrot.lane.b32.xlu0 %v6953, 24
        %v6983 = vpop.permute.xlu0 %6982
        %6984 = vrot.lane.b32.xlu0 %v6954, 24
        %v6985 = vpop.permute.xlu0 %6984
        %6986 = vrot.lane.b32.xlu0 %v6955, 24
        %v6987 = vpop.permute.xlu0 %6986
        %v6988 = vunpack.c.l.b16 %v5865
        %v6989 = vunpack.c.l.b16 %v5875
        %v6990 = vunpack.c.l.b16 %v5889
        %v6991 = vunpack.c.l.b16 %v5899
        %v6992 = vunpack.c.l.b16 %v5913
        %v6993 = vunpack.c.l.b16 %v5923
        %v6994 = vunpack.c.l.b16 %v5937
        %v6995 = vunpack.c.l.b16 %v5947
        %v6996 = vunpack.c.l.b16 %v5961
        %v6997 = vunpack.c.l.b16 %v5971
        %v6998 = vunpack.c.l.b16 %v5985
        %v6999 = vunpack.c.l.b16 %v5995
        %v7000 = vunpack.c.l.b16 %v6009
        %v7001 = vunpack.c.l.b16 %v6019
        %v7002 = vunpack.c.l.b16 %v6033
        %v7003 = vunpack.c.l.b16 %v6043
        %v7004 = vunpack.c.l.b16 %v6057
        %v7005 = vunpack.c.l.b16 %v6067
        %v7006 = vunpack.c.l.b16 %v6081
        %v7007 = vunpack.c.l.b16 %v6091
        %v7008 = vunpack.c.l.b16 %v6105
        %v7009 = vunpack.c.l.b16 %v6115
        %v7010 = vunpack.c.l.b16 %v6129
        %v7011 = vunpack.c.l.b16 %v6139
        %v7012 = vunpack.c.l.b16 %v6153
        %v7013 = vunpack.c.l.b16 %v6163
        %v7014 = vunpack.c.l.b16 %v6177
        %v7015 = vunpack.c.l.b16 %v6187
        %v7016 = vunpack.c.l.b16 %v6201
        %v7017 = vunpack.c.l.b16 %v6211
        %v7018 = vunpack.c.l.b16 %v6225
        %v7019 = vunpack.c.l.b16 %v6235
        %v7020 = vpack.c.b16 %v6989, %v6988
        %v7021 = vpack.c.b16 %v6991, %v6990
        %v7022 = vpack.c.b16 %v6993, %v6992
        %v7023 = vpack.c.b16 %v6995, %v6994
        %v7024 = vpack.c.b16 %v6997, %v6996
        %v7025 = vpack.c.b16 %v6999, %v6998
        %v7026 = vpack.c.b16 %v7001, %v7000
        %v7027 = vpack.c.b16 %v7003, %v7002
        %v7028 = vpack.c.b16 %v7005, %v7004
        %v7029 = vpack.c.b16 %v7007, %v7006
        %v7030 = vpack.c.b16 %v7009, %v7008
        %v7031 = vpack.c.b16 %v7011, %v7010
        %v7032 = vpack.c.b16 %v7013, %v7012
        %v7033 = vpack.c.b16 %v7015, %v7014
        %v7034 = vpack.c.b16 %v7017, %v7016
        %v7035 = vpack.c.b16 %v7019, %v7018
        %7036 = vrot.lane.b32.xlu0 %v7020, 28
        %v7037 = vpop.permute.xlu0 %7036
        %7038 = vrot.lane.b32.xlu0 %v7021, 28
        %v7039 = vpop.permute.xlu0 %7038
        %7040 = vrot.lane.b32.xlu0 %v7022, 28
        %v7041 = vpop.permute.xlu0 %7040
        %7042 = vrot.lane.b32.xlu0 %v7023, 28
        %v7043 = vpop.permute.xlu0 %7042
        %7044 = vrot.lane.b32.xlu0 %v7024, 28
        %v7045 = vpop.permute.xlu0 %7044
        %7046 = vrot.lane.b32.xlu0 %v7025, 28
        %v7047 = vpop.permute.xlu0 %7046
        %7048 = vrot.lane.b32.xlu0 %v7026, 28
        %v7049 = vpop.permute.xlu0 %7048
        %7050 = vrot.lane.b32.xlu0 %v7027, 28
        %v7051 = vpop.permute.xlu0 %7050
        %7052 = vrot.lane.b32.xlu0 %v7028, 28
        %v7053 = vpop.permute.xlu0 %7052
        %7054 = vrot.lane.b32.xlu0 %v7029, 28
        %v7055 = vpop.permute.xlu0 %7054
        %7056 = vrot.lane.b32.xlu0 %v7030, 28
        %v7057 = vpop.permute.xlu0 %7056
        %7058 = vrot.lane.b32.xlu0 %v7031, 28
        %v7059 = vpop.permute.xlu0 %7058
        %7060 = vrot.lane.b32.xlu0 %v7032, 28
        %v7061 = vpop.permute.xlu0 %7060
        %7062 = vrot.lane.b32.xlu0 %v7033, 28
        %v7063 = vpop.permute.xlu0 %7062
        %7064 = vrot.lane.b32.xlu0 %v7034, 28
        %v7065 = vpop.permute.xlu0 %7064
        %7066 = vrot.lane.b32.xlu0 %v7035, 28
        %v7067 = vpop.permute.xlu0 %7066
        %v7068 = vunpack.c.l.b16 %v6303
        %v7069 = vunpack.c.l.b16 %v6306
        %v7070 = vunpack.c.l.b16 %v6310
        %v7071 = vunpack.c.l.b16 %v6313
        %v7072 = vunpack.c.l.b16 %v6317
        %v7073 = vunpack.c.l.b16 %v6320
        %v7074 = vunpack.c.l.b16 %v6324
        %v7075 = vunpack.c.l.b16 %v6327
        %v7076 = vunpack.c.l.b16 %v6331
        %v7077 = vunpack.c.l.b16 %v6334
        %v7078 = vunpack.c.l.b16 %v6338
        %v7079 = vunpack.c.l.b16 %v6341
        %v7080 = vunpack.c.l.b16 %v6345
        %v7081 = vunpack.c.l.b16 %v6348
        %v7082 = vunpack.c.l.b16 %v6352
        %v7083 = vunpack.c.l.b16 %v6355
        %v7084 = vunpack.c.l.b16 %v6359
        %v7085 = vunpack.c.l.b16 %v6362
        %v7086 = vunpack.c.l.b16 %v6366
        %v7087 = vunpack.c.l.b16 %v6369
        %v7088 = vunpack.c.l.b16 %v6373
        %v7089 = vunpack.c.l.b16 %v6376
        %v7090 = vunpack.c.l.b16 %v6380
        %v7091 = vunpack.c.l.b16 %v6383
        %v7092 = vunpack.c.l.b16 %v6387
        %v7093 = vunpack.c.l.b16 %v6390
        %v7094 = vunpack.c.l.b16 %v6394
        %v7095 = vunpack.c.l.b16 %v6397
        %v7096 = vunpack.c.l.b16 %v6401
        %v7097 = vunpack.c.l.b16 %v6404
        %v7098 = vunpack.c.l.b16 %v6408
        %v7099 = vunpack.c.l.b16 %v6411
        %v7100 = vpack.c.b16 %v7069, %v7068
        %v7101 = vpack.c.b16 %v7071, %v7070
        %v7102 = vpack.c.b16 %v7073, %v7072
        %v7103 = vpack.c.b16 %v7075, %v7074
        %v7104 = vpack.c.b16 %v7077, %v7076
        %v7105 = vpack.c.b16 %v7079, %v7078
        %v7106 = vpack.c.b16 %v7081, %v7080
        %v7107 = vpack.c.b16 %v7083, %v7082
        %v7108 = vpack.c.b16 %v7085, %v7084
        %v7109 = vpack.c.b16 %v7087, %v7086
        %v7110 = vpack.c.b16 %v7089, %v7088
        %v7111 = vpack.c.b16 %v7091, %v7090
        %v7112 = vpack.c.b16 %v7093, %v7092
        %v7113 = vpack.c.b16 %v7095, %v7094
        %v7114 = vpack.c.b16 %v7097, %v7096
        %v7115 = vpack.c.b16 %v7099, %v7098
        %7116 = vrot.lane.b32.xlu0 %v7100, 32
        %v7117 = vpop.permute.xlu0 %7116
        %7118 = vrot.lane.b32.xlu0 %v7101, 32
        %v7119 = vpop.permute.xlu0 %7118
        %7120 = vrot.lane.b32.xlu0 %v7102, 32
        %v7121 = vpop.permute.xlu0 %7120
        %7122 = vrot.lane.b32.xlu0 %v7103, 32
        %v7123 = vpop.permute.xlu0 %7122
        %7124 = vrot.lane.b32.xlu0 %v7104, 32
        %v7125 = vpop.permute.xlu0 %7124
        %7126 = vrot.lane.b32.xlu0 %v7105, 32
        %v7127 = vpop.permute.xlu0 %7126
        %7128 = vrot.lane.b32.xlu0 %v7106, 32
        %v7129 = vpop.permute.xlu0 %7128
        %7130 = vrot.lane.b32.xlu0 %v7107, 32
        %v7131 = vpop.permute.xlu0 %7130
        %7132 = vrot.lane.b32.xlu0 %v7108, 32
        %v7133 = vpop.permute.xlu0 %7132
        %7134 = vrot.lane.b32.xlu0 %v7109, 32
        %v7135 = vpop.permute.xlu0 %7134
        %7136 = vrot.lane.b32.xlu0 %v7110, 32
        %v7137 = vpop.permute.xlu0 %7136
        %7138 = vrot.lane.b32.xlu0 %v7111, 32
        %v7139 = vpop.permute.xlu0 %7138
        %7140 = vrot.lane.b32.xlu0 %v7112, 32
        %v7141 = vpop.permute.xlu0 %7140
        %7142 = vrot.lane.b32.xlu0 %v7113, 32
        %v7143 = vpop.permute.xlu0 %7142
        %7144 = vrot.lane.b32.xlu0 %v7114, 32
        %v7145 = vpop.permute.xlu0 %7144
        %7146 = vrot.lane.b32.xlu0 %v7115, 32
        %v7147 = vpop.permute.xlu0 %7146
        %v7150 = vsel %vm450, %v6460, %v6525
        %v7153 = vsel %vm450, %v6461, %v6527
        %v7156 = vsel %vm450, %v6462, %v6529
        %v7159 = vsel %vm450, %v6463, %v6531
        %v7162 = vsel %vm450, %v6464, %v6533
        %v7165 = vsel %vm450, %v6465, %v6535
        %v7168 = vsel %vm450, %v6466, %v6537
        %v7171 = vsel %vm450, %v6467, %v6539
        %v7174 = vsel %vm450, %v6468, %v6541
        %v7177 = vsel %vm450, %v6469, %v6543
        %v7180 = vsel %vm450, %v6470, %v6545
        %v7183 = vsel %vm450, %v6471, %v6547
        %v7186 = vsel %vm450, %v6472, %v6549
        %v7189 = vsel %vm450, %v6473, %v6551
        %v7192 = vsel %vm450, %v6474, %v6553
        %v7195 = vsel %vm450, %v6475, %v6555
        %v7197 = vsel %vm3864, %v7150, %v6605
        %v7199 = vsel %vm3864, %v7153, %v6607
        %v7201 = vsel %vm3864, %v7156, %v6609
        %v7203 = vsel %vm3864, %v7159, %v6611
        %v7205 = vsel %vm3864, %v7162, %v6613
        %v7207 = vsel %vm3864, %v7165, %v6615
        %v7209 = vsel %vm3864, %v7168, %v6617
        %v7211 = vsel %vm3864, %v7171, %v6619
        %v7213 = vsel %vm3864, %v7174, %v6621
        %v7215 = vsel %vm3864, %v7177, %v6623
        %v7217 = vsel %vm3864, %v7180, %v6625
        %v7219 = vsel %vm3864, %v7183, %v6627
        %v7221 = vsel %vm3864, %v7186, %v6629
        %v7223 = vsel %vm3864, %v7189, %v6631
        %v7225 = vsel %vm3864, %v7192, %v6633
        %v7227 = vsel %vm3864, %v7195, %v6635
        %v7229 = vsel %vm3897, %v7197, %v6701
        %v7231 = vsel %vm3897, %v7199, %v6703
        %v7233 = vsel %vm3897, %v7201, %v6705
        %v7235 = vsel %vm3897, %v7203, %v6707
        %v7237 = vsel %vm3897, %v7205, %v6709
        %v7239 = vsel %vm3897, %v7207, %v6711
        %v7241 = vsel %vm3897, %v7209, %v6713
        %v7243 = vsel %vm3897, %v7211, %v6715
        %v7245 = vsel %vm3897, %v7213, %v6717
        %v7247 = vsel %vm3897, %v7215, %v6719
        %v7249 = vsel %vm3897, %v7217, %v6721
        %v7251 = vsel %vm3897, %v7219, %v6723
        %v7253 = vsel %vm3897, %v7221, %v6725
        %v7255 = vsel %vm3897, %v7223, %v6727
        %v7257 = vsel %vm3897, %v7225, %v6729
        %v7259 = vsel %vm3897, %v7227, %v6731
        %v7261 = vsel %vm3930, %v7229, %v6781
        %v7263 = vsel %vm3930, %v7231, %v6783
        %v7265 = vsel %vm3930, %v7233, %v6785
        %v7267 = vsel %vm3930, %v7235, %v6787
        %v7269 = vsel %vm3930, %v7237, %v6789
        %v7271 = vsel %vm3930, %v7239, %v6791
        %v7273 = vsel %vm3930, %v7241, %v6793
        %v7275 = vsel %vm3930, %v7243, %v6795
        %v7277 = vsel %vm3930, %v7245, %v6797
        %v7279 = vsel %vm3930, %v7247, %v6799
        %v7281 = vsel %vm3930, %v7249, %v6801
        %v7283 = vsel %vm3930, %v7251, %v6803
        %v7285 = vsel %vm3930, %v7253, %v6805
        %v7287 = vsel %vm3930, %v7255, %v6807
        %v7289 = vsel %vm3930, %v7257, %v6809
        %v7291 = vsel %vm3930, %v7259, %v6811
        %v7293 = vsel %vm3963, %v7261, %v6861
        %v7295 = vsel %vm3963, %v7263, %v6863
        %v7297 = vsel %vm3963, %v7265, %v6865
        %v7299 = vsel %vm3963, %v7267, %v6867
        %v7301 = vsel %vm3963, %v7269, %v6869
        %v7303 = vsel %vm3963, %v7271, %v6871
        %v7305 = vsel %vm3963, %v7273, %v6873
        %v7307 = vsel %vm3963, %v7275, %v6875
        %v7309 = vsel %vm3963, %v7277, %v6877
        %v7311 = vsel %vm3963, %v7279, %v6879
        %v7313 = vsel %vm3963, %v7281, %v6881
        %v7315 = vsel %vm3963, %v7283, %v6883
        %v7317 = vsel %vm3963, %v7285, %v6885
        %v7319 = vsel %vm3963, %v7287, %v6887
        %v7321 = vsel %vm3963, %v7289, %v6889
        %v7323 = vsel %vm3963, %v7291, %v6891
        %v7325 = vsel %vm3996, %v7293, %v6957
        %v7327 = vsel %vm3996, %v7295, %v6959
        %v7329 = vsel %vm3996, %v7297, %v6961
        %v7331 = vsel %vm3996, %v7299, %v6963
        %v7333 = vsel %vm3996, %v7301, %v6965
        %v7335 = vsel %vm3996, %v7303, %v6967
        %v7337 = vsel %vm3996, %v7305, %v6969
        %v7339 = vsel %vm3996, %v7307, %v6971
        %v7341 = vsel %vm3996, %v7309, %v6973
        %v7343 = vsel %vm3996, %v7311, %v6975
        %v7345 = vsel %vm3996, %v7313, %v6977
        %v7347 = vsel %vm3996, %v7315, %v6979
        %v7349 = vsel %vm3996, %v7317, %v6981
        %v7351 = vsel %vm3996, %v7319, %v6983
        %v7353 = vsel %vm3996, %v7321, %v6985
        %v7355 = vsel %vm3996, %v7323, %v6987
        %v7357 = vsel %vm4029, %v7325, %v7037
        %v7359 = vsel %vm4029, %v7327, %v7039
        %v7361 = vsel %vm4029, %v7329, %v7041
        %v7363 = vsel %vm4029, %v7331, %v7043
        %v7365 = vsel %vm4029, %v7333, %v7045
        %v7367 = vsel %vm4029, %v7335, %v7047
        %v7369 = vsel %vm4029, %v7337, %v7049
        %v7371 = vsel %vm4029, %v7339, %v7051
        %v7373 = vsel %vm4029, %v7341, %v7053
        %v7375 = vsel %vm4029, %v7343, %v7055
        %v7377 = vsel %vm4029, %v7345, %v7057
        %v7379 = vsel %vm4029, %v7347, %v7059
        %v7381 = vsel %vm4029, %v7349, %v7061
        %v7383 = vsel %vm4029, %v7351, %v7063
        %v7385 = vsel %vm4029, %v7353, %v7065
        %v7387 = vsel %vm4029, %v7355, %v7067
        %v7389 = vsel %vm4062, %v7357, %v7117
        %v7391 = vsel %vm4062, %v7359, %v7119
        %v7393 = vsel %vm4062, %v7361, %v7121
        %v7395 = vsel %vm4062, %v7363, %v7123
        %v7397 = vsel %vm4062, %v7365, %v7125
        %v7399 = vsel %vm4062, %v7367, %v7127
        %v7401 = vsel %vm4062, %v7369, %v7129
        %v7403 = vsel %vm4062, %v7371, %v7131
        %v7405 = vsel %vm4062, %v7373, %v7133
        %v7407 = vsel %vm4062, %v7375, %v7135
        %v7409 = vsel %vm4062, %v7377, %v7137
        %v7411 = vsel %vm4062, %v7379, %v7139
        %v7413 = vsel %vm4062, %v7381, %v7141
        %v7415 = vsel %vm4062, %v7383, %v7143
        %v7417 = vsel %vm4062, %v7385, %v7145
        %v7419 = vsel %vm4062, %v7387, %v7147
        %v7420 = vld [vmem:[%s5] sm:$0xf]
        %v7421 = vld [vmem:[%s5 + $0x4] sm:$0xf]
        %v7422 = vld [vmem:[%s5 + $0x8] sm:$0xf]
        %v7423 = vld [vmem:[%s5 + $0xc] sm:$0xf]
        %v7424 = vld [vmem:[%s5 + $0x10] sm:$0x3]
        %v7425 = vld [vmem:[%s6] sm:$0x1]
        %v7427 = vperm.slane %v7425, 0
        %v7434 = vunpack.c.l.b16 %v7420
        %v7435 = vunpack.c.l.b16 %v7421
        %v7436 = vunpack.c.l.b16 %v7422
        %v7437 = vunpack.c.l.b16 %v7423
        %v7438 = vunpack.c.l.b16 %v7424
        %v7439 = vpack.c.b16 %v7435, %v7434
        %v7440 = vpack.c.b16 %v7437, %v7436
        %v7441 = vpack.c.b16 %v7438, %v7438
        %v7444 = vsel %vm4119, %v7389, 0
        %v7446 = vsel %vm4119, %v7391, 0
        %v7448 = vsel %vm4119, %v7393, 0
        %v7450 = vsel %vm4119, %v7395, 0
        %v7452 = vsel %vm4119, %v7397, 0
        %v7454 = vsel %vm4119, %v7399, 0
        %v7456 = vsel %vm4119, %v7401, 0
        %v7458 = vsel %vm4119, %v7403, 0
        %v7460 = vsel %vm4119, %v7405, 0
        %v7462 = vsel %vm4119, %v7407, 0
        %v7464 = vsel %vm4119, %v7409, 0
        %v7466 = vsel %vm4119, %v7411, 0
        %v7468 = vsel %vm4119, %v7413, 0
        %v7470 = vsel %vm4119, %v7415, 0
        %v7472 = vsel %vm4119, %v7417, 0
        %v7474 = vsel %vm4119, %v7419, 0
        %v7477 = vsel %vm499, %v7441, 0
        %7479 = vmatpush.bf16.msra.mxu0 0
        %7480 = vmatpush.bf16.msra.mxu0 0
        %7481 = vmatpush.bf16.msra.mxu0 0
        %7482 = vmatpush.bf16.msra.mxu0 0
        %7483 = vmatpush.bf16.msra.mxu0 0
        %7484 = vmatpush.bf16.msra.mxu0 %v7477
        %7485 = vmatpush.bf16.msra.mxu0 %v7440
        %7486 = vmatpush.bf16.msra.mxu0 %v7439
        %7487 = vmatmul.bf16.gmra.mxu0 %v7444
        %v7488 = vpop.f32.mrf.mxu0
        %v7489 = vadd.f32 %v7427, %v7488
        %v7490 = vpop.f32.mrf.mxu0
        %v7491 = vadd.f32 %v7427, %v7490
        %7492 = vmatmul.bf16.gmra.mxu0 %v7446
        %v7493 = vpop.f32.mrf.mxu0
        %v7494 = vadd.f32 %v7427, %v7493
        %v7495 = vpop.f32.mrf.mxu0
        %v7496 = vadd.f32 %v7427, %v7495
        %7497 = vmatmul.bf16.gmra.mxu0 %v7448
        %v7498 = vpop.f32.mrf.mxu0
        %v7499 = vadd.f32 %v7427, %v7498
        %v7500 = vpop.f32.mrf.mxu0
        %v7501 = vadd.f32 %v7427, %v7500
        %7502 = vmatmul.bf16.gmra.mxu0 %v7450
        %v7503 = vpop.f32.mrf.mxu0
        %v7504 = vadd.f32 %v7427, %v7503
        %v7505 = vpop.f32.mrf.mxu0
        %v7506 = vadd.f32 %v7427, %v7505
        %7507 = vmatmul.bf16.gmra.mxu0 %v7452
        %v7508 = vpop.f32.mrf.mxu0
        %v7509 = vadd.f32 %v7427, %v7508
        %v7510 = vpop.f32.mrf.mxu0
        %v7511 = vadd.f32 %v7427, %v7510
        %7512 = vmatmul.bf16.gmra.mxu0 %v7454
        %v7513 = vpop.f32.mrf.mxu0
        %v7514 = vadd.f32 %v7427, %v7513
        %v7515 = vpop.f32.mrf.mxu0
        %v7516 = vadd.f32 %v7427, %v7515
        %7517 = vmatmul.bf16.gmra.mxu0 %v7456
        %v7518 = vpop.f32.mrf.mxu0
        %v7519 = vadd.f32 %v7427, %v7518
        %v7520 = vpop.f32.mrf.mxu0
        %v7521 = vadd.f32 %v7427, %v7520
        %7522 = vmatmul.bf16.gmra.mxu0 %v7458
        %v7523 = vpop.f32.mrf.mxu0
        %v7524 = vadd.f32 %v7427, %v7523
        %v7525 = vpop.f32.mrf.mxu0
        %v7526 = vadd.f32 %v7427, %v7525
        %7527 = vmatmul.bf16.gmra.mxu0 %v7460
        %v7528 = vpop.f32.mrf.mxu0
        %v7529 = vadd.f32 %v7427, %v7528
        %v7530 = vpop.f32.mrf.mxu0
        %v7531 = vadd.f32 %v7427, %v7530
        %7532 = vmatmul.bf16.gmra.mxu0 %v7462
        %v7533 = vpop.f32.mrf.mxu0
        %v7534 = vadd.f32 %v7427, %v7533
        %v7535 = vpop.f32.mrf.mxu0
        %v7536 = vadd.f32 %v7427, %v7535
        %7537 = vmatmul.bf16.gmra.mxu0 %v7464
        %v7538 = vpop.f32.mrf.mxu0
        %v7539 = vadd.f32 %v7427, %v7538
        %v7540 = vpop.f32.mrf.mxu0
        %v7541 = vadd.f32 %v7427, %v7540
        %7542 = vmatmul.bf16.gmra.mxu0 %v7466
        %v7543 = vpop.f32.mrf.mxu0
        %v7544 = vadd.f32 %v7427, %v7543
        %v7545 = vpop.f32.mrf.mxu0
        %v7546 = vadd.f32 %v7427, %v7545
        %7547 = vmatmul.bf16.gmra.mxu0 %v7468
        %v7548 = vpop.f32.mrf.mxu0
        %v7549 = vadd.f32 %v7427, %v7548
        %v7550 = vpop.f32.mrf.mxu0
        %v7551 = vadd.f32 %v7427, %v7550
        %7552 = vmatmul.bf16.gmra.mxu0 %v7470
        %v7553 = vpop.f32.mrf.mxu0
        %v7554 = vadd.f32 %v7427, %v7553
        %v7555 = vpop.f32.mrf.mxu0
        %v7556 = vadd.f32 %v7427, %v7555
        %7557 = vmatmul.bf16.gmra.mxu0 %v7472
        %v7558 = vpop.f32.mrf.mxu0
        %v7559 = vadd.f32 %v7427, %v7558
        %v7560 = vpop.f32.mrf.mxu0
        %v7561 = vadd.f32 %v7427, %v7560
        %7562 = vmatmul.bf16.gmra.mxu0 %v7474
        %v7563 = vpop.f32.mrf.mxu0
        %v7564 = vadd.f32 %v7427, %v7563
        %v7565 = vpop.f32.mrf.mxu0
        %v7566 = vadd.f32 %v7427, %v7565
        %7567 = vdwg.mxu0
        %v7568 = vmax.f32 %v7489, 0.0
        %v7569 = vmax.f32 %v7491, 0.0
        %v7570 = vmax.f32 %v7494, 0.0
        %v7571 = vmax.f32 %v7496, 0.0
        %v7572 = vmax.f32 %v7499, 0.0
        %v7573 = vmax.f32 %v7501, 0.0
        %v7574 = vmax.f32 %v7504, 0.0
        %v7575 = vmax.f32 %v7506, 0.0
        %v7576 = vmax.f32 %v7509, 0.0
        %v7577 = vmax.f32 %v7511, 0.0
        %v7578 = vmax.f32 %v7514, 0.0
        %v7579 = vmax.f32 %v7516, 0.0
        %v7580 = vmax.f32 %v7519, 0.0
        %v7581 = vmax.f32 %v7521, 0.0
        %v7582 = vmax.f32 %v7524, 0.0
        %v7583 = vmax.f32 %v7526, 0.0
        %v7584 = vmax.f32 %v7529, 0.0
        %v7585 = vmax.f32 %v7531, 0.0
        %v7586 = vmax.f32 %v7534, 0.0
        %v7587 = vmax.f32 %v7536, 0.0
        %v7588 = vmax.f32 %v7539, 0.0
        %v7589 = vmax.f32 %v7541, 0.0
        %v7590 = vmax.f32 %v7544, 0.0
        %v7591 = vmax.f32 %v7546, 0.0
        %v7592 = vmax.f32 %v7549, 0.0
        %v7593 = vmax.f32 %v7551, 0.0
        %v7594 = vmax.f32 %v7554, 0.0
        %v7595 = vmax.f32 %v7556, 0.0
        %v7596 = vmax.f32 %v7559, 0.0
        %v7597 = vmax.f32 %v7561, 0.0
        %v7598 = vmax.f32 %v7564, 0.0
        %v7599 = vmax.f32 %v7566, 0.0
        %v7600 = vshrl.u32 %v434, 16
        %v7602 = vshll.u32 %v434, 16
        %v7604 = vrot.slane %v7602, 1
        %v7605 = vor.u32 %v7600, %v7604
        %v7606 = vshrl.u32 %v435, 16
        %v7608 = vshll.u32 %v435, 16
        %v7610 = vrot.slane %v7608, 1
        %v7611 = vor.u32 %v7606, %v7610
        %v7612 = vshrl.u32 %v436, 16
        %v7614 = vshll.u32 %v436, 16
        %v7616 = vrot.slane %v7614, 1
        %v7617 = vor.u32 %v7612, %v7616
        %v7618 = vshrl.u32 %v437, 16
        %v7620 = vshll.u32 %v437, 16
        %v7622 = vrot.slane %v7620, 1
        %v7623 = vor.u32 %v7618, %v7622
        %v7624 = vshrl.u32 %v438, 16
        %v7626 = vshll.u32 %v438, 16
        %v7628 = vrot.slane %v7626, 1
        %v7629 = vor.u32 %v7624, %v7628
        %v7630 = vshrl.u32 %v439, 16
        %v7632 = vshll.u32 %v439, 16
        %v7634 = vrot.slane %v7632, 1
        %v7635 = vor.u32 %v7630, %v7634
        %v7636 = vshrl.u32 %v440, 16
        %v7638 = vshll.u32 %v440, 16
        %v7640 = vrot.slane %v7638, 1
        %v7641 = vor.u32 %v7636, %v7640
        %v7642 = vshrl.u32 %v441, 16
        %v7644 = vshll.u32 %v441, 16
        %v7646 = vrot.slane %v7644, 1
        %v7647 = vor.u32 %v7642, %v7646
        %v7648 = vshrl.u32 %v442, 16
        %v7650 = vshll.u32 %v442, 16
        %v7652 = vrot.slane %v7650, 1
        %v7653 = vor.u32 %v7648, %v7652
        %v7654 = vshrl.u32 %v443, 16
        %v7656 = vshll.u32 %v443, 16
        %v7658 = vrot.slane %v7656, 1
        %v7659 = vor.u32 %v7654, %v7658
        %v7660 = vshrl.u32 %v444, 16
        %v7662 = vshll.u32 %v444, 16
        %v7664 = vrot.slane %v7662, 1
        %v7665 = vor.u32 %v7660, %v7664
        %v7666 = vshrl.u32 %v445, 16
        %v7668 = vshll.u32 %v445, 16
        %v7670 = vrot.slane %v7668, 1
        %v7671 = vor.u32 %v7666, %v7670
        %v7672 = vshrl.u32 %v446, 16
        %v7674 = vshll.u32 %v446, 16
        %v7676 = vrot.slane %v7674, 1
        %v7677 = vor.u32 %v7672, %v7676
        %v7678 = vshrl.u32 %v447, 16
        %v7680 = vshll.u32 %v447, 16
        %v7682 = vrot.slane %v7680, 1
        %v7683 = vor.u32 %v7678, %v7682
        %v7684 = vshrl.u32 %v448, 16
        %v7686 = vshll.u32 %v448, 16
        %v7688 = vrot.slane %v7686, 1
        %v7689 = vor.u32 %v7684, %v7688
        %v7690 = vshrl.u32 %v449, 16
        %v7692 = vshll.u32 %v449, 16
        %v7694 = vrot.slane %v7692, 1
        %v7695 = vor.u32 %v7690, %v7694
        %vm7712 = vcmask 1047552
        %vm7713 = vsmask.f32 7424
        %vm7714 = vmand %vm7712, %vm7713
        %v7715 = vsel %vm7714, %v7605, 4286578559
        %v7716 = vsel %vm7714, %v7611, 4286578559
        %v7717 = vsel %vm7714, %v7617, 4286578559
        %v7718 = vsel %vm7714, %v7623, 4286578559
        %v7719 = vsel %vm7714, %v7629, 4286578559
        %v7720 = vsel %vm7714, %v7635, 4286578559
        %v7721 = vsel %vm7714, %v7641, 4286578559
        %v7722 = vsel %vm7714, %v7647, 4286578559
        %v7723 = vsel %vm7714, %v7653, 4286578559
        %v7724 = vsel %vm7714, %v7659, 4286578559
        %v7725 = vsel %vm7714, %v7665, 4286578559
        %v7726 = vsel %vm7714, %v7671, 4286578559
        %v7727 = vsel %vm7714, %v7677, 4286578559
        %v7728 = vsel %vm7714, %v7683, 4286578559
        %v7729 = vsel %vm7714, %v7689, 4286578559
        %v7730 = vsel %vm7714, %v7695, 4286578559
        %v7731 = vunpack.c.l.bf16 %v333
        %v7732 = vunpack.c.l.bf16 %v334
        %v7733 = vunpack.c.l.bf16 %v335
        %v7734 = vunpack.c.l.bf16 %v336
        %v7735 = vunpack.c.l.bf16 %v337
        %v7736 = vunpack.c.l.bf16 %v338
        %v7737 = vunpack.c.l.bf16 %v339
        %v7738 = vunpack.c.l.bf16 %v340
        %v7739 = vunpack.c.l.bf16 %v341
        %v7740 = vunpack.c.l.bf16 %v342
        %v7741 = vunpack.c.l.bf16 %v343
        %v7742 = vunpack.c.l.bf16 %v344
        %v7743 = vunpack.c.l.bf16 %v345
        %v7744 = vunpack.c.l.bf16 %v346
        %v7745 = vunpack.c.l.bf16 %v347
        %v7746 = vunpack.c.l.bf16 %v348
        %v7747 = vunpack.c.l.bf16 %v349
        %v7748 = vunpack.c.l.bf16 %v350
        %v7749 = vunpack.c.l.bf16 %v351
        %v7750 = vunpack.c.l.bf16 %v352
        %v7751 = vunpack.c.l.bf16 %v353
        %v7752 = vunpack.c.l.bf16 %v354
        %v7753 = vunpack.c.l.bf16 %v355
        %v7754 = vunpack.c.l.bf16 %v356
        %v7755 = vunpack.c.l.bf16 %v357
        %v7756 = vunpack.c.l.bf16 %v358
        %v7757 = vunpack.c.l.bf16 %v359
        %v7758 = vunpack.c.l.bf16 %v360
        %v7759 = vunpack.c.l.bf16 %v361
        %v7760 = vunpack.c.l.bf16 %v362
        %v7761 = vunpack.c.l.bf16 %v363
        %v7762 = vunpack.c.l.bf16 %v364
        %v7763 = vunpack.c.l.bf16 %v7715
        %v7764 = vunpack.c.h.bf16 %v7715
        %v7765 = vunpack.c.l.bf16 %v7716
        %v7766 = vunpack.c.h.bf16 %v7716
        %v7767 = vunpack.c.l.bf16 %v7717
        %v7768 = vunpack.c.h.bf16 %v7717
        %v7769 = vunpack.c.l.bf16 %v7718
        %v7770 = vunpack.c.h.bf16 %v7718
        %v7771 = vunpack.c.l.bf16 %v7719
        %v7772 = vunpack.c.h.bf16 %v7719
        %v7773 = vunpack.c.l.bf16 %v7720
        %v7774 = vunpack.c.h.bf16 %v7720
        %v7775 = vunpack.c.l.bf16 %v7721
        %v7776 = vunpack.c.h.bf16 %v7721
        %v7777 = vunpack.c.l.bf16 %v7722
        %v7778 = vunpack.c.h.bf16 %v7722
        %v7779 = vunpack.c.l.bf16 %v7723
        %v7780 = vunpack.c.h.bf16 %v7723
        %v7781 = vunpack.c.l.bf16 %v7724
        %v7782 = vunpack.c.h.bf16 %v7724
        %v7783 = vunpack.c.l.bf16 %v7725
        %v7784 = vunpack.c.h.bf16 %v7725
        %v7785 = vunpack.c.l.bf16 %v7726
        %v7786 = vunpack.c.h.bf16 %v7726
        %v7787 = vunpack.c.l.bf16 %v7727
        %v7788 = vunpack.c.h.bf16 %v7727
        %v7789 = vunpack.c.l.bf16 %v7728
        %v7790 = vunpack.c.h.bf16 %v7728
        %v7791 = vunpack.c.l.bf16 %v7729
        %v7792 = vunpack.c.h.bf16 %v7729
        %v7793 = vunpack.c.l.bf16 %v7730
        %v7794 = vunpack.c.h.bf16 %v7730
        %v7795 = vmax.f32 %v7731, %v7763
        %v7796 = vmax.f32 %v7732, %v7764
        %v7797 = vmax.f32 %v7733, %v7765
        %v7798 = vmax.f32 %v7734, %v7766
        %v7799 = vmax.f32 %v7735, %v7767
        %v7800 = vmax.f32 %v7736, %v7768
        %v7801 = vmax.f32 %v7737, %v7769
        %v7802 = vmax.f32 %v7738, %v7770
        %v7803 = vmax.f32 %v7739, %v7771
        %v7804 = vmax.f32 %v7740, %v7772
        %v7805 = vmax.f32 %v7741, %v7773
        %v7806 = vmax.f32 %v7742, %v7774
        %v7807 = vmax.f32 %v7743, %v7775
        %v7808 = vmax.f32 %v7744, %v7776
        %v7809 = vmax.f32 %v7745, %v7777
        %v7810 = vmax.f32 %v7746, %v7778
        %v7811 = vmax.f32 %v7747, %v7779
        %v7812 = vmax.f32 %v7748, %v7780
        %v7813 = vmax.f32 %v7749, %v7781
        %v7814 = vmax.f32 %v7750, %v7782
        %v7815 = vmax.f32 %v7751, %v7783
        %v7816 = vmax.f32 %v7752, %v7784
        %v7817 = vmax.f32 %v7753, %v7785
        %v7818 = vmax.f32 %v7754, %v7786
        %v7819 = vmax.f32 %v7755, %v7787
        %v7820 = vmax.f32 %v7756, %v7788
        %v7821 = vmax.f32 %v7757, %v7789
        %v7822 = vmax.f32 %v7758, %v7790
        %v7823 = vmax.f32 %v7759, %v7791
        %v7824 = vmax.f32 %v7760, %v7792
        %v7825 = vmax.f32 %v7761, %v7793
        %v7826 = vmax.f32 %v7762, %v7794
        %v7827 = vpack.c.bf16 %v7795, %v7795
        %v7828 = vpack.c.bf16 %v7796, %v7796
        %v7829 = vpack.c.bf16 %v7797, %v7797
        %v7830 = vpack.c.bf16 %v7798, %v7798
        %v7831 = vpack.c.bf16 %v7799, %v7799
        %v7832 = vpack.c.bf16 %v7800, %v7800
        %v7833 = vpack.c.bf16 %v7801, %v7801
        %v7834 = vpack.c.bf16 %v7802, %v7802
        %v7835 = vpack.c.bf16 %v7803, %v7803
        %v7836 = vpack.c.bf16 %v7804, %v7804
        %v7837 = vpack.c.bf16 %v7805, %v7805
        %v7838 = vpack.c.bf16 %v7806, %v7806
        %v7839 = vpack.c.bf16 %v7807, %v7807
        %v7840 = vpack.c.bf16 %v7808, %v7808
        %v7841 = vpack.c.bf16 %v7809, %v7809
        %v7842 = vpack.c.bf16 %v7810, %v7810
        %v7843 = vpack.c.bf16 %v7811, %v7811
        %v7844 = vpack.c.bf16 %v7812, %v7812
        %v7845 = vpack.c.bf16 %v7813, %v7813
        %v7846 = vpack.c.bf16 %v7814, %v7814
        %v7847 = vpack.c.bf16 %v7815, %v7815
        %v7848 = vpack.c.bf16 %v7816, %v7816
        %v7849 = vpack.c.bf16 %v7817, %v7817
        %v7850 = vpack.c.bf16 %v7818, %v7818
        %v7851 = vpack.c.bf16 %v7819, %v7819
        %v7852 = vpack.c.bf16 %v7820, %v7820
        %v7853 = vpack.c.bf16 %v7821, %v7821
        %v7854 = vpack.c.bf16 %v7822, %v7822
        %v7855 = vpack.c.bf16 %v7823, %v7823
        %v7856 = vpack.c.bf16 %v7824, %v7824
        %v7857 = vpack.c.bf16 %v7825, %v7825
        %v7858 = vpack.c.bf16 %v7826, %v7826
        %v7859 = vrot.slane %v7600, 7
        %v7860 = vor.u32 %v7859, %v7602
        %v7861 = vrot.slane %v7606, 7
        %v7862 = vor.u32 %v7861, %v7608
        %v7863 = vrot.slane %v7612, 7
        %v7864 = vor.u32 %v7863, %v7614
        %v7865 = vrot.slane %v7618, 7
        %v7866 = vor.u32 %v7865, %v7620
        %v7867 = vrot.slane %v7624, 7
        %v7868 = vor.u32 %v7867, %v7626
        %v7869 = vrot.slane %v7630, 7
        %v7870 = vor.u32 %v7869, %v7632
        %v7871 = vrot.slane %v7636, 7
        %v7872 = vor.u32 %v7871, %v7638
        %v7873 = vrot.slane %v7642, 7
        %v7874 = vor.u32 %v7873, %v7644
        %v7875 = vrot.slane %v7648, 7
        %v7876 = vor.u32 %v7875, %v7650
        %v7877 = vrot.slane %v7654, 7
        %v7878 = vor.u32 %v7877, %v7656
        %v7879 = vrot.slane %v7660, 7
        %v7880 = vor.u32 %v7879, %v7662
        %v7881 = vrot.slane %v7666, 7
        %v7882 = vor.u32 %v7881, %v7668
        %v7883 = vrot.slane %v7672, 7
        %v7884 = vor.u32 %v7883, %v7674
        %v7885 = vrot.slane %v7678, 7
        %v7886 = vor.u32 %v7885, %v7680
        %v7887 = vrot.slane %v7684, 7
        %v7888 = vor.u32 %v7887, %v7686
        %v7889 = vrot.slane %v7690, 7
        %v7890 = vor.u32 %v7889, %v7692
        %vm7907 = vcmask 1040384
        %vm7908 = vmand %vm7907, %vm712
        %v7909 = vsel %vm7908, 4286578559, %v7860
        %v7910 = vsel %vm7908, 4286578559, %v7862
        %v7911 = vsel %vm7908, 4286578559, %v7864
        %v7912 = vsel %vm7908, 4286578559, %v7866
        %v7913 = vsel %vm7908, 4286578559, %v7868
        %v7914 = vsel %vm7908, 4286578559, %v7870
        %v7915 = vsel %vm7908, 4286578559, %v7872
        %v7916 = vsel %vm7908, 4286578559, %v7874
        %v7917 = vsel %vm7908, 4286578559, %v7876
        %v7918 = vsel %vm7908, 4286578559, %v7878
        %v7919 = vsel %vm7908, 4286578559, %v7880
        %v7920 = vsel %vm7908, 4286578559, %v7882
        %v7921 = vsel %vm7908, 4286578559, %v7884
        %v7922 = vsel %vm7908, 4286578559, %v7886
        %v7923 = vsel %vm7908, 4286578559, %v7888
        %v7924 = vsel %vm7908, 4286578559, %v7890
        %v7925 = vunpack.c.l.bf16 %v7827
        %v7926 = vunpack.c.l.bf16 %v7828
        %v7927 = vunpack.c.l.bf16 %v7829
        %v7928 = vunpack.c.l.bf16 %v7830
        %v7929 = vunpack.c.l.bf16 %v7831
        %v7930 = vunpack.c.l.bf16 %v7832
        %v7931 = vunpack.c.l.bf16 %v7833
        %v7932 = vunpack.c.l.bf16 %v7834
        %v7933 = vunpack.c.l.bf16 %v7835
        %v7934 = vunpack.c.l.bf16 %v7836
        %v7935 = vunpack.c.l.bf16 %v7837
        %v7936 = vunpack.c.l.bf16 %v7838
        %v7937 = vunpack.c.l.bf16 %v7839
        %v7938 = vunpack.c.l.bf16 %v7840
        %v7939 = vunpack.c.l.bf16 %v7841
        %v7940 = vunpack.c.l.bf16 %v7842
        %v7941 = vunpack.c.l.bf16 %v7843
        %v7942 = vunpack.c.l.bf16 %v7844
        %v7943 = vunpack.c.l.bf16 %v7845
        %v7944 = vunpack.c.l.bf16 %v7846
        %v7945 = vunpack.c.l.bf16 %v7847
        %v7946 = vunpack.c.l.bf16 %v7848
        %v7947 = vunpack.c.l.bf16 %v7849
        %v7948 = vunpack.c.l.bf16 %v7850
        %v7949 = vunpack.c.l.bf16 %v7851
        %v7950 = vunpack.c.l.bf16 %v7852
        %v7951 = vunpack.c.l.bf16 %v7853
        %v7952 = vunpack.c.l.bf16 %v7854
        %v7953 = vunpack.c.l.bf16 %v7855
        %v7954 = vunpack.c.l.bf16 %v7856
        %v7955 = vunpack.c.l.bf16 %v7857
        %v7956 = vunpack.c.l.bf16 %v7858
        %v7957 = vunpack.c.l.bf16 %v7909
        %v7958 = vunpack.c.h.bf16 %v7909
        %v7959 = vunpack.c.l.bf16 %v7910
        %v7960 = vunpack.c.h.bf16 %v7910
        %v7961 = vunpack.c.l.bf16 %v7911
        %v7962 = vunpack.c.h.bf16 %v7911
        %v7963 = vunpack.c.l.bf16 %v7912
        %v7964 = vunpack.c.h.bf16 %v7912
        %v7965 = vunpack.c.l.bf16 %v7913
        %v7966 = vunpack.c.h.bf16 %v7913
        %v7967 = vunpack.c.l.bf16 %v7914
        %v7968 = vunpack.c.h.bf16 %v7914
        %v7969 = vunpack.c.l.bf16 %v7915
        %v7970 = vunpack.c.h.bf16 %v7915
        %v7971 = vunpack.c.l.bf16 %v7916
        %v7972 = vunpack.c.h.bf16 %v7916
        %v7973 = vunpack.c.l.bf16 %v7917
        %v7974 = vunpack.c.h.bf16 %v7917
        %v7975 = vunpack.c.l.bf16 %v7918
        %v7976 = vunpack.c.h.bf16 %v7918
        %v7977 = vunpack.c.l.bf16 %v7919
        %v7978 = vunpack.c.h.bf16 %v7919
        %v7979 = vunpack.c.l.bf16 %v7920
        %v7980 = vunpack.c.h.bf16 %v7920
        %v7981 = vunpack.c.l.bf16 %v7921
        %v7982 = vunpack.c.h.bf16 %v7921
        %v7983 = vunpack.c.l.bf16 %v7922
        %v7984 = vunpack.c.h.bf16 %v7922
        %v7985 = vunpack.c.l.bf16 %v7923
        %v7986 = vunpack.c.h.bf16 %v7923
        %v7987 = vunpack.c.l.bf16 %v7924
        %v7988 = vunpack.c.h.bf16 %v7924
        %v7989 = vmax.f32 %v7925, %v7957
        %v7990 = vmax.f32 %v7926, %v7958
        %v7991 = vmax.f32 %v7927, %v7959
        %v7992 = vmax.f32 %v7928, %v7960
        %v7993 = vmax.f32 %v7929, %v7961
        %v7994 = vmax.f32 %v7930, %v7962
        %v7995 = vmax.f32 %v7931, %v7963
        %v7996 = vmax.f32 %v7932, %v7964
        %v7997 = vmax.f32 %v7933, %v7965
        %v7998 = vmax.f32 %v7934, %v7966
        %v7999 = vmax.f32 %v7935, %v7967
        %v8000 = vmax.f32 %v7936, %v7968
        %v8001 = vmax.f32 %v7937, %v7969
        %v8002 = vmax.f32 %v7938, %v7970
        %v8003 = vmax.f32 %v7939, %v7971
        %v8004 = vmax.f32 %v7940, %v7972
        %v8005 = vmax.f32 %v7941, %v7973
        %v8006 = vmax.f32 %v7942, %v7974
        %v8007 = vmax.f32 %v7943, %v7975
        %v8008 = vmax.f32 %v7944, %v7976
        %v8009 = vmax.f32 %v7945, %v7977
        %v8010 = vmax.f32 %v7946, %v7978
        %v8011 = vmax.f32 %v7947, %v7979
        %v8012 = vmax.f32 %v7948, %v7980
        %v8013 = vmax.f32 %v7949, %v7981
        %v8014 = vmax.f32 %v7950, %v7982
        %v8015 = vmax.f32 %v7951, %v7983
        %v8016 = vmax.f32 %v7952, %v7984
        %v8017 = vmax.f32 %v7953, %v7985
        %v8018 = vmax.f32 %v7954, %v7986
        %v8019 = vmax.f32 %v7955, %v7987
        %v8020 = vmax.f32 %v7956, %v7988
        %v8021 = vpack.c.bf16 %v7989, %v7989
        %v8022 = vpack.c.bf16 %v7990, %v7990
        %v8023 = vpack.c.bf16 %v7991, %v7991
        %v8024 = vpack.c.bf16 %v7992, %v7992
        %v8025 = vpack.c.bf16 %v7993, %v7993
        %v8026 = vpack.c.bf16 %v7994, %v7994
        %v8027 = vpack.c.bf16 %v7995, %v7995
        %v8028 = vpack.c.bf16 %v7996, %v7996
        %v8029 = vpack.c.bf16 %v7997, %v7997
        %v8030 = vpack.c.bf16 %v7998, %v7998
        %v8031 = vpack.c.bf16 %v7999, %v7999
        %v8032 = vpack.c.bf16 %v8000, %v8000
        %v8033 = vpack.c.bf16 %v8001, %v8001
        %v8034 = vpack.c.bf16 %v8002, %v8002
        %v8035 = vpack.c.bf16 %v8003, %v8003
        %v8036 = vpack.c.bf16 %v8004, %v8004
        %v8037 = vpack.c.bf16 %v8005, %v8005
        %v8038 = vpack.c.bf16 %v8006, %v8006
        %v8039 = vpack.c.bf16 %v8007, %v8007
        %v8040 = vpack.c.bf16 %v8008, %v8008
        %v8041 = vpack.c.bf16 %v8009, %v8009
        %v8042 = vpack.c.bf16 %v8010, %v8010
        %v8043 = vpack.c.bf16 %v8011, %v8011
        %v8044 = vpack.c.bf16 %v8012, %v8012
        %v8045 = vpack.c.bf16 %v8013, %v8013
        %v8046 = vpack.c.bf16 %v8014, %v8014
        %v8047 = vpack.c.bf16 %v8015, %v8015
        %v8048 = vpack.c.bf16 %v8016, %v8016
        %v8049 = vpack.c.bf16 %v8017, %v8017
        %v8050 = vpack.c.bf16 %v8018, %v8018
        %v8051 = vpack.c.bf16 %v8019, %v8019
        %v8052 = vpack.c.bf16 %v8020, %v8020
        %v8053 = vunpack.c.l.bf16 %v8021
        %v8054 = vunpack.c.l.bf16 %v8022
        %v8055 = vunpack.c.l.bf16 %v8023
        %v8056 = vunpack.c.l.bf16 %v8024
        %v8057 = vunpack.c.l.bf16 %v8025
        %v8058 = vunpack.c.l.bf16 %v8026
        %v8059 = vunpack.c.l.bf16 %v8027
        %v8060 = vunpack.c.l.bf16 %v8028
        %v8061 = vunpack.c.l.bf16 %v8029
        %v8062 = vunpack.c.l.bf16 %v8030
        %v8063 = vunpack.c.l.bf16 %v8031
        %v8064 = vunpack.c.l.bf16 %v8032
        %v8065 = vunpack.c.l.bf16 %v8033
        %v8066 = vunpack.c.l.bf16 %v8034
        %v8067 = vunpack.c.l.bf16 %v8035
        %v8068 = vunpack.c.l.bf16 %v8036
        %v8069 = vunpack.c.l.bf16 %v8037
        %v8070 = vunpack.c.l.bf16 %v8038
        %v8071 = vunpack.c.l.bf16 %v8039
        %v8072 = vunpack.c.l.bf16 %v8040
        %v8073 = vunpack.c.l.bf16 %v8041
        %v8074 = vunpack.c.l.bf16 %v8042
        %v8075 = vunpack.c.l.bf16 %v8043
        %v8076 = vunpack.c.l.bf16 %v8044
        %v8077 = vunpack.c.l.bf16 %v8045
        %v8078 = vunpack.c.l.bf16 %v8046
        %v8079 = vunpack.c.l.bf16 %v8047
        %v8080 = vunpack.c.l.bf16 %v8048
        %v8081 = vunpack.c.l.bf16 %v8049
        %v8082 = vunpack.c.l.bf16 %v8050
        %v8083 = vunpack.c.l.bf16 %v8051
        %v8084 = vunpack.c.l.bf16 %v8052
        %v8085 = vunpack.c.l.bf16 4286578559
        %v8086 = vmax.f32 %v8053, %v8055
        %v8087 = vmax.f32 %v8054, %v8056
        %v8088 = vmax.f32 %v8055, %v8057
        %v8089 = vmax.f32 %v8056, %v8058
        %v8090 = vmax.f32 %v8057, %v8059
        %v8091 = vmax.f32 %v8058, %v8060
        %v8092 = vmax.f32 %v8059, %v8061
        %v8093 = vmax.f32 %v8060, %v8062
        %v8094 = vmax.f32 %v8061, %v8063
        %v8095 = vmax.f32 %v8062, %v8064
        %v8096 = vmax.f32 %v8063, %v8065
        %v8097 = vmax.f32 %v8064, %v8066
        %v8098 = vmax.f32 %v8065, %v8067
        %v8099 = vmax.f32 %v8066, %v8068
        %v8100 = vmax.f32 %v8067, %v8069
        %v8101 = vmax.f32 %v8068, %v8070
        %v8102 = vmax.f32 %v8069, %v8071
        %v8103 = vmax.f32 %v8070, %v8072
        %v8104 = vmax.f32 %v8071, %v8073
        %v8105 = vmax.f32 %v8072, %v8074
        %v8106 = vmax.f32 %v8073, %v8075
        %v8107 = vmax.f32 %v8074, %v8076
        %v8108 = vmax.f32 %v8075, %v8077
        %v8109 = vmax.f32 %v8076, %v8078
        %v8110 = vmax.f32 %v8077, %v8079
        %v8111 = vmax.f32 %v8078, %v8080
        %v8112 = vmax.f32 %v8079, %v8081
        %v8113 = vmax.f32 %v8080, %v8082
        %v8114 = vmax.f32 %v8081, %v8083
        %v8115 = vmax.f32 %v8082, %v8084
        %v8116 = vmax.f32 %v8083, %v8085
        %v8117 = vmax.f32 %v8084, %v8085
        %v8118 = vpack.c.bf16 %v8086, %v8086
        %v8119 = vpack.c.bf16 %v8087, %v8087
        %v8120 = vpack.c.bf16 %v8088, %v8088
        %v8121 = vpack.c.bf16 %v8089, %v8089
        %v8122 = vpack.c.bf16 %v8090, %v8090
        %v8123 = vpack.c.bf16 %v8091, %v8091
        %v8124 = vpack.c.bf16 %v8092, %v8092
        %v8125 = vpack.c.bf16 %v8093, %v8093
        %v8126 = vpack.c.bf16 %v8094, %v8094
        %v8127 = vpack.c.bf16 %v8095, %v8095
        %v8128 = vpack.c.bf16 %v8096, %v8096
        %v8129 = vpack.c.bf16 %v8097, %v8097
        %v8130 = vpack.c.bf16 %v8098, %v8098
        %v8131 = vpack.c.bf16 %v8099, %v8099
        %v8132 = vpack.c.bf16 %v8100, %v8100
        %v8133 = vpack.c.bf16 %v8101, %v8101
        %v8134 = vpack.c.bf16 %v8102, %v8102
        %v8135 = vpack.c.bf16 %v8103, %v8103
        %v8136 = vpack.c.bf16 %v8104, %v8104
        %v8137 = vpack.c.bf16 %v8105, %v8105
        %v8138 = vpack.c.bf16 %v8106, %v8106
        %v8139 = vpack.c.bf16 %v8107, %v8107
        %v8140 = vpack.c.bf16 %v8108, %v8108
        %v8141 = vpack.c.bf16 %v8109, %v8109
        %v8142 = vpack.c.bf16 %v8110, %v8110
        %v8143 = vpack.c.bf16 %v8111, %v8111
        %v8144 = vpack.c.bf16 %v8112, %v8112
        %v8145 = vpack.c.bf16 %v8113, %v8113
        %v8146 = vpack.c.bf16 %v8114, %v8114
        %v8147 = vpack.c.bf16 %v8115, %v8115
        %v8148 = vpack.c.bf16 %v8116, %v8116
        %v8149 = vpack.c.bf16 %v8117, %v8117
        %v8180 = vunpack.c.l.b16 %v8021
        %v8181 = vunpack.c.l.b16 %v8022
        %v8182 = vunpack.c.l.b16 %v8023
        %v8183 = vunpack.c.l.b16 %v8024
        %v8184 = vunpack.c.l.b16 %v8025
        %v8185 = vunpack.c.l.b16 %v8026
        %v8186 = vunpack.c.l.b16 %v8027
        %v8187 = vunpack.c.l.b16 %v8028
        %v8188 = vunpack.c.l.b16 %v8029
        %v8189 = vunpack.c.l.b16 %v8030
        %v8190 = vunpack.c.l.b16 %v8031
        %v8191 = vunpack.c.l.b16 %v8032
        %v8192 = vunpack.c.l.b16 %v8033
        %v8193 = vunpack.c.l.b16 %v8034
        %v8194 = vunpack.c.l.b16 %v8035
        %v8195 = vunpack.c.l.b16 %v8036
        %v8196 = vunpack.c.l.b16 %v8037
        %v8197 = vunpack.c.l.b16 %v8038
        %v8198 = vunpack.c.l.b16 %v8039
        %v8199 = vunpack.c.l.b16 %v8040
        %v8200 = vunpack.c.l.b16 %v8041
        %v8201 = vunpack.c.l.b16 %v8042
        %v8202 = vunpack.c.l.b16 %v8043
        %v8203 = vunpack.c.l.b16 %v8044
        %v8204 = vunpack.c.l.b16 %v8045
        %v8205 = vunpack.c.l.b16 %v8046
        %v8206 = vunpack.c.l.b16 %v8047
        %v8207 = vunpack.c.l.b16 %v8048
        %v8208 = vunpack.c.l.b16 %v8049
        %v8209 = vunpack.c.l.b16 %v8050
        %v8210 = vpack.c.b16 %v8181, %v8180
        %v8211 = vpack.c.b16 %v8183, %v8182
        %v8212 = vpack.c.b16 %v8185, %v8184
        %v8213 = vpack.c.b16 %v8187, %v8186
        %v8214 = vpack.c.b16 %v8189, %v8188
        %v8215 = vpack.c.b16 %v8191, %v8190
        %v8216 = vpack.c.b16 %v8193, %v8192
        %v8217 = vpack.c.b16 %v8195, %v8194
        %v8218 = vpack.c.b16 %v8197, %v8196
        %v8219 = vpack.c.b16 %v8199, %v8198
        %v8220 = vpack.c.b16 %v8201, %v8200
        %v8221 = vpack.c.b16 %v8203, %v8202
        %v8222 = vpack.c.b16 %v8205, %v8204
        %v8223 = vpack.c.b16 %v8207, %v8206
        %v8224 = vpack.c.b16 %v8209, %v8208
        %v8240 = vunpack.c.l.bf16 %v8118
        %v8241 = vunpack.c.l.bf16 %v8119
        %v8242 = vunpack.c.l.bf16 %v8120
        %v8243 = vunpack.c.l.bf16 %v8121
        %v8244 = vunpack.c.l.bf16 %v8122
        %v8245 = vunpack.c.l.bf16 %v8123
        %v8246 = vunpack.c.l.bf16 %v8124
        %v8247 = vunpack.c.l.bf16 %v8125
        %v8248 = vunpack.c.l.bf16 %v8126
        %v8249 = vunpack.c.l.bf16 %v8127
        %v8250 = vunpack.c.l.bf16 %v8128
        %v8251 = vunpack.c.l.bf16 %v8129
        %v8252 = vunpack.c.l.bf16 %v8130
        %v8253 = vunpack.c.l.bf16 %v8131
        %v8254 = vunpack.c.l.bf16 %v8132
        %v8255 = vunpack.c.l.bf16 %v8133
        %v8256 = vunpack.c.l.bf16 %v8134
        %v8257 = vunpack.c.l.bf16 %v8135
        %v8258 = vunpack.c.l.bf16 %v8136
        %v8259 = vunpack.c.l.bf16 %v8137
        %v8260 = vunpack.c.l.bf16 %v8138
        %v8261 = vunpack.c.l.bf16 %v8139
        %v8262 = vunpack.c.l.bf16 %v8140
        %v8263 = vunpack.c.l.bf16 %v8141
        %v8264 = vunpack.c.l.bf16 %v8142
        %v8265 = vunpack.c.l.bf16 %v8143
        %v8266 = vunpack.c.l.bf16 %v8144
        %v8267 = vunpack.c.l.bf16 %v8145
        %v8268 = vunpack.c.l.bf16 %v8146
        %v8269 = vunpack.c.l.bf16 %v8147
        %v8270 = vunpack.c.l.bf16 %v8148
        %v8271 = vunpack.c.l.bf16 %v8149
        %v8272 = vunpack.c.h.bf16 4286578559
        %v8273 = vunpack.c.l.bf16 %v8210
        %v8274 = vunpack.c.h.bf16 %v8210
        %v8275 = vunpack.c.l.bf16 %v8211
        %v8276 = vunpack.c.h.bf16 %v8211
        %v8277 = vunpack.c.l.bf16 %v8212
        %v8278 = vunpack.c.h.bf16 %v8212
        %v8279 = vunpack.c.l.bf16 %v8213
        %v8280 = vunpack.c.h.bf16 %v8213
        %v8281 = vunpack.c.l.bf16 %v8214
        %v8282 = vunpack.c.h.bf16 %v8214
        %v8283 = vunpack.c.l.bf16 %v8215
        %v8284 = vunpack.c.h.bf16 %v8215
        %v8285 = vunpack.c.l.bf16 %v8216
        %v8286 = vunpack.c.h.bf16 %v8216
        %v8287 = vunpack.c.l.bf16 %v8217
        %v8288 = vunpack.c.h.bf16 %v8217
        %v8289 = vunpack.c.l.bf16 %v8218
        %v8290 = vunpack.c.h.bf16 %v8218
        %v8291 = vunpack.c.l.bf16 %v8219
        %v8292 = vunpack.c.h.bf16 %v8219
        %v8293 = vunpack.c.l.bf16 %v8220
        %v8294 = vunpack.c.h.bf16 %v8220
        %v8295 = vunpack.c.l.bf16 %v8221
        %v8296 = vunpack.c.h.bf16 %v8221
        %v8297 = vunpack.c.l.bf16 %v8222
        %v8298 = vunpack.c.h.bf16 %v8222
        %v8299 = vunpack.c.l.bf16 %v8223
        %v8300 = vunpack.c.h.bf16 %v8223
        %v8301 = vunpack.c.l.bf16 %v8224
        %v8302 = vunpack.c.h.bf16 %v8224
        %v8303 = vmax.f32 %v8240, %v8085
        %v8304 = vmax.f32 %v8241, %v8272
        %v8305 = vmax.f32 %v8242, %v8273
        %v8306 = vmax.f32 %v8243, %v8274
        %v8307 = vmax.f32 %v8244, %v8275
        %v8308 = vmax.f32 %v8245, %v8276
        %v8309 = vmax.f32 %v8246, %v8277
        %v8310 = vmax.f32 %v8247, %v8278
        %v8311 = vmax.f32 %v8248, %v8279
        %v8312 = vmax.f32 %v8249, %v8280
        %v8313 = vmax.f32 %v8250, %v8281
        %v8314 = vmax.f32 %v8251, %v8282
        %v8315 = vmax.f32 %v8252, %v8283
        %v8316 = vmax.f32 %v8253, %v8284
        %v8317 = vmax.f32 %v8254, %v8285
        %v8318 = vmax.f32 %v8255, %v8286
        %v8319 = vmax.f32 %v8256, %v8287
        %v8320 = vmax.f32 %v8257, %v8288
        %v8321 = vmax.f32 %v8258, %v8289
        %v8322 = vmax.f32 %v8259, %v8290
        %v8323 = vmax.f32 %v8260, %v8291
        %v8324 = vmax.f32 %v8261, %v8292
        %v8325 = vmax.f32 %v8262, %v8293
        %v8326 = vmax.f32 %v8263, %v8294
        %v8327 = vmax.f32 %v8264, %v8295
        %v8328 = vmax.f32 %v8265, %v8296
        %v8329 = vmax.f32 %v8266, %v8297
        %v8330 = vmax.f32 %v8267, %v8298
        %v8331 = vmax.f32 %v8268, %v8299
        %v8332 = vmax.f32 %v8269, %v8300
        %v8333 = vmax.f32 %v8270, %v8301
        %v8334 = vmax.f32 %v8271, %v8302
        %v8335 = vpack.c.bf16 %v8303, %v8303
        %v8336 = vpack.c.bf16 %v8304, %v8304
        %v8337 = vpack.c.bf16 %v8305, %v8305
        %v8338 = vpack.c.bf16 %v8306, %v8306
        %v8339 = vpack.c.bf16 %v8307, %v8307
        %v8340 = vpack.c.bf16 %v8308, %v8308
        %v8341 = vpack.c.bf16 %v8309, %v8309
        %v8342 = vpack.c.bf16 %v8310, %v8310
        %v8343 = vpack.c.bf16 %v8311, %v8311
        %v8344 = vpack.c.bf16 %v8312, %v8312
        %v8345 = vpack.c.bf16 %v8313, %v8313
        %v8346 = vpack.c.bf16 %v8314, %v8314
        %v8347 = vpack.c.bf16 %v8315, %v8315
        %v8348 = vpack.c.bf16 %v8316, %v8316
        %v8349 = vpack.c.bf16 %v8317, %v8317
        %v8350 = vpack.c.bf16 %v8318, %v8318
        %v8351 = vpack.c.bf16 %v8319, %v8319
        %v8352 = vpack.c.bf16 %v8320, %v8320
        %v8353 = vpack.c.bf16 %v8321, %v8321
        %v8354 = vpack.c.bf16 %v8322, %v8322
        %v8355 = vpack.c.bf16 %v8323, %v8323
        %v8356 = vpack.c.bf16 %v8324, %v8324
        %v8357 = vpack.c.bf16 %v8325, %v8325
        %v8358 = vpack.c.bf16 %v8326, %v8326
        %v8359 = vpack.c.bf16 %v8327, %v8327
        %v8360 = vpack.c.bf16 %v8328, %v8328
        %v8361 = vpack.c.bf16 %v8329, %v8329
        %v8362 = vpack.c.bf16 %v8330, %v8330
        %v8363 = vpack.c.bf16 %v8331, %v8331
        %v8364 = vpack.c.bf16 %v8332, %v8332
        %v8365 = vpack.c.bf16 %v8333, %v8333
        %v8366 = vpack.c.bf16 %v8334, %v8334
        %v8367 = vld [vmem:[%s7] sm:$0x3]
        %v8368 = vld [vmem:[%s8] sm:$0x1]
        %v8370 = vperm.slane %v8368, 0
        %v8404 = vunpack.c.l.b16 %v8335
        %v8405 = vunpack.c.l.b16 %v8336
        %v8406 = vunpack.c.l.b16 %v8337
        %v8407 = vunpack.c.l.b16 %v8338
        %v8408 = vunpack.c.l.b16 %v8339
        %v8409 = vunpack.c.l.b16 %v8340
        %v8410 = vunpack.c.l.b16 %v8341
        %v8411 = vunpack.c.l.b16 %v8342
        %v8412 = vunpack.c.l.b16 %v8343
        %v8413 = vunpack.c.l.b16 %v8344
        %v8414 = vunpack.c.l.b16 %v8345
        %v8415 = vunpack.c.l.b16 %v8346
        %v8416 = vunpack.c.l.b16 %v8347
        %v8417 = vunpack.c.l.b16 %v8348
        %v8418 = vunpack.c.l.b16 %v8349
        %v8419 = vunpack.c.l.b16 %v8350
        %v8420 = vunpack.c.l.b16 %v8351
        %v8421 = vunpack.c.l.b16 %v8352
        %v8422 = vunpack.c.l.b16 %v8353
        %v8423 = vunpack.c.l.b16 %v8354
        %v8424 = vunpack.c.l.b16 %v8355
        %v8425 = vunpack.c.l.b16 %v8356
        %v8426 = vunpack.c.l.b16 %v8357
        %v8427 = vunpack.c.l.b16 %v8358
        %v8428 = vunpack.c.l.b16 %v8359
        %v8429 = vunpack.c.l.b16 %v8360
        %v8430 = vunpack.c.l.b16 %v8361
        %v8431 = vunpack.c.l.b16 %v8362
        %v8432 = vunpack.c.l.b16 %v8363
        %v8433 = vunpack.c.l.b16 %v8364
        %v8434 = vunpack.c.l.b16 %v8365
        %v8435 = vunpack.c.l.b16 %v8366
        %v8436 = vpack.c.b16 %v8405, %v8404
        %v8437 = vpack.c.b16 %v8407, %v8406
        %v8438 = vpack.c.b16 %v8409, %v8408
        %v8439 = vpack.c.b16 %v8411, %v8410
        %v8440 = vpack.c.b16 %v8413, %v8412
        %v8441 = vpack.c.b16 %v8415, %v8414
        %v8442 = vpack.c.b16 %v8417, %v8416
        %v8443 = vpack.c.b16 %v8419, %v8418
        %v8444 = vpack.c.b16 %v8421, %v8420
        %v8445 = vpack.c.b16 %v8423, %v8422
        %v8446 = vpack.c.b16 %v8425, %v8424
        %v8447 = vpack.c.b16 %v8427, %v8426
        %v8448 = vpack.c.b16 %v8429, %v8428
        %v8449 = vpack.c.b16 %v8431, %v8430
        %v8450 = vpack.c.b16 %v8433, %v8432
        %v8451 = vpack.c.b16 %v8435, %v8434
        %v8453 = vsel %vm450, %v8436, 0
        %v8456 = vsel %vm450, %v8437, 0
        %v8459 = vsel %vm450, %v8438, 0
        %v8462 = vsel %vm450, %v8439, 0
        %v8465 = vsel %vm450, %v8440, 0
        %v8468 = vsel %vm450, %v8441, 0
        %v8471 = vsel %vm450, %v8442, 0
        %v8474 = vsel %vm450, %v8443, 0
        %v8477 = vsel %vm450, %v8444, 0
        %v8480 = vsel %vm450, %v8445, 0
        %v8483 = vsel %vm450, %v8446, 0
        %v8486 = vsel %vm450, %v8447, 0
        %v8489 = vsel %vm450, %v8448, 0
        %v8492 = vsel %vm450, %v8449, 0
        %v8495 = vsel %vm450, %v8450, 0
        %v8498 = vsel %vm450, %v8451, 0
        %v8501 = vsel %vm499, %v8367, 0
        %8503 = vmatpush.bf16.msra.mxu0 0
        %8504 = vmatpush.bf16.msra.mxu0 0
        %8505 = vmatpush.bf16.msra.mxu0 0
        %8506 = vmatpush.bf16.msra.mxu0 0
        %8507 = vmatpush.bf16.msra.mxu0 0
        %8508 = vmatpush.bf16.msra.mxu0 0
        %8509 = vmatpush.bf16.msra.mxu0 0
        %8510 = vmatpush.bf16.msra.mxu0 %v8501
        %8511 = vmatmul.bf16.gmra.mxu0 %v8453
        %v8512 = vpop.f32.mrf.mxu0
        %v8513 = vadd.f32 %v8370, %v8512
        %v8514 = vpop.f32.mrf.mxu0
        %v8515 = vadd.f32 %v8370, %v8514
        %8516 = vmatmul.bf16.gmra.mxu0 %v8456
        %v8517 = vpop.f32.mrf.mxu0
        %v8518 = vadd.f32 %v8370, %v8517
        %v8519 = vpop.f32.mrf.mxu0
        %v8520 = vadd.f32 %v8370, %v8519
        %8521 = vmatmul.bf16.gmra.mxu0 %v8459
        %v8522 = vpop.f32.mrf.mxu0
        %v8523 = vadd.f32 %v8370, %v8522
        %v8524 = vpop.f32.mrf.mxu0
        %v8525 = vadd.f32 %v8370, %v8524
        %8526 = vmatmul.bf16.gmra.mxu0 %v8462
        %v8527 = vpop.f32.mrf.mxu0
        %v8528 = vadd.f32 %v8370, %v8527
        %v8529 = vpop.f32.mrf.mxu0
        %v8530 = vadd.f32 %v8370, %v8529
        %8531 = vmatmul.bf16.gmra.mxu0 %v8465
        %v8532 = vpop.f32.mrf.mxu0
        %v8533 = vadd.f32 %v8370, %v8532
        %v8534 = vpop.f32.mrf.mxu0
        %v8535 = vadd.f32 %v8370, %v8534
        %8536 = vmatmul.bf16.gmra.mxu0 %v8468
        %v8537 = vpop.f32.mrf.mxu0
        %v8538 = vadd.f32 %v8370, %v8537
        %v8539 = vpop.f32.mrf.mxu0
        %v8540 = vadd.f32 %v8370, %v8539
        %8541 = vmatmul.bf16.gmra.mxu0 %v8471
        %v8542 = vpop.f32.mrf.mxu0
        %v8543 = vadd.f32 %v8370, %v8542
        %v8544 = vpop.f32.mrf.mxu0
        %v8545 = vadd.f32 %v8370, %v8544
        %8546 = vmatmul.bf16.gmra.mxu0 %v8474
        %v8547 = vpop.f32.mrf.mxu0
        %v8548 = vadd.f32 %v8370, %v8547
        %v8549 = vpop.f32.mrf.mxu0
        %v8550 = vadd.f32 %v8370, %v8549
        %8551 = vmatmul.bf16.gmra.mxu0 %v8477
        %v8552 = vpop.f32.mrf.mxu0
        %v8553 = vadd.f32 %v8370, %v8552
        %v8554 = vpop.f32.mrf.mxu0
        %v8555 = vadd.f32 %v8370, %v8554
        %8556 = vmatmul.bf16.gmra.mxu0 %v8480
        %v8557 = vpop.f32.mrf.mxu0
        %v8558 = vadd.f32 %v8370, %v8557
        %v8559 = vpop.f32.mrf.mxu0
        %v8560 = vadd.f32 %v8370, %v8559
        %8561 = vmatmul.bf16.gmra.mxu0 %v8483
        %v8562 = vpop.f32.mrf.mxu0
        %v8563 = vadd.f32 %v8370, %v8562
        %v8564 = vpop.f32.mrf.mxu0
        %v8565 = vadd.f32 %v8370, %v8564
        %8566 = vmatmul.bf16.gmra.mxu0 %v8486
        %v8567 = vpop.f32.mrf.mxu0
        %v8568 = vadd.f32 %v8370, %v8567
        %v8569 = vpop.f32.mrf.mxu0
        %v8570 = vadd.f32 %v8370, %v8569
        %8571 = vmatmul.bf16.gmra.mxu0 %v8489
        %v8572 = vpop.f32.mrf.mxu0
        %v8573 = vadd.f32 %v8370, %v8572
        %v8574 = vpop.f32.mrf.mxu0
        %v8575 = vadd.f32 %v8370, %v8574
        %8576 = vmatmul.bf16.gmra.mxu0 %v8492
        %v8577 = vpop.f32.mrf.mxu0
        %v8578 = vadd.f32 %v8370, %v8577
        %v8579 = vpop.f32.mrf.mxu0
        %v8580 = vadd.f32 %v8370, %v8579
        %8581 = vmatmul.bf16.gmra.mxu0 %v8495
        %v8582 = vpop.f32.mrf.mxu0
        %v8583 = vadd.f32 %v8370, %v8582
        %v8584 = vpop.f32.mrf.mxu0
        %v8585 = vadd.f32 %v8370, %v8584
        %8586 = vmatmul.bf16.gmra.mxu0 %v8498
        %v8587 = vpop.f32.mrf.mxu0
        %v8588 = vadd.f32 %v8370, %v8587
        %v8589 = vpop.f32.mrf.mxu0
        %v8590 = vadd.f32 %v8370, %v8589
        %8591 = vdwg.mxu0
        %v8592 = vmax.f32 %v8513, 0.0
        %v8593 = vmax.f32 %v8515, 0.0
        %v8594 = vmax.f32 %v8518, 0.0
        %v8595 = vmax.f32 %v8520, 0.0
        %v8596 = vmax.f32 %v8523, 0.0
        %v8597 = vmax.f32 %v8525, 0.0
        %v8598 = vmax.f32 %v8528, 0.0
        %v8599 = vmax.f32 %v8530, 0.0
        %v8600 = vmax.f32 %v8533, 0.0
        %v8601 = vmax.f32 %v8535, 0.0
        %v8602 = vmax.f32 %v8538, 0.0
        %v8603 = vmax.f32 %v8540, 0.0
        %v8604 = vmax.f32 %v8543, 0.0
        %v8605 = vmax.f32 %v8545, 0.0
        %v8606 = vmax.f32 %v8548, 0.0
        %v8607 = vmax.f32 %v8550, 0.0
        %v8608 = vmax.f32 %v8553, 0.0
        %v8609 = vmax.f32 %v8555, 0.0
        %v8610 = vmax.f32 %v8558, 0.0
        %v8611 = vmax.f32 %v8560, 0.0
        %v8612 = vmax.f32 %v8563, 0.0
        %v8613 = vmax.f32 %v8565, 0.0
        %v8614 = vmax.f32 %v8568, 0.0
        %v8615 = vmax.f32 %v8570, 0.0
        %v8616 = vmax.f32 %v8573, 0.0
        %v8617 = vmax.f32 %v8575, 0.0
        %v8618 = vmax.f32 %v8578, 0.0
        %v8619 = vmax.f32 %v8580, 0.0
        %v8620 = vmax.f32 %v8583, 0.0
        %v8621 = vmax.f32 %v8585, 0.0
        %v8622 = vmax.f32 %v8588, 0.0
        %v8623 = vmax.f32 %v8590, 0.0
        %8656 = vrot.lane.b32.xlu0 %v4244, 8
        %v8657 = vpop.permute.xlu0 %8656
        %8658 = vrot.lane.b32.xlu0 %v4245, 8
        %v8659 = vpop.permute.xlu0 %8658
        %8660 = vrot.lane.b32.xlu0 %v4246, 8
        %v8661 = vpop.permute.xlu0 %8660
        %8662 = vrot.lane.b32.xlu0 %v4247, 8
        %v8663 = vpop.permute.xlu0 %8662
        %8664 = vrot.lane.b32.xlu0 %v4248, 8
        %v8665 = vpop.permute.xlu0 %8664
        %8666 = vrot.lane.b32.xlu0 %v4249, 8
        %v8667 = vpop.permute.xlu0 %8666
        %8668 = vrot.lane.b32.xlu0 %v4250, 8
        %v8669 = vpop.permute.xlu0 %8668
        %8670 = vrot.lane.b32.xlu0 %v4251, 8
        %v8671 = vpop.permute.xlu0 %8670
        %8672 = vrot.lane.b32.xlu0 %v4252, 8
        %v8673 = vpop.permute.xlu0 %8672
        %8674 = vrot.lane.b32.xlu0 %v4253, 8
        %v8675 = vpop.permute.xlu0 %8674
        %8676 = vrot.lane.b32.xlu0 %v4254, 8
        %v8677 = vpop.permute.xlu0 %8676
        %8678 = vrot.lane.b32.xlu0 %v4255, 8
        %v8679 = vpop.permute.xlu0 %8678
        %8680 = vrot.lane.b32.xlu0 %v4256, 8
        %v8681 = vpop.permute.xlu0 %8680
        %8682 = vrot.lane.b32.xlu0 %v4257, 8
        %v8683 = vpop.permute.xlu0 %8682
        %8684 = vrot.lane.b32.xlu0 %v4258, 8
        %v8685 = vpop.permute.xlu0 %8684
        %8686 = vrot.lane.b32.xlu0 %v4259, 8
        %v8687 = vpop.permute.xlu0 %8686
        %8688 = vrot.lane.b32.xlu0 %v4260, 8
        %v8689 = vpop.permute.xlu0 %8688
        %8690 = vrot.lane.b32.xlu0 %v4261, 8
        %v8691 = vpop.permute.xlu0 %8690
        %8692 = vrot.lane.b32.xlu0 %v4262, 8
        %v8693 = vpop.permute.xlu0 %8692
        %8694 = vrot.lane.b32.xlu0 %v4263, 8
        %v8695 = vpop.permute.xlu0 %8694
        %8696 = vrot.lane.b32.xlu0 %v4264, 8
        %v8697 = vpop.permute.xlu0 %8696
        %8698 = vrot.lane.b32.xlu0 %v4265, 8
        %v8699 = vpop.permute.xlu0 %8698
        %8700 = vrot.lane.b32.xlu0 %v4266, 8
        %v8701 = vpop.permute.xlu0 %8700
        %8702 = vrot.lane.b32.xlu0 %v4267, 8
        %v8703 = vpop.permute.xlu0 %8702
        %8704 = vrot.lane.b32.xlu0 %v4268, 8
        %v8705 = vpop.permute.xlu0 %8704
        %8706 = vrot.lane.b32.xlu0 %v4269, 8
        %v8707 = vpop.permute.xlu0 %8706
        %8708 = vrot.lane.b32.xlu0 %v4270, 8
        %v8709 = vpop.permute.xlu0 %8708
        %8710 = vrot.lane.b32.xlu0 %v4271, 8
        %v8711 = vpop.permute.xlu0 %8710
        %8712 = vrot.lane.b32.xlu0 %v4272, 8
        %v8713 = vpop.permute.xlu0 %8712
        %8714 = vrot.lane.b32.xlu0 %v4273, 8
        %v8715 = vpop.permute.xlu0 %8714
        %8716 = vrot.lane.b32.xlu0 %v4274, 8
        %v8717 = vpop.permute.xlu0 %8716
        %8718 = vrot.lane.b32.xlu0 %v4275, 8
        %v8719 = vpop.permute.xlu0 %8718
        %8784 = vrot.lane.b32.xlu0 %v7568, 16
        %v8785 = vpop.permute.xlu0 %8784
        %8786 = vrot.lane.b32.xlu0 %v7569, 16
        %v8787 = vpop.permute.xlu0 %8786
        %8788 = vrot.lane.b32.xlu0 %v7570, 16
        %v8789 = vpop.permute.xlu0 %8788
        %8790 = vrot.lane.b32.xlu0 %v7571, 16
        %v8791 = vpop.permute.xlu0 %8790
        %8792 = vrot.lane.b32.xlu0 %v7572, 16
        %v8793 = vpop.permute.xlu0 %8792
        %8794 = vrot.lane.b32.xlu0 %v7573, 16
        %v8795 = vpop.permute.xlu0 %8794
        %8796 = vrot.lane.b32.xlu0 %v7574, 16
        %v8797 = vpop.permute.xlu0 %8796
        %8798 = vrot.lane.b32.xlu0 %v7575, 16
        %v8799 = vpop.permute.xlu0 %8798
        %8800 = vrot.lane.b32.xlu0 %v7576, 16
        %v8801 = vpop.permute.xlu0 %8800
        %8802 = vrot.lane.b32.xlu0 %v7577, 16
        %v8803 = vpop.permute.xlu0 %8802
        %8804 = vrot.lane.b32.xlu0 %v7578, 16
        %v8805 = vpop.permute.xlu0 %8804
        %8806 = vrot.lane.b32.xlu0 %v7579, 16
        %v8807 = vpop.permute.xlu0 %8806
        %8808 = vrot.lane.b32.xlu0 %v7580, 16
        %v8809 = vpop.permute.xlu0 %8808
        %8810 = vrot.lane.b32.xlu0 %v7581, 16
        %v8811 = vpop.permute.xlu0 %8810
        %8812 = vrot.lane.b32.xlu0 %v7582, 16
        %v8813 = vpop.permute.xlu0 %8812
        %8814 = vrot.lane.b32.xlu0 %v7583, 16
        %v8815 = vpop.permute.xlu0 %8814
        %8816 = vrot.lane.b32.xlu0 %v7584, 16
        %v8817 = vpop.permute.xlu0 %8816
        %8818 = vrot.lane.b32.xlu0 %v7585, 16
        %v8819 = vpop.permute.xlu0 %8818
        %8820 = vrot.lane.b32.xlu0 %v7586, 16
        %v8821 = vpop.permute.xlu0 %8820
        %8822 = vrot.lane.b32.xlu0 %v7587, 16
        %v8823 = vpop.permute.xlu0 %8822
        %8824 = vrot.lane.b32.xlu0 %v7588, 16
        %v8825 = vpop.permute.xlu0 %8824
        %8826 = vrot.lane.b32.xlu0 %v7589, 16
        %v8827 = vpop.permute.xlu0 %8826
        %8828 = vrot.lane.b32.xlu0 %v7590, 16
        %v8829 = vpop.permute.xlu0 %8828
        %8830 = vrot.lane.b32.xlu0 %v7591, 16
        %v8831 = vpop.permute.xlu0 %8830
        %8832 = vrot.lane.b32.xlu0 %v7592, 16
        %v8833 = vpop.permute.xlu0 %8832
        %8834 = vrot.lane.b32.xlu0 %v7593, 16
        %v8835 = vpop.permute.xlu0 %8834
        %8836 = vrot.lane.b32.xlu0 %v7594, 16
        %v8837 = vpop.permute.xlu0 %8836
        %8838 = vrot.lane.b32.xlu0 %v7595, 16
        %v8839 = vpop.permute.xlu0 %8838
        %8840 = vrot.lane.b32.xlu0 %v7596, 16
        %v8841 = vpop.permute.xlu0 %8840
        %8842 = vrot.lane.b32.xlu0 %v7597, 16
        %v8843 = vpop.permute.xlu0 %8842
        %8844 = vrot.lane.b32.xlu0 %v7598, 16
        %v8845 = vpop.permute.xlu0 %8844
        %8846 = vrot.lane.b32.xlu0 %v7599, 16
        %v8847 = vpop.permute.xlu0 %8846
        %8912 = vrot.lane.b32.xlu0 %v8592, 24
        %v8913 = vpop.permute.xlu0 %8912
        %8914 = vrot.lane.b32.xlu0 %v8593, 24
        %v8915 = vpop.permute.xlu0 %8914
        %8916 = vrot.lane.b32.xlu0 %v8594, 24
        %v8917 = vpop.permute.xlu0 %8916
        %8918 = vrot.lane.b32.xlu0 %v8595, 24
        %v8919 = vpop.permute.xlu0 %8918
        %8920 = vrot.lane.b32.xlu0 %v8596, 24
        %v8921 = vpop.permute.xlu0 %8920
        %8922 = vrot.lane.b32.xlu0 %v8597, 24
        %v8923 = vpop.permute.xlu0 %8922
        %8924 = vrot.lane.b32.xlu0 %v8598, 24
        %v8925 = vpop.permute.xlu0 %8924
        %8926 = vrot.lane.b32.xlu0 %v8599, 24
        %v8927 = vpop.permute.xlu0 %8926
        %8928 = vrot.lane.b32.xlu0 %v8600, 24
        %v8929 = vpop.permute.xlu0 %8928
        %8930 = vrot.lane.b32.xlu0 %v8601, 24
        %v8931 = vpop.permute.xlu0 %8930
        %8932 = vrot.lane.b32.xlu0 %v8602, 24
        %v8933 = vpop.permute.xlu0 %8932
        %8934 = vrot.lane.b32.xlu0 %v8603, 24
        %v8935 = vpop.permute.xlu0 %8934
        %8936 = vrot.lane.b32.xlu0 %v8604, 24
        %v8937 = vpop.permute.xlu0 %8936
        %8938 = vrot.lane.b32.xlu0 %v8605, 24
        %v8939 = vpop.permute.xlu0 %8938
        %8940 = vrot.lane.b32.xlu0 %v8606, 24
        %v8941 = vpop.permute.xlu0 %8940
        %8942 = vrot.lane.b32.xlu0 %v8607, 24
        %v8943 = vpop.permute.xlu0 %8942
        %8944 = vrot.lane.b32.xlu0 %v8608, 24
        %v8945 = vpop.permute.xlu0 %8944
        %8946 = vrot.lane.b32.xlu0 %v8609, 24
        %v8947 = vpop.permute.xlu0 %8946
        %8948 = vrot.lane.b32.xlu0 %v8610, 24
        %v8949 = vpop.permute.xlu0 %8948
        %8950 = vrot.lane.b32.xlu0 %v8611, 24
        %v8951 = vpop.permute.xlu0 %8950
        %8952 = vrot.lane.b32.xlu0 %v8612, 24
        %v8953 = vpop.permute.xlu0 %8952
        %8954 = vrot.lane.b32.xlu0 %v8613, 24
        %v8955 = vpop.permute.xlu0 %8954
        %8956 = vrot.lane.b32.xlu0 %v8614, 24
        %v8957 = vpop.permute.xlu0 %8956
        %8958 = vrot.lane.b32.xlu0 %v8615, 24
        %v8959 = vpop.permute.xlu0 %8958
        %8960 = vrot.lane.b32.xlu0 %v8616, 24
        %v8961 = vpop.permute.xlu0 %8960
        %8962 = vrot.lane.b32.xlu0 %v8617, 24
        %v8963 = vpop.permute.xlu0 %8962
        %8964 = vrot.lane.b32.xlu0 %v8618, 24
        %v8965 = vpop.permute.xlu0 %8964
        %8966 = vrot.lane.b32.xlu0 %v8619, 24
        %v8967 = vpop.permute.xlu0 %8966
        %8968 = vrot.lane.b32.xlu0 %v8620, 24
        %v8969 = vpop.permute.xlu0 %8968
        %8970 = vrot.lane.b32.xlu0 %v8621, 24
        %v8971 = vpop.permute.xlu0 %8970
        %8972 = vrot.lane.b32.xlu0 %v8622, 24
        %v8973 = vpop.permute.xlu0 %8972
        %8974 = vrot.lane.b32.xlu0 %v8623, 24
        %v8975 = vpop.permute.xlu0 %8974
        %v9008 = vsel %vm3864, %v592, %v8657
        %v9009 = vsel %vm3864, %v593, %v8659
        %v9010 = vsel %vm3864, %v594, %v8661
        %v9011 = vsel %vm3864, %v595, %v8663
        %v9012 = vsel %vm3864, %v596, %v8665
        %v9013 = vsel %vm3864, %v597, %v8667
        %v9014 = vsel %vm3864, %v598, %v8669
        %v9015 = vsel %vm3864, %v599, %v8671
        %v9016 = vsel %vm3864, %v600, %v8673
        %v9017 = vsel %vm3864, %v601, %v8675
        %v9018 = vsel %vm3864, %v602, %v8677
        %v9019 = vsel %vm3864, %v603, %v8679
        %v9020 = vsel %vm3864, %v604, %v8681
        %v9021 = vsel %vm3864, %v605, %v8683
        %v9022 = vsel %vm3864, %v606, %v8685
        %v9023 = vsel %vm3864, %v607, %v8687
        %v9024 = vsel %vm3864, %v608, %v8689
        %v9025 = vsel %vm3864, %v609, %v8691
        %v9026 = vsel %vm3864, %v610, %v8693
        %v9027 = vsel %vm3864, %v611, %v8695
        %v9028 = vsel %vm3864, %v612, %v8697
        %v9029 = vsel %vm3864, %v613, %v8699
        %v9030 = vsel %vm3864, %v614, %v8701
        %v9031 = vsel %vm3864, %v615, %v8703
        %v9032 = vsel %vm3864, %v616, %v8705
        %v9033 = vsel %vm3864, %v617, %v8707
        %v9034 = vsel %vm3864, %v618, %v8709
        %v9035 = vsel %vm3864, %v619, %v8711
        %v9036 = vsel %vm3864, %v620, %v8713
        %v9037 = vsel %vm3864, %v621, %v8715
        %v9038 = vsel %vm3864, %v622, %v8717
        %v9039 = vsel %vm3864, %v623, %v8719
        %v9040 = vsel %vm3930, %v9008, %v8785
        %v9041 = vsel %vm3930, %v9009, %v8787
        %v9042 = vsel %vm3930, %v9010, %v8789
        %v9043 = vsel %vm3930, %v9011, %v8791
        %v9044 = vsel %vm3930, %v9012, %v8793
        %v9045 = vsel %vm3930, %v9013, %v8795
        %v9046 = vsel %vm3930, %v9014, %v8797
        %v9047 = vsel %vm3930, %v9015, %v8799
        %v9048 = vsel %vm3930, %v9016, %v8801
        %v9049 = vsel %vm3930, %v9017, %v8803
        %v9050 = vsel %vm3930, %v9018, %v8805
        %v9051 = vsel %vm3930, %v9019, %v8807
        %v9052 = vsel %vm3930, %v9020, %v8809
        %v9053 = vsel %vm3930, %v9021, %v8811
        %v9054 = vsel %vm3930, %v9022, %v8813
        %v9055 = vsel %vm3930, %v9023, %v8815
        %v9056 = vsel %vm3930, %v9024, %v8817
        %v9057 = vsel %vm3930, %v9025, %v8819
        %v9058 = vsel %vm3930, %v9026, %v8821
        %v9059 = vsel %vm3930, %v9027, %v8823
        %v9060 = vsel %vm3930, %v9028, %v8825
        %v9061 = vsel %vm3930, %v9029, %v8827
        %v9062 = vsel %vm3930, %v9030, %v8829
        %v9063 = vsel %vm3930, %v9031, %v8831
        %v9064 = vsel %vm3930, %v9032, %v8833
        %v9065 = vsel %vm3930, %v9033, %v8835
        %v9066 = vsel %vm3930, %v9034, %v8837
        %v9067 = vsel %vm3930, %v9035, %v8839
        %v9068 = vsel %vm3930, %v9036, %v8841
        %v9069 = vsel %vm3930, %v9037, %v8843
        %v9070 = vsel %vm3930, %v9038, %v8845
        %v9071 = vsel %vm3930, %v9039, %v8847
        %v9072 = vsel %vm3996, %v9040, %v8913
        %v9073 = vsel %vm3996, %v9041, %v8915
        %v9074 = vsel %vm3996, %v9042, %v8917
        %v9075 = vsel %vm3996, %v9043, %v8919
        %v9076 = vsel %vm3996, %v9044, %v8921
        %v9077 = vsel %vm3996, %v9045, %v8923
        %v9078 = vsel %vm3996, %v9046, %v8925
        %v9079 = vsel %vm3996, %v9047, %v8927
        %v9080 = vsel %vm3996, %v9048, %v8929
        %v9081 = vsel %vm3996, %v9049, %v8931
        %v9082 = vsel %vm3996, %v9050, %v8933
        %v9083 = vsel %vm3996, %v9051, %v8935
        %v9084 = vsel %vm3996, %v9052, %v8937
        %v9085 = vsel %vm3996, %v9053, %v8939
        %v9086 = vsel %vm3996, %v9054, %v8941
        %v9087 = vsel %vm3996, %v9055, %v8943
        %v9088 = vsel %vm3996, %v9056, %v8945
        %v9089 = vsel %vm3996, %v9057, %v8947
        %v9090 = vsel %vm3996, %v9058, %v8949
        %v9091 = vsel %vm3996, %v9059, %v8951
        %v9092 = vsel %vm3996, %v9060, %v8953
        %v9093 = vsel %vm3996, %v9061, %v8955
        %v9094 = vsel %vm3996, %v9062, %v8957
        %v9095 = vsel %vm3996, %v9063, %v8959
        %v9096 = vsel %vm3996, %v9064, %v8961
        %v9097 = vsel %vm3996, %v9065, %v8963
        %v9098 = vsel %vm3996, %v9066, %v8965
        %v9099 = vsel %vm3996, %v9067, %v8967
        %v9100 = vsel %vm3996, %v9068, %v8969
        %v9101 = vsel %vm3996, %v9069, %v8971
        %v9102 = vsel %vm3996, %v9070, %v8973
        %v9103 = vsel %vm3996, %v9071, %v8975
        %9104 = vst.msk [vmem:[%s325] sm:$0xff] %vm4062, %v9072
        %9105 = vst.msk [vmem:[%s325 + $0x8] sm:$0xff] %vm4062, %v9073
        %9106 = vst.msk [vmem:[%s325 + $0x10] sm:$0xff] %vm4062, %v9074
        %9107 = vst.msk [vmem:[%s325 + $0x18] sm:$0xff] %vm4062, %v9075
        %9108 = vst.msk [vmem:[%s325 + $0x20] sm:$0xff] %vm4062, %v9076
        %9109 = vst.msk [vmem:[%s325 + $0x28] sm:$0xff] %vm4062, %v9077
        %9110 = vst.msk [vmem:[%s325 + $0x30] sm:$0xff] %vm4062, %v9078
        %9111 = vst.msk [vmem:[%s325 + $0x38] sm:$0xff] %vm4062, %v9079
        %9112 = vst.msk [vmem:[%s325 + $0x40] sm:$0xff] %vm4062, %v9080
        %9113 = vst.msk [vmem:[%s325 + $0x48] sm:$0xff] %vm4062, %v9081
        %9114 = vst.msk [vmem:[%s325 + $0x50] sm:$0xff] %vm4062, %v9082
        %9115 = vst.msk [vmem:[%s325 + $0x58] sm:$0xff] %vm4062, %v9083
        %9116 = vst.msk [vmem:[%s325 + $0x60] sm:$0xff] %vm4062, %v9084
        %9117 = vst.msk [vmem:[%s325 + $0x68] sm:$0xff] %vm4062, %v9085
        %9118 = vst.msk [vmem:[%s325 + $0x70] sm:$0xff] %vm4062, %v9086
        %9119 = vst.msk [vmem:[%s325 + $0x78] sm:$0xff] %vm4062, %v9087
        %9120 = vst.msk [vmem:[%s325 + $0x80] sm:$0xff] %vm4062, %v9088
        %9121 = vst.msk [vmem:[%s325 + $0x88] sm:$0xff] %vm4062, %v9089
        %9122 = vst.msk [vmem:[%s325 + $0x90] sm:$0xff] %vm4062, %v9090
        %9123 = vst.msk [vmem:[%s325 + $0x98] sm:$0xff] %vm4062, %v9091
        %9124 = vst.msk [vmem:[%s325 + $0xa0] sm:$0xff] %vm4062, %v9092
        %9125 = vst.msk [vmem:[%s325 + $0xa8] sm:$0xff] %vm4062, %v9093
        %9126 = vst.msk [vmem:[%s325 + $0xb0] sm:$0xff] %vm4062, %v9094
        %9127 = vst.msk [vmem:[%s325 + $0xb8] sm:$0xff] %vm4062, %v9095
        %9128 = vst.msk [vmem:[%s325 + $0xc0] sm:$0xff] %vm4062, %v9096
        %9129 = vst.msk [vmem:[%s325 + $0xc8] sm:$0xff] %vm4062, %v9097
        %9130 = vst.msk [vmem:[%s325 + $0xd0] sm:$0xff] %vm4062, %v9098
        %9131 = vst.msk [vmem:[%s325 + $0xd8] sm:$0xff] %vm4062, %v9099
        %9132 = vst.msk [vmem:[%s325 + $0xe0] sm:$0xff] %vm4062, %v9100
        %9133 = vst.msk [vmem:[%s325 + $0xe8] sm:$0xff] %vm4062, %v9101
        %9134 = vst.msk [vmem:[%s325 + $0xf0] sm:$0xff] %vm4062, %v9102
        %9135 = vst.msk [vmem:[%s325 + $0xf8] sm:$0xff] %vm4062, %v9103
        %s9136 = sand.u32 %s225, 1
        %s9137 = scalar_lea.sflag [#allocation5], %s9136
        %s9138 = sand.u32 %s225, 1
        %s9139 = smul.addr %s9138, 256
        %s9140 = scalar_lea.vmem [#allocation4], %s9139
        // Predicated region
        $region57: #{inception_forward.1} parent=55 // pred_check
          %p9141 = pneg %p235
        $region58: #{inception_forward.1} parent=55 // pred_check_branch
          %9143 = sbr.rel (%p9141) target = $region60
        $region59: #{inception_forward.1} parent=55 // pred_region
          %9145 = vsyncadd %s9137, 0
          %s9146 = smul.addr %s23, 32
          %s9147 = smul.addr %s9146, 8
          %s9148 = scalar_lea.hbm %s9, %s9147
          %s9149 = sshll.u32 %s9140, 4
          %s9150 = int_to_ptr.vmem [resolvable:$true] %s9149
          %s9151 = sshll.u32 %s9148, 4
          %s9152 = int_to_ptr.hbm [resolvable:$true] %s9151
          %9157 = dma.vmem_to_hbm [thread:$0]  %s9150, 4096, %s9152, %s9137, 128, 128, 8
        $region60: #{inception_forward.1} parent=55 // pred_fallthru
          _
      $region56: #{inception_forward.1} parent=5 // pred_fallthru
        _
      %p9158 = scmp.le.s32.totalorder 2, %s18
      // Predicated region
      $region61: #{inception_forward.1} parent=5 // pred_check
        %p9159 = pneg %p9158
      $region62: #{inception_forward.1} parent=5 // pred_check_branch
        %9161 = sbr.rel (%p9159) target = $region64
      $region63: #{inception_forward.1} parent=5 // pred_region
        %s9162 = ssub.s32 %s18, 2
        // Predicated region
        $region65: #{inception_forward.1} parent=63 // pred_check
          %p9163 = pneg %p241
        $region66: #{inception_forward.1} parent=63 // pred_check_branch
          %9165 = sbr.rel (%p9163) target = $region68
        $region67: #{inception_forward.1} parent=63 // pred_region
          %s9166 = sand.u32 %s226, 1
          %s9167 = scalar_lea.sflag [#allocation5], %s9166
          %s9168 = sand.u32 %s226, 1
          %s9169 = smul.addr %s9168, 256
          %s9170 = scalar_lea.vmem [#allocation4], %s9169
          %9172 = dma.done %s9167, 4096
        $region68: #{inception_forward.1} parent=63 // pred_fallthru
          _
      $region64: #{inception_forward.1} parent=5 // pred_fallthru
        _
    $region6: #{inception_forward.1} parent=1 // loop_footer
      %s22 = sadd.s32 1, %s18
    $region7: #{inception_forward.1} parent=1 // loop_footer_branch
      %17 = sbr.rel target = $region3
    $region8: #{inception_forward.1} parent=1 // loop_exit
      _
    %9173 = vsyncpa [#allocation5], 1
    %s9174 = scalar_lea.sflag [#allocation5], 1
    %9175 = vsyncpa %s9174, 1

</llo_original>
